<compile_context>
chip_gen: v5e
topology: v5e:2x2
jax: 0.10.0
libtpu: 0.0.40
codegen_flags: <defaults>
</compile_context>

<pallas_src>
from functools import partial

import jax
import jax.numpy as jnp
from jax.experimental import pallas as pl
from jax.experimental.pallas import tpu as pltpu

LN_EPS = 1e-5          # PyTorch nn.LayerNorm default
_NEG_INF = -1e30       # additive mask value for cross-batch attention
_OUT_HALF = 64         # lane offset of the pose output in the packed output

_COMPILER_PARAMS = pltpu.CompilerParams(vmem_limit_bytes=16 * 1024 * 1024)


# ----------------------------- small helpers -----------------------------

def _pad_last(a, width):
    pad = width - a.shape[-1]
    if pad == 0:
        return a
    return jnp.pad(a, ((0, 0), (0, pad)))


def _make_batch_mask(B, T):
    """Additive [B*T, B*T] mask: 0 within a batch element, -1e30 across them."""
    bid = jnp.arange(B * T, dtype=jnp.int32) // T
    return jnp.where(bid[:, None] == bid[None, :], 0.0, _NEG_INF).astype(jnp.float32)


def _layernorm(x, gamma, beta):
    mu = jnp.mean(x, axis=-1, keepdims=True)
    var = jnp.mean(jnp.square(x - mu), axis=-1, keepdims=True)
    return (x - mu) * jax.lax.rsqrt(var + LN_EPS) * gamma + beta


# ----------------------------- in-kernel tower -----------------------------

def _tower_apply(x, w_ref, v_ref, plan, mask, B, T):
    """(optional pre-LN) -> (optional proj) -> +pos_embed -> pre-norm blocks
    -> final LN.  All weights come from two VMEM slabs sliced at static
    offsets.  x is an f32 [B*T, Din] value; result stays in VMEM/registers."""
    BT = B * T
    D, dh, Hm, nh = plan["D"], plan["dh"], plan["Hm"], plan["num_heads"]

    def vec(row, width):                       # one bias / LN vector -> [1, width]
        return v_ref[row:row + 1, :width]

    if plan["pre_ln"] is not None:             # input_norm(f_joint + f_pose)
        gr, br = plan["pre_ln"]
        din = x.shape[1]
        x = _layernorm(x, vec(gr, din), vec(br, din))

    if plan["proj"] is not None:               # decoder-side projection
        r0, din = plan["proj"]
        w = w_ref[r0:r0 + din, :D]
        x = (jnp.dot(x.astype(jnp.bfloat16), w, preferred_element_type=jnp.float32)
             + vec(plan["proj_b"], D))

    # learned positional embedding, pre-tiled to [B*T, D] at pack time
    x = x + v_ref[plan["pos_row"]:plan["pos_row"] + BT, :D]

    for blk in plan["blocks"]:
        # ---- multi-head self-attention (pre-norm); qk scale folded into Wq ----
        xn = _layernorm(x, vec(blk["g1"], D), vec(blk["b1"], D))
        wqkv = w_ref[blk["wqkv"]:blk["wqkv"] + D, :3 * D]
        qkv = (jnp.dot(xn.astype(jnp.bfloat16), wqkv,
                       preferred_element_type=jnp.float32)
               + vec(blk["bqkv"], 3 * D))
        heads = []
        for h in range(nh):                    # static unroll over heads
            qh = qkv[:, h * dh:(h + 1) * dh].astype(jnp.bfloat16)
            kh = qkv[:, D + h * dh:D + (h + 1) * dh].astype(jnp.bfloat16)
            vh = qkv[:, 2 * D + h * dh:2 * D + (h + 1) * dh].astype(jnp.bfloat16)
            # one [BT, BT] score matmul; cross-batch entries masked out
            s = jax.lax.dot_general(qh, kh, (((1,), (1,)), ((), ())),
                                    preferred_element_type=jnp.float32)
            s = s + mask
            s = s - jnp.max(s, axis=-1, keepdims=True)
            p = jnp.exp(s)
            p = p * pl.reciprocal(jnp.sum(p, axis=-1, keepdims=True), approx=True)
            heads.append(jnp.dot(p.astype(jnp.bfloat16), vh,
                                 preferred_element_type=jnp.float32))
        a = jnp.concatenate(heads, axis=-1)    # [BT, D], head order = torch
        wo = w_ref[blk["wo"]:blk["wo"] + D, :D]
        x = (x + jnp.dot(a.astype(jnp.bfloat16), wo,
                         preferred_element_type=jnp.float32)
             + vec(blk["bo"], D))              # dropout / drop-path identity (eval)

        # ---- MLP ----
        xn2 = _layernorm(x, vec(blk["g2"], D), vec(blk["b2"], D))
        w1 = w_ref[blk["w1"]:blk["w1"] + D, :Hm]
        hmid = (jnp.dot(xn2.astype(jnp.bfloat16), w1,
                        preferred_element_type=jnp.float32)
                + vec(blk["b1m"], Hm))
        # TODO(synk): exact erf-GELU not used; tanh approximation instead.
        hmid = jax.nn.gelu(hmid, approximate=True)
        w2 = w_ref[blk["w2"]:blk["w2"] + Hm, :D]
        x = (x + jnp.dot(hmid.astype(jnp.bfloat16), w2,
                         preferred_element_type=jnp.float32)
             + vec(blk["b2m"], D))

    return _layernorm(x, vec(plan["gN"], D), vec(plan["bN"], D))


# ----------------------------- fused DTM kernel -----------------------------

def _make_dtm_kernel(plans, B, T, with_decoder):
    camE, poseE = plans["camE"], plans["poseE"]
    camD, poseD = plans["camD"], plans["poseD"]
    BT = B * T

    def kernel(*refs):
        if with_decoder:
            (x_ref, fj_ref, mask_ref, wenc_ref, benc_ref,
             cew, cev, pew, pev, cdw, cdv, pdw, pdv, o_ref) = refs
        else:
            (x_ref, mask_ref, wenc_ref, benc_ref,
             cew, cev, pew, pev, o_ref) = refs

        mask = mask_ref[...]
        d_ce, d_pe = camE["D"], poseE["D"]

        # Fused K=2048 projection for BOTH encoder towers (one MXU pass over K).
        # x's live range ends right here.
        proj = (jnp.dot(x_ref[...].astype(jnp.bfloat16), wenc_ref[...],
                        preferred_element_type=jnp.float32) + benc_ref[...])

        f_cam = _tower_apply(proj[:, :d_ce], cew, cev, camE, mask, B, T)
        f_pose = _tower_apply(proj[:, d_ce:d_ce + d_pe], pew, pev, poseE, mask, B, T)

        if with_decoder:
            f_cam = _tower_apply(f_cam, cdw, cdv, camD, mask, B, T)
            # pose decoder plan carries input_norm as its pre-LN
            f_pose = _tower_apply(fj_ref[...] + f_pose, pdw, pdv, poseD, mask, B, T)

        # pack both outputs into one lane-dense [BT, 128] store
        pieces = [f_cam]
        if f_cam.shape[1] < _OUT_HALF:
            pieces.append(jnp.zeros((BT, _OUT_HALF - f_cam.shape[1]), jnp.float32))
        pieces.append(f_pose)
        if f_pose.shape[1] < _OUT_HALF:
            pieces.append(jnp.zeros((BT, _OUT_HALF - f_pose.shape[1]), jnp.float32))
        o_ref[...] = jnp.concatenate(pieces, axis=-1)

    return kernel


# ----------------------------- parameter packing -----------------------------

def _pack_tower(tf, num_heads, B, T, proj=None, pre_ln=None):
    """Pack (optional pre-LN) + (optional projection) + one Transformer tower
    into:
      * w_slab [Rw, W] bf16 : all matmul weights stacked on rows
      * v_slab [Rv, W] f32  : pos_embed (pre-tiled to [B*T, D]) + every bias /
                              LayerNorm vector, one per row
    plus a static `plan` of row offsets used for in-kernel slicing.
    Q, K, V weights are fused into one [D, 3D] matrix; qk scale is folded
    into Wq / bq.  All weight row offsets end up 16-aligned (bf16 sublanes)."""
    blocks = tf["blocks"]
    D = blocks[0]["wq"].shape[0]
    assert D % num_heads == 0
    dh = D // num_heads
    Hm = blocks[0]["w1"].shape[1]
    W = max(3 * D, Hm)

    w_parts, v_parts = [], []

    def add_w(a):
        off = sum(p.shape[0] for p in w_parts)
        w_parts.append(_pad_last(a, W))
        return off

    def add_v(a):
        off = sum(p.shape[0] for p in v_parts)
        v_parts.append(_pad_last(a, W))
        return off

    plan = dict(D=D, dh=dh, Hm=Hm, num_heads=num_heads, blocks=[])

    # pos_embed first (8-aligned multi-row read), pre-tiled over the batch.
    plan["pos_row"] = add_v(jnp.tile(tf["pos_embed"][0], (B, 1)))      # [B*T, D]

    if pre_ln is not None:
        plan["pre_ln"] = (add_v(pre_ln[0]), add_v(pre_ln[1]))
    else:
        plan["pre_ln"] = None

    if proj is not None:
        wp, bp = proj
        plan["proj"] = (add_w(wp), wp.shape[0])
        plan["proj_b"] = add_v(bp)
    else:
        plan["proj"] = None

    scale = dh ** -0.5
    for blk in blocks:
        wqkv = jnp.concatenate([blk["wq"] * scale, blk["wk"], blk["wv"]], axis=1)
        bqkv = jnp.concatenate([blk["bq"] * scale, blk["bk"], blk["bv"]], axis=1)
        plan["blocks"].append(dict(
            g1=add_v(blk["ln1_g"]), b1=add_v(blk["ln1_b"]),
            wqkv=add_w(wqkv), bqkv=add_v(bqkv),
            wo=add_w(blk["wo"]), bo=add_v(blk["bo"]),
            g2=add_v(blk["ln2_g"]), b2=add_v(blk["ln2_b"]),
            w1=add_w(blk["w1"]), b1m=add_v(blk["b1"]),
            w2=add_w(blk["w2"]), b2m=add_v(blk["b2"]),
        ))

    plan["gN"] = add_v(tf["norm_g"])
    plan["bN"] = add_v(tf["norm_b"])

    w_slab = jnp.concatenate(w_parts, axis=0).astype(jnp.bfloat16)
    v_slab = jnp.concatenate(v_parts, axis=0).astype(jnp.float32)
    return w_slab, v_slab, plan


def _pack_dtm(params, *, num_heads, B, T):
    camE_w, camE_v, camE_p = _pack_tower(params["cam_encoder"], num_heads, B, T)
    poseE_w, poseE_v, poseE_p = _pack_tower(params["pose_shape_encoder"],
                                            num_heads, B, T)
    camD_w, camD_v, camD_p = _pack_tower(params["cam_decoder"], num_heads, B, T,
                                         proj=params["cam_dec_proj"])
    poseD_w, poseD_v, poseD_p = _pack_tower(params["pose_shape_decoder"],
                                            num_heads, B, T,
                                            proj=params["pose_shape_dec_proj"],
                                            pre_ln=params["input_norm"])
    # Fused encoder projection: one K=2048 matmul for both towers.
    wenc = jnp.concatenate([params["cam_proj"][0], params["pose_shape_proj"][0]],
                           axis=1).astype(jnp.bfloat16)
    benc = jnp.concatenate([params["cam_proj"][1], params["pose_shape_proj"][1]],
                           axis=1).astype(jnp.float32)
    mask = _make_batch_mask(B, T)

    enc_arrays = (mask, wenc, benc, camE_w, camE_v, poseE_w, poseE_v)
    dec_arrays = (camD_w, camD_v, poseD_w, poseD_v)
    plans = dict(camE=camE_p, poseE=poseE_p, camD=camD_p, poseD=poseD_p)
    return enc_arrays, dec_arrays, plans


# ----------------------------- DTM forward builder -----------------------------

def make_dtm_forward(params, *, num_heads, B, T):
    """Packs parameters once and returns forward(x, f_joint=None)."""
    enc_arrays, dec_arrays, plans = _pack_dtm(params, num_heads=num_heads, B=B, T=T)
    BT = B * T
    d_cam_e, d_pose_e = plans["camE"]["D"], plans["poseE"]["D"]
    d_cam_d, d_pose_d = plans["camD"]["D"], plans["poseD"]["D"]

    call_full = pl.pallas_call(
        _make_dtm_kernel(plans, B, T, with_decoder=True),
        out_shape=jax.ShapeDtypeStruct((BT, 2 * _OUT_HALF), jnp.float32),
        compiler_params=_COMPILER_PARAMS)
    call_enc = pl.pallas_call(
        _make_dtm_kernel(plans, B, T, with_decoder=False),
        out_shape=jax.ShapeDtypeStruct((BT, 2 * _OUT_HALF), jnp.float32),
        compiler_params=_COMPILER_PARAMS)

    @jax.jit
    def _fwd_full(arrays, x, f_joint):
        out = call_full(x.reshape(BT, -1), f_joint.reshape(BT, -1), *arrays)
        return (out[:, :d_cam_d].reshape(B, T, d_cam_d),
                out[:, _OUT_HALF:_OUT_HALF + d_pose_d].reshape(B, T, d_pose_d))

    @jax.jit
    def _fwd_enc(arrays, x):
        out = call_enc(x.reshape(BT, -1), *arrays)
        return (out[:, :d_cam_e].reshape(B, T, d_cam_e),
                out[:, _OUT_HALF:_OUT_HALF + d_pose_e].reshape(B, T, d_pose_e))

    def forward(x, f_joint=None):
        if f_joint is None:
            return _fwd_enc(enc_arrays, x)
        return _fwd_full(enc_arrays + dec_arrays, x, f_joint)

    return forward


# ----------------------------- parameter init (synthetic) -----------------------------

def _init_linear(key, din, dout, std=0.02):
    kw, kb = jax.random.split(key)
    return (jax.random.normal(kw, (din, dout), jnp.float32) * std,
            jax.random.normal(kb, (1, dout), jnp.float32) * std)


def _init_block(key, dim, hidden, std=0.02):
    ks = jax.random.split(key, 6)
    wq, bq = _init_linear(ks[0], dim, dim, std)
    wk, bk = _init_linear(ks[1], dim, dim, std)
    wv, bv = _init_linear(ks[2], dim, dim, std)
    wo, bo = _init_linear(ks[3], dim, dim, std)
    w1, b1 = _init_linear(ks[4], dim, hidden, std)
    w2, b2 = _init_linear(ks[5], hidden, dim, std)
    ones = jnp.ones((1, dim), jnp.float32)
    zeros = jnp.zeros((1, dim), jnp.float32)
    return dict(ln1_g=ones, ln1_b=zeros, wq=wq, bq=bq, wk=wk, bk=bk,
                wv=wv, bv=bv, wo=wo, bo=bo, ln2_g=ones, ln2_b=zeros,
                w1=w1, b1=b1, w2=w2, b2=b2)


def _init_transformer(key, depth, dim, mlp_hidden, length, std=0.02):
    ks = jax.random.split(key, depth + 1)
    return dict(
        pos_embed=jax.random.normal(ks[0], (1, length, dim), jnp.float32) * std,
        blocks=[_init_block(ks[i + 1], dim, int(mlp_hidden)) for i in range(depth)],
        norm_g=jnp.ones((1, dim), jnp.float32),
        norm_b=jnp.zeros((1, dim), jnp.float32),
    )


def init_dtm(key, depth=3, embed_dim=64, length=8, in_dim=2048):
    ks = jax.random.split(key, 8)
    return dict(
        cam_proj=_init_linear(ks[0], in_dim, embed_dim // 2),
        cam_encoder=_init_transformer(ks[1], depth - 1, embed_dim // 2,
                                      embed_dim * 2.0, length),
        pose_shape_proj=_init_linear(ks[2], in_dim, embed_dim),
        pose_shape_encoder=_init_transformer(ks[3], depth, embed_dim,
                                             embed_dim * 4.0, length),
        input_norm=(jnp.ones((1, embed_dim), jnp.float32),
                    jnp.zeros((1, embed_dim), jnp.float32)),
        cam_dec_proj=_init_linear(ks[4], embed_dim // 2, embed_dim // 4),
        cam_decoder=_init_transformer(ks[5], 1, embed_dim // 4,
                                      embed_dim, length),
        pose_shape_dec_proj=_init_linear(ks[6], embed_dim, embed_dim // 2),
        pose_shape_decoder=_init_transformer(ks[7], 1, embed_dim // 2,
                                             embed_dim * 4.0, length),
    )


if __name__ == "__main__":
    # Small shapes consistent with the module: x is [B, T, 2048]; embed_dim
    # scaled 512 -> 64, heads 8 -> 4, length 16 -> 8 for a quick run.
    B, T, IN_DIM, EMBED_DIM, HEADS, DEPTH = 2, 8, 2048, 64, 4, 3

    key = jax.random.PRNGKey(0)
    kp, kx, kj = jax.random.split(key, 3)
    params = init_dtm(kp, depth=DEPTH, embed_dim=EMBED_DIM,
                      length=T, in_dim=IN_DIM)
    x = jax.random.normal(kx, (B, T, IN_DIM), jnp.float32)
    f_joint = jax.random.normal(kj, (B, T, EMBED_DIM), jnp.float32)

    fwd = make_dtm_forward(params, num_heads=HEADS, B=B, T=T)

    # encoder + decoder path (DTM.forward(x, f_joint))
    f_cam, f_pose_shape = fwd(x, f_joint)
    jax.block_until_ready((f_cam, f_pose_shape))
    assert f_cam.shape == (B, T, EMBED_DIM // 4)
    assert f_pose_shape.shape == (B, T, EMBED_DIM // 2)
    assert bool(jnp.all(jnp.isfinite(f_cam)))
    assert bool(jnp.all(jnp.isfinite(f_pose_shape)))

    # encoder-only path (DTM.forward(x))
    e_cam, e_pose = fwd(x)
    jax.block_until_ready((e_cam, e_pose))
    assert e_cam.shape == (B, T, EMBED_DIM // 2)
    assert e_pose.shape == (B, T, EMBED_DIM)
    assert bool(jnp.all(jnp.isfinite(e_cam)))
    assert bool(jnp.all(jnp.isfinite(e_pose)))

    print("KERNEL_OK")
</pallas_src>

<mosaic_0001>
module attributes {stable_mosaic.version = 11 : i64} {
  func.func @kernel(%arg0: memref<16x2048xf32, #tpu.memory_space<vmem>>, %arg1: memref<16x64xf32, #tpu.memory_space<vmem>>, %arg2: memref<16x16xf32, #tpu.memory_space<vmem>>, %arg3: memref<2048x96xbf16, #tpu.memory_space<vmem>>, %arg4: memref<1x96xf32, #tpu.memory_space<vmem>>, %arg5: memref<448x128xbf16, #tpu.memory_space<vmem>>, %arg6: memref<34x128xf32, #tpu.memory_space<vmem>>, %arg7: memref<1344x256xbf16, #tpu.memory_space<vmem>>, %arg8: memref<42x256xf32, #tpu.memory_space<vmem>>, %arg9: memref<144x64xbf16, #tpu.memory_space<vmem>>, %arg10: memref<27x64xf32, #tpu.memory_space<vmem>>, %arg11: memref<416x256xbf16, #tpu.memory_space<vmem>>, %arg12: memref<29x256xf32, #tpu.memory_space<vmem>>, %arg13: memref<16x128xf32, #tpu.memory_space<vmem>>) attributes {dimension_semantics = [], scalar_prefetch = 0 : i64, scratch_operands = 0 : i64, tpu.core_type = #tpu.core_type<tc>} {
    %c0 = arith.constant 0 : index
    %c0_0 = arith.constant 0 : index
    %0 = vector.load %arg2[%c0, %c0_0] : memref<16x16xf32, #tpu.memory_space<vmem>>, vector<16x16xf32>
    %c0_1 = arith.constant 0 : index
    %c0_2 = arith.constant 0 : index
    %1 = vector.load %arg0[%c0_1, %c0_2] : memref<16x2048xf32, #tpu.memory_space<vmem>>, vector<16x2048xf32>
    %2 = arith.truncf %1 : vector<16x2048xf32> to vector<16x2048xbf16>
    %c0_3 = arith.constant 0 : index
    %c0_4 = arith.constant 0 : index
    %3 = vector.load %arg3[%c0_3, %c0_4] : memref<2048x96xbf16, #tpu.memory_space<vmem>>, vector<2048x96xbf16>
    %cst = arith.constant dense<0.000000e+00> : vector<16x96xf32>
    %4 = tpu.matmul %2, %3, %cst {dimension_numbers = #tpu.dot_dimension_numbers<[1], [0], [0], [1], [0, 0, 1, 1], [], []>} : vector<16x2048xbf16>, vector<2048x96xbf16>, vector<16x96xf32> -> vector<16x96xf32>
    %c0_5 = arith.constant 0 : index
    %c0_6 = arith.constant 0 : index
    %5 = vector.load %arg4[%c0_5, %c0_6] : memref<1x96xf32, #tpu.memory_space<vmem>>, vector<1x96xf32>
    %6 = vector.broadcast %5 : vector<1x96xf32> to vector<16x96xf32>
    %7 = arith.addf %4, %6 : vector<16x96xf32>
    %8 = vector.extract_strided_slice %7 {offsets = [0, 0], sizes = [16, 32], strides = [1, 1]} : vector<16x96xf32> to vector<16x32xf32>
    %c0_7 = arith.constant 0 : index
    %c0_8 = arith.constant 0 : index
    %9 = vector.load %arg6[%c0_7, %c0_8] : memref<34x128xf32, #tpu.memory_space<vmem>>, vector<16x32xf32>
    %10 = arith.addf %8, %9 : vector<16x32xf32>
    %c16 = arith.constant 16 : index
    %c0_9 = arith.constant 0 : index
    %11 = vector.load %arg6[%c16, %c0_9] : memref<34x128xf32, #tpu.memory_space<vmem>>, vector<1x32xf32>
    %c17 = arith.constant 17 : index
    %c0_10 = arith.constant 0 : index
    %12 = vector.load %arg6[%c17, %c0_10] : memref<34x128xf32, #tpu.memory_space<vmem>>, vector<1x32xf32>
    %cst_11 = arith.constant dense<0.000000e+00> : vector<16xf32>
    %13 = vector.multi_reduction <add>, %10, %cst_11 [1] : vector<16x32xf32> to vector<16xf32>
    %14 = vector.shape_cast %13 : vector<16xf32> to vector<16x1xf32>
    %cst_12 = arith.constant 3.200000e+01 : f32
    %15 = vector.broadcast %cst_12 : f32 to vector<16x1xf32>
    %16 = arith.divf %14, %15 : vector<16x1xf32>
    %17 = vector.broadcast %16 : vector<16x1xf32> to vector<16x32xf32>
    %18 = arith.subf %10, %17 : vector<16x32xf32>
    %19 = arith.mulf %18, %18 : vector<16x32xf32>
    %cst_13 = arith.constant dense<0.000000e+00> : vector<16xf32>
    %20 = vector.multi_reduction <add>, %19, %cst_13 [1] : vector<16x32xf32> to vector<16xf32>
    %21 = vector.shape_cast %20 : vector<16xf32> to vector<16x1xf32>
    %cst_14 = arith.constant 3.200000e+01 : f32
    %22 = vector.broadcast %cst_14 : f32 to vector<16x1xf32>
    %23 = arith.divf %21, %22 : vector<16x1xf32>
    %24 = vector.broadcast %16 : vector<16x1xf32> to vector<16x32xf32>
    %25 = arith.subf %10, %24 : vector<16x32xf32>
    %cst_15 = arith.constant 9.99999974E-6 : f32
    %26 = vector.broadcast %cst_15 : f32 to vector<16x1xf32>
    %27 = arith.addf %23, %26 : vector<16x1xf32>
    %28 = math.rsqrt %27 : vector<16x1xf32>
    %29 = vector.broadcast %28 : vector<16x1xf32> to vector<16x32xf32>
    %30 = arith.mulf %25, %29 : vector<16x32xf32>
    %31 = vector.broadcast %11 : vector<1x32xf32> to vector<16x32xf32>
    %32 = arith.mulf %30, %31 : vector<16x32xf32>
    %33 = vector.broadcast %12 : vector<1x32xf32> to vector<16x32xf32>
    %34 = arith.addf %32, %33 : vector<16x32xf32>
    %c0_16 = arith.constant 0 : index
    %c0_17 = arith.constant 0 : index
    %35 = vector.load %arg5[%c0_16, %c0_17] : memref<448x128xbf16, #tpu.memory_space<vmem>>, vector<32x96xbf16>
    %36 = arith.truncf %34 : vector<16x32xf32> to vector<16x32xbf16>
    %cst_18 = arith.constant dense<0.000000e+00> : vector<16x96xf32>
    %37 = tpu.matmul %36, %35, %cst_18 {dimension_numbers = #tpu.dot_dimension_numbers<[1], [0], [0], [1], [0, 0, 1, 1], [], []>} : vector<16x32xbf16>, vector<32x96xbf16>, vector<16x96xf32> -> vector<16x96xf32>
    %c18 = arith.constant 18 : index
    %c0_19 = arith.constant 0 : index
    %38 = vector.load %arg6[%c18, %c0_19] : memref<34x128xf32, #tpu.memory_space<vmem>>, vector<1x96xf32>
    %39 = vector.broadcast %38 : vector<1x96xf32> to vector<16x96xf32>
    %40 = arith.addf %37, %39 : vector<16x96xf32>
    %41 = vector.extract_strided_slice %40 {offsets = [0, 0], sizes = [16, 8], strides = [1, 1]} : vector<16x96xf32> to vector<16x8xf32>
    %42 = arith.truncf %41 : vector<16x8xf32> to vector<16x8xbf16>
    %43 = vector.extract_strided_slice %40 {offsets = [0, 32], sizes = [16, 8], strides = [1, 1]} : vector<16x96xf32> to vector<16x8xf32>
    %44 = arith.truncf %43 : vector<16x8xf32> to vector<16x8xbf16>
    %45 = vector.extract_strided_slice %40 {offsets = [0, 64], sizes = [16, 8], strides = [1, 1]} : vector<16x96xf32> to vector<16x8xf32>
    %46 = arith.truncf %45 : vector<16x8xf32> to vector<16x8xbf16>
    %cst_20 = arith.constant dense<0.000000e+00> : vector<16x16xf32>
    %47 = tpu.matmul %42, %44, %cst_20 {dimension_numbers = #tpu.dot_dimension_numbers<[1], [1], [0], [0], [0, 0, 1, 0], [], []>} : vector<16x8xbf16>, vector<16x8xbf16>, vector<16x16xf32> -> vector<16x16xf32>
    %48 = arith.addf %47, %0 : vector<16x16xf32>
    %cst_21 = arith.constant dense<0xFF800000> : vector<16xf32>
    %49 = vector.multi_reduction <maximumf>, %48, %cst_21 [1] : vector<16x16xf32> to vector<16xf32>
    %50 = vector.shape_cast %49 : vector<16xf32> to vector<16x1xf32>
    %51 = vector.broadcast %50 : vector<16x1xf32> to vector<16x16xf32>
    %52 = arith.subf %48, %51 : vector<16x16xf32>
    %53 = math.exp %52 : vector<16x16xf32>
    %cst_22 = arith.constant dense<0.000000e+00> : vector<16xf32>
    %54 = vector.multi_reduction <add>, %53, %cst_22 [1] : vector<16x16xf32> to vector<16xf32>
    %55 = vector.shape_cast %54 : vector<16xf32> to vector<16x1xf32>
    %56 = tpu.reciprocal %55 {approx = true} : vector<16x1xf32> -> vector<16x1xf32>
    %57 = vector.broadcast %56 : vector<16x1xf32> to vector<16x16xf32>
    %58 = arith.mulf %53, %57 : vector<16x16xf32>
    %59 = arith.truncf %58 : vector<16x16xf32> to vector<16x16xbf16>
    %cst_23 = arith.constant dense<0.000000e+00> : vector<16x8xf32>
    %60 = tpu.matmul %59, %46, %cst_23 {dimension_numbers = #tpu.dot_dimension_numbers<[1], [0], [0], [1], [0, 0, 1, 1], [], []>} : vector<16x16xbf16>, vector<16x8xbf16>, vector<16x8xf32> -> vector<16x8xf32>
    %61 = vector.extract_strided_slice %40 {offsets = [0, 8], sizes = [16, 8], strides = [1, 1]} : vector<16x96xf32> to vector<16x8xf32>
    %62 = arith.truncf %61 : vector<16x8xf32> to vector<16x8xbf16>
    %63 = vector.extract_strided_slice %40 {offsets = [0, 40], sizes = [16, 8], strides = [1, 1]} : vector<16x96xf32> to vector<16x8xf32>
    %64 = arith.truncf %63 : vector<16x8xf32> to vector<16x8xbf16>
    %65 = vector.extract_strided_slice %40 {offsets = [0, 72], sizes = [16, 8], strides = [1, 1]} : vector<16x96xf32> to vector<16x8xf32>
    %66 = arith.truncf %65 : vector<16x8xf32> to vector<16x8xbf16>
    %cst_24 = arith.constant dense<0.000000e+00> : vector<16x16xf32>
    %67 = tpu.matmul %62, %64, %cst_24 {dimension_numbers = #tpu.dot_dimension_numbers<[1], [1], [0], [0], [0, 0, 1, 0], [], []>} : vector<16x8xbf16>, vector<16x8xbf16>, vector<16x16xf32> -> vector<16x16xf32>
    %68 = arith.addf %67, %0 : vector<16x16xf32>
    %cst_25 = arith.constant dense<0xFF800000> : vector<16xf32>
    %69 = vector.multi_reduction <maximumf>, %68, %cst_25 [1] : vector<16x16xf32> to vector<16xf32>
    %70 = vector.shape_cast %69 : vector<16xf32> to vector<16x1xf32>
    %71 = vector.broadcast %70 : vector<16x1xf32> to vector<16x16xf32>
    %72 = arith.subf %68, %71 : vector<16x16xf32>
    %73 = math.exp %72 : vector<16x16xf32>
    %cst_26 = arith.constant dense<0.000000e+00> : vector<16xf32>
    %74 = vector.multi_reduction <add>, %73, %cst_26 [1] : vector<16x16xf32> to vector<16xf32>
    %75 = vector.shape_cast %74 : vector<16xf32> to vector<16x1xf32>
    %76 = tpu.reciprocal %75 {approx = true} : vector<16x1xf32> -> vector<16x1xf32>
    %77 = vector.broadcast %76 : vector<16x1xf32> to vector<16x16xf32>
    %78 = arith.mulf %73, %77 : vector<16x16xf32>
    %79 = arith.truncf %78 : vector<16x16xf32> to vector<16x16xbf16>
    %cst_27 = arith.constant dense<0.000000e+00> : vector<16x8xf32>
    %80 = tpu.matmul %79, %66, %cst_27 {dimension_numbers = #tpu.dot_dimension_numbers<[1], [0], [0], [1], [0, 0, 1, 1], [], []>} : vector<16x16xbf16>, vector<16x8xbf16>, vector<16x8xf32> -> vector<16x8xf32>
    %81 = vector.extract_strided_slice %40 {offsets = [0, 16], sizes = [16, 8], strides = [1, 1]} : vector<16x96xf32> to vector<16x8xf32>
    %82 = arith.truncf %81 : vector<16x8xf32> to vector<16x8xbf16>
    %83 = vector.extract_strided_slice %40 {offsets = [0, 48], sizes = [16, 8], strides = [1, 1]} : vector<16x96xf32> to vector<16x8xf32>
    %84 = arith.truncf %83 : vector<16x8xf32> to vector<16x8xbf16>
    %85 = vector.extract_strided_slice %40 {offsets = [0, 80], sizes = [16, 8], strides = [1, 1]} : vector<16x96xf32> to vector<16x8xf32>
    %86 = arith.truncf %85 : vector<16x8xf32> to vector<16x8xbf16>
    %cst_28 = arith.constant dense<0.000000e+00> : vector<16x16xf32>
    %87 = tpu.matmul %82, %84, %cst_28 {dimension_numbers = #tpu.dot_dimension_numbers<[1], [1], [0], [0], [0, 0, 1, 0], [], []>} : vector<16x8xbf16>, vector<16x8xbf16>, vector<16x16xf32> -> vector<16x16xf32>
    %88 = arith.addf %87, %0 : vector<16x16xf32>
    %cst_29 = arith.constant dense<0xFF800000> : vector<16xf32>
    %89 = vector.multi_reduction <maximumf>, %88, %cst_29 [1] : vector<16x16xf32> to vector<16xf32>
    %90 = vector.shape_cast %89 : vector<16xf32> to vector<16x1xf32>
    %91 = vector.broadcast %90 : vector<16x1xf32> to vector<16x16xf32>
    %92 = arith.subf %88, %91 : vector<16x16xf32>
    %93 = math.exp %92 : vector<16x16xf32>
    %cst_30 = arith.constant dense<0.000000e+00> : vector<16xf32>
    %94 = vector.multi_reduction <add>, %93, %cst_30 [1] : vector<16x16xf32> to vector<16xf32>
    %95 = vector.shape_cast %94 : vector<16xf32> to vector<16x1xf32>
    %96 = tpu.reciprocal %95 {approx = true} : vector<16x1xf32> -> vector<16x1xf32>
    %97 = vector.broadcast %96 : vector<16x1xf32> to vector<16x16xf32>
    %98 = arith.mulf %93, %97 : vector<16x16xf32>
    %99 = arith.truncf %98 : vector<16x16xf32> to vector<16x16xbf16>
    %cst_31 = arith.constant dense<0.000000e+00> : vector<16x8xf32>
    %100 = tpu.matmul %99, %86, %cst_31 {dimension_numbers = #tpu.dot_dimension_numbers<[1], [0], [0], [1], [0, 0, 1, 1], [], []>} : vector<16x16xbf16>, vector<16x8xbf16>, vector<16x8xf32> -> vector<16x8xf32>
    %101 = vector.extract_strided_slice %40 {offsets = [0, 24], sizes = [16, 8], strides = [1, 1]} : vector<16x96xf32> to vector<16x8xf32>
    %102 = arith.truncf %101 : vector<16x8xf32> to vector<16x8xbf16>
    %103 = vector.extract_strided_slice %40 {offsets = [0, 56], sizes = [16, 8], strides = [1, 1]} : vector<16x96xf32> to vector<16x8xf32>
    %104 = arith.truncf %103 : vector<16x8xf32> to vector<16x8xbf16>
    %105 = vector.extract_strided_slice %40 {offsets = [0, 88], sizes = [16, 8], strides = [1, 1]} : vector<16x96xf32> to vector<16x8xf32>
    %106 = arith.truncf %105 : vector<16x8xf32> to vector<16x8xbf16>
    %cst_32 = arith.constant dense<0.000000e+00> : vector<16x16xf32>
    %107 = tpu.matmul %102, %104, %cst_32 {dimension_numbers = #tpu.dot_dimension_numbers<[1], [1], [0], [0], [0, 0, 1, 0], [], []>} : vector<16x8xbf16>, vector<16x8xbf16>, vector<16x16xf32> -> vector<16x16xf32>
    %108 = arith.addf %107, %0 : vector<16x16xf32>
    %cst_33 = arith.constant dense<0xFF800000> : vector<16xf32>
    %109 = vector.multi_reduction <maximumf>, %108, %cst_33 [1] : vector<16x16xf32> to vector<16xf32>
    %110 = vector.shape_cast %109 : vector<16xf32> to vector<16x1xf32>
    %111 = vector.broadcast %110 : vector<16x1xf32> to vector<16x16xf32>
    %112 = arith.subf %108, %111 : vector<16x16xf32>
    %113 = math.exp %112 : vector<16x16xf32>
    %cst_34 = arith.constant dense<0.000000e+00> : vector<16xf32>
    %114 = vector.multi_reduction <add>, %113, %cst_34 [1] : vector<16x16xf32> to vector<16xf32>
    %115 = vector.shape_cast %114 : vector<16xf32> to vector<16x1xf32>
    %116 = tpu.reciprocal %115 {approx = true} : vector<16x1xf32> -> vector<16x1xf32>
    %117 = vector.broadcast %116 : vector<16x1xf32> to vector<16x16xf32>
    %118 = arith.mulf %113, %117 : vector<16x16xf32>
    %119 = arith.truncf %118 : vector<16x16xf32> to vector<16x16xbf16>
    %cst_35 = arith.constant dense<0.000000e+00> : vector<16x8xf32>
    %120 = tpu.matmul %119, %106, %cst_35 {dimension_numbers = #tpu.dot_dimension_numbers<[1], [0], [0], [1], [0, 0, 1, 1], [], []>} : vector<16x16xbf16>, vector<16x8xbf16>, vector<16x8xf32> -> vector<16x8xf32>
    %121 = tpu.concatenate %60, %80, %100, %120 in 1 : vector<16x8xf32>, vector<16x8xf32>, vector<16x8xf32>, vector<16x8xf32> -> vector<16x32xf32>
    %c32 = arith.constant 32 : index
    %c0_36 = arith.constant 0 : index
    %122 = vector.load %arg5[%c32, %c0_36] : memref<448x128xbf16, #tpu.memory_space<vmem>>, vector<32x32xbf16>
    %123 = arith.truncf %121 : vector<16x32xf32> to vector<16x32xbf16>
    %cst_37 = arith.constant dense<0.000000e+00> : vector<16x32xf32>
    %124 = tpu.matmul %123, %122, %cst_37 {dimension_numbers = #tpu.dot_dimension_numbers<[1], [0], [0], [1], [0, 0, 1, 1], [], []>} : vector<16x32xbf16>, vector<32x32xbf16>, vector<16x32xf32> -> vector<16x32xf32>
    %125 = arith.addf %10, %124 : vector<16x32xf32>
    %c19 = arith.constant 19 : index
    %c0_38 = arith.constant 0 : index
    %126 = vector.load %arg6[%c19, %c0_38] : memref<34x128xf32, #tpu.memory_space<vmem>>, vector<1x32xf32>
    %127 = vector.broadcast %126 : vector<1x32xf32> to vector<16x32xf32>
    %128 = arith.addf %125, %127 : vector<16x32xf32>
    %c20 = arith.constant 20 : index
    %c0_39 = arith.constant 0 : index
    %129 = vector.load %arg6[%c20, %c0_39] : memref<34x128xf32, #tpu.memory_space<vmem>>, vector<1x32xf32>
    %c21 = arith.constant 21 : index
    %c0_40 = arith.constant 0 : index
    %130 = vector.load %arg6[%c21, %c0_40] : memref<34x128xf32, #tpu.memory_space<vmem>>, vector<1x32xf32>
    %cst_41 = arith.constant dense<0.000000e+00> : vector<16xf32>
    %131 = vector.multi_reduction <add>, %128, %cst_41 [1] : vector<16x32xf32> to vector<16xf32>
    %132 = vector.shape_cast %131 : vector<16xf32> to vector<16x1xf32>
    %cst_42 = arith.constant 3.200000e+01 : f32
    %133 = vector.broadcast %cst_42 : f32 to vector<16x1xf32>
    %134 = arith.divf %132, %133 : vector<16x1xf32>
    %135 = vector.broadcast %134 : vector<16x1xf32> to vector<16x32xf32>
    %136 = arith.subf %128, %135 : vector<16x32xf32>
    %137 = arith.mulf %136, %136 : vector<16x32xf32>
    %cst_43 = arith.constant dense<0.000000e+00> : vector<16xf32>
    %138 = vector.multi_reduction <add>, %137, %cst_43 [1] : vector<16x32xf32> to vector<16xf32>
    %139 = vector.shape_cast %138 : vector<16xf32> to vector<16x1xf32>
    %cst_44 = arith.constant 3.200000e+01 : f32
    %140 = vector.broadcast %cst_44 : f32 to vector<16x1xf32>
    %141 = arith.divf %139, %140 : vector<16x1xf32>
    %142 = vector.broadcast %134 : vector<16x1xf32> to vector<16x32xf32>
    %143 = arith.subf %128, %142 : vector<16x32xf32>
    %cst_45 = arith.constant 9.99999974E-6 : f32
    %144 = vector.broadcast %cst_45 : f32 to vector<16x1xf32>
    %145 = arith.addf %141, %144 : vector<16x1xf32>
    %146 = math.rsqrt %145 : vector<16x1xf32>
    %147 = vector.broadcast %146 : vector<16x1xf32> to vector<16x32xf32>
    %148 = arith.mulf %143, %147 : vector<16x32xf32>
    %149 = vector.broadcast %129 : vector<1x32xf32> to vector<16x32xf32>
    %150 = arith.mulf %148, %149 : vector<16x32xf32>
    %151 = vector.broadcast %130 : vector<1x32xf32> to vector<16x32xf32>
    %152 = arith.addf %150, %151 : vector<16x32xf32>
    %c64 = arith.constant 64 : index
    %c0_46 = arith.constant 0 : index
    %153 = vector.load %arg5[%c64, %c0_46] : memref<448x128xbf16, #tpu.memory_space<vmem>>, vector<32x128xbf16>
    %154 = arith.truncf %152 : vector<16x32xf32> to vector<16x32xbf16>
    %cst_47 = arith.constant dense<0.000000e+00> : vector<16x128xf32>
    %155 = tpu.matmul %154, %153, %cst_47 {dimension_numbers = #tpu.dot_dimension_numbers<[1], [0], [0], [1], [0, 0, 1, 1], [], []>} : vector<16x32xbf16>, vector<32x128xbf16>, vector<16x128xf32> -> vector<16x128xf32>
    %c22 = arith.constant 22 : index
    %c0_48 = arith.constant 0 : index
    %156 = vector.load %arg6[%c22, %c0_48] : memref<34x128xf32, #tpu.memory_space<vmem>>, vector<1x128xf32>
    %157 = vector.broadcast %156 : vector<1x128xf32> to vector<16x128xf32>
    %158 = arith.addf %155, %157 : vector<16x128xf32>
    %159 = arith.mulf %158, %158 : vector<16x128xf32>
    %160 = arith.mulf %158, %159 : vector<16x128xf32>
    %cst_49 = arith.constant 4.471500e-02 : f32
    %161 = vector.broadcast %cst_49 : f32 to vector<16x128xf32>
    %162 = arith.mulf %161, %160 : vector<16x128xf32>
    %163 = arith.addf %158, %162 : vector<16x128xf32>
    %cst_50 = arith.constant 0.797884583 : f32
    %164 = vector.broadcast %cst_50 : f32 to vector<16x128xf32>
    %165 = arith.mulf %164, %163 : vector<16x128xf32>
    %166 = math.tanh %165 : vector<16x128xf32>
    %cst_51 = arith.constant 1.000000e+00 : f32
    %167 = vector.broadcast %cst_51 : f32 to vector<16x128xf32>
    %168 = arith.addf %167, %166 : vector<16x128xf32>
    %cst_52 = arith.constant 5.000000e-01 : f32
    %169 = vector.broadcast %cst_52 : f32 to vector<16x128xf32>
    %170 = arith.mulf %169, %168 : vector<16x128xf32>
    %171 = arith.mulf %158, %170 : vector<16x128xf32>
    %c96 = arith.constant 96 : index
    %c0_53 = arith.constant 0 : index
    %172 = vector.load %arg5[%c96, %c0_53] : memref<448x128xbf16, #tpu.memory_space<vmem>>, vector<128x32xbf16>
    %173 = arith.truncf %171 : vector<16x128xf32> to vector<16x128xbf16>
    %cst_54 = arith.constant dense<0.000000e+00> : vector<16x32xf32>
    %174 = tpu.matmul %173, %172, %cst_54 {dimension_numbers = #tpu.dot_dimension_numbers<[1], [0], [0], [1], [0, 0, 1, 1], [], []>} : vector<16x128xbf16>, vector<128x32xbf16>, vector<16x32xf32> -> vector<16x32xf32>
    %175 = arith.addf %128, %174 : vector<16x32xf32>
    %c23 = arith.constant 23 : index
    %c0_55 = arith.constant 0 : index
    %176 = vector.load %arg6[%c23, %c0_55] : memref<34x128xf32, #tpu.memory_space<vmem>>, vector<1x32xf32>
    %177 = vector.broadcast %176 : vector<1x32xf32> to vector<16x32xf32>
    %178 = arith.addf %175, %177 : vector<16x32xf32>
    %c24 = arith.constant 24 : index
    %c0_56 = arith.constant 0 : index
    %179 = vector.load %arg6[%c24, %c0_56] : memref<34x128xf32, #tpu.memory_space<vmem>>, vector<1x32xf32>
    %c25 = arith.constant 25 : index
    %c0_57 = arith.constant 0 : index
    %180 = vector.load %arg6[%c25, %c0_57] : memref<34x128xf32, #tpu.memory_space<vmem>>, vector<1x32xf32>
    %cst_58 = arith.constant dense<0.000000e+00> : vector<16xf32>
    %181 = vector.multi_reduction <add>, %178, %cst_58 [1] : vector<16x32xf32> to vector<16xf32>
    %182 = vector.shape_cast %181 : vector<16xf32> to vector<16x1xf32>
    %cst_59 = arith.constant 3.200000e+01 : f32
    %183 = vector.broadcast %cst_59 : f32 to vector<16x1xf32>
    %184 = arith.divf %182, %183 : vector<16x1xf32>
    %185 = vector.broadcast %184 : vector<16x1xf32> to vector<16x32xf32>
    %186 = arith.subf %178, %185 : vector<16x32xf32>
    %187 = arith.mulf %186, %186 : vector<16x32xf32>
    %cst_60 = arith.constant dense<0.000000e+00> : vector<16xf32>
    %188 = vector.multi_reduction <add>, %187, %cst_60 [1] : vector<16x32xf32> to vector<16xf32>
    %189 = vector.shape_cast %188 : vector<16xf32> to vector<16x1xf32>
    %cst_61 = arith.constant 3.200000e+01 : f32
    %190 = vector.broadcast %cst_61 : f32 to vector<16x1xf32>
    %191 = arith.divf %189, %190 : vector<16x1xf32>
    %192 = vector.broadcast %184 : vector<16x1xf32> to vector<16x32xf32>
    %193 = arith.subf %178, %192 : vector<16x32xf32>
    %cst_62 = arith.constant 9.99999974E-6 : f32
    %194 = vector.broadcast %cst_62 : f32 to vector<16x1xf32>
    %195 = arith.addf %191, %194 : vector<16x1xf32>
    %196 = math.rsqrt %195 : vector<16x1xf32>
    %197 = vector.broadcast %196 : vector<16x1xf32> to vector<16x32xf32>
    %198 = arith.mulf %193, %197 : vector<16x32xf32>
    %199 = vector.broadcast %179 : vector<1x32xf32> to vector<16x32xf32>
    %200 = arith.mulf %198, %199 : vector<16x32xf32>
    %201 = vector.broadcast %180 : vector<1x32xf32> to vector<16x32xf32>
    %202 = arith.addf %200, %201 : vector<16x32xf32>
    %c224 = arith.constant 224 : index
    %c0_63 = arith.constant 0 : index
    %203 = vector.load %arg5[%c224, %c0_63] : memref<448x128xbf16, #tpu.memory_space<vmem>>, vector<32x96xbf16>
    %204 = arith.truncf %202 : vector<16x32xf32> to vector<16x32xbf16>
    %cst_64 = arith.constant dense<0.000000e+00> : vector<16x96xf32>
    %205 = tpu.matmul %204, %203, %cst_64 {dimension_numbers = #tpu.dot_dimension_numbers<[1], [0], [0], [1], [0, 0, 1, 1], [], []>} : vector<16x32xbf16>, vector<32x96xbf16>, vector<16x96xf32> -> vector<16x96xf32>
    %c26 = arith.constant 26 : index
    %c0_65 = arith.constant 0 : index
    %206 = vector.load %arg6[%c26, %c0_65] : memref<34x128xf32, #tpu.memory_space<vmem>>, vector<1x96xf32>
    %207 = vector.broadcast %206 : vector<1x96xf32> to vector<16x96xf32>
    %208 = arith.addf %205, %207 : vector<16x96xf32>
    %209 = vector.extract_strided_slice %208 {offsets = [0, 0], sizes = [16, 8], strides = [1, 1]} : vector<16x96xf32> to vector<16x8xf32>
    %210 = arith.truncf %209 : vector<16x8xf32> to vector<16x8xbf16>
    %211 = vector.extract_strided_slice %208 {offsets = [0, 32], sizes = [16, 8], strides = [1, 1]} : vector<16x96xf32> to vector<16x8xf32>
    %212 = arith.truncf %211 : vector<16x8xf32> to vector<16x8xbf16>
    %213 = vector.extract_strided_slice %208 {offsets = [0, 64], sizes = [16, 8], strides = [1, 1]} : vector<16x96xf32> to vector<16x8xf32>
    %214 = arith.truncf %213 : vector<16x8xf32> to vector<16x8xbf16>
    %cst_66 = arith.constant dense<0.000000e+00> : vector<16x16xf32>
    %215 = tpu.matmul %210, %212, %cst_66 {dimension_numbers = #tpu.dot_dimension_numbers<[1], [1], [0], [0], [0, 0, 1, 0], [], []>} : vector<16x8xbf16>, vector<16x8xbf16>, vector<16x16xf32> -> vector<16x16xf32>
    %216 = arith.addf %215, %0 : vector<16x16xf32>
    %cst_67 = arith.constant dense<0xFF800000> : vector<16xf32>
    %217 = vector.multi_reduction <maximumf>, %216, %cst_67 [1] : vector<16x16xf32> to vector<16xf32>
    %218 = vector.shape_cast %217 : vector<16xf32> to vector<16x1xf32>
    %219 = vector.broadcast %218 : vector<16x1xf32> to vector<16x16xf32>
    %220 = arith.subf %216, %219 : vector<16x16xf32>
    %221 = math.exp %220 : vector<16x16xf32>
    %cst_68 = arith.constant dense<0.000000e+00> : vector<16xf32>
    %222 = vector.multi_reduction <add>, %221, %cst_68 [1] : vector<16x16xf32> to vector<16xf32>
    %223 = vector.shape_cast %222 : vector<16xf32> to vector<16x1xf32>
    %224 = tpu.reciprocal %223 {approx = true} : vector<16x1xf32> -> vector<16x1xf32>
    %225 = vector.broadcast %224 : vector<16x1xf32> to vector<16x16xf32>
    %226 = arith.mulf %221, %225 : vector<16x16xf32>
    %227 = arith.truncf %226 : vector<16x16xf32> to vector<16x16xbf16>
    %cst_69 = arith.constant dense<0.000000e+00> : vector<16x8xf32>
    %228 = tpu.matmul %227, %214, %cst_69 {dimension_numbers = #tpu.dot_dimension_numbers<[1], [0], [0], [1], [0, 0, 1, 1], [], []>} : vector<16x16xbf16>, vector<16x8xbf16>, vector<16x8xf32> -> vector<16x8xf32>
    %229 = vector.extract_strided_slice %208 {offsets = [0, 8], sizes = [16, 8], strides = [1, 1]} : vector<16x96xf32> to vector<16x8xf32>
    %230 = arith.truncf %229 : vector<16x8xf32> to vector<16x8xbf16>
    %231 = vector.extract_strided_slice %208 {offsets = [0, 40], sizes = [16, 8], strides = [1, 1]} : vector<16x96xf32> to vector<16x8xf32>
    %232 = arith.truncf %231 : vector<16x8xf32> to vector<16x8xbf16>
    %233 = vector.extract_strided_slice %208 {offsets = [0, 72], sizes = [16, 8], strides = [1, 1]} : vector<16x96xf32> to vector<16x8xf32>
    %234 = arith.truncf %233 : vector<16x8xf32> to vector<16x8xbf16>
    %cst_70 = arith.constant dense<0.000000e+00> : vector<16x16xf32>
    %235 = tpu.matmul %230, %232, %cst_70 {dimension_numbers = #tpu.dot_dimension_numbers<[1], [1], [0], [0], [0, 0, 1, 0], [], []>} : vector<16x8xbf16>, vector<16x8xbf16>, vector<16x16xf32> -> vector<16x16xf32>
    %236 = arith.addf %235, %0 : vector<16x16xf32>
    %cst_71 = arith.constant dense<0xFF800000> : vector<16xf32>
    %237 = vector.multi_reduction <maximumf>, %236, %cst_71 [1] : vector<16x16xf32> to vector<16xf32>
    %238 = vector.shape_cast %237 : vector<16xf32> to vector<16x1xf32>
    %239 = vector.broadcast %238 : vector<16x1xf32> to vector<16x16xf32>
    %240 = arith.subf %236, %239 : vector<16x16xf32>
    %241 = math.exp %240 : vector<16x16xf32>
    %cst_72 = arith.constant dense<0.000000e+00> : vector<16xf32>
    %242 = vector.multi_reduction <add>, %241, %cst_72 [1] : vector<16x16xf32> to vector<16xf32>
    %243 = vector.shape_cast %242 : vector<16xf32> to vector<16x1xf32>
    %244 = tpu.reciprocal %243 {approx = true} : vector<16x1xf32> -> vector<16x1xf32>
    %245 = vector.broadcast %244 : vector<16x1xf32> to vector<16x16xf32>
    %246 = arith.mulf %241, %245 : vector<16x16xf32>
    %247 = arith.truncf %246 : vector<16x16xf32> to vector<16x16xbf16>
    %cst_73 = arith.constant dense<0.000000e+00> : vector<16x8xf32>
    %248 = tpu.matmul %247, %234, %cst_73 {dimension_numbers = #tpu.dot_dimension_numbers<[1], [0], [0], [1], [0, 0, 1, 1], [], []>} : vector<16x16xbf16>, vector<16x8xbf16>, vector<16x8xf32> -> vector<16x8xf32>
    %249 = vector.extract_strided_slice %208 {offsets = [0, 16], sizes = [16, 8], strides = [1, 1]} : vector<16x96xf32> to vector<16x8xf32>
    %250 = arith.truncf %249 : vector<16x8xf32> to vector<16x8xbf16>
    %251 = vector.extract_strided_slice %208 {offsets = [0, 48], sizes = [16, 8], strides = [1, 1]} : vector<16x96xf32> to vector<16x8xf32>
    %252 = arith.truncf %251 : vector<16x8xf32> to vector<16x8xbf16>
    %253 = vector.extract_strided_slice %208 {offsets = [0, 80], sizes = [16, 8], strides = [1, 1]} : vector<16x96xf32> to vector<16x8xf32>
    %254 = arith.truncf %253 : vector<16x8xf32> to vector<16x8xbf16>
    %cst_74 = arith.constant dense<0.000000e+00> : vector<16x16xf32>
    %255 = tpu.matmul %250, %252, %cst_74 {dimension_numbers = #tpu.dot_dimension_numbers<[1], [1], [0], [0], [0, 0, 1, 0], [], []>} : vector<16x8xbf16>, vector<16x8xbf16>, vector<16x16xf32> -> vector<16x16xf32>
    %256 = arith.addf %255, %0 : vector<16x16xf32>
    %cst_75 = arith.constant dense<0xFF800000> : vector<16xf32>
    %257 = vector.multi_reduction <maximumf>, %256, %cst_75 [1] : vector<16x16xf32> to vector<16xf32>
    %258 = vector.shape_cast %257 : vector<16xf32> to vector<16x1xf32>
    %259 = vector.broadcast %258 : vector<16x1xf32> to vector<16x16xf32>
    %260 = arith.subf %256, %259 : vector<16x16xf32>
    %261 = math.exp %260 : vector<16x16xf32>
    %cst_76 = arith.constant dense<0.000000e+00> : vector<16xf32>
    %262 = vector.multi_reduction <add>, %261, %cst_76 [1] : vector<16x16xf32> to vector<16xf32>
    %263 = vector.shape_cast %262 : vector<16xf32> to vector<16x1xf32>
    %264 = tpu.reciprocal %263 {approx = true} : vector<16x1xf32> -> vector<16x1xf32>
    %265 = vector.broadcast %264 : vector<16x1xf32> to vector<16x16xf32>
    %266 = arith.mulf %261, %265 : vector<16x16xf32>
    %267 = arith.truncf %266 : vector<16x16xf32> to vector<16x16xbf16>
    %cst_77 = arith.constant dense<0.000000e+00> : vector<16x8xf32>
    %268 = tpu.matmul %267, %254, %cst_77 {dimension_numbers = #tpu.dot_dimension_numbers<[1], [0], [0], [1], [0, 0, 1, 1], [], []>} : vector<16x16xbf16>, vector<16x8xbf16>, vector<16x8xf32> -> vector<16x8xf32>
    %269 = vector.extract_strided_slice %208 {offsets = [0, 24], sizes = [16, 8], strides = [1, 1]} : vector<16x96xf32> to vector<16x8xf32>
    %270 = arith.truncf %269 : vector<16x8xf32> to vector<16x8xbf16>
    %271 = vector.extract_strided_slice %208 {offsets = [0, 56], sizes = [16, 8], strides = [1, 1]} : vector<16x96xf32> to vector<16x8xf32>
    %272 = arith.truncf %271 : vector<16x8xf32> to vector<16x8xbf16>
    %273 = vector.extract_strided_slice %208 {offsets = [0, 88], sizes = [16, 8], strides = [1, 1]} : vector<16x96xf32> to vector<16x8xf32>
    %274 = arith.truncf %273 : vector<16x8xf32> to vector<16x8xbf16>
    %cst_78 = arith.constant dense<0.000000e+00> : vector<16x16xf32>
    %275 = tpu.matmul %270, %272, %cst_78 {dimension_numbers = #tpu.dot_dimension_numbers<[1], [1], [0], [0], [0, 0, 1, 0], [], []>} : vector<16x8xbf16>, vector<16x8xbf16>, vector<16x16xf32> -> vector<16x16xf32>
    %276 = arith.addf %275, %0 : vector<16x16xf32>
    %cst_79 = arith.constant dense<0xFF800000> : vector<16xf32>
    %277 = vector.multi_reduction <maximumf>, %276, %cst_79 [1] : vector<16x16xf32> to vector<16xf32>
    %278 = vector.shape_cast %277 : vector<16xf32> to vector<16x1xf32>
    %279 = vector.broadcast %278 : vector<16x1xf32> to vector<16x16xf32>
    %280 = arith.subf %276, %279 : vector<16x16xf32>
    %281 = math.exp %280 : vector<16x16xf32>
    %cst_80 = arith.constant dense<0.000000e+00> : vector<16xf32>
    %282 = vector.multi_reduction <add>, %281, %cst_80 [1] : vector<16x16xf32> to vector<16xf32>
    %283 = vector.shape_cast %282 : vector<16xf32> to vector<16x1xf32>
    %284 = tpu.reciprocal %283 {approx = true} : vector<16x1xf32> -> vector<16x1xf32>
    %285 = vector.broadcast %284 : vector<16x1xf32> to vector<16x16xf32>
    %286 = arith.mulf %281, %285 : vector<16x16xf32>
    %287 = arith.truncf %286 : vector<16x16xf32> to vector<16x16xbf16>
    %cst_81 = arith.constant dense<0.000000e+00> : vector<16x8xf32>
    %288 = tpu.matmul %287, %274, %cst_81 {dimension_numbers = #tpu.dot_dimension_numbers<[1], [0], [0], [1], [0, 0, 1, 1], [], []>} : vector<16x16xbf16>, vector<16x8xbf16>, vector<16x8xf32> -> vector<16x8xf32>
    %289 = tpu.concatenate %228, %248, %268, %288 in 1 : vector<16x8xf32>, vector<16x8xf32>, vector<16x8xf32>, vector<16x8xf32> -> vector<16x32xf32>
    %c256 = arith.constant 256 : index
    %c0_82 = arith.constant 0 : index
    %290 = vector.load %arg5[%c256, %c0_82] : memref<448x128xbf16, #tpu.memory_space<vmem>>, vector<32x32xbf16>
    %291 = arith.truncf %289 : vector<16x32xf32> to vector<16x32xbf16>
    %cst_83 = arith.constant dense<0.000000e+00> : vector<16x32xf32>
    %292 = tpu.matmul %291, %290, %cst_83 {dimension_numbers = #tpu.dot_dimension_numbers<[1], [0], [0], [1], [0, 0, 1, 1], [], []>} : vector<16x32xbf16>, vector<32x32xbf16>, vector<16x32xf32> -> vector<16x32xf32>
    %293 = arith.addf %178, %292 : vector<16x32xf32>
    %c27 = arith.constant 27 : index
    %c0_84 = arith.constant 0 : index
    %294 = vector.load %arg6[%c27, %c0_84] : memref<34x128xf32, #tpu.memory_space<vmem>>, vector<1x32xf32>
    %295 = vector.broadcast %294 : vector<1x32xf32> to vector<16x32xf32>
    %296 = arith.addf %293, %295 : vector<16x32xf32>
    %c28 = arith.constant 28 : index
    %c0_85 = arith.constant 0 : index
    %297 = vector.load %arg6[%c28, %c0_85] : memref<34x128xf32, #tpu.memory_space<vmem>>, vector<1x32xf32>
    %c29 = arith.constant 29 : index
    %c0_86 = arith.constant 0 : index
    %298 = vector.load %arg6[%c29, %c0_86] : memref<34x128xf32, #tpu.memory_space<vmem>>, vector<1x32xf32>
    %cst_87 = arith.constant dense<0.000000e+00> : vector<16xf32>
    %299 = vector.multi_reduction <add>, %296, %cst_87 [1] : vector<16x32xf32> to vector<16xf32>
    %300 = vector.shape_cast %299 : vector<16xf32> to vector<16x1xf32>
    %cst_88 = arith.constant 3.200000e+01 : f32
    %301 = vector.broadcast %cst_88 : f32 to vector<16x1xf32>
    %302 = arith.divf %300, %301 : vector<16x1xf32>
    %303 = vector.broadcast %302 : vector<16x1xf32> to vector<16x32xf32>
    %304 = arith.subf %296, %303 : vector<16x32xf32>
    %305 = arith.mulf %304, %304 : vector<16x32xf32>
    %cst_89 = arith.constant dense<0.000000e+00> : vector<16xf32>
    %306 = vector.multi_reduction <add>, %305, %cst_89 [1] : vector<16x32xf32> to vector<16xf32>
    %307 = vector.shape_cast %306 : vector<16xf32> to vector<16x1xf32>
    %cst_90 = arith.constant 3.200000e+01 : f32
    %308 = vector.broadcast %cst_90 : f32 to vector<16x1xf32>
    %309 = arith.divf %307, %308 : vector<16x1xf32>
    %310 = vector.broadcast %302 : vector<16x1xf32> to vector<16x32xf32>
    %311 = arith.subf %296, %310 : vector<16x32xf32>
    %cst_91 = arith.constant 9.99999974E-6 : f32
    %312 = vector.broadcast %cst_91 : f32 to vector<16x1xf32>
    %313 = arith.addf %309, %312 : vector<16x1xf32>
    %314 = math.rsqrt %313 : vector<16x1xf32>
    %315 = vector.broadcast %314 : vector<16x1xf32> to vector<16x32xf32>
    %316 = arith.mulf %311, %315 : vector<16x32xf32>
    %317 = vector.broadcast %297 : vector<1x32xf32> to vector<16x32xf32>
    %318 = arith.mulf %316, %317 : vector<16x32xf32>
    %319 = vector.broadcast %298 : vector<1x32xf32> to vector<16x32xf32>
    %320 = arith.addf %318, %319 : vector<16x32xf32>
    %c288 = arith.constant 288 : index
    %c0_92 = arith.constant 0 : index
    %321 = vector.load %arg5[%c288, %c0_92] : memref<448x128xbf16, #tpu.memory_space<vmem>>, vector<32x128xbf16>
    %322 = arith.truncf %320 : vector<16x32xf32> to vector<16x32xbf16>
    %cst_93 = arith.constant dense<0.000000e+00> : vector<16x128xf32>
    %323 = tpu.matmul %322, %321, %cst_93 {dimension_numbers = #tpu.dot_dimension_numbers<[1], [0], [0], [1], [0, 0, 1, 1], [], []>} : vector<16x32xbf16>, vector<32x128xbf16>, vector<16x128xf32> -> vector<16x128xf32>
    %c30 = arith.constant 30 : index
    %c0_94 = arith.constant 0 : index
    %324 = vector.load %arg6[%c30, %c0_94] : memref<34x128xf32, #tpu.memory_space<vmem>>, vector<1x128xf32>
    %325 = vector.broadcast %324 : vector<1x128xf32> to vector<16x128xf32>
    %326 = arith.addf %323, %325 : vector<16x128xf32>
    %327 = arith.mulf %326, %326 : vector<16x128xf32>
    %328 = arith.mulf %326, %327 : vector<16x128xf32>
    %cst_95 = arith.constant 4.471500e-02 : f32
    %329 = vector.broadcast %cst_95 : f32 to vector<16x128xf32>
    %330 = arith.mulf %329, %328 : vector<16x128xf32>
    %331 = arith.addf %326, %330 : vector<16x128xf32>
    %cst_96 = arith.constant 0.797884583 : f32
    %332 = vector.broadcast %cst_96 : f32 to vector<16x128xf32>
    %333 = arith.mulf %332, %331 : vector<16x128xf32>
    %334 = math.tanh %333 : vector<16x128xf32>
    %cst_97 = arith.constant 1.000000e+00 : f32
    %335 = vector.broadcast %cst_97 : f32 to vector<16x128xf32>
    %336 = arith.addf %335, %334 : vector<16x128xf32>
    %cst_98 = arith.constant 5.000000e-01 : f32
    %337 = vector.broadcast %cst_98 : f32 to vector<16x128xf32>
    %338 = arith.mulf %337, %336 : vector<16x128xf32>
    %339 = arith.mulf %326, %338 : vector<16x128xf32>
    %c320 = arith.constant 320 : index
    %c0_99 = arith.constant 0 : index
    %340 = vector.load %arg5[%c320, %c0_99] : memref<448x128xbf16, #tpu.memory_space<vmem>>, vector<128x32xbf16>
    %341 = arith.truncf %339 : vector<16x128xf32> to vector<16x128xbf16>
    %cst_100 = arith.constant dense<0.000000e+00> : vector<16x32xf32>
    %342 = tpu.matmul %341, %340, %cst_100 {dimension_numbers = #tpu.dot_dimension_numbers<[1], [0], [0], [1], [0, 0, 1, 1], [], []>} : vector<16x128xbf16>, vector<128x32xbf16>, vector<16x32xf32> -> vector<16x32xf32>
    %343 = arith.addf %296, %342 : vector<16x32xf32>
    %c31 = arith.constant 31 : index
    %c0_101 = arith.constant 0 : index
    %344 = vector.load %arg6[%c31, %c0_101] : memref<34x128xf32, #tpu.memory_space<vmem>>, vector<1x32xf32>
    %345 = vector.broadcast %344 : vector<1x32xf32> to vector<16x32xf32>
    %346 = arith.addf %343, %345 : vector<16x32xf32>
    %c32_102 = arith.constant 32 : index
    %c0_103 = arith.constant 0 : index
    %347 = vector.load %arg6[%c32_102, %c0_103] : memref<34x128xf32, #tpu.memory_space<vmem>>, vector<1x32xf32>
    %c33 = arith.constant 33 : index
    %c0_104 = arith.constant 0 : index
    %348 = vector.load %arg6[%c33, %c0_104] : memref<34x128xf32, #tpu.memory_space<vmem>>, vector<1x32xf32>
    %cst_105 = arith.constant dense<0.000000e+00> : vector<16xf32>
    %349 = vector.multi_reduction <add>, %346, %cst_105 [1] : vector<16x32xf32> to vector<16xf32>
    %350 = vector.shape_cast %349 : vector<16xf32> to vector<16x1xf32>
    %cst_106 = arith.constant 3.200000e+01 : f32
    %351 = vector.broadcast %cst_106 : f32 to vector<16x1xf32>
    %352 = arith.divf %350, %351 : vector<16x1xf32>
    %353 = vector.broadcast %352 : vector<16x1xf32> to vector<16x32xf32>
    %354 = arith.subf %346, %353 : vector<16x32xf32>
    %355 = arith.mulf %354, %354 : vector<16x32xf32>
    %cst_107 = arith.constant dense<0.000000e+00> : vector<16xf32>
    %356 = vector.multi_reduction <add>, %355, %cst_107 [1] : vector<16x32xf32> to vector<16xf32>
    %357 = vector.shape_cast %356 : vector<16xf32> to vector<16x1xf32>
    %cst_108 = arith.constant 3.200000e+01 : f32
    %358 = vector.broadcast %cst_108 : f32 to vector<16x1xf32>
    %359 = arith.divf %357, %358 : vector<16x1xf32>
    %360 = vector.broadcast %352 : vector<16x1xf32> to vector<16x32xf32>
    %361 = arith.subf %346, %360 : vector<16x32xf32>
    %cst_109 = arith.constant 9.99999974E-6 : f32
    %362 = vector.broadcast %cst_109 : f32 to vector<16x1xf32>
    %363 = arith.addf %359, %362 : vector<16x1xf32>
    %364 = math.rsqrt %363 : vector<16x1xf32>
    %365 = vector.broadcast %364 : vector<16x1xf32> to vector<16x32xf32>
    %366 = arith.mulf %361, %365 : vector<16x32xf32>
    %367 = vector.broadcast %347 : vector<1x32xf32> to vector<16x32xf32>
    %368 = arith.mulf %366, %367 : vector<16x32xf32>
    %369 = vector.broadcast %348 : vector<1x32xf32> to vector<16x32xf32>
    %370 = arith.addf %368, %369 : vector<16x32xf32>
    %371 = vector.extract_strided_slice %7 {offsets = [0, 32], sizes = [16, 64], strides = [1, 1]} : vector<16x96xf32> to vector<16x64xf32>
    %c0_110 = arith.constant 0 : index
    %c0_111 = arith.constant 0 : index
    %372 = vector.load %arg8[%c0_110, %c0_111] : memref<42x256xf32, #tpu.memory_space<vmem>>, vector<16x64xf32>
    %373 = arith.addf %371, %372 : vector<16x64xf32>
    %c16_112 = arith.constant 16 : index
    %c0_113 = arith.constant 0 : index
    %374 = vector.load %arg8[%c16_112, %c0_113] : memref<42x256xf32, #tpu.memory_space<vmem>>, vector<1x64xf32>
    %c17_114 = arith.constant 17 : index
    %c0_115 = arith.constant 0 : index
    %375 = vector.load %arg8[%c17_114, %c0_115] : memref<42x256xf32, #tpu.memory_space<vmem>>, vector<1x64xf32>
    %cst_116 = arith.constant dense<0.000000e+00> : vector<16xf32>
    %376 = vector.multi_reduction <add>, %373, %cst_116 [1] : vector<16x64xf32> to vector<16xf32>
    %377 = vector.shape_cast %376 : vector<16xf32> to vector<16x1xf32>
    %cst_117 = arith.constant 6.400000e+01 : f32
    %378 = vector.broadcast %cst_117 : f32 to vector<16x1xf32>
    %379 = arith.divf %377, %378 : vector<16x1xf32>
    %380 = vector.broadcast %379 : vector<16x1xf32> to vector<16x64xf32>
    %381 = arith.subf %373, %380 : vector<16x64xf32>
    %382 = arith.mulf %381, %381 : vector<16x64xf32>
    %cst_118 = arith.constant dense<0.000000e+00> : vector<16xf32>
    %383 = vector.multi_reduction <add>, %382, %cst_118 [1] : vector<16x64xf32> to vector<16xf32>
    %384 = vector.shape_cast %383 : vector<16xf32> to vector<16x1xf32>
    %cst_119 = arith.constant 6.400000e+01 : f32
    %385 = vector.broadcast %cst_119 : f32 to vector<16x1xf32>
    %386 = arith.divf %384, %385 : vector<16x1xf32>
    %387 = vector.broadcast %379 : vector<16x1xf32> to vector<16x64xf32>
    %388 = arith.subf %373, %387 : vector<16x64xf32>
    %cst_120 = arith.constant 9.99999974E-6 : f32
    %389 = vector.broadcast %cst_120 : f32 to vector<16x1xf32>
    %390 = arith.addf %386, %389 : vector<16x1xf32>
    %391 = math.rsqrt %390 : vector<16x1xf32>
    %392 = vector.broadcast %391 : vector<16x1xf32> to vector<16x64xf32>
    %393 = arith.mulf %388, %392 : vector<16x64xf32>
    %394 = vector.broadcast %374 : vector<1x64xf32> to vector<16x64xf32>
    %395 = arith.mulf %393, %394 : vector<16x64xf32>
    %396 = vector.broadcast %375 : vector<1x64xf32> to vector<16x64xf32>
    %397 = arith.addf %395, %396 : vector<16x64xf32>
    %c0_121 = arith.constant 0 : index
    %c0_122 = arith.constant 0 : index
    %398 = vector.load %arg7[%c0_121, %c0_122] : memref<1344x256xbf16, #tpu.memory_space<vmem>>, vector<64x192xbf16>
    %399 = arith.truncf %397 : vector<16x64xf32> to vector<16x64xbf16>
    %cst_123 = arith.constant dense<0.000000e+00> : vector<16x192xf32>
    %400 = tpu.matmul %399, %398, %cst_123 {dimension_numbers = #tpu.dot_dimension_numbers<[1], [0], [0], [1], [0, 0, 1, 1], [], []>} : vector<16x64xbf16>, vector<64x192xbf16>, vector<16x192xf32> -> vector<16x192xf32>
    %c18_124 = arith.constant 18 : index
    %c0_125 = arith.constant 0 : index
    %401 = vector.load %arg8[%c18_124, %c0_125] : memref<42x256xf32, #tpu.memory_space<vmem>>, vector<1x192xf32>
    %402 = vector.broadcast %401 : vector<1x192xf32> to vector<16x192xf32>
    %403 = arith.addf %400, %402 : vector<16x192xf32>
    %404 = vector.extract_strided_slice %403 {offsets = [0, 0], sizes = [16, 16], strides = [1, 1]} : vector<16x192xf32> to vector<16x16xf32>
    %405 = arith.truncf %404 : vector<16x16xf32> to vector<16x16xbf16>
    %406 = vector.extract_strided_slice %403 {offsets = [0, 64], sizes = [16, 16], strides = [1, 1]} : vector<16x192xf32> to vector<16x16xf32>
    %407 = arith.truncf %406 : vector<16x16xf32> to vector<16x16xbf16>
    %408 = vector.extract_strided_slice %403 {offsets = [0, 128], sizes = [16, 16], strides = [1, 1]} : vector<16x192xf32> to vector<16x16xf32>
    %409 = arith.truncf %408 : vector<16x16xf32> to vector<16x16xbf16>
    %cst_126 = arith.constant dense<0.000000e+00> : vector<16x16xf32>
    %410 = tpu.matmul %405, %407, %cst_126 {dimension_numbers = #tpu.dot_dimension_numbers<[1], [1], [0], [0], [0, 0, 1, 0], [], []>} : vector<16x16xbf16>, vector<16x16xbf16>, vector<16x16xf32> -> vector<16x16xf32>
    %411 = arith.addf %410, %0 : vector<16x16xf32>
    %cst_127 = arith.constant dense<0xFF800000> : vector<16xf32>
    %412 = vector.multi_reduction <maximumf>, %411, %cst_127 [1] : vector<16x16xf32> to vector<16xf32>
    %413 = vector.shape_cast %412 : vector<16xf32> to vector<16x1xf32>
    %414 = vector.broadcast %413 : vector<16x1xf32> to vector<16x16xf32>
    %415 = arith.subf %411, %414 : vector<16x16xf32>
    %416 = math.exp %415 : vector<16x16xf32>
    %cst_128 = arith.constant dense<0.000000e+00> : vector<16xf32>
    %417 = vector.multi_reduction <add>, %416, %cst_128 [1] : vector<16x16xf32> to vector<16xf32>
    %418 = vector.shape_cast %417 : vector<16xf32> to vector<16x1xf32>
    %419 = tpu.reciprocal %418 {approx = true} : vector<16x1xf32> -> vector<16x1xf32>
    %420 = vector.broadcast %419 : vector<16x1xf32> to vector<16x16xf32>
    %421 = arith.mulf %416, %420 : vector<16x16xf32>
    %422 = arith.truncf %421 : vector<16x16xf32> to vector<16x16xbf16>
    %cst_129 = arith.constant dense<0.000000e+00> : vector<16x16xf32>
    %423 = tpu.matmul %422, %409, %cst_129 {dimension_numbers = #tpu.dot_dimension_numbers<[1], [0], [0], [1], [0, 0, 1, 1], [], []>} : vector<16x16xbf16>, vector<16x16xbf16>, vector<16x16xf32> -> vector<16x16xf32>
    %424 = vector.extract_strided_slice %403 {offsets = [0, 16], sizes = [16, 16], strides = [1, 1]} : vector<16x192xf32> to vector<16x16xf32>
    %425 = arith.truncf %424 : vector<16x16xf32> to vector<16x16xbf16>
    %426 = vector.extract_strided_slice %403 {offsets = [0, 80], sizes = [16, 16], strides = [1, 1]} : vector<16x192xf32> to vector<16x16xf32>
    %427 = arith.truncf %426 : vector<16x16xf32> to vector<16x16xbf16>
    %428 = vector.extract_strided_slice %403 {offsets = [0, 144], sizes = [16, 16], strides = [1, 1]} : vector<16x192xf32> to vector<16x16xf32>
    %429 = arith.truncf %428 : vector<16x16xf32> to vector<16x16xbf16>
    %cst_130 = arith.constant dense<0.000000e+00> : vector<16x16xf32>
    %430 = tpu.matmul %425, %427, %cst_130 {dimension_numbers = #tpu.dot_dimension_numbers<[1], [1], [0], [0], [0, 0, 1, 0], [], []>} : vector<16x16xbf16>, vector<16x16xbf16>, vector<16x16xf32> -> vector<16x16xf32>
    %431 = arith.addf %430, %0 : vector<16x16xf32>
    %cst_131 = arith.constant dense<0xFF800000> : vector<16xf32>
    %432 = vector.multi_reduction <maximumf>, %431, %cst_131 [1] : vector<16x16xf32> to vector<16xf32>
    %433 = vector.shape_cast %432 : vector<16xf32> to vector<16x1xf32>
    %434 = vector.broadcast %433 : vector<16x1xf32> to vector<16x16xf32>
    %435 = arith.subf %431, %434 : vector<16x16xf32>
    %436 = math.exp %435 : vector<16x16xf32>
    %cst_132 = arith.constant dense<0.000000e+00> : vector<16xf32>
    %437 = vector.multi_reduction <add>, %436, %cst_132 [1] : vector<16x16xf32> to vector<16xf32>
    %438 = vector.shape_cast %437 : vector<16xf32> to vector<16x1xf32>
    %439 = tpu.reciprocal %438 {approx = true} : vector<16x1xf32> -> vector<16x1xf32>
    %440 = vector.broadcast %439 : vector<16x1xf32> to vector<16x16xf32>
    %441 = arith.mulf %436, %440 : vector<16x16xf32>
    %442 = arith.truncf %441 : vector<16x16xf32> to vector<16x16xbf16>
    %cst_133 = arith.constant dense<0.000000e+00> : vector<16x16xf32>
    %443 = tpu.matmul %442, %429, %cst_133 {dimension_numbers = #tpu.dot_dimension_numbers<[1], [0], [0], [1], [0, 0, 1, 1], [], []>} : vector<16x16xbf16>, vector<16x16xbf16>, vector<16x16xf32> -> vector<16x16xf32>
    %444 = vector.extract_strided_slice %403 {offsets = [0, 32], sizes = [16, 16], strides = [1, 1]} : vector<16x192xf32> to vector<16x16xf32>
    %445 = arith.truncf %444 : vector<16x16xf32> to vector<16x16xbf16>
    %446 = vector.extract_strided_slice %403 {offsets = [0, 96], sizes = [16, 16], strides = [1, 1]} : vector<16x192xf32> to vector<16x16xf32>
    %447 = arith.truncf %446 : vector<16x16xf32> to vector<16x16xbf16>
    %448 = vector.extract_strided_slice %403 {offsets = [0, 160], sizes = [16, 16], strides = [1, 1]} : vector<16x192xf32> to vector<16x16xf32>
    %449 = arith.truncf %448 : vector<16x16xf32> to vector<16x16xbf16>
    %cst_134 = arith.constant dense<0.000000e+00> : vector<16x16xf32>
    %450 = tpu.matmul %445, %447, %cst_134 {dimension_numbers = #tpu.dot_dimension_numbers<[1], [1], [0], [0], [0, 0, 1, 0], [], []>} : vector<16x16xbf16>, vector<16x16xbf16>, vector<16x16xf32> -> vector<16x16xf32>
    %451 = arith.addf %450, %0 : vector<16x16xf32>
    %cst_135 = arith.constant dense<0xFF800000> : vector<16xf32>
    %452 = vector.multi_reduction <maximumf>, %451, %cst_135 [1] : vector<16x16xf32> to vector<16xf32>
    %453 = vector.shape_cast %452 : vector<16xf32> to vector<16x1xf32>
    %454 = vector.broadcast %453 : vector<16x1xf32> to vector<16x16xf32>
    %455 = arith.subf %451, %454 : vector<16x16xf32>
    %456 = math.exp %455 : vector<16x16xf32>
    %cst_136 = arith.constant dense<0.000000e+00> : vector<16xf32>
    %457 = vector.multi_reduction <add>, %456, %cst_136 [1] : vector<16x16xf32> to vector<16xf32>
    %458 = vector.shape_cast %457 : vector<16xf32> to vector<16x1xf32>
    %459 = tpu.reciprocal %458 {approx = true} : vector<16x1xf32> -> vector<16x1xf32>
    %460 = vector.broadcast %459 : vector<16x1xf32> to vector<16x16xf32>
    %461 = arith.mulf %456, %460 : vector<16x16xf32>
    %462 = arith.truncf %461 : vector<16x16xf32> to vector<16x16xbf16>
    %cst_137 = arith.constant dense<0.000000e+00> : vector<16x16xf32>
    %463 = tpu.matmul %462, %449, %cst_137 {dimension_numbers = #tpu.dot_dimension_numbers<[1], [0], [0], [1], [0, 0, 1, 1], [], []>} : vector<16x16xbf16>, vector<16x16xbf16>, vector<16x16xf32> -> vector<16x16xf32>
    %464 = vector.extract_strided_slice %403 {offsets = [0, 48], sizes = [16, 16], strides = [1, 1]} : vector<16x192xf32> to vector<16x16xf32>
    %465 = arith.truncf %464 : vector<16x16xf32> to vector<16x16xbf16>
    %466 = vector.extract_strided_slice %403 {offsets = [0, 112], sizes = [16, 16], strides = [1, 1]} : vector<16x192xf32> to vector<16x16xf32>
    %467 = arith.truncf %466 : vector<16x16xf32> to vector<16x16xbf16>
    %468 = vector.extract_strided_slice %403 {offsets = [0, 176], sizes = [16, 16], strides = [1, 1]} : vector<16x192xf32> to vector<16x16xf32>
    %469 = arith.truncf %468 : vector<16x16xf32> to vector<16x16xbf16>
    %cst_138 = arith.constant dense<0.000000e+00> : vector<16x16xf32>
    %470 = tpu.matmul %465, %467, %cst_138 {dimension_numbers = #tpu.dot_dimension_numbers<[1], [1], [0], [0], [0, 0, 1, 0], [], []>} : vector<16x16xbf16>, vector<16x16xbf16>, vector<16x16xf32> -> vector<16x16xf32>
    %471 = arith.addf %470, %0 : vector<16x16xf32>
    %cst_139 = arith.constant dense<0xFF800000> : vector<16xf32>
    %472 = vector.multi_reduction <maximumf>, %471, %cst_139 [1] : vector<16x16xf32> to vector<16xf32>
    %473 = vector.shape_cast %472 : vector<16xf32> to vector<16x1xf32>
    %474 = vector.broadcast %473 : vector<16x1xf32> to vector<16x16xf32>
    %475 = arith.subf %471, %474 : vector<16x16xf32>
    %476 = math.exp %475 : vector<16x16xf32>
    %cst_140 = arith.constant dense<0.000000e+00> : vector<16xf32>
    %477 = vector.multi_reduction <add>, %476, %cst_140 [1] : vector<16x16xf32> to vector<16xf32>
    %478 = vector.shape_cast %477 : vector<16xf32> to vector<16x1xf32>
    %479 = tpu.reciprocal %478 {approx = true} : vector<16x1xf32> -> vector<16x1xf32>
    %480 = vector.broadcast %479 : vector<16x1xf32> to vector<16x16xf32>
    %481 = arith.mulf %476, %480 : vector<16x16xf32>
    %482 = arith.truncf %481 : vector<16x16xf32> to vector<16x16xbf16>
    %cst_141 = arith.constant dense<0.000000e+00> : vector<16x16xf32>
    %483 = tpu.matmul %482, %469, %cst_141 {dimension_numbers = #tpu.dot_dimension_numbers<[1], [0], [0], [1], [0, 0, 1, 1], [], []>} : vector<16x16xbf16>, vector<16x16xbf16>, vector<16x16xf32> -> vector<16x16xf32>
    %484 = tpu.concatenate %423, %443, %463, %483 in 1 : vector<16x16xf32>, vector<16x16xf32>, vector<16x16xf32>, vector<16x16xf32> -> vector<16x64xf32>
    %c64_142 = arith.constant 64 : index
    %c0_143 = arith.constant 0 : index
    %485 = vector.load %arg7[%c64_142, %c0_143] : memref<1344x256xbf16, #tpu.memory_space<vmem>>, vector<64x64xbf16>
    %486 = arith.truncf %484 : vector<16x64xf32> to vector<16x64xbf16>
    %cst_144 = arith.constant dense<0.000000e+00> : vector<16x64xf32>
    %487 = tpu.matmul %486, %485, %cst_144 {dimension_numbers = #tpu.dot_dimension_numbers<[1], [0], [0], [1], [0, 0, 1, 1], [], []>} : vector<16x64xbf16>, vector<64x64xbf16>, vector<16x64xf32> -> vector<16x64xf32>
    %488 = arith.addf %373, %487 : vector<16x64xf32>
    %c19_145 = arith.constant 19 : index
    %c0_146 = arith.constant 0 : index
    %489 = vector.load %arg8[%c19_145, %c0_146] : memref<42x256xf32, #tpu.memory_space<vmem>>, vector<1x64xf32>
    %490 = vector.broadcast %489 : vector<1x64xf32> to vector<16x64xf32>
    %491 = arith.addf %488, %490 : vector<16x64xf32>
    %c20_147 = arith.constant 20 : index
    %c0_148 = arith.constant 0 : index
    %492 = vector.load %arg8[%c20_147, %c0_148] : memref<42x256xf32, #tpu.memory_space<vmem>>, vector<1x64xf32>
    %c21_149 = arith.constant 21 : index
    %c0_150 = arith.constant 0 : index
    %493 = vector.load %arg8[%c21_149, %c0_150] : memref<42x256xf32, #tpu.memory_space<vmem>>, vector<1x64xf32>
    %cst_151 = arith.constant dense<0.000000e+00> : vector<16xf32>
    %494 = vector.multi_reduction <add>, %491, %cst_151 [1] : vector<16x64xf32> to vector<16xf32>
    %495 = vector.shape_cast %494 : vector<16xf32> to vector<16x1xf32>
    %cst_152 = arith.constant 6.400000e+01 : f32
    %496 = vector.broadcast %cst_152 : f32 to vector<16x1xf32>
    %497 = arith.divf %495, %496 : vector<16x1xf32>
    %498 = vector.broadcast %497 : vector<16x1xf32> to vector<16x64xf32>
    %499 = arith.subf %491, %498 : vector<16x64xf32>
    %500 = arith.mulf %499, %499 : vector<16x64xf32>
    %cst_153 = arith.constant dense<0.000000e+00> : vector<16xf32>
    %501 = vector.multi_reduction <add>, %500, %cst_153 [1] : vector<16x64xf32> to vector<16xf32>
    %502 = vector.shape_cast %501 : vector<16xf32> to vector<16x1xf32>
    %cst_154 = arith.constant 6.400000e+01 : f32
    %503 = vector.broadcast %cst_154 : f32 to vector<16x1xf32>
    %504 = arith.divf %502, %503 : vector<16x1xf32>
    %505 = vector.broadcast %497 : vector<16x1xf32> to vector<16x64xf32>
    %506 = arith.subf %491, %505 : vector<16x64xf32>
    %cst_155 = arith.constant 9.99999974E-6 : f32
    %507 = vector.broadcast %cst_155 : f32 to vector<16x1xf32>
    %508 = arith.addf %504, %507 : vector<16x1xf32>
    %509 = math.rsqrt %508 : vector<16x1xf32>
    %510 = vector.broadcast %509 : vector<16x1xf32> to vector<16x64xf32>
    %511 = arith.mulf %506, %510 : vector<16x64xf32>
    %512 = vector.broadcast %492 : vector<1x64xf32> to vector<16x64xf32>
    %513 = arith.mulf %511, %512 : vector<16x64xf32>
    %514 = vector.broadcast %493 : vector<1x64xf32> to vector<16x64xf32>
    %515 = arith.addf %513, %514 : vector<16x64xf32>
    %c128 = arith.constant 128 : index
    %c0_156 = arith.constant 0 : index
    %516 = vector.load %arg7[%c128, %c0_156] : memref<1344x256xbf16, #tpu.memory_space<vmem>>, vector<64x256xbf16>
    %517 = arith.truncf %515 : vector<16x64xf32> to vector<16x64xbf16>
    %cst_157 = arith.constant dense<0.000000e+00> : vector<16x256xf32>
    %518 = tpu.matmul %517, %516, %cst_157 {dimension_numbers = #tpu.dot_dimension_numbers<[1], [0], [0], [1], [0, 0, 1, 1], [], []>} : vector<16x64xbf16>, vector<64x256xbf16>, vector<16x256xf32> -> vector<16x256xf32>
    %c22_158 = arith.constant 22 : index
    %c0_159 = arith.constant 0 : index
    %519 = vector.load %arg8[%c22_158, %c0_159] : memref<42x256xf32, #tpu.memory_space<vmem>>, vector<1x256xf32>
    %520 = vector.broadcast %519 : vector<1x256xf32> to vector<16x256xf32>
    %521 = arith.addf %518, %520 : vector<16x256xf32>
    %522 = arith.mulf %521, %521 : vector<16x256xf32>
    %523 = arith.mulf %521, %522 : vector<16x256xf32>
    %cst_160 = arith.constant 4.471500e-02 : f32
    %524 = vector.broadcast %cst_160 : f32 to vector<16x256xf32>
    %525 = arith.mulf %524, %523 : vector<16x256xf32>
    %526 = arith.addf %521, %525 : vector<16x256xf32>
    %cst_161 = arith.constant 0.797884583 : f32
    %527 = vector.broadcast %cst_161 : f32 to vector<16x256xf32>
    %528 = arith.mulf %527, %526 : vector<16x256xf32>
    %529 = math.tanh %528 : vector<16x256xf32>
    %cst_162 = arith.constant 1.000000e+00 : f32
    %530 = vector.broadcast %cst_162 : f32 to vector<16x256xf32>
    %531 = arith.addf %530, %529 : vector<16x256xf32>
    %cst_163 = arith.constant 5.000000e-01 : f32
    %532 = vector.broadcast %cst_163 : f32 to vector<16x256xf32>
    %533 = arith.mulf %532, %531 : vector<16x256xf32>
    %534 = arith.mulf %521, %533 : vector<16x256xf32>
    %c192 = arith.constant 192 : index
    %c0_164 = arith.constant 0 : index
    %535 = vector.load %arg7[%c192, %c0_164] : memref<1344x256xbf16, #tpu.memory_space<vmem>>, vector<256x64xbf16>
    %536 = arith.truncf %534 : vector<16x256xf32> to vector<16x256xbf16>
    %cst_165 = arith.constant dense<0.000000e+00> : vector<16x64xf32>
    %537 = tpu.matmul %536, %535, %cst_165 {dimension_numbers = #tpu.dot_dimension_numbers<[1], [0], [0], [1], [0, 0, 1, 1], [], []>} : vector<16x256xbf16>, vector<256x64xbf16>, vector<16x64xf32> -> vector<16x64xf32>
    %538 = arith.addf %491, %537 : vector<16x64xf32>
    %c23_166 = arith.constant 23 : index
    %c0_167 = arith.constant 0 : index
    %539 = vector.load %arg8[%c23_166, %c0_167] : memref<42x256xf32, #tpu.memory_space<vmem>>, vector<1x64xf32>
    %540 = vector.broadcast %539 : vector<1x64xf32> to vector<16x64xf32>
    %541 = arith.addf %538, %540 : vector<16x64xf32>
    %c24_168 = arith.constant 24 : index
    %c0_169 = arith.constant 0 : index
    %542 = vector.load %arg8[%c24_168, %c0_169] : memref<42x256xf32, #tpu.memory_space<vmem>>, vector<1x64xf32>
    %c25_170 = arith.constant 25 : index
    %c0_171 = arith.constant 0 : index
    %543 = vector.load %arg8[%c25_170, %c0_171] : memref<42x256xf32, #tpu.memory_space<vmem>>, vector<1x64xf32>
    %cst_172 = arith.constant dense<0.000000e+00> : vector<16xf32>
    %544 = vector.multi_reduction <add>, %541, %cst_172 [1] : vector<16x64xf32> to vector<16xf32>
    %545 = vector.shape_cast %544 : vector<16xf32> to vector<16x1xf32>
    %cst_173 = arith.constant 6.400000e+01 : f32
    %546 = vector.broadcast %cst_173 : f32 to vector<16x1xf32>
    %547 = arith.divf %545, %546 : vector<16x1xf32>
    %548 = vector.broadcast %547 : vector<16x1xf32> to vector<16x64xf32>
    %549 = arith.subf %541, %548 : vector<16x64xf32>
    %550 = arith.mulf %549, %549 : vector<16x64xf32>
    %cst_174 = arith.constant dense<0.000000e+00> : vector<16xf32>
    %551 = vector.multi_reduction <add>, %550, %cst_174 [1] : vector<16x64xf32> to vector<16xf32>
    %552 = vector.shape_cast %551 : vector<16xf32> to vector<16x1xf32>
    %cst_175 = arith.constant 6.400000e+01 : f32
    %553 = vector.broadcast %cst_175 : f32 to vector<16x1xf32>
    %554 = arith.divf %552, %553 : vector<16x1xf32>
    %555 = vector.broadcast %547 : vector<16x1xf32> to vector<16x64xf32>
    %556 = arith.subf %541, %555 : vector<16x64xf32>
    %cst_176 = arith.constant 9.99999974E-6 : f32
    %557 = vector.broadcast %cst_176 : f32 to vector<16x1xf32>
    %558 = arith.addf %554, %557 : vector<16x1xf32>
    %559 = math.rsqrt %558 : vector<16x1xf32>
    %560 = vector.broadcast %559 : vector<16x1xf32> to vector<16x64xf32>
    %561 = arith.mulf %556, %560 : vector<16x64xf32>
    %562 = vector.broadcast %542 : vector<1x64xf32> to vector<16x64xf32>
    %563 = arith.mulf %561, %562 : vector<16x64xf32>
    %564 = vector.broadcast %543 : vector<1x64xf32> to vector<16x64xf32>
    %565 = arith.addf %563, %564 : vector<16x64xf32>
    %c448 = arith.constant 448 : index
    %c0_177 = arith.constant 0 : index
    %566 = vector.load %arg7[%c448, %c0_177] : memref<1344x256xbf16, #tpu.memory_space<vmem>>, vector<64x192xbf16>
    %567 = arith.truncf %565 : vector<16x64xf32> to vector<16x64xbf16>
    %cst_178 = arith.constant dense<0.000000e+00> : vector<16x192xf32>
    %568 = tpu.matmul %567, %566, %cst_178 {dimension_numbers = #tpu.dot_dimension_numbers<[1], [0], [0], [1], [0, 0, 1, 1], [], []>} : vector<16x64xbf16>, vector<64x192xbf16>, vector<16x192xf32> -> vector<16x192xf32>
    %c26_179 = arith.constant 26 : index
    %c0_180 = arith.constant 0 : index
    %569 = vector.load %arg8[%c26_179, %c0_180] : memref<42x256xf32, #tpu.memory_space<vmem>>, vector<1x192xf32>
    %570 = vector.broadcast %569 : vector<1x192xf32> to vector<16x192xf32>
    %571 = arith.addf %568, %570 : vector<16x192xf32>
    %572 = vector.extract_strided_slice %571 {offsets = [0, 0], sizes = [16, 16], strides = [1, 1]} : vector<16x192xf32> to vector<16x16xf32>
    %573 = arith.truncf %572 : vector<16x16xf32> to vector<16x16xbf16>
    %574 = vector.extract_strided_slice %571 {offsets = [0, 64], sizes = [16, 16], strides = [1, 1]} : vector<16x192xf32> to vector<16x16xf32>
    %575 = arith.truncf %574 : vector<16x16xf32> to vector<16x16xbf16>
    %576 = vector.extract_strided_slice %571 {offsets = [0, 128], sizes = [16, 16], strides = [1, 1]} : vector<16x192xf32> to vector<16x16xf32>
    %577 = arith.truncf %576 : vector<16x16xf32> to vector<16x16xbf16>
    %cst_181 = arith.constant dense<0.000000e+00> : vector<16x16xf32>
    %578 = tpu.matmul %573, %575, %cst_181 {dimension_numbers = #tpu.dot_dimension_numbers<[1], [1], [0], [0], [0, 0, 1, 0], [], []>} : vector<16x16xbf16>, vector<16x16xbf16>, vector<16x16xf32> -> vector<16x16xf32>
    %579 = arith.addf %578, %0 : vector<16x16xf32>
    %cst_182 = arith.constant dense<0xFF800000> : vector<16xf32>
    %580 = vector.multi_reduction <maximumf>, %579, %cst_182 [1] : vector<16x16xf32> to vector<16xf32>
    %581 = vector.shape_cast %580 : vector<16xf32> to vector<16x1xf32>
    %582 = vector.broadcast %581 : vector<16x1xf32> to vector<16x16xf32>
    %583 = arith.subf %579, %582 : vector<16x16xf32>
    %584 = math.exp %583 : vector<16x16xf32>
    %cst_183 = arith.constant dense<0.000000e+00> : vector<16xf32>
    %585 = vector.multi_reduction <add>, %584, %cst_183 [1] : vector<16x16xf32> to vector<16xf32>
    %586 = vector.shape_cast %585 : vector<16xf32> to vector<16x1xf32>
    %587 = tpu.reciprocal %586 {approx = true} : vector<16x1xf32> -> vector<16x1xf32>
    %588 = vector.broadcast %587 : vector<16x1xf32> to vector<16x16xf32>
    %589 = arith.mulf %584, %588 : vector<16x16xf32>
    %590 = arith.truncf %589 : vector<16x16xf32> to vector<16x16xbf16>
    %cst_184 = arith.constant dense<0.000000e+00> : vector<16x16xf32>
    %591 = tpu.matmul %590, %577, %cst_184 {dimension_numbers = #tpu.dot_dimension_numbers<[1], [0], [0], [1], [0, 0, 1, 1], [], []>} : vector<16x16xbf16>, vector<16x16xbf16>, vector<16x16xf32> -> vector<16x16xf32>
    %592 = vector.extract_strided_slice %571 {offsets = [0, 16], sizes = [16, 16], strides = [1, 1]} : vector<16x192xf32> to vector<16x16xf32>
    %593 = arith.truncf %592 : vector<16x16xf32> to vector<16x16xbf16>
    %594 = vector.extract_strided_slice %571 {offsets = [0, 80], sizes = [16, 16], strides = [1, 1]} : vector<16x192xf32> to vector<16x16xf32>
    %595 = arith.truncf %594 : vector<16x16xf32> to vector<16x16xbf16>
    %596 = vector.extract_strided_slice %571 {offsets = [0, 144], sizes = [16, 16], strides = [1, 1]} : vector<16x192xf32> to vector<16x16xf32>
    %597 = arith.truncf %596 : vector<16x16xf32> to vector<16x16xbf16>
    %cst_185 = arith.constant dense<0.000000e+00> : vector<16x16xf32>
    %598 = tpu.matmul %593, %595, %cst_185 {dimension_numbers = #tpu.dot_dimension_numbers<[1], [1], [0], [0], [0, 0, 1, 0], [], []>} : vector<16x16xbf16>, vector<16x16xbf16>, vector<16x16xf32> -> vector<16x16xf32>
    %599 = arith.addf %598, %0 : vector<16x16xf32>
    %cst_186 = arith.constant dense<0xFF800000> : vector<16xf32>
    %600 = vector.multi_reduction <maximumf>, %599, %cst_186 [1] : vector<16x16xf32> to vector<16xf32>
    %601 = vector.shape_cast %600 : vector<16xf32> to vector<16x1xf32>
    %602 = vector.broadcast %601 : vector<16x1xf32> to vector<16x16xf32>
    %603 = arith.subf %599, %602 : vector<16x16xf32>
    %604 = math.exp %603 : vector<16x16xf32>
    %cst_187 = arith.constant dense<0.000000e+00> : vector<16xf32>
    %605 = vector.multi_reduction <add>, %604, %cst_187 [1] : vector<16x16xf32> to vector<16xf32>
    %606 = vector.shape_cast %605 : vector<16xf32> to vector<16x1xf32>
    %607 = tpu.reciprocal %606 {approx = true} : vector<16x1xf32> -> vector<16x1xf32>
    %608 = vector.broadcast %607 : vector<16x1xf32> to vector<16x16xf32>
    %609 = arith.mulf %604, %608 : vector<16x16xf32>
    %610 = arith.truncf %609 : vector<16x16xf32> to vector<16x16xbf16>
    %cst_188 = arith.constant dense<0.000000e+00> : vector<16x16xf32>
    %611 = tpu.matmul %610, %597, %cst_188 {dimension_numbers = #tpu.dot_dimension_numbers<[1], [0], [0], [1], [0, 0, 1, 1], [], []>} : vector<16x16xbf16>, vector<16x16xbf16>, vector<16x16xf32> -> vector<16x16xf32>
    %612 = vector.extract_strided_slice %571 {offsets = [0, 32], sizes = [16, 16], strides = [1, 1]} : vector<16x192xf32> to vector<16x16xf32>
    %613 = arith.truncf %612 : vector<16x16xf32> to vector<16x16xbf16>
    %614 = vector.extract_strided_slice %571 {offsets = [0, 96], sizes = [16, 16], strides = [1, 1]} : vector<16x192xf32> to vector<16x16xf32>
    %615 = arith.truncf %614 : vector<16x16xf32> to vector<16x16xbf16>
    %616 = vector.extract_strided_slice %571 {offsets = [0, 160], sizes = [16, 16], strides = [1, 1]} : vector<16x192xf32> to vector<16x16xf32>
    %617 = arith.truncf %616 : vector<16x16xf32> to vector<16x16xbf16>
    %cst_189 = arith.constant dense<0.000000e+00> : vector<16x16xf32>
    %618 = tpu.matmul %613, %615, %cst_189 {dimension_numbers = #tpu.dot_dimension_numbers<[1], [1], [0], [0], [0, 0, 1, 0], [], []>} : vector<16x16xbf16>, vector<16x16xbf16>, vector<16x16xf32> -> vector<16x16xf32>
    %619 = arith.addf %618, %0 : vector<16x16xf32>
    %cst_190 = arith.constant dense<0xFF800000> : vector<16xf32>
    %620 = vector.multi_reduction <maximumf>, %619, %cst_190 [1] : vector<16x16xf32> to vector<16xf32>
    %621 = vector.shape_cast %620 : vector<16xf32> to vector<16x1xf32>
    %622 = vector.broadcast %621 : vector<16x1xf32> to vector<16x16xf32>
    %623 = arith.subf %619, %622 : vector<16x16xf32>
    %624 = math.exp %623 : vector<16x16xf32>
    %cst_191 = arith.constant dense<0.000000e+00> : vector<16xf32>
    %625 = vector.multi_reduction <add>, %624, %cst_191 [1] : vector<16x16xf32> to vector<16xf32>
    %626 = vector.shape_cast %625 : vector<16xf32> to vector<16x1xf32>
    %627 = tpu.reciprocal %626 {approx = true} : vector<16x1xf32> -> vector<16x1xf32>
    %628 = vector.broadcast %627 : vector<16x1xf32> to vector<16x16xf32>
    %629 = arith.mulf %624, %628 : vector<16x16xf32>
    %630 = arith.truncf %629 : vector<16x16xf32> to vector<16x16xbf16>
    %cst_192 = arith.constant dense<0.000000e+00> : vector<16x16xf32>
    %631 = tpu.matmul %630, %617, %cst_192 {dimension_numbers = #tpu.dot_dimension_numbers<[1], [0], [0], [1], [0, 0, 1, 1], [], []>} : vector<16x16xbf16>, vector<16x16xbf16>, vector<16x16xf32> -> vector<16x16xf32>
    %632 = vector.extract_strided_slice %571 {offsets = [0, 48], sizes = [16, 16], strides = [1, 1]} : vector<16x192xf32> to vector<16x16xf32>
    %633 = arith.truncf %632 : vector<16x16xf32> to vector<16x16xbf16>
    %634 = vector.extract_strided_slice %571 {offsets = [0, 112], sizes = [16, 16], strides = [1, 1]} : vector<16x192xf32> to vector<16x16xf32>
    %635 = arith.truncf %634 : vector<16x16xf32> to vector<16x16xbf16>
    %636 = vector.extract_strided_slice %571 {offsets = [0, 176], sizes = [16, 16], strides = [1, 1]} : vector<16x192xf32> to vector<16x16xf32>
    %637 = arith.truncf %636 : vector<16x16xf32> to vector<16x16xbf16>
    %cst_193 = arith.constant dense<0.000000e+00> : vector<16x16xf32>
    %638 = tpu.matmul %633, %635, %cst_193 {dimension_numbers = #tpu.dot_dimension_numbers<[1], [1], [0], [0], [0, 0, 1, 0], [], []>} : vector<16x16xbf16>, vector<16x16xbf16>, vector<16x16xf32> -> vector<16x16xf32>
    %639 = arith.addf %638, %0 : vector<16x16xf32>
    %cst_194 = arith.constant dense<0xFF800000> : vector<16xf32>
    %640 = vector.multi_reduction <maximumf>, %639, %cst_194 [1] : vector<16x16xf32> to vector<16xf32>
    %641 = vector.shape_cast %640 : vector<16xf32> to vector<16x1xf32>
    %642 = vector.broadcast %641 : vector<16x1xf32> to vector<16x16xf32>
    %643 = arith.subf %639, %642 : vector<16x16xf32>
    %644 = math.exp %643 : vector<16x16xf32>
    %cst_195 = arith.constant dense<0.000000e+00> : vector<16xf32>
    %645 = vector.multi_reduction <add>, %644, %cst_195 [1] : vector<16x16xf32> to vector<16xf32>
    %646 = vector.shape_cast %645 : vector<16xf32> to vector<16x1xf32>
    %647 = tpu.reciprocal %646 {approx = true} : vector<16x1xf32> -> vector<16x1xf32>
    %648 = vector.broadcast %647 : vector<16x1xf32> to vector<16x16xf32>
    %649 = arith.mulf %644, %648 : vector<16x16xf32>
    %650 = arith.truncf %649 : vector<16x16xf32> to vector<16x16xbf16>
    %cst_196 = arith.constant dense<0.000000e+00> : vector<16x16xf32>
    %651 = tpu.matmul %650, %637, %cst_196 {dimension_numbers = #tpu.dot_dimension_numbers<[1], [0], [0], [1], [0, 0, 1, 1], [], []>} : vector<16x16xbf16>, vector<16x16xbf16>, vector<16x16xf32> -> vector<16x16xf32>
    %652 = tpu.concatenate %591, %611, %631, %651 in 1 : vector<16x16xf32>, vector<16x16xf32>, vector<16x16xf32>, vector<16x16xf32> -> vector<16x64xf32>
    %c512 = arith.constant 512 : index
    %c0_197 = arith.constant 0 : index
    %653 = vector.load %arg7[%c512, %c0_197] : memref<1344x256xbf16, #tpu.memory_space<vmem>>, vector<64x64xbf16>
    %654 = arith.truncf %652 : vector<16x64xf32> to vector<16x64xbf16>
    %cst_198 = arith.constant dense<0.000000e+00> : vector<16x64xf32>
    %655 = tpu.matmul %654, %653, %cst_198 {dimension_numbers = #tpu.dot_dimension_numbers<[1], [0], [0], [1], [0, 0, 1, 1], [], []>} : vector<16x64xbf16>, vector<64x64xbf16>, vector<16x64xf32> -> vector<16x64xf32>
    %656 = arith.addf %541, %655 : vector<16x64xf32>
    %c27_199 = arith.constant 27 : index
    %c0_200 = arith.constant 0 : index
    %657 = vector.load %arg8[%c27_199, %c0_200] : memref<42x256xf32, #tpu.memory_space<vmem>>, vector<1x64xf32>
    %658 = vector.broadcast %657 : vector<1x64xf32> to vector<16x64xf32>
    %659 = arith.addf %656, %658 : vector<16x64xf32>
    %c28_201 = arith.constant 28 : index
    %c0_202 = arith.constant 0 : index
    %660 = vector.load %arg8[%c28_201, %c0_202] : memref<42x256xf32, #tpu.memory_space<vmem>>, vector<1x64xf32>
    %c29_203 = arith.constant 29 : index
    %c0_204 = arith.constant 0 : index
    %661 = vector.load %arg8[%c29_203, %c0_204] : memref<42x256xf32, #tpu.memory_space<vmem>>, vector<1x64xf32>
    %cst_205 = arith.constant dense<0.000000e+00> : vector<16xf32>
    %662 = vector.multi_reduction <add>, %659, %cst_205 [1] : vector<16x64xf32> to vector<16xf32>
    %663 = vector.shape_cast %662 : vector<16xf32> to vector<16x1xf32>
    %cst_206 = arith.constant 6.400000e+01 : f32
    %664 = vector.broadcast %cst_206 : f32 to vector<16x1xf32>
    %665 = arith.divf %663, %664 : vector<16x1xf32>
    %666 = vector.broadcast %665 : vector<16x1xf32> to vector<16x64xf32>
    %667 = arith.subf %659, %666 : vector<16x64xf32>
    %668 = arith.mulf %667, %667 : vector<16x64xf32>
    %cst_207 = arith.constant dense<0.000000e+00> : vector<16xf32>
    %669 = vector.multi_reduction <add>, %668, %cst_207 [1] : vector<16x64xf32> to vector<16xf32>
    %670 = vector.shape_cast %669 : vector<16xf32> to vector<16x1xf32>
    %cst_208 = arith.constant 6.400000e+01 : f32
    %671 = vector.broadcast %cst_208 : f32 to vector<16x1xf32>
    %672 = arith.divf %670, %671 : vector<16x1xf32>
    %673 = vector.broadcast %665 : vector<16x1xf32> to vector<16x64xf32>
    %674 = arith.subf %659, %673 : vector<16x64xf32>
    %cst_209 = arith.constant 9.99999974E-6 : f32
    %675 = vector.broadcast %cst_209 : f32 to vector<16x1xf32>
    %676 = arith.addf %672, %675 : vector<16x1xf32>
    %677 = math.rsqrt %676 : vector<16x1xf32>
    %678 = vector.broadcast %677 : vector<16x1xf32> to vector<16x64xf32>
    %679 = arith.mulf %674, %678 : vector<16x64xf32>
    %680 = vector.broadcast %660 : vector<1x64xf32> to vector<16x64xf32>
    %681 = arith.mulf %679, %680 : vector<16x64xf32>
    %682 = vector.broadcast %661 : vector<1x64xf32> to vector<16x64xf32>
    %683 = arith.addf %681, %682 : vector<16x64xf32>
    %c576 = arith.constant 576 : index
    %c0_210 = arith.constant 0 : index
    %684 = vector.load %arg7[%c576, %c0_210] : memref<1344x256xbf16, #tpu.memory_space<vmem>>, vector<64x256xbf16>
    %685 = arith.truncf %683 : vector<16x64xf32> to vector<16x64xbf16>
    %cst_211 = arith.constant dense<0.000000e+00> : vector<16x256xf32>
    %686 = tpu.matmul %685, %684, %cst_211 {dimension_numbers = #tpu.dot_dimension_numbers<[1], [0], [0], [1], [0, 0, 1, 1], [], []>} : vector<16x64xbf16>, vector<64x256xbf16>, vector<16x256xf32> -> vector<16x256xf32>
    %c30_212 = arith.constant 30 : index
    %c0_213 = arith.constant 0 : index
    %687 = vector.load %arg8[%c30_212, %c0_213] : memref<42x256xf32, #tpu.memory_space<vmem>>, vector<1x256xf32>
    %688 = vector.broadcast %687 : vector<1x256xf32> to vector<16x256xf32>
    %689 = arith.addf %686, %688 : vector<16x256xf32>
    %690 = arith.mulf %689, %689 : vector<16x256xf32>
    %691 = arith.mulf %689, %690 : vector<16x256xf32>
    %cst_214 = arith.constant 4.471500e-02 : f32
    %692 = vector.broadcast %cst_214 : f32 to vector<16x256xf32>
    %693 = arith.mulf %692, %691 : vector<16x256xf32>
    %694 = arith.addf %689, %693 : vector<16x256xf32>
    %cst_215 = arith.constant 0.797884583 : f32
    %695 = vector.broadcast %cst_215 : f32 to vector<16x256xf32>
    %696 = arith.mulf %695, %694 : vector<16x256xf32>
    %697 = math.tanh %696 : vector<16x256xf32>
    %cst_216 = arith.constant 1.000000e+00 : f32
    %698 = vector.broadcast %cst_216 : f32 to vector<16x256xf32>
    %699 = arith.addf %698, %697 : vector<16x256xf32>
    %cst_217 = arith.constant 5.000000e-01 : f32
    %700 = vector.broadcast %cst_217 : f32 to vector<16x256xf32>
    %701 = arith.mulf %700, %699 : vector<16x256xf32>
    %702 = arith.mulf %689, %701 : vector<16x256xf32>
    %c640 = arith.constant 640 : index
    %c0_218 = arith.constant 0 : index
    %703 = vector.load %arg7[%c640, %c0_218] : memref<1344x256xbf16, #tpu.memory_space<vmem>>, vector<256x64xbf16>
    %704 = arith.truncf %702 : vector<16x256xf32> to vector<16x256xbf16>
    %cst_219 = arith.constant dense<0.000000e+00> : vector<16x64xf32>
    %705 = tpu.matmul %704, %703, %cst_219 {dimension_numbers = #tpu.dot_dimension_numbers<[1], [0], [0], [1], [0, 0, 1, 1], [], []>} : vector<16x256xbf16>, vector<256x64xbf16>, vector<16x64xf32> -> vector<16x64xf32>
    %706 = arith.addf %659, %705 : vector<16x64xf32>
    %c31_220 = arith.constant 31 : index
    %c0_221 = arith.constant 0 : index
    %707 = vector.load %arg8[%c31_220, %c0_221] : memref<42x256xf32, #tpu.memory_space<vmem>>, vector<1x64xf32>
    %708 = vector.broadcast %707 : vector<1x64xf32> to vector<16x64xf32>
    %709 = arith.addf %706, %708 : vector<16x64xf32>
    %c32_222 = arith.constant 32 : index
    %c0_223 = arith.constant 0 : index
    %710 = vector.load %arg8[%c32_222, %c0_223] : memref<42x256xf32, #tpu.memory_space<vmem>>, vector<1x64xf32>
    %c33_224 = arith.constant 33 : index
    %c0_225 = arith.constant 0 : index
    %711 = vector.load %arg8[%c33_224, %c0_225] : memref<42x256xf32, #tpu.memory_space<vmem>>, vector<1x64xf32>
    %cst_226 = arith.constant dense<0.000000e+00> : vector<16xf32>
    %712 = vector.multi_reduction <add>, %709, %cst_226 [1] : vector<16x64xf32> to vector<16xf32>
    %713 = vector.shape_cast %712 : vector<16xf32> to vector<16x1xf32>
    %cst_227 = arith.constant 6.400000e+01 : f32
    %714 = vector.broadcast %cst_227 : f32 to vector<16x1xf32>
    %715 = arith.divf %713, %714 : vector<16x1xf32>
    %716 = vector.broadcast %715 : vector<16x1xf32> to vector<16x64xf32>
    %717 = arith.subf %709, %716 : vector<16x64xf32>
    %718 = arith.mulf %717, %717 : vector<16x64xf32>
    %cst_228 = arith.constant dense<0.000000e+00> : vector<16xf32>
    %719 = vector.multi_reduction <add>, %718, %cst_228 [1] : vector<16x64xf32> to vector<16xf32>
    %720 = vector.shape_cast %719 : vector<16xf32> to vector<16x1xf32>
    %cst_229 = arith.constant 6.400000e+01 : f32
    %721 = vector.broadcast %cst_229 : f32 to vector<16x1xf32>
    %722 = arith.divf %720, %721 : vector<16x1xf32>
    %723 = vector.broadcast %715 : vector<16x1xf32> to vector<16x64xf32>
    %724 = arith.subf %709, %723 : vector<16x64xf32>
    %cst_230 = arith.constant 9.99999974E-6 : f32
    %725 = vector.broadcast %cst_230 : f32 to vector<16x1xf32>
    %726 = arith.addf %722, %725 : vector<16x1xf32>
    %727 = math.rsqrt %726 : vector<16x1xf32>
    %728 = vector.broadcast %727 : vector<16x1xf32> to vector<16x64xf32>
    %729 = arith.mulf %724, %728 : vector<16x64xf32>
    %730 = vector.broadcast %710 : vector<1x64xf32> to vector<16x64xf32>
    %731 = arith.mulf %729, %730 : vector<16x64xf32>
    %732 = vector.broadcast %711 : vector<1x64xf32> to vector<16x64xf32>
    %733 = arith.addf %731, %732 : vector<16x64xf32>
    %c896 = arith.constant 896 : index
    %c0_231 = arith.constant 0 : index
    %734 = vector.load %arg7[%c896, %c0_231] : memref<1344x256xbf16, #tpu.memory_space<vmem>>, vector<64x192xbf16>
    %735 = arith.truncf %733 : vector<16x64xf32> to vector<16x64xbf16>
    %cst_232 = arith.constant dense<0.000000e+00> : vector<16x192xf32>
    %736 = tpu.matmul %735, %734, %cst_232 {dimension_numbers = #tpu.dot_dimension_numbers<[1], [0], [0], [1], [0, 0, 1, 1], [], []>} : vector<16x64xbf16>, vector<64x192xbf16>, vector<16x192xf32> -> vector<16x192xf32>
    %c34 = arith.constant 34 : index
    %c0_233 = arith.constant 0 : index
    %737 = vector.load %arg8[%c34, %c0_233] : memref<42x256xf32, #tpu.memory_space<vmem>>, vector<1x192xf32>
    %738 = vector.broadcast %737 : vector<1x192xf32> to vector<16x192xf32>
    %739 = arith.addf %736, %738 : vector<16x192xf32>
    %740 = vector.extract_strided_slice %739 {offsets = [0, 0], sizes = [16, 16], strides = [1, 1]} : vector<16x192xf32> to vector<16x16xf32>
    %741 = arith.truncf %740 : vector<16x16xf32> to vector<16x16xbf16>
    %742 = vector.extract_strided_slice %739 {offsets = [0, 64], sizes = [16, 16], strides = [1, 1]} : vector<16x192xf32> to vector<16x16xf32>
    %743 = arith.truncf %742 : vector<16x16xf32> to vector<16x16xbf16>
    %744 = vector.extract_strided_slice %739 {offsets = [0, 128], sizes = [16, 16], strides = [1, 1]} : vector<16x192xf32> to vector<16x16xf32>
    %745 = arith.truncf %744 : vector<16x16xf32> to vector<16x16xbf16>
    %cst_234 = arith.constant dense<0.000000e+00> : vector<16x16xf32>
    %746 = tpu.matmul %741, %743, %cst_234 {dimension_numbers = #tpu.dot_dimension_numbers<[1], [1], [0], [0], [0, 0, 1, 0], [], []>} : vector<16x16xbf16>, vector<16x16xbf16>, vector<16x16xf32> -> vector<16x16xf32>
    %747 = arith.addf %746, %0 : vector<16x16xf32>
    %cst_235 = arith.constant dense<0xFF800000> : vector<16xf32>
    %748 = vector.multi_reduction <maximumf>, %747, %cst_235 [1] : vector<16x16xf32> to vector<16xf32>
    %749 = vector.shape_cast %748 : vector<16xf32> to vector<16x1xf32>
    %750 = vector.broadcast %749 : vector<16x1xf32> to vector<16x16xf32>
    %751 = arith.subf %747, %750 : vector<16x16xf32>
    %752 = math.exp %751 : vector<16x16xf32>
    %cst_236 = arith.constant dense<0.000000e+00> : vector<16xf32>
    %753 = vector.multi_reduction <add>, %752, %cst_236 [1] : vector<16x16xf32> to vector<16xf32>
    %754 = vector.shape_cast %753 : vector<16xf32> to vector<16x1xf32>
    %755 = tpu.reciprocal %754 {approx = true} : vector<16x1xf32> -> vector<16x1xf32>
    %756 = vector.broadcast %755 : vector<16x1xf32> to vector<16x16xf32>
    %757 = arith.mulf %752, %756 : vector<16x16xf32>
    %758 = arith.truncf %757 : vector<16x16xf32> to vector<16x16xbf16>
    %cst_237 = arith.constant dense<0.000000e+00> : vector<16x16xf32>
    %759 = tpu.matmul %758, %745, %cst_237 {dimension_numbers = #tpu.dot_dimension_numbers<[1], [0], [0], [1], [0, 0, 1, 1], [], []>} : vector<16x16xbf16>, vector<16x16xbf16>, vector<16x16xf32> -> vector<16x16xf32>
    %760 = vector.extract_strided_slice %739 {offsets = [0, 16], sizes = [16, 16], strides = [1, 1]} : vector<16x192xf32> to vector<16x16xf32>
    %761 = arith.truncf %760 : vector<16x16xf32> to vector<16x16xbf16>
    %762 = vector.extract_strided_slice %739 {offsets = [0, 80], sizes = [16, 16], strides = [1, 1]} : vector<16x192xf32> to vector<16x16xf32>
    %763 = arith.truncf %762 : vector<16x16xf32> to vector<16x16xbf16>
    %764 = vector.extract_strided_slice %739 {offsets = [0, 144], sizes = [16, 16], strides = [1, 1]} : vector<16x192xf32> to vector<16x16xf32>
    %765 = arith.truncf %764 : vector<16x16xf32> to vector<16x16xbf16>
    %cst_238 = arith.constant dense<0.000000e+00> : vector<16x16xf32>
    %766 = tpu.matmul %761, %763, %cst_238 {dimension_numbers = #tpu.dot_dimension_numbers<[1], [1], [0], [0], [0, 0, 1, 0], [], []>} : vector<16x16xbf16>, vector<16x16xbf16>, vector<16x16xf32> -> vector<16x16xf32>
    %767 = arith.addf %766, %0 : vector<16x16xf32>
    %cst_239 = arith.constant dense<0xFF800000> : vector<16xf32>
    %768 = vector.multi_reduction <maximumf>, %767, %cst_239 [1] : vector<16x16xf32> to vector<16xf32>
    %769 = vector.shape_cast %768 : vector<16xf32> to vector<16x1xf32>
    %770 = vector.broadcast %769 : vector<16x1xf32> to vector<16x16xf32>
    %771 = arith.subf %767, %770 : vector<16x16xf32>
    %772 = math.exp %771 : vector<16x16xf32>
    %cst_240 = arith.constant dense<0.000000e+00> : vector<16xf32>
    %773 = vector.multi_reduction <add>, %772, %cst_240 [1] : vector<16x16xf32> to vector<16xf32>
    %774 = vector.shape_cast %773 : vector<16xf32> to vector<16x1xf32>
    %775 = tpu.reciprocal %774 {approx = true} : vector<16x1xf32> -> vector<16x1xf32>
    %776 = vector.broadcast %775 : vector<16x1xf32> to vector<16x16xf32>
    %777 = arith.mulf %772, %776 : vector<16x16xf32>
    %778 = arith.truncf %777 : vector<16x16xf32> to vector<16x16xbf16>
    %cst_241 = arith.constant dense<0.000000e+00> : vector<16x16xf32>
    %779 = tpu.matmul %778, %765, %cst_241 {dimension_numbers = #tpu.dot_dimension_numbers<[1], [0], [0], [1], [0, 0, 1, 1], [], []>} : vector<16x16xbf16>, vector<16x16xbf16>, vector<16x16xf32> -> vector<16x16xf32>
    %780 = vector.extract_strided_slice %739 {offsets = [0, 32], sizes = [16, 16], strides = [1, 1]} : vector<16x192xf32> to vector<16x16xf32>
    %781 = arith.truncf %780 : vector<16x16xf32> to vector<16x16xbf16>
    %782 = vector.extract_strided_slice %739 {offsets = [0, 96], sizes = [16, 16], strides = [1, 1]} : vector<16x192xf32> to vector<16x16xf32>
    %783 = arith.truncf %782 : vector<16x16xf32> to vector<16x16xbf16>
    %784 = vector.extract_strided_slice %739 {offsets = [0, 160], sizes = [16, 16], strides = [1, 1]} : vector<16x192xf32> to vector<16x16xf32>
    %785 = arith.truncf %784 : vector<16x16xf32> to vector<16x16xbf16>
    %cst_242 = arith.constant dense<0.000000e+00> : vector<16x16xf32>
    %786 = tpu.matmul %781, %783, %cst_242 {dimension_numbers = #tpu.dot_dimension_numbers<[1], [1], [0], [0], [0, 0, 1, 0], [], []>} : vector<16x16xbf16>, vector<16x16xbf16>, vector<16x16xf32> -> vector<16x16xf32>
    %787 = arith.addf %786, %0 : vector<16x16xf32>
    %cst_243 = arith.constant dense<0xFF800000> : vector<16xf32>
    %788 = vector.multi_reduction <maximumf>, %787, %cst_243 [1] : vector<16x16xf32> to vector<16xf32>
    %789 = vector.shape_cast %788 : vector<16xf32> to vector<16x1xf32>
    %790 = vector.broadcast %789 : vector<16x1xf32> to vector<16x16xf32>
    %791 = arith.subf %787, %790 : vector<16x16xf32>
    %792 = math.exp %791 : vector<16x16xf32>
    %cst_244 = arith.constant dense<0.000000e+00> : vector<16xf32>
    %793 = vector.multi_reduction <add>, %792, %cst_244 [1] : vector<16x16xf32> to vector<16xf32>
    %794 = vector.shape_cast %793 : vector<16xf32> to vector<16x1xf32>
    %795 = tpu.reciprocal %794 {approx = true} : vector<16x1xf32> -> vector<16x1xf32>
    %796 = vector.broadcast %795 : vector<16x1xf32> to vector<16x16xf32>
    %797 = arith.mulf %792, %796 : vector<16x16xf32>
    %798 = arith.truncf %797 : vector<16x16xf32> to vector<16x16xbf16>
    %cst_245 = arith.constant dense<0.000000e+00> : vector<16x16xf32>
    %799 = tpu.matmul %798, %785, %cst_245 {dimension_numbers = #tpu.dot_dimension_numbers<[1], [0], [0], [1], [0, 0, 1, 1], [], []>} : vector<16x16xbf16>, vector<16x16xbf16>, vector<16x16xf32> -> vector<16x16xf32>
    %800 = vector.extract_strided_slice %739 {offsets = [0, 48], sizes = [16, 16], strides = [1, 1]} : vector<16x192xf32> to vector<16x16xf32>
    %801 = arith.truncf %800 : vector<16x16xf32> to vector<16x16xbf16>
    %802 = vector.extract_strided_slice %739 {offsets = [0, 112], sizes = [16, 16], strides = [1, 1]} : vector<16x192xf32> to vector<16x16xf32>
    %803 = arith.truncf %802 : vector<16x16xf32> to vector<16x16xbf16>
    %804 = vector.extract_strided_slice %739 {offsets = [0, 176], sizes = [16, 16], strides = [1, 1]} : vector<16x192xf32> to vector<16x16xf32>
    %805 = arith.truncf %804 : vector<16x16xf32> to vector<16x16xbf16>
    %cst_246 = arith.constant dense<0.000000e+00> : vector<16x16xf32>
    %806 = tpu.matmul %801, %803, %cst_246 {dimension_numbers = #tpu.dot_dimension_numbers<[1], [1], [0], [0], [0, 0, 1, 0], [], []>} : vector<16x16xbf16>, vector<16x16xbf16>, vector<16x16xf32> -> vector<16x16xf32>
    %807 = arith.addf %806, %0 : vector<16x16xf32>
    %cst_247 = arith.constant dense<0xFF800000> : vector<16xf32>
    %808 = vector.multi_reduction <maximumf>, %807, %cst_247 [1] : vector<16x16xf32> to vector<16xf32>
    %809 = vector.shape_cast %808 : vector<16xf32> to vector<16x1xf32>
    %810 = vector.broadcast %809 : vector<16x1xf32> to vector<16x16xf32>
    %811 = arith.subf %807, %810 : vector<16x16xf32>
    %812 = math.exp %811 : vector<16x16xf32>
    %cst_248 = arith.constant dense<0.000000e+00> : vector<16xf32>
    %813 = vector.multi_reduction <add>, %812, %cst_248 [1] : vector<16x16xf32> to vector<16xf32>
    %814 = vector.shape_cast %813 : vector<16xf32> to vector<16x1xf32>
    %815 = tpu.reciprocal %814 {approx = true} : vector<16x1xf32> -> vector<16x1xf32>
    %816 = vector.broadcast %815 : vector<16x1xf32> to vector<16x16xf32>
    %817 = arith.mulf %812, %816 : vector<16x16xf32>
    %818 = arith.truncf %817 : vector<16x16xf32> to vector<16x16xbf16>
    %cst_249 = arith.constant dense<0.000000e+00> : vector<16x16xf32>
    %819 = tpu.matmul %818, %805, %cst_249 {dimension_numbers = #tpu.dot_dimension_numbers<[1], [0], [0], [1], [0, 0, 1, 1], [], []>} : vector<16x16xbf16>, vector<16x16xbf16>, vector<16x16xf32> -> vector<16x16xf32>
    %820 = tpu.concatenate %759, %779, %799, %819 in 1 : vector<16x16xf32>, vector<16x16xf32>, vector<16x16xf32>, vector<16x16xf32> -> vector<16x64xf32>
    %c960 = arith.constant 960 : index
    %c0_250 = arith.constant 0 : index
    %821 = vector.load %arg7[%c960, %c0_250] : memref<1344x256xbf16, #tpu.memory_space<vmem>>, vector<64x64xbf16>
    %822 = arith.truncf %820 : vector<16x64xf32> to vector<16x64xbf16>
    %cst_251 = arith.constant dense<0.000000e+00> : vector<16x64xf32>
    %823 = tpu.matmul %822, %821, %cst_251 {dimension_numbers = #tpu.dot_dimension_numbers<[1], [0], [0], [1], [0, 0, 1, 1], [], []>} : vector<16x64xbf16>, vector<64x64xbf16>, vector<16x64xf32> -> vector<16x64xf32>
    %824 = arith.addf %709, %823 : vector<16x64xf32>
    %c35 = arith.constant 35 : index
    %c0_252 = arith.constant 0 : index
    %825 = vector.load %arg8[%c35, %c0_252] : memref<42x256xf32, #tpu.memory_space<vmem>>, vector<1x64xf32>
    %826 = vector.broadcast %825 : vector<1x64xf32> to vector<16x64xf32>
    %827 = arith.addf %824, %826 : vector<16x64xf32>
    %c36 = arith.constant 36 : index
    %c0_253 = arith.constant 0 : index
    %828 = vector.load %arg8[%c36, %c0_253] : memref<42x256xf32, #tpu.memory_space<vmem>>, vector<1x64xf32>
    %c37 = arith.constant 37 : index
    %c0_254 = arith.constant 0 : index
    %829 = vector.load %arg8[%c37, %c0_254] : memref<42x256xf32, #tpu.memory_space<vmem>>, vector<1x64xf32>
    %cst_255 = arith.constant dense<0.000000e+00> : vector<16xf32>
    %830 = vector.multi_reduction <add>, %827, %cst_255 [1] : vector<16x64xf32> to vector<16xf32>
    %831 = vector.shape_cast %830 : vector<16xf32> to vector<16x1xf32>
    %cst_256 = arith.constant 6.400000e+01 : f32
    %832 = vector.broadcast %cst_256 : f32 to vector<16x1xf32>
    %833 = arith.divf %831, %832 : vector<16x1xf32>
    %834 = vector.broadcast %833 : vector<16x1xf32> to vector<16x64xf32>
    %835 = arith.subf %827, %834 : vector<16x64xf32>
    %836 = arith.mulf %835, %835 : vector<16x64xf32>
    %cst_257 = arith.constant dense<0.000000e+00> : vector<16xf32>
    %837 = vector.multi_reduction <add>, %836, %cst_257 [1] : vector<16x64xf32> to vector<16xf32>
    %838 = vector.shape_cast %837 : vector<16xf32> to vector<16x1xf32>
    %cst_258 = arith.constant 6.400000e+01 : f32
    %839 = vector.broadcast %cst_258 : f32 to vector<16x1xf32>
    %840 = arith.divf %838, %839 : vector<16x1xf32>
    %841 = vector.broadcast %833 : vector<16x1xf32> to vector<16x64xf32>
    %842 = arith.subf %827, %841 : vector<16x64xf32>
    %cst_259 = arith.constant 9.99999974E-6 : f32
    %843 = vector.broadcast %cst_259 : f32 to vector<16x1xf32>
    %844 = arith.addf %840, %843 : vector<16x1xf32>
    %845 = math.rsqrt %844 : vector<16x1xf32>
    %846 = vector.broadcast %845 : vector<16x1xf32> to vector<16x64xf32>
    %847 = arith.mulf %842, %846 : vector<16x64xf32>
    %848 = vector.broadcast %828 : vector<1x64xf32> to vector<16x64xf32>
    %849 = arith.mulf %847, %848 : vector<16x64xf32>
    %850 = vector.broadcast %829 : vector<1x64xf32> to vector<16x64xf32>
    %851 = arith.addf %849, %850 : vector<16x64xf32>
    %c1024 = arith.constant 1024 : index
    %c0_260 = arith.constant 0 : index
    %852 = vector.load %arg7[%c1024, %c0_260] : memref<1344x256xbf16, #tpu.memory_space<vmem>>, vector<64x256xbf16>
    %853 = arith.truncf %851 : vector<16x64xf32> to vector<16x64xbf16>
    %cst_261 = arith.constant dense<0.000000e+00> : vector<16x256xf32>
    %854 = tpu.matmul %853, %852, %cst_261 {dimension_numbers = #tpu.dot_dimension_numbers<[1], [0], [0], [1], [0, 0, 1, 1], [], []>} : vector<16x64xbf16>, vector<64x256xbf16>, vector<16x256xf32> -> vector<16x256xf32>
    %c38 = arith.constant 38 : index
    %c0_262 = arith.constant 0 : index
    %855 = vector.load %arg8[%c38, %c0_262] : memref<42x256xf32, #tpu.memory_space<vmem>>, vector<1x256xf32>
    %856 = vector.broadcast %855 : vector<1x256xf32> to vector<16x256xf32>
    %857 = arith.addf %854, %856 : vector<16x256xf32>
    %858 = arith.mulf %857, %857 : vector<16x256xf32>
    %859 = arith.mulf %857, %858 : vector<16x256xf32>
    %cst_263 = arith.constant 4.471500e-02 : f32
    %860 = vector.broadcast %cst_263 : f32 to vector<16x256xf32>
    %861 = arith.mulf %860, %859 : vector<16x256xf32>
    %862 = arith.addf %857, %861 : vector<16x256xf32>
    %cst_264 = arith.constant 0.797884583 : f32
    %863 = vector.broadcast %cst_264 : f32 to vector<16x256xf32>
    %864 = arith.mulf %863, %862 : vector<16x256xf32>
    %865 = math.tanh %864 : vector<16x256xf32>
    %cst_265 = arith.constant 1.000000e+00 : f32
    %866 = vector.broadcast %cst_265 : f32 to vector<16x256xf32>
    %867 = arith.addf %866, %865 : vector<16x256xf32>
    %cst_266 = arith.constant 5.000000e-01 : f32
    %868 = vector.broadcast %cst_266 : f32 to vector<16x256xf32>
    %869 = arith.mulf %868, %867 : vector<16x256xf32>
    %870 = arith.mulf %857, %869 : vector<16x256xf32>
    %c1088 = arith.constant 1088 : index
    %c0_267 = arith.constant 0 : index
    %871 = vector.load %arg7[%c1088, %c0_267] : memref<1344x256xbf16, #tpu.memory_space<vmem>>, vector<256x64xbf16>
    %872 = arith.truncf %870 : vector<16x256xf32> to vector<16x256xbf16>
    %cst_268 = arith.constant dense<0.000000e+00> : vector<16x64xf32>
    %873 = tpu.matmul %872, %871, %cst_268 {dimension_numbers = #tpu.dot_dimension_numbers<[1], [0], [0], [1], [0, 0, 1, 1], [], []>} : vector<16x256xbf16>, vector<256x64xbf16>, vector<16x64xf32> -> vector<16x64xf32>
    %874 = arith.addf %827, %873 : vector<16x64xf32>
    %c39 = arith.constant 39 : index
    %c0_269 = arith.constant 0 : index
    %875 = vector.load %arg8[%c39, %c0_269] : memref<42x256xf32, #tpu.memory_space<vmem>>, vector<1x64xf32>
    %876 = vector.broadcast %875 : vector<1x64xf32> to vector<16x64xf32>
    %877 = arith.addf %874, %876 : vector<16x64xf32>
    %c40 = arith.constant 40 : index
    %c0_270 = arith.constant 0 : index
    %878 = vector.load %arg8[%c40, %c0_270] : memref<42x256xf32, #tpu.memory_space<vmem>>, vector<1x64xf32>
    %c41 = arith.constant 41 : index
    %c0_271 = arith.constant 0 : index
    %879 = vector.load %arg8[%c41, %c0_271] : memref<42x256xf32, #tpu.memory_space<vmem>>, vector<1x64xf32>
    %cst_272 = arith.constant dense<0.000000e+00> : vector<16xf32>
    %880 = vector.multi_reduction <add>, %877, %cst_272 [1] : vector<16x64xf32> to vector<16xf32>
    %881 = vector.shape_cast %880 : vector<16xf32> to vector<16x1xf32>
    %cst_273 = arith.constant 6.400000e+01 : f32
    %882 = vector.broadcast %cst_273 : f32 to vector<16x1xf32>
    %883 = arith.divf %881, %882 : vector<16x1xf32>
    %884 = vector.broadcast %883 : vector<16x1xf32> to vector<16x64xf32>
    %885 = arith.subf %877, %884 : vector<16x64xf32>
    %886 = arith.mulf %885, %885 : vector<16x64xf32>
    %cst_274 = arith.constant dense<0.000000e+00> : vector<16xf32>
    %887 = vector.multi_reduction <add>, %886, %cst_274 [1] : vector<16x64xf32> to vector<16xf32>
    %888 = vector.shape_cast %887 : vector<16xf32> to vector<16x1xf32>
    %cst_275 = arith.constant 6.400000e+01 : f32
    %889 = vector.broadcast %cst_275 : f32 to vector<16x1xf32>
    %890 = arith.divf %888, %889 : vector<16x1xf32>
    %891 = vector.broadcast %883 : vector<16x1xf32> to vector<16x64xf32>
    %892 = arith.subf %877, %891 : vector<16x64xf32>
    %cst_276 = arith.constant 9.99999974E-6 : f32
    %893 = vector.broadcast %cst_276 : f32 to vector<16x1xf32>
    %894 = arith.addf %890, %893 : vector<16x1xf32>
    %895 = math.rsqrt %894 : vector<16x1xf32>
    %896 = vector.broadcast %895 : vector<16x1xf32> to vector<16x64xf32>
    %897 = arith.mulf %892, %896 : vector<16x64xf32>
    %898 = vector.broadcast %878 : vector<1x64xf32> to vector<16x64xf32>
    %899 = arith.mulf %897, %898 : vector<16x64xf32>
    %900 = vector.broadcast %879 : vector<1x64xf32> to vector<16x64xf32>
    %901 = arith.addf %899, %900 : vector<16x64xf32>
    %c0_277 = arith.constant 0 : index
    %c0_278 = arith.constant 0 : index
    %902 = vector.load %arg9[%c0_277, %c0_278] : memref<144x64xbf16, #tpu.memory_space<vmem>>, vector<32x16xbf16>
    %903 = arith.truncf %370 : vector<16x32xf32> to vector<16x32xbf16>
    %cst_279 = arith.constant dense<0.000000e+00> : vector<16x16xf32>
    %904 = tpu.matmul %903, %902, %cst_279 {dimension_numbers = #tpu.dot_dimension_numbers<[1], [0], [0], [1], [0, 0, 1, 1], [], []>} : vector<16x32xbf16>, vector<32x16xbf16>, vector<16x16xf32> -> vector<16x16xf32>
    %c16_280 = arith.constant 16 : index
    %c0_281 = arith.constant 0 : index
    %905 = vector.load %arg10[%c16_280, %c0_281] : memref<27x64xf32, #tpu.memory_space<vmem>>, vector<1x16xf32>
    %906 = vector.broadcast %905 : vector<1x16xf32> to vector<16x16xf32>
    %907 = arith.addf %904, %906 : vector<16x16xf32>
    %c0_282 = arith.constant 0 : index
    %c0_283 = arith.constant 0 : index
    %908 = vector.load %arg10[%c0_282, %c0_283] : memref<27x64xf32, #tpu.memory_space<vmem>>, vector<16x16xf32>
    %909 = arith.addf %907, %908 : vector<16x16xf32>
    %c17_284 = arith.constant 17 : index
    %c0_285 = arith.constant 0 : index
    %910 = vector.load %arg10[%c17_284, %c0_285] : memref<27x64xf32, #tpu.memory_space<vmem>>, vector<1x16xf32>
    %c18_286 = arith.constant 18 : index
    %c0_287 = arith.constant 0 : index
    %911 = vector.load %arg10[%c18_286, %c0_287] : memref<27x64xf32, #tpu.memory_space<vmem>>, vector<1x16xf32>
    %cst_288 = arith.constant dense<0.000000e+00> : vector<16xf32>
    %912 = vector.multi_reduction <add>, %909, %cst_288 [1] : vector<16x16xf32> to vector<16xf32>
    %913 = vector.shape_cast %912 : vector<16xf32> to vector<16x1xf32>
    %cst_289 = arith.constant 1.600000e+01 : f32
    %914 = vector.broadcast %cst_289 : f32 to vector<16x1xf32>
    %915 = arith.divf %913, %914 : vector<16x1xf32>
    %916 = vector.broadcast %915 : vector<16x1xf32> to vector<16x16xf32>
    %917 = arith.subf %909, %916 : vector<16x16xf32>
    %918 = arith.mulf %917, %917 : vector<16x16xf32>
    %cst_290 = arith.constant dense<0.000000e+00> : vector<16xf32>
    %919 = vector.multi_reduction <add>, %918, %cst_290 [1] : vector<16x16xf32> to vector<16xf32>
    %920 = vector.shape_cast %919 : vector<16xf32> to vector<16x1xf32>
    %cst_291 = arith.constant 1.600000e+01 : f32
    %921 = vector.broadcast %cst_291 : f32 to vector<16x1xf32>
    %922 = arith.divf %920, %921 : vector<16x1xf32>
    %923 = vector.broadcast %915 : vector<16x1xf32> to vector<16x16xf32>
    %924 = arith.subf %909, %923 : vector<16x16xf32>
    %cst_292 = arith.constant 9.99999974E-6 : f32
    %925 = vector.broadcast %cst_292 : f32 to vector<16x1xf32>
    %926 = arith.addf %922, %925 : vector<16x1xf32>
    %927 = math.rsqrt %926 : vector<16x1xf32>
    %928 = vector.broadcast %927 : vector<16x1xf32> to vector<16x16xf32>
    %929 = arith.mulf %924, %928 : vector<16x16xf32>
    %930 = vector.broadcast %910 : vector<1x16xf32> to vector<16x16xf32>
    %931 = arith.mulf %929, %930 : vector<16x16xf32>
    %932 = vector.broadcast %911 : vector<1x16xf32> to vector<16x16xf32>
    %933 = arith.addf %931, %932 : vector<16x16xf32>
    %c32_293 = arith.constant 32 : index
    %c0_294 = arith.constant 0 : index
    %934 = vector.load %arg9[%c32_293, %c0_294] : memref<144x64xbf16, #tpu.memory_space<vmem>>, vector<16x48xbf16>
    %935 = arith.truncf %933 : vector<16x16xf32> to vector<16x16xbf16>
    %cst_295 = arith.constant dense<0.000000e+00> : vector<16x48xf32>
    %936 = tpu.matmul %935, %934, %cst_295 {dimension_numbers = #tpu.dot_dimension_numbers<[1], [0], [0], [1], [0, 0, 1, 1], [], []>} : vector<16x16xbf16>, vector<16x48xbf16>, vector<16x48xf32> -> vector<16x48xf32>
    %c19_296 = arith.constant 19 : index
    %c0_297 = arith.constant 0 : index
    %937 = vector.load %arg10[%c19_296, %c0_297] : memref<27x64xf32, #tpu.memory_space<vmem>>, vector<1x48xf32>
    %938 = vector.broadcast %937 : vector<1x48xf32> to vector<16x48xf32>
    %939 = arith.addf %936, %938 : vector<16x48xf32>
    %940 = vector.extract_strided_slice %939 {offsets = [0, 0], sizes = [16, 4], strides = [1, 1]} : vector<16x48xf32> to vector<16x4xf32>
    %941 = arith.truncf %940 : vector<16x4xf32> to vector<16x4xbf16>
    %942 = vector.extract_strided_slice %939 {offsets = [0, 16], sizes = [16, 4], strides = [1, 1]} : vector<16x48xf32> to vector<16x4xf32>
    %943 = arith.truncf %942 : vector<16x4xf32> to vector<16x4xbf16>
    %944 = vector.extract_strided_slice %939 {offsets = [0, 32], sizes = [16, 4], strides = [1, 1]} : vector<16x48xf32> to vector<16x4xf32>
    %945 = arith.truncf %944 : vector<16x4xf32> to vector<16x4xbf16>
    %cst_298 = arith.constant dense<0.000000e+00> : vector<16x16xf32>
    %946 = tpu.matmul %941, %943, %cst_298 {dimension_numbers = #tpu.dot_dimension_numbers<[1], [1], [0], [0], [0, 0, 1, 0], [], []>} : vector<16x4xbf16>, vector<16x4xbf16>, vector<16x16xf32> -> vector<16x16xf32>
    %947 = arith.addf %946, %0 : vector<16x16xf32>
    %cst_299 = arith.constant dense<0xFF800000> : vector<16xf32>
    %948 = vector.multi_reduction <maximumf>, %947, %cst_299 [1] : vector<16x16xf32> to vector<16xf32>
    %949 = vector.shape_cast %948 : vector<16xf32> to vector<16x1xf32>
    %950 = vector.broadcast %949 : vector<16x1xf32> to vector<16x16xf32>
    %951 = arith.subf %947, %950 : vector<16x16xf32>
    %952 = math.exp %951 : vector<16x16xf32>
    %cst_300 = arith.constant dense<0.000000e+00> : vector<16xf32>
    %953 = vector.multi_reduction <add>, %952, %cst_300 [1] : vector<16x16xf32> to vector<16xf32>
    %954 = vector.shape_cast %953 : vector<16xf32> to vector<16x1xf32>
    %955 = tpu.reciprocal %954 {approx = true} : vector<16x1xf32> -> vector<16x1xf32>
    %956 = vector.broadcast %955 : vector<16x1xf32> to vector<16x16xf32>
    %957 = arith.mulf %952, %956 : vector<16x16xf32>
    %958 = arith.truncf %957 : vector<16x16xf32> to vector<16x16xbf16>
    %cst_301 = arith.constant dense<0.000000e+00> : vector<16x4xf32>
    %959 = tpu.matmul %958, %945, %cst_301 {dimension_numbers = #tpu.dot_dimension_numbers<[1], [0], [0], [1], [0, 0, 1, 1], [], []>} : vector<16x16xbf16>, vector<16x4xbf16>, vector<16x4xf32> -> vector<16x4xf32>
    %960 = vector.extract_strided_slice %939 {offsets = [0, 4], sizes = [16, 4], strides = [1, 1]} : vector<16x48xf32> to vector<16x4xf32>
    %961 = arith.truncf %960 : vector<16x4xf32> to vector<16x4xbf16>
    %962 = vector.extract_strided_slice %939 {offsets = [0, 20], sizes = [16, 4], strides = [1, 1]} : vector<16x48xf32> to vector<16x4xf32>
    %963 = arith.truncf %962 : vector<16x4xf32> to vector<16x4xbf16>
    %964 = vector.extract_strided_slice %939 {offsets = [0, 36], sizes = [16, 4], strides = [1, 1]} : vector<16x48xf32> to vector<16x4xf32>
    %965 = arith.truncf %964 : vector<16x4xf32> to vector<16x4xbf16>
    %cst_302 = arith.constant dense<0.000000e+00> : vector<16x16xf32>
    %966 = tpu.matmul %961, %963, %cst_302 {dimension_numbers = #tpu.dot_dimension_numbers<[1], [1], [0], [0], [0, 0, 1, 0], [], []>} : vector<16x4xbf16>, vector<16x4xbf16>, vector<16x16xf32> -> vector<16x16xf32>
    %967 = arith.addf %966, %0 : vector<16x16xf32>
    %cst_303 = arith.constant dense<0xFF800000> : vector<16xf32>
    %968 = vector.multi_reduction <maximumf>, %967, %cst_303 [1] : vector<16x16xf32> to vector<16xf32>
    %969 = vector.shape_cast %968 : vector<16xf32> to vector<16x1xf32>
    %970 = vector.broadcast %969 : vector<16x1xf32> to vector<16x16xf32>
    %971 = arith.subf %967, %970 : vector<16x16xf32>
    %972 = math.exp %971 : vector<16x16xf32>
    %cst_304 = arith.constant dense<0.000000e+00> : vector<16xf32>
    %973 = vector.multi_reduction <add>, %972, %cst_304 [1] : vector<16x16xf32> to vector<16xf32>
    %974 = vector.shape_cast %973 : vector<16xf32> to vector<16x1xf32>
    %975 = tpu.reciprocal %974 {approx = true} : vector<16x1xf32> -> vector<16x1xf32>
    %976 = vector.broadcast %975 : vector<16x1xf32> to vector<16x16xf32>
    %977 = arith.mulf %972, %976 : vector<16x16xf32>
    %978 = arith.truncf %977 : vector<16x16xf32> to vector<16x16xbf16>
    %cst_305 = arith.constant dense<0.000000e+00> : vector<16x4xf32>
    %979 = tpu.matmul %978, %965, %cst_305 {dimension_numbers = #tpu.dot_dimension_numbers<[1], [0], [0], [1], [0, 0, 1, 1], [], []>} : vector<16x16xbf16>, vector<16x4xbf16>, vector<16x4xf32> -> vector<16x4xf32>
    %980 = vector.extract_strided_slice %939 {offsets = [0, 8], sizes = [16, 4], strides = [1, 1]} : vector<16x48xf32> to vector<16x4xf32>
    %981 = arith.truncf %980 : vector<16x4xf32> to vector<16x4xbf16>
    %982 = vector.extract_strided_slice %939 {offsets = [0, 24], sizes = [16, 4], strides = [1, 1]} : vector<16x48xf32> to vector<16x4xf32>
    %983 = arith.truncf %982 : vector<16x4xf32> to vector<16x4xbf16>
    %984 = vector.extract_strided_slice %939 {offsets = [0, 40], sizes = [16, 4], strides = [1, 1]} : vector<16x48xf32> to vector<16x4xf32>
    %985 = arith.truncf %984 : vector<16x4xf32> to vector<16x4xbf16>
    %cst_306 = arith.constant dense<0.000000e+00> : vector<16x16xf32>
    %986 = tpu.matmul %981, %983, %cst_306 {dimension_numbers = #tpu.dot_dimension_numbers<[1], [1], [0], [0], [0, 0, 1, 0], [], []>} : vector<16x4xbf16>, vector<16x4xbf16>, vector<16x16xf32> -> vector<16x16xf32>
    %987 = arith.addf %986, %0 : vector<16x16xf32>
    %cst_307 = arith.constant dense<0xFF800000> : vector<16xf32>
    %988 = vector.multi_reduction <maximumf>, %987, %cst_307 [1] : vector<16x16xf32> to vector<16xf32>
    %989 = vector.shape_cast %988 : vector<16xf32> to vector<16x1xf32>
    %990 = vector.broadcast %989 : vector<16x1xf32> to vector<16x16xf32>
    %991 = arith.subf %987, %990 : vector<16x16xf32>
    %992 = math.exp %991 : vector<16x16xf32>
    %cst_308 = arith.constant dense<0.000000e+00> : vector<16xf32>
    %993 = vector.multi_reduction <add>, %992, %cst_308 [1] : vector<16x16xf32> to vector<16xf32>
    %994 = vector.shape_cast %993 : vector<16xf32> to vector<16x1xf32>
    %995 = tpu.reciprocal %994 {approx = true} : vector<16x1xf32> -> vector<16x1xf32>
    %996 = vector.broadcast %995 : vector<16x1xf32> to vector<16x16xf32>
    %997 = arith.mulf %992, %996 : vector<16x16xf32>
    %998 = arith.truncf %997 : vector<16x16xf32> to vector<16x16xbf16>
    %cst_309 = arith.constant dense<0.000000e+00> : vector<16x4xf32>
    %999 = tpu.matmul %998, %985, %cst_309 {dimension_numbers = #tpu.dot_dimension_numbers<[1], [0], [0], [1], [0, 0, 1, 1], [], []>} : vector<16x16xbf16>, vector<16x4xbf16>, vector<16x4xf32> -> vector<16x4xf32>
    %1000 = vector.extract_strided_slice %939 {offsets = [0, 12], sizes = [16, 4], strides = [1, 1]} : vector<16x48xf32> to vector<16x4xf32>
    %1001 = arith.truncf %1000 : vector<16x4xf32> to vector<16x4xbf16>
    %1002 = vector.extract_strided_slice %939 {offsets = [0, 28], sizes = [16, 4], strides = [1, 1]} : vector<16x48xf32> to vector<16x4xf32>
    %1003 = arith.truncf %1002 : vector<16x4xf32> to vector<16x4xbf16>
    %1004 = vector.extract_strided_slice %939 {offsets = [0, 44], sizes = [16, 4], strides = [1, 1]} : vector<16x48xf32> to vector<16x4xf32>
    %1005 = arith.truncf %1004 : vector<16x4xf32> to vector<16x4xbf16>
    %cst_310 = arith.constant dense<0.000000e+00> : vector<16x16xf32>
    %1006 = tpu.matmul %1001, %1003, %cst_310 {dimension_numbers = #tpu.dot_dimension_numbers<[1], [1], [0], [0], [0, 0, 1, 0], [], []>} : vector<16x4xbf16>, vector<16x4xbf16>, vector<16x16xf32> -> vector<16x16xf32>
    %1007 = arith.addf %1006, %0 : vector<16x16xf32>
    %cst_311 = arith.constant dense<0xFF800000> : vector<16xf32>
    %1008 = vector.multi_reduction <maximumf>, %1007, %cst_311 [1] : vector<16x16xf32> to vector<16xf32>
    %1009 = vector.shape_cast %1008 : vector<16xf32> to vector<16x1xf32>
    %1010 = vector.broadcast %1009 : vector<16x1xf32> to vector<16x16xf32>
    %1011 = arith.subf %1007, %1010 : vector<16x16xf32>
    %1012 = math.exp %1011 : vector<16x16xf32>
    %cst_312 = arith.constant dense<0.000000e+00> : vector<16xf32>
    %1013 = vector.multi_reduction <add>, %1012, %cst_312 [1] : vector<16x16xf32> to vector<16xf32>
    %1014 = vector.shape_cast %1013 : vector<16xf32> to vector<16x1xf32>
    %1015 = tpu.reciprocal %1014 {approx = true} : vector<16x1xf32> -> vector<16x1xf32>
    %1016 = vector.broadcast %1015 : vector<16x1xf32> to vector<16x16xf32>
    %1017 = arith.mulf %1012, %1016 : vector<16x16xf32>
    %1018 = arith.truncf %1017 : vector<16x16xf32> to vector<16x16xbf16>
    %cst_313 = arith.constant dense<0.000000e+00> : vector<16x4xf32>
    %1019 = tpu.matmul %1018, %1005, %cst_313 {dimension_numbers = #tpu.dot_dimension_numbers<[1], [0], [0], [1], [0, 0, 1, 1], [], []>} : vector<16x16xbf16>, vector<16x4xbf16>, vector<16x4xf32> -> vector<16x4xf32>
    %1020 = tpu.concatenate %959, %979, %999, %1019 in 1 : vector<16x4xf32>, vector<16x4xf32>, vector<16x4xf32>, vector<16x4xf32> -> vector<16x16xf32>
    %c48 = arith.constant 48 : index
    %c0_314 = arith.constant 0 : index
    %1021 = vector.load %arg9[%c48, %c0_314] : memref<144x64xbf16, #tpu.memory_space<vmem>>, vector<16x16xbf16>
    %1022 = arith.truncf %1020 : vector<16x16xf32> to vector<16x16xbf16>
    %cst_315 = arith.constant dense<0.000000e+00> : vector<16x16xf32>
    %1023 = tpu.matmul %1022, %1021, %cst_315 {dimension_numbers = #tpu.dot_dimension_numbers<[1], [0], [0], [1], [0, 0, 1, 1], [], []>} : vector<16x16xbf16>, vector<16x16xbf16>, vector<16x16xf32> -> vector<16x16xf32>
    %1024 = arith.addf %909, %1023 : vector<16x16xf32>
    %c20_316 = arith.constant 20 : index
    %c0_317 = arith.constant 0 : index
    %1025 = vector.load %arg10[%c20_316, %c0_317] : memref<27x64xf32, #tpu.memory_space<vmem>>, vector<1x16xf32>
    %1026 = vector.broadcast %1025 : vector<1x16xf32> to vector<16x16xf32>
    %1027 = arith.addf %1024, %1026 : vector<16x16xf32>
    %c21_318 = arith.constant 21 : index
    %c0_319 = arith.constant 0 : index
    %1028 = vector.load %arg10[%c21_318, %c0_319] : memref<27x64xf32, #tpu.memory_space<vmem>>, vector<1x16xf32>
    %c22_320 = arith.constant 22 : index
    %c0_321 = arith.constant 0 : index
    %1029 = vector.load %arg10[%c22_320, %c0_321] : memref<27x64xf32, #tpu.memory_space<vmem>>, vector<1x16xf32>
    %cst_322 = arith.constant dense<0.000000e+00> : vector<16xf32>
    %1030 = vector.multi_reduction <add>, %1027, %cst_322 [1] : vector<16x16xf32> to vector<16xf32>
    %1031 = vector.shape_cast %1030 : vector<16xf32> to vector<16x1xf32>
    %cst_323 = arith.constant 1.600000e+01 : f32
    %1032 = vector.broadcast %cst_323 : f32 to vector<16x1xf32>
    %1033 = arith.divf %1031, %1032 : vector<16x1xf32>
    %1034 = vector.broadcast %1033 : vector<16x1xf32> to vector<16x16xf32>
    %1035 = arith.subf %1027, %1034 : vector<16x16xf32>
    %1036 = arith.mulf %1035, %1035 : vector<16x16xf32>
    %cst_324 = arith.constant dense<0.000000e+00> : vector<16xf32>
    %1037 = vector.multi_reduction <add>, %1036, %cst_324 [1] : vector<16x16xf32> to vector<16xf32>
    %1038 = vector.shape_cast %1037 : vector<16xf32> to vector<16x1xf32>
    %cst_325 = arith.constant 1.600000e+01 : f32
    %1039 = vector.broadcast %cst_325 : f32 to vector<16x1xf32>
    %1040 = arith.divf %1038, %1039 : vector<16x1xf32>
    %1041 = vector.broadcast %1033 : vector<16x1xf32> to vector<16x16xf32>
    %1042 = arith.subf %1027, %1041 : vector<16x16xf32>
    %cst_326 = arith.constant 9.99999974E-6 : f32
    %1043 = vector.broadcast %cst_326 : f32 to vector<16x1xf32>
    %1044 = arith.addf %1040, %1043 : vector<16x1xf32>
    %1045 = math.rsqrt %1044 : vector<16x1xf32>
    %1046 = vector.broadcast %1045 : vector<16x1xf32> to vector<16x16xf32>
    %1047 = arith.mulf %1042, %1046 : vector<16x16xf32>
    %1048 = vector.broadcast %1028 : vector<1x16xf32> to vector<16x16xf32>
    %1049 = arith.mulf %1047, %1048 : vector<16x16xf32>
    %1050 = vector.broadcast %1029 : vector<1x16xf32> to vector<16x16xf32>
    %1051 = arith.addf %1049, %1050 : vector<16x16xf32>
    %c64_327 = arith.constant 64 : index
    %c0_328 = arith.constant 0 : index
    %1052 = vector.load %arg9[%c64_327, %c0_328] : memref<144x64xbf16, #tpu.memory_space<vmem>>, vector<16x64xbf16>
    %1053 = arith.truncf %1051 : vector<16x16xf32> to vector<16x16xbf16>
    %cst_329 = arith.constant dense<0.000000e+00> : vector<16x64xf32>
    %1054 = tpu.matmul %1053, %1052, %cst_329 {dimension_numbers = #tpu.dot_dimension_numbers<[1], [0], [0], [1], [0, 0, 1, 1], [], []>} : vector<16x16xbf16>, vector<16x64xbf16>, vector<16x64xf32> -> vector<16x64xf32>
    %c23_330 = arith.constant 23 : index
    %c0_331 = arith.constant 0 : index
    %1055 = vector.load %arg10[%c23_330, %c0_331] : memref<27x64xf32, #tpu.memory_space<vmem>>, vector<1x64xf32>
    %1056 = vector.broadcast %1055 : vector<1x64xf32> to vector<16x64xf32>
    %1057 = arith.addf %1054, %1056 : vector<16x64xf32>
    %1058 = arith.mulf %1057, %1057 : vector<16x64xf32>
    %1059 = arith.mulf %1057, %1058 : vector<16x64xf32>
    %cst_332 = arith.constant 4.471500e-02 : f32
    %1060 = vector.broadcast %cst_332 : f32 to vector<16x64xf32>
    %1061 = arith.mulf %1060, %1059 : vector<16x64xf32>
    %1062 = arith.addf %1057, %1061 : vector<16x64xf32>
    %cst_333 = arith.constant 0.797884583 : f32
    %1063 = vector.broadcast %cst_333 : f32 to vector<16x64xf32>
    %1064 = arith.mulf %1063, %1062 : vector<16x64xf32>
    %1065 = math.tanh %1064 : vector<16x64xf32>
    %cst_334 = arith.constant 1.000000e+00 : f32
    %1066 = vector.broadcast %cst_334 : f32 to vector<16x64xf32>
    %1067 = arith.addf %1066, %1065 : vector<16x64xf32>
    %cst_335 = arith.constant 5.000000e-01 : f32
    %1068 = vector.broadcast %cst_335 : f32 to vector<16x64xf32>
    %1069 = arith.mulf %1068, %1067 : vector<16x64xf32>
    %1070 = arith.mulf %1057, %1069 : vector<16x64xf32>
    %c80 = arith.constant 80 : index
    %c0_336 = arith.constant 0 : index
    %1071 = vector.load %arg9[%c80, %c0_336] : memref<144x64xbf16, #tpu.memory_space<vmem>>, vector<64x16xbf16>
    %1072 = arith.truncf %1070 : vector<16x64xf32> to vector<16x64xbf16>
    %cst_337 = arith.constant dense<0.000000e+00> : vector<16x16xf32>
    %1073 = tpu.matmul %1072, %1071, %cst_337 {dimension_numbers = #tpu.dot_dimension_numbers<[1], [0], [0], [1], [0, 0, 1, 1], [], []>} : vector<16x64xbf16>, vector<64x16xbf16>, vector<16x16xf32> -> vector<16x16xf32>
    %1074 = arith.addf %1027, %1073 : vector<16x16xf32>
    %c24_338 = arith.constant 24 : index
    %c0_339 = arith.constant 0 : index
    %1075 = vector.load %arg10[%c24_338, %c0_339] : memref<27x64xf32, #tpu.memory_space<vmem>>, vector<1x16xf32>
    %1076 = vector.broadcast %1075 : vector<1x16xf32> to vector<16x16xf32>
    %1077 = arith.addf %1074, %1076 : vector<16x16xf32>
    %c25_340 = arith.constant 25 : index
    %c0_341 = arith.constant 0 : index
    %1078 = vector.load %arg10[%c25_340, %c0_341] : memref<27x64xf32, #tpu.memory_space<vmem>>, vector<1x16xf32>
    %c26_342 = arith.constant 26 : index
    %c0_343 = arith.constant 0 : index
    %1079 = vector.load %arg10[%c26_342, %c0_343] : memref<27x64xf32, #tpu.memory_space<vmem>>, vector<1x16xf32>
    %cst_344 = arith.constant dense<0.000000e+00> : vector<16xf32>
    %1080 = vector.multi_reduction <add>, %1077, %cst_344 [1] : vector<16x16xf32> to vector<16xf32>
    %1081 = vector.shape_cast %1080 : vector<16xf32> to vector<16x1xf32>
    %cst_345 = arith.constant 1.600000e+01 : f32
    %1082 = vector.broadcast %cst_345 : f32 to vector<16x1xf32>
    %1083 = arith.divf %1081, %1082 : vector<16x1xf32>
    %1084 = vector.broadcast %1083 : vector<16x1xf32> to vector<16x16xf32>
    %1085 = arith.subf %1077, %1084 : vector<16x16xf32>
    %1086 = arith.mulf %1085, %1085 : vector<16x16xf32>
    %cst_346 = arith.constant dense<0.000000e+00> : vector<16xf32>
    %1087 = vector.multi_reduction <add>, %1086, %cst_346 [1] : vector<16x16xf32> to vector<16xf32>
    %1088 = vector.shape_cast %1087 : vector<16xf32> to vector<16x1xf32>
    %cst_347 = arith.constant 1.600000e+01 : f32
    %1089 = vector.broadcast %cst_347 : f32 to vector<16x1xf32>
    %1090 = arith.divf %1088, %1089 : vector<16x1xf32>
    %1091 = vector.broadcast %1083 : vector<16x1xf32> to vector<16x16xf32>
    %1092 = arith.subf %1077, %1091 : vector<16x16xf32>
    %cst_348 = arith.constant 9.99999974E-6 : f32
    %1093 = vector.broadcast %cst_348 : f32 to vector<16x1xf32>
    %1094 = arith.addf %1090, %1093 : vector<16x1xf32>
    %1095 = math.rsqrt %1094 : vector<16x1xf32>
    %1096 = vector.broadcast %1095 : vector<16x1xf32> to vector<16x16xf32>
    %1097 = arith.mulf %1092, %1096 : vector<16x16xf32>
    %1098 = vector.broadcast %1078 : vector<1x16xf32> to vector<16x16xf32>
    %1099 = arith.mulf %1097, %1098 : vector<16x16xf32>
    %1100 = vector.broadcast %1079 : vector<1x16xf32> to vector<16x16xf32>
    %1101 = arith.addf %1099, %1100 : vector<16x16xf32>
    %c0_349 = arith.constant 0 : index
    %c0_350 = arith.constant 0 : index
    %1102 = vector.load %arg1[%c0_349, %c0_350] : memref<16x64xf32, #tpu.memory_space<vmem>>, vector<16x64xf32>
    %1103 = arith.addf %1102, %901 : vector<16x64xf32>
    %c16_351 = arith.constant 16 : index
    %c0_352 = arith.constant 0 : index
    %1104 = vector.load %arg12[%c16_351, %c0_352] : memref<29x256xf32, #tpu.memory_space<vmem>>, vector<1x64xf32>
    %c17_353 = arith.constant 17 : index
    %c0_354 = arith.constant 0 : index
    %1105 = vector.load %arg12[%c17_353, %c0_354] : memref<29x256xf32, #tpu.memory_space<vmem>>, vector<1x64xf32>
    %cst_355 = arith.constant dense<0.000000e+00> : vector<16xf32>
    %1106 = vector.multi_reduction <add>, %1103, %cst_355 [1] : vector<16x64xf32> to vector<16xf32>
    %1107 = vector.shape_cast %1106 : vector<16xf32> to vector<16x1xf32>
    %cst_356 = arith.constant 6.400000e+01 : f32
    %1108 = vector.broadcast %cst_356 : f32 to vector<16x1xf32>
    %1109 = arith.divf %1107, %1108 : vector<16x1xf32>
    %1110 = vector.broadcast %1109 : vector<16x1xf32> to vector<16x64xf32>
    %1111 = arith.subf %1103, %1110 : vector<16x64xf32>
    %1112 = arith.mulf %1111, %1111 : vector<16x64xf32>
    %cst_357 = arith.constant dense<0.000000e+00> : vector<16xf32>
    %1113 = vector.multi_reduction <add>, %1112, %cst_357 [1] : vector<16x64xf32> to vector<16xf32>
    %1114 = vector.shape_cast %1113 : vector<16xf32> to vector<16x1xf32>
    %cst_358 = arith.constant 6.400000e+01 : f32
    %1115 = vector.broadcast %cst_358 : f32 to vector<16x1xf32>
    %1116 = arith.divf %1114, %1115 : vector<16x1xf32>
    %1117 = vector.broadcast %1109 : vector<16x1xf32> to vector<16x64xf32>
    %1118 = arith.subf %1103, %1117 : vector<16x64xf32>
    %cst_359 = arith.constant 9.99999974E-6 : f32
    %1119 = vector.broadcast %cst_359 : f32 to vector<16x1xf32>
    %1120 = arith.addf %1116, %1119 : vector<16x1xf32>
    %1121 = math.rsqrt %1120 : vector<16x1xf32>
    %1122 = vector.broadcast %1121 : vector<16x1xf32> to vector<16x64xf32>
    %1123 = arith.mulf %1118, %1122 : vector<16x64xf32>
    %1124 = vector.broadcast %1104 : vector<1x64xf32> to vector<16x64xf32>
    %1125 = arith.mulf %1123, %1124 : vector<16x64xf32>
    %1126 = vector.broadcast %1105 : vector<1x64xf32> to vector<16x64xf32>
    %1127 = arith.addf %1125, %1126 : vector<16x64xf32>
    %c0_360 = arith.constant 0 : index
    %c0_361 = arith.constant 0 : index
    %1128 = vector.load %arg11[%c0_360, %c0_361] : memref<416x256xbf16, #tpu.memory_space<vmem>>, vector<64x32xbf16>
    %1129 = arith.truncf %1127 : vector<16x64xf32> to vector<16x64xbf16>
    %cst_362 = arith.constant dense<0.000000e+00> : vector<16x32xf32>
    %1130 = tpu.matmul %1129, %1128, %cst_362 {dimension_numbers = #tpu.dot_dimension_numbers<[1], [0], [0], [1], [0, 0, 1, 1], [], []>} : vector<16x64xbf16>, vector<64x32xbf16>, vector<16x32xf32> -> vector<16x32xf32>
    %c18_363 = arith.constant 18 : index
    %c0_364 = arith.constant 0 : index
    %1131 = vector.load %arg12[%c18_363, %c0_364] : memref<29x256xf32, #tpu.memory_space<vmem>>, vector<1x32xf32>
    %1132 = vector.broadcast %1131 : vector<1x32xf32> to vector<16x32xf32>
    %1133 = arith.addf %1130, %1132 : vector<16x32xf32>
    %c0_365 = arith.constant 0 : index
    %c0_366 = arith.constant 0 : index
    %1134 = vector.load %arg12[%c0_365, %c0_366] : memref<29x256xf32, #tpu.memory_space<vmem>>, vector<16x32xf32>
    %1135 = arith.addf %1133, %1134 : vector<16x32xf32>
    %c19_367 = arith.constant 19 : index
    %c0_368 = arith.constant 0 : index
    %1136 = vector.load %arg12[%c19_367, %c0_368] : memref<29x256xf32, #tpu.memory_space<vmem>>, vector<1x32xf32>
    %c20_369 = arith.constant 20 : index
    %c0_370 = arith.constant 0 : index
    %1137 = vector.load %arg12[%c20_369, %c0_370] : memref<29x256xf32, #tpu.memory_space<vmem>>, vector<1x32xf32>
    %cst_371 = arith.constant dense<0.000000e+00> : vector<16xf32>
    %1138 = vector.multi_reduction <add>, %1135, %cst_371 [1] : vector<16x32xf32> to vector<16xf32>
    %1139 = vector.shape_cast %1138 : vector<16xf32> to vector<16x1xf32>
    %cst_372 = arith.constant 3.200000e+01 : f32
    %1140 = vector.broadcast %cst_372 : f32 to vector<16x1xf32>
    %1141 = arith.divf %1139, %1140 : vector<16x1xf32>
    %1142 = vector.broadcast %1141 : vector<16x1xf32> to vector<16x32xf32>
    %1143 = arith.subf %1135, %1142 : vector<16x32xf32>
    %1144 = arith.mulf %1143, %1143 : vector<16x32xf32>
    %cst_373 = arith.constant dense<0.000000e+00> : vector<16xf32>
    %1145 = vector.multi_reduction <add>, %1144, %cst_373 [1] : vector<16x32xf32> to vector<16xf32>
    %1146 = vector.shape_cast %1145 : vector<16xf32> to vector<16x1xf32>
    %cst_374 = arith.constant 3.200000e+01 : f32
    %1147 = vector.broadcast %cst_374 : f32 to vector<16x1xf32>
    %1148 = arith.divf %1146, %1147 : vector<16x1xf32>
    %1149 = vector.broadcast %1141 : vector<16x1xf32> to vector<16x32xf32>
    %1150 = arith.subf %1135, %1149 : vector<16x32xf32>
    %cst_375 = arith.constant 9.99999974E-6 : f32
    %1151 = vector.broadcast %cst_375 : f32 to vector<16x1xf32>
    %1152 = arith.addf %1148, %1151 : vector<16x1xf32>
    %1153 = math.rsqrt %1152 : vector<16x1xf32>
    %1154 = vector.broadcast %1153 : vector<16x1xf32> to vector<16x32xf32>
    %1155 = arith.mulf %1150, %1154 : vector<16x32xf32>
    %1156 = vector.broadcast %1136 : vector<1x32xf32> to vector<16x32xf32>
    %1157 = arith.mulf %1155, %1156 : vector<16x32xf32>
    %1158 = vector.broadcast %1137 : vector<1x32xf32> to vector<16x32xf32>
    %1159 = arith.addf %1157, %1158 : vector<16x32xf32>
    %c64_376 = arith.constant 64 : index
    %c0_377 = arith.constant 0 : index
    %1160 = vector.load %arg11[%c64_376, %c0_377] : memref<416x256xbf16, #tpu.memory_space<vmem>>, vector<32x96xbf16>
    %1161 = arith.truncf %1159 : vector<16x32xf32> to vector<16x32xbf16>
    %cst_378 = arith.constant dense<0.000000e+00> : vector<16x96xf32>
    %1162 = tpu.matmul %1161, %1160, %cst_378 {dimension_numbers = #tpu.dot_dimension_numbers<[1], [0], [0], [1], [0, 0, 1, 1], [], []>} : vector<16x32xbf16>, vector<32x96xbf16>, vector<16x96xf32> -> vector<16x96xf32>
    %c21_379 = arith.constant 21 : index
    %c0_380 = arith.constant 0 : index
    %1163 = vector.load %arg12[%c21_379, %c0_380] : memref<29x256xf32, #tpu.memory_space<vmem>>, vector<1x96xf32>
    %1164 = vector.broadcast %1163 : vector<1x96xf32> to vector<16x96xf32>
    %1165 = arith.addf %1162, %1164 : vector<16x96xf32>
    %1166 = vector.extract_strided_slice %1165 {offsets = [0, 0], sizes = [16, 8], strides = [1, 1]} : vector<16x96xf32> to vector<16x8xf32>
    %1167 = arith.truncf %1166 : vector<16x8xf32> to vector<16x8xbf16>
    %1168 = vector.extract_strided_slice %1165 {offsets = [0, 32], sizes = [16, 8], strides = [1, 1]} : vector<16x96xf32> to vector<16x8xf32>
    %1169 = arith.truncf %1168 : vector<16x8xf32> to vector<16x8xbf16>
    %1170 = vector.extract_strided_slice %1165 {offsets = [0, 64], sizes = [16, 8], strides = [1, 1]} : vector<16x96xf32> to vector<16x8xf32>
    %1171 = arith.truncf %1170 : vector<16x8xf32> to vector<16x8xbf16>
    %cst_381 = arith.constant dense<0.000000e+00> : vector<16x16xf32>
    %1172 = tpu.matmul %1167, %1169, %cst_381 {dimension_numbers = #tpu.dot_dimension_numbers<[1], [1], [0], [0], [0, 0, 1, 0], [], []>} : vector<16x8xbf16>, vector<16x8xbf16>, vector<16x16xf32> -> vector<16x16xf32>
    %1173 = arith.addf %1172, %0 : vector<16x16xf32>
    %cst_382 = arith.constant dense<0xFF800000> : vector<16xf32>
    %1174 = vector.multi_reduction <maximumf>, %1173, %cst_382 [1] : vector<16x16xf32> to vector<16xf32>
    %1175 = vector.shape_cast %1174 : vector<16xf32> to vector<16x1xf32>
    %1176 = vector.broadcast %1175 : vector<16x1xf32> to vector<16x16xf32>
    %1177 = arith.subf %1173, %1176 : vector<16x16xf32>
    %1178 = math.exp %1177 : vector<16x16xf32>
    %cst_383 = arith.constant dense<0.000000e+00> : vector<16xf32>
    %1179 = vector.multi_reduction <add>, %1178, %cst_383 [1] : vector<16x16xf32> to vector<16xf32>
    %1180 = vector.shape_cast %1179 : vector<16xf32> to vector<16x1xf32>
    %1181 = tpu.reciprocal %1180 {approx = true} : vector<16x1xf32> -> vector<16x1xf32>
    %1182 = vector.broadcast %1181 : vector<16x1xf32> to vector<16x16xf32>
    %1183 = arith.mulf %1178, %1182 : vector<16x16xf32>
    %1184 = arith.truncf %1183 : vector<16x16xf32> to vector<16x16xbf16>
    %cst_384 = arith.constant dense<0.000000e+00> : vector<16x8xf32>
    %1185 = tpu.matmul %1184, %1171, %cst_384 {dimension_numbers = #tpu.dot_dimension_numbers<[1], [0], [0], [1], [0, 0, 1, 1], [], []>} : vector<16x16xbf16>, vector<16x8xbf16>, vector<16x8xf32> -> vector<16x8xf32>
    %1186 = vector.extract_strided_slice %1165 {offsets = [0, 8], sizes = [16, 8], strides = [1, 1]} : vector<16x96xf32> to vector<16x8xf32>
    %1187 = arith.truncf %1186 : vector<16x8xf32> to vector<16x8xbf16>
    %1188 = vector.extract_strided_slice %1165 {offsets = [0, 40], sizes = [16, 8], strides = [1, 1]} : vector<16x96xf32> to vector<16x8xf32>
    %1189 = arith.truncf %1188 : vector<16x8xf32> to vector<16x8xbf16>
    %1190 = vector.extract_strided_slice %1165 {offsets = [0, 72], sizes = [16, 8], strides = [1, 1]} : vector<16x96xf32> to vector<16x8xf32>
    %1191 = arith.truncf %1190 : vector<16x8xf32> to vector<16x8xbf16>
    %cst_385 = arith.constant dense<0.000000e+00> : vector<16x16xf32>
    %1192 = tpu.matmul %1187, %1189, %cst_385 {dimension_numbers = #tpu.dot_dimension_numbers<[1], [1], [0], [0], [0, 0, 1, 0], [], []>} : vector<16x8xbf16>, vector<16x8xbf16>, vector<16x16xf32> -> vector<16x16xf32>
    %1193 = arith.addf %1192, %0 : vector<16x16xf32>
    %cst_386 = arith.constant dense<0xFF800000> : vector<16xf32>
    %1194 = vector.multi_reduction <maximumf>, %1193, %cst_386 [1] : vector<16x16xf32> to vector<16xf32>
    %1195 = vector.shape_cast %1194 : vector<16xf32> to vector<16x1xf32>
    %1196 = vector.broadcast %1195 : vector<16x1xf32> to vector<16x16xf32>
    %1197 = arith.subf %1193, %1196 : vector<16x16xf32>
    %1198 = math.exp %1197 : vector<16x16xf32>
    %cst_387 = arith.constant dense<0.000000e+00> : vector<16xf32>
    %1199 = vector.multi_reduction <add>, %1198, %cst_387 [1] : vector<16x16xf32> to vector<16xf32>
    %1200 = vector.shape_cast %1199 : vector<16xf32> to vector<16x1xf32>
    %1201 = tpu.reciprocal %1200 {approx = true} : vector<16x1xf32> -> vector<16x1xf32>
    %1202 = vector.broadcast %1201 : vector<16x1xf32> to vector<16x16xf32>
    %1203 = arith.mulf %1198, %1202 : vector<16x16xf32>
    %1204 = arith.truncf %1203 : vector<16x16xf32> to vector<16x16xbf16>
    %cst_388 = arith.constant dense<0.000000e+00> : vector<16x8xf32>
    %1205 = tpu.matmul %1204, %1191, %cst_388 {dimension_numbers = #tpu.dot_dimension_numbers<[1], [0], [0], [1], [0, 0, 1, 1], [], []>} : vector<16x16xbf16>, vector<16x8xbf16>, vector<16x8xf32> -> vector<16x8xf32>
    %1206 = vector.extract_strided_slice %1165 {offsets = [0, 16], sizes = [16, 8], strides = [1, 1]} : vector<16x96xf32> to vector<16x8xf32>
    %1207 = arith.truncf %1206 : vector<16x8xf32> to vector<16x8xbf16>
    %1208 = vector.extract_strided_slice %1165 {offsets = [0, 48], sizes = [16, 8], strides = [1, 1]} : vector<16x96xf32> to vector<16x8xf32>
    %1209 = arith.truncf %1208 : vector<16x8xf32> to vector<16x8xbf16>
    %1210 = vector.extract_strided_slice %1165 {offsets = [0, 80], sizes = [16, 8], strides = [1, 1]} : vector<16x96xf32> to vector<16x8xf32>
    %1211 = arith.truncf %1210 : vector<16x8xf32> to vector<16x8xbf16>
    %cst_389 = arith.constant dense<0.000000e+00> : vector<16x16xf32>
    %1212 = tpu.matmul %1207, %1209, %cst_389 {dimension_numbers = #tpu.dot_dimension_numbers<[1], [1], [0], [0], [0, 0, 1, 0], [], []>} : vector<16x8xbf16>, vector<16x8xbf16>, vector<16x16xf32> -> vector<16x16xf32>
    %1213 = arith.addf %1212, %0 : vector<16x16xf32>
    %cst_390 = arith.constant dense<0xFF800000> : vector<16xf32>
    %1214 = vector.multi_reduction <maximumf>, %1213, %cst_390 [1] : vector<16x16xf32> to vector<16xf32>
    %1215 = vector.shape_cast %1214 : vector<16xf32> to vector<16x1xf32>
    %1216 = vector.broadcast %1215 : vector<16x1xf32> to vector<16x16xf32>
    %1217 = arith.subf %1213, %1216 : vector<16x16xf32>
    %1218 = math.exp %1217 : vector<16x16xf32>
    %cst_391 = arith.constant dense<0.000000e+00> : vector<16xf32>
    %1219 = vector.multi_reduction <add>, %1218, %cst_391 [1] : vector<16x16xf32> to vector<16xf32>
    %1220 = vector.shape_cast %1219 : vector<16xf32> to vector<16x1xf32>
    %1221 = tpu.reciprocal %1220 {approx = true} : vector<16x1xf32> -> vector<16x1xf32>
    %1222 = vector.broadcast %1221 : vector<16x1xf32> to vector<16x16xf32>
    %1223 = arith.mulf %1218, %1222 : vector<16x16xf32>
    %1224 = arith.truncf %1223 : vector<16x16xf32> to vector<16x16xbf16>
    %cst_392 = arith.constant dense<0.000000e+00> : vector<16x8xf32>
    %1225 = tpu.matmul %1224, %1211, %cst_392 {dimension_numbers = #tpu.dot_dimension_numbers<[1], [0], [0], [1], [0, 0, 1, 1], [], []>} : vector<16x16xbf16>, vector<16x8xbf16>, vector<16x8xf32> -> vector<16x8xf32>
    %1226 = vector.extract_strided_slice %1165 {offsets = [0, 24], sizes = [16, 8], strides = [1, 1]} : vector<16x96xf32> to vector<16x8xf32>
    %1227 = arith.truncf %1226 : vector<16x8xf32> to vector<16x8xbf16>
    %1228 = vector.extract_strided_slice %1165 {offsets = [0, 56], sizes = [16, 8], strides = [1, 1]} : vector<16x96xf32> to vector<16x8xf32>
    %1229 = arith.truncf %1228 : vector<16x8xf32> to vector<16x8xbf16>
    %1230 = vector.extract_strided_slice %1165 {offsets = [0, 88], sizes = [16, 8], strides = [1, 1]} : vector<16x96xf32> to vector<16x8xf32>
    %1231 = arith.truncf %1230 : vector<16x8xf32> to vector<16x8xbf16>
    %cst_393 = arith.constant dense<0.000000e+00> : vector<16x16xf32>
    %1232 = tpu.matmul %1227, %1229, %cst_393 {dimension_numbers = #tpu.dot_dimension_numbers<[1], [1], [0], [0], [0, 0, 1, 0], [], []>} : vector<16x8xbf16>, vector<16x8xbf16>, vector<16x16xf32> -> vector<16x16xf32>
    %1233 = arith.addf %1232, %0 : vector<16x16xf32>
    %cst_394 = arith.constant dense<0xFF800000> : vector<16xf32>
    %1234 = vector.multi_reduction <maximumf>, %1233, %cst_394 [1] : vector<16x16xf32> to vector<16xf32>
    %1235 = vector.shape_cast %1234 : vector<16xf32> to vector<16x1xf32>
    %1236 = vector.broadcast %1235 : vector<16x1xf32> to vector<16x16xf32>
    %1237 = arith.subf %1233, %1236 : vector<16x16xf32>
    %1238 = math.exp %1237 : vector<16x16xf32>
    %cst_395 = arith.constant dense<0.000000e+00> : vector<16xf32>
    %1239 = vector.multi_reduction <add>, %1238, %cst_395 [1] : vector<16x16xf32> to vector<16xf32>
    %1240 = vector.shape_cast %1239 : vector<16xf32> to vector<16x1xf32>
    %1241 = tpu.reciprocal %1240 {approx = true} : vector<16x1xf32> -> vector<16x1xf32>
    %1242 = vector.broadcast %1241 : vector<16x1xf32> to vector<16x16xf32>
    %1243 = arith.mulf %1238, %1242 : vector<16x16xf32>
    %1244 = arith.truncf %1243 : vector<16x16xf32> to vector<16x16xbf16>
    %cst_396 = arith.constant dense<0.000000e+00> : vector<16x8xf32>
    %1245 = tpu.matmul %1244, %1231, %cst_396 {dimension_numbers = #tpu.dot_dimension_numbers<[1], [0], [0], [1], [0, 0, 1, 1], [], []>} : vector<16x16xbf16>, vector<16x8xbf16>, vector<16x8xf32> -> vector<16x8xf32>
    %1246 = tpu.concatenate %1185, %1205, %1225, %1245 in 1 : vector<16x8xf32>, vector<16x8xf32>, vector<16x8xf32>, vector<16x8xf32> -> vector<16x32xf32>
    %c96_397 = arith.constant 96 : index
    %c0_398 = arith.constant 0 : index
    %1247 = vector.load %arg11[%c96_397, %c0_398] : memref<416x256xbf16, #tpu.memory_space<vmem>>, vector<32x32xbf16>
    %1248 = arith.truncf %1246 : vector<16x32xf32> to vector<16x32xbf16>
    %cst_399 = arith.constant dense<0.000000e+00> : vector<16x32xf32>
    %1249 = tpu.matmul %1248, %1247, %cst_399 {dimension_numbers = #tpu.dot_dimension_numbers<[1], [0], [0], [1], [0, 0, 1, 1], [], []>} : vector<16x32xbf16>, vector<32x32xbf16>, vector<16x32xf32> -> vector<16x32xf32>
    %1250 = arith.addf %1135, %1249 : vector<16x32xf32>
    %c22_400 = arith.constant 22 : index
    %c0_401 = arith.constant 0 : index
    %1251 = vector.load %arg12[%c22_400, %c0_401] : memref<29x256xf32, #tpu.memory_space<vmem>>, vector<1x32xf32>
    %1252 = vector.broadcast %1251 : vector<1x32xf32> to vector<16x32xf32>
    %1253 = arith.addf %1250, %1252 : vector<16x32xf32>
    %c23_402 = arith.constant 23 : index
    %c0_403 = arith.constant 0 : index
    %1254 = vector.load %arg12[%c23_402, %c0_403] : memref<29x256xf32, #tpu.memory_space<vmem>>, vector<1x32xf32>
    %c24_404 = arith.constant 24 : index
    %c0_405 = arith.constant 0 : index
    %1255 = vector.load %arg12[%c24_404, %c0_405] : memref<29x256xf32, #tpu.memory_space<vmem>>, vector<1x32xf32>
    %cst_406 = arith.constant dense<0.000000e+00> : vector<16xf32>
    %1256 = vector.multi_reduction <add>, %1253, %cst_406 [1] : vector<16x32xf32> to vector<16xf32>
    %1257 = vector.shape_cast %1256 : vector<16xf32> to vector<16x1xf32>
    %cst_407 = arith.constant 3.200000e+01 : f32
    %1258 = vector.broadcast %cst_407 : f32 to vector<16x1xf32>
    %1259 = arith.divf %1257, %1258 : vector<16x1xf32>
    %1260 = vector.broadcast %1259 : vector<16x1xf32> to vector<16x32xf32>
    %1261 = arith.subf %1253, %1260 : vector<16x32xf32>
    %1262 = arith.mulf %1261, %1261 : vector<16x32xf32>
    %cst_408 = arith.constant dense<0.000000e+00> : vector<16xf32>
    %1263 = vector.multi_reduction <add>, %1262, %cst_408 [1] : vector<16x32xf32> to vector<16xf32>
    %1264 = vector.shape_cast %1263 : vector<16xf32> to vector<16x1xf32>
    %cst_409 = arith.constant 3.200000e+01 : f32
    %1265 = vector.broadcast %cst_409 : f32 to vector<16x1xf32>
    %1266 = arith.divf %1264, %1265 : vector<16x1xf32>
    %1267 = vector.broadcast %1259 : vector<16x1xf32> to vector<16x32xf32>
    %1268 = arith.subf %1253, %1267 : vector<16x32xf32>
    %cst_410 = arith.constant 9.99999974E-6 : f32
    %1269 = vector.broadcast %cst_410 : f32 to vector<16x1xf32>
    %1270 = arith.addf %1266, %1269 : vector<16x1xf32>
    %1271 = math.rsqrt %1270 : vector<16x1xf32>
    %1272 = vector.broadcast %1271 : vector<16x1xf32> to vector<16x32xf32>
    %1273 = arith.mulf %1268, %1272 : vector<16x32xf32>
    %1274 = vector.broadcast %1254 : vector<1x32xf32> to vector<16x32xf32>
    %1275 = arith.mulf %1273, %1274 : vector<16x32xf32>
    %1276 = vector.broadcast %1255 : vector<1x32xf32> to vector<16x32xf32>
    %1277 = arith.addf %1275, %1276 : vector<16x32xf32>
    %c128_411 = arith.constant 128 : index
    %c0_412 = arith.constant 0 : index
    %1278 = vector.load %arg11[%c128_411, %c0_412] : memref<416x256xbf16, #tpu.memory_space<vmem>>, vector<32x256xbf16>
    %1279 = arith.truncf %1277 : vector<16x32xf32> to vector<16x32xbf16>
    %cst_413 = arith.constant dense<0.000000e+00> : vector<16x256xf32>
    %1280 = tpu.matmul %1279, %1278, %cst_413 {dimension_numbers = #tpu.dot_dimension_numbers<[1], [0], [0], [1], [0, 0, 1, 1], [], []>} : vector<16x32xbf16>, vector<32x256xbf16>, vector<16x256xf32> -> vector<16x256xf32>
    %c25_414 = arith.constant 25 : index
    %c0_415 = arith.constant 0 : index
    %1281 = vector.load %arg12[%c25_414, %c0_415] : memref<29x256xf32, #tpu.memory_space<vmem>>, vector<1x256xf32>
    %1282 = vector.broadcast %1281 : vector<1x256xf32> to vector<16x256xf32>
    %1283 = arith.addf %1280, %1282 : vector<16x256xf32>
    %1284 = arith.mulf %1283, %1283 : vector<16x256xf32>
    %1285 = arith.mulf %1283, %1284 : vector<16x256xf32>
    %cst_416 = arith.constant 4.471500e-02 : f32
    %1286 = vector.broadcast %cst_416 : f32 to vector<16x256xf32>
    %1287 = arith.mulf %1286, %1285 : vector<16x256xf32>
    %1288 = arith.addf %1283, %1287 : vector<16x256xf32>
    %cst_417 = arith.constant 0.797884583 : f32
    %1289 = vector.broadcast %cst_417 : f32 to vector<16x256xf32>
    %1290 = arith.mulf %1289, %1288 : vector<16x256xf32>
    %1291 = math.tanh %1290 : vector<16x256xf32>
    %cst_418 = arith.constant 1.000000e+00 : f32
    %1292 = vector.broadcast %cst_418 : f32 to vector<16x256xf32>
    %1293 = arith.addf %1292, %1291 : vector<16x256xf32>
    %cst_419 = arith.constant 5.000000e-01 : f32
    %1294 = vector.broadcast %cst_419 : f32 to vector<16x256xf32>
    %1295 = arith.mulf %1294, %1293 : vector<16x256xf32>
    %1296 = arith.mulf %1283, %1295 : vector<16x256xf32>
    %c160 = arith.constant 160 : index
    %c0_420 = arith.constant 0 : index
    %1297 = vector.load %arg11[%c160, %c0_420] : memref<416x256xbf16, #tpu.memory_space<vmem>>, vector<256x32xbf16>
    %1298 = arith.truncf %1296 : vector<16x256xf32> to vector<16x256xbf16>
    %cst_421 = arith.constant dense<0.000000e+00> : vector<16x32xf32>
    %1299 = tpu.matmul %1298, %1297, %cst_421 {dimension_numbers = #tpu.dot_dimension_numbers<[1], [0], [0], [1], [0, 0, 1, 1], [], []>} : vector<16x256xbf16>, vector<256x32xbf16>, vector<16x32xf32> -> vector<16x32xf32>
    %1300 = arith.addf %1253, %1299 : vector<16x32xf32>
    %c26_422 = arith.constant 26 : index
    %c0_423 = arith.constant 0 : index
    %1301 = vector.load %arg12[%c26_422, %c0_423] : memref<29x256xf32, #tpu.memory_space<vmem>>, vector<1x32xf32>
    %1302 = vector.broadcast %1301 : vector<1x32xf32> to vector<16x32xf32>
    %1303 = arith.addf %1300, %1302 : vector<16x32xf32>
    %c27_424 = arith.constant 27 : index
    %c0_425 = arith.constant 0 : index
    %1304 = vector.load %arg12[%c27_424, %c0_425] : memref<29x256xf32, #tpu.memory_space<vmem>>, vector<1x32xf32>
    %c28_426 = arith.constant 28 : index
    %c0_427 = arith.constant 0 : index
    %1305 = vector.load %arg12[%c28_426, %c0_427] : memref<29x256xf32, #tpu.memory_space<vmem>>, vector<1x32xf32>
    %cst_428 = arith.constant dense<0.000000e+00> : vector<16xf32>
    %1306 = vector.multi_reduction <add>, %1303, %cst_428 [1] : vector<16x32xf32> to vector<16xf32>
    %1307 = vector.shape_cast %1306 : vector<16xf32> to vector<16x1xf32>
    %cst_429 = arith.constant 3.200000e+01 : f32
    %1308 = vector.broadcast %cst_429 : f32 to vector<16x1xf32>
    %1309 = arith.divf %1307, %1308 : vector<16x1xf32>
    %1310 = vector.broadcast %1309 : vector<16x1xf32> to vector<16x32xf32>
    %1311 = arith.subf %1303, %1310 : vector<16x32xf32>
    %1312 = arith.mulf %1311, %1311 : vector<16x32xf32>
    %cst_430 = arith.constant dense<0.000000e+00> : vector<16xf32>
    %1313 = vector.multi_reduction <add>, %1312, %cst_430 [1] : vector<16x32xf32> to vector<16xf32>
    %1314 = vector.shape_cast %1313 : vector<16xf32> to vector<16x1xf32>
    %cst_431 = arith.constant 3.200000e+01 : f32
    %1315 = vector.broadcast %cst_431 : f32 to vector<16x1xf32>
    %1316 = arith.divf %1314, %1315 : vector<16x1xf32>
    %1317 = vector.broadcast %1309 : vector<16x1xf32> to vector<16x32xf32>
    %1318 = arith.subf %1303, %1317 : vector<16x32xf32>
    %cst_432 = arith.constant 9.99999974E-6 : f32
    %1319 = vector.broadcast %cst_432 : f32 to vector<16x1xf32>
    %1320 = arith.addf %1316, %1319 : vector<16x1xf32>
    %1321 = math.rsqrt %1320 : vector<16x1xf32>
    %1322 = vector.broadcast %1321 : vector<16x1xf32> to vector<16x32xf32>
    %1323 = arith.mulf %1318, %1322 : vector<16x32xf32>
    %1324 = vector.broadcast %1304 : vector<1x32xf32> to vector<16x32xf32>
    %1325 = arith.mulf %1323, %1324 : vector<16x32xf32>
    %1326 = vector.broadcast %1305 : vector<1x32xf32> to vector<16x32xf32>
    %1327 = arith.addf %1325, %1326 : vector<16x32xf32>
    %cst_433 = arith.constant 0.000000e+00 : f32
    %1328 = vector.broadcast %cst_433 : f32 to vector<16x48xf32>
    %cst_434 = arith.constant 0.000000e+00 : f32
    %1329 = vector.broadcast %cst_434 : f32 to vector<16x32xf32>
    %1330 = tpu.concatenate %1101, %1328, %1327, %1329 in 1 : vector<16x16xf32>, vector<16x48xf32>, vector<16x32xf32>, vector<16x32xf32> -> vector<16x128xf32>
    %c0_435 = arith.constant 0 : index
    %c0_436 = arith.constant 0 : index
    %1331 = vector.load %arg13[%c0_435, %c0_436] : memref<16x128xf32, #tpu.memory_space<vmem>>, vector<16x128xf32>
    tpu.vector_store %arg13[%c0_435, %c0_436], %1330 {strides = array<i32>} : memref<16x128xf32, #tpu.memory_space<vmem>>, vector<16x128xf32>,
    return
  }
}

</mosaic_0001>

<llo_original>
// kernel: _fwd_full.1
$region0: #{_fwd_full.1}
  #allocation0 [shape = 'u32[]', space=smem, size = 0x4, offset = 0x4, fixed_abs, tag = 'smem constant byte address 0x4 - core index']
  #allocation1 [shape = 'u32[72,128]{1,0:T(1,128)}', space=vmem, size = 0x9000, scoped, tag = 'internal scratch']
  %s0 = inlined_call_operand.hbm [shape: f32[16,2048], index: 0, kind: input, shape index: {}]
  %s1 = inlined_call_operand.hbm [shape: f32[16,64], index: 1, kind: input, shape index: {}]
  %s2 = inlined_call_operand.hbm [shape: f32[16,16], index: 2, kind: input, shape index: {}]
  %s3 = inlined_call_operand.vmem [shape: bf16[2048,96], index: 3, kind: input, shape index: {}]
  %s4 = inlined_call_operand.vmem [shape: f32[1,96], index: 4, kind: input, shape index: {}]
  %s5 = inlined_call_operand.hbm [shape: bf16[448,128], index: 5, kind: input, shape index: {}]
  %s6 = inlined_call_operand.hbm [shape: f32[34,128], index: 6, kind: input, shape index: {}]
  %s7 = inlined_call_operand.vmem [shape: bf16[1344,256], index: 7, kind: input, shape index: {}]
  %s8 = inlined_call_operand.vmem [shape: f32[42,256], index: 8, kind: input, shape index: {}]
  %s9 = inlined_call_operand.vmem [shape: bf16[144,64], index: 9, kind: input, shape index: {}]
  %s10 = inlined_call_operand.hbm [shape: f32[27,64], index: 10, kind: input, shape index: {}]
  %s11 = inlined_call_operand.vmem [shape: bf16[416,256], index: 11, kind: input, shape index: {}]
  %s12 = inlined_call_operand.vmem [shape: f32[29,256], index: 12, kind: input, shape index: {}]
  %s13 = inlined_call_operand.vmem [shape: f32[16,128], index: 13, kind: output, shape index: {}]
  %s14 = sld [smem:[#allocation0]]
  $region86: #{_fwd_full.1} parent=0
    _
  %s16 = ssub.s32 1, %s14
  %s17 = scalar_select 0, %s16, %s14
  $region1: #{_fwd_full.1} parent=0
    #allocation2 [shape = 'u8[131072]{0}', space=vmem, size = 0x20000, scoped, tag = 'input window, operand 0, single buffered']
    #allocation3 [shape = 's32[1]{0}', space=sflag, size = 0x4, scoped, tag = 'scoped memory for _fwd_full.1']
    #allocation4 [shape = 'u8[8192]{0}', space=vmem, size = 0x2000, scoped, tag = 'input window, operand 1, single buffered']
    #allocation5 [shape = 's32[1]{0}', space=sflag, size = 0x4, scoped, tag = 'scoped memory for _fwd_full.1']
    #allocation6 [shape = 'u8[8192]{0}', space=vmem, size = 0x2000, scoped, tag = 'input window, operand 2, single buffered']
    #allocation7 [shape = 'u8[114688]{0}', space=vmem, size = 0x1c000, scoped, tag = 'input window, operand 5, single buffered']
    #allocation8 [shape = 's32[1]{0}', space=sflag, size = 0x4, scoped, tag = 'scoped memory for _fwd_full.1']
    #allocation9 [shape = 'u8[20480]{0}', space=vmem, size = 0x5000, scoped, tag = 'input window, operand 6, single buffered']
    #allocation10 [shape = 'u8[16384]{0}', space=vmem, size = 0x4000, scoped, tag = 'input window, operand 10, single buffered']
    #allocation11 [shape = 's32[1]{0}', space=sflag, size = 0x4, scoped, tag = 'scoped memory for _fwd_full.1']
    %18 = vsyncpa [#allocation3], 0
    %19 = vsyncpa [#allocation5], 0
    %20 = vsyncpa [#allocation8], 0
    %21 = vsyncpa [#allocation11], 0
    // Predicated region
    $region2: #{_fwd_full.1} parent=1 // pred_check
      _
    $region3: #{_fwd_full.1} parent=1 // pred_check_branch
      %23 = sbr.rel (0) target = $region5
    $region4: #{_fwd_full.1} parent=1 // pred_region
      %25 = vsyncadd [#allocation3], 0
      %s26 = sshll.u32 %s0, 4
      %s27 = int_to_ptr.hbm [resolvable:$true] %s26
      %s28 = sshll.u32 [#allocation2], 4
      %s29 = int_to_ptr.vmem [resolvable:$true] %s28
      %34 = dma.hbm_to_vmem [thread:$0]  %s27, 4096, %s29, [#allocation3], 2048, 2048, 128
    $region5: #{_fwd_full.1} parent=1 // pred_fallthru
      _
    // Predicated region
    $region6: #{_fwd_full.1} parent=1 // pred_check
      _
    $region7: #{_fwd_full.1} parent=1 // pred_check_branch
      %36 = sbr.rel (0) target = $region9
    $region8: #{_fwd_full.1} parent=1 // pred_region
      %38 = vsyncadd [#allocation5], 0
      %s39 = sshll.u32 %s1, 4
      %s40 = int_to_ptr.hbm [resolvable:$true] %s39
      %s41 = sshll.u32 [#allocation4], 4
      %s42 = int_to_ptr.vmem [resolvable:$true] %s41
      %47 = dma.hbm_to_vmem [thread:$0]  %s40, 256, %s42, [#allocation5], 128, 128, 8
    $region9: #{_fwd_full.1} parent=1 // pred_fallthru
      _
    // Predicated region
    $region10: #{_fwd_full.1} parent=1 // pred_check
      _
    $region11: #{_fwd_full.1} parent=1 // pred_check_branch
      %49 = sbr.rel (0) target = $region13
    $region12: #{_fwd_full.1} parent=1 // pred_region
      %51 = vsyncadd [#allocation5], 0
      %s52 = sshll.u32 %s2, 4
      %s53 = int_to_ptr.hbm [resolvable:$true] %s52
      %s54 = sshll.u32 [#allocation6], 4
      %s55 = int_to_ptr.vmem [resolvable:$true] %s54
      %60 = dma.hbm_to_vmem [thread:$0]  %s53, 256, %s55, [#allocation5], 128, 128, 8
    $region13: #{_fwd_full.1} parent=1 // pred_fallthru
      _
    // Predicated region
    $region14: #{_fwd_full.1} parent=1 // pred_check
      _
    $region15: #{_fwd_full.1} parent=1 // pred_check_branch
      %62 = sbr.rel (0) target = $region17
    $region16: #{_fwd_full.1} parent=1 // pred_region
      _
    $region17: #{_fwd_full.1} parent=1 // pred_fallthru
      _
    // Predicated region
    $region18: #{_fwd_full.1} parent=1 // pred_check
      _
    $region19: #{_fwd_full.1} parent=1 // pred_check_branch
      %64 = sbr.rel (0) target = $region21
    $region20: #{_fwd_full.1} parent=1 // pred_region
      _
    $region21: #{_fwd_full.1} parent=1 // pred_fallthru
      _
    // Predicated region
    $region22: #{_fwd_full.1} parent=1 // pred_check
      _
    $region23: #{_fwd_full.1} parent=1 // pred_check_branch
      %66 = sbr.rel (0) target = $region25
    $region24: #{_fwd_full.1} parent=1 // pred_region
      %68 = vsyncadd [#allocation8], 0
      %s69 = sshll.u32 %s5, 4
      %s70 = int_to_ptr.hbm [resolvable:$true] %s69
      %s71 = sshll.u32 [#allocation7], 4
      %s72 = int_to_ptr.vmem [resolvable:$true] %s71
      %77 = dma.hbm_to_vmem [thread:$0]  %s70, 3584, %s72, [#allocation8], 64, 64, 4
    $region25: #{_fwd_full.1} parent=1 // pred_fallthru
      _
    // Predicated region
    $region26: #{_fwd_full.1} parent=1 // pred_check
      _
    $region27: #{_fwd_full.1} parent=1 // pred_check_branch
      %79 = sbr.rel (0) target = $region29
    $region28: #{_fwd_full.1} parent=1 // pred_region
      %81 = vsyncadd [#allocation8], 0
      %s82 = sshll.u32 %s6, 4
      %s83 = int_to_ptr.hbm [resolvable:$true] %s82
      %s84 = sshll.u32 [#allocation9], 4
      %s85 = int_to_ptr.vmem [resolvable:$true] %s84
      %90 = dma.hbm_to_vmem [thread:$0]  %s83, 640, %s85, [#allocation8], 128, 128, 8
    $region29: #{_fwd_full.1} parent=1 // pred_fallthru
      _
    // Predicated region
    $region30: #{_fwd_full.1} parent=1 // pred_check
      _
    $region31: #{_fwd_full.1} parent=1 // pred_check_branch
      %92 = sbr.rel (0) target = $region33
    $region32: #{_fwd_full.1} parent=1 // pred_region
      _
    $region33: #{_fwd_full.1} parent=1 // pred_fallthru
      _
    // Predicated region
    $region34: #{_fwd_full.1} parent=1 // pred_check
      _
    $region35: #{_fwd_full.1} parent=1 // pred_check_branch
      %94 = sbr.rel (0) target = $region37
    $region36: #{_fwd_full.1} parent=1 // pred_region
      _
    $region37: #{_fwd_full.1} parent=1 // pred_fallthru
      _
    // Predicated region
    $region38: #{_fwd_full.1} parent=1 // pred_check
      _
    $region39: #{_fwd_full.1} parent=1 // pred_check_branch
      %96 = sbr.rel (0) target = $region41
    $region40: #{_fwd_full.1} parent=1 // pred_region
      _
    $region41: #{_fwd_full.1} parent=1 // pred_fallthru
      _
    // Predicated region
    $region42: #{_fwd_full.1} parent=1 // pred_check
      _
    $region43: #{_fwd_full.1} parent=1 // pred_check_branch
      %98 = sbr.rel (0) target = $region45
    $region44: #{_fwd_full.1} parent=1 // pred_region
      %100 = vsyncadd [#allocation11], 0
      %s101 = sshll.u32 %s10, 4
      %s102 = int_to_ptr.hbm [resolvable:$true] %s101
      %s103 = sshll.u32 [#allocation10], 4
      %s104 = int_to_ptr.vmem [resolvable:$true] %s103
      %109 = dma.hbm_to_vmem [thread:$0]  %s102, 512, %s104, [#allocation11], 128, 128, 8
    $region45: #{_fwd_full.1} parent=1 // pred_fallthru
      _
    // Predicated region
    $region46: #{_fwd_full.1} parent=1 // pred_check
      _
    $region47: #{_fwd_full.1} parent=1 // pred_check_branch
      %111 = sbr.rel (0) target = $region49
    $region48: #{_fwd_full.1} parent=1 // pred_region
      _
    $region49: #{_fwd_full.1} parent=1 // pred_fallthru
      _
    // Predicated region
    $region50: #{_fwd_full.1} parent=1 // pred_check
      _
    $region51: #{_fwd_full.1} parent=1 // pred_check_branch
      %113 = sbr.rel (0) target = $region53
    $region52: #{_fwd_full.1} parent=1 // pred_region
      _
    $region53: #{_fwd_full.1} parent=1 // pred_fallthru
      _
    // Predicated region
    $region54: #{_fwd_full.1} parent=1 // pred_check
      _
    $region55: #{_fwd_full.1} parent=1 // pred_check_branch
      %115 = sbr.rel (0) target = $region57
    $region56: #{_fwd_full.1} parent=1 // pred_region
      %117 = dma.done [#allocation3], 4096
    $region57: #{_fwd_full.1} parent=1 // pred_fallthru
      _
    // Predicated region
    $region58: #{_fwd_full.1} parent=1 // pred_check
      _
    $region59: #{_fwd_full.1} parent=1 // pred_check_branch
      %119 = sbr.rel (0) target = $region61
    $region60: #{_fwd_full.1} parent=1 // pred_region
      %121 = dma.done [#allocation5], 256
    $region61: #{_fwd_full.1} parent=1 // pred_fallthru
      _
    // Predicated region
    $region62: #{_fwd_full.1} parent=1 // pred_check
      _
    $region63: #{_fwd_full.1} parent=1 // pred_check_branch
      %123 = sbr.rel (0) target = $region65
    $region64: #{_fwd_full.1} parent=1 // pred_region
      %125 = dma.done [#allocation5], 256
    $region65: #{_fwd_full.1} parent=1 // pred_fallthru
      _
    // Predicated region
    $region66: #{_fwd_full.1} parent=1 // pred_check
      _
    $region67: #{_fwd_full.1} parent=1 // pred_check_branch
      %127 = sbr.rel (0) target = $region69
    $region68: #{_fwd_full.1} parent=1 // pred_region
      %129 = dma.done [#allocation8], 3584
    $region69: #{_fwd_full.1} parent=1 // pred_fallthru
      _
    // Predicated region
    $region70: #{_fwd_full.1} parent=1 // pred_check
      _
    $region71: #{_fwd_full.1} parent=1 // pred_check_branch
      %131 = sbr.rel (0) target = $region73
    $region72: #{_fwd_full.1} parent=1 // pred_region
      %133 = dma.done [#allocation8], 640
    $region73: #{_fwd_full.1} parent=1 // pred_fallthru
      _
    // Predicated region
    $region74: #{_fwd_full.1} parent=1 // pred_check
      _
    $region75: #{_fwd_full.1} parent=1 // pred_check_branch
      %135 = sbr.rel (0) target = $region77
    $region76: #{_fwd_full.1} parent=1 // pred_region
      %137 = dma.done [#allocation11], 512
    $region77: #{_fwd_full.1} parent=1 // pred_fallthru
      _
    %v139 = vld [vmem:[#allocation6] sm:$0xff]
    %v140 = vld [vmem:[#allocation6 + $0x8] sm:$0xff]
    %v141 = vld [vmem:[#allocation2] sm:$0xff]
    %v142 = vld [vmem:[#allocation2 + $0x8] sm:$0xff]
    %v143 = vld [vmem:[#allocation2 + $0x10] sm:$0xff]
    %v144 = vld [vmem:[#allocation2 + $0x18] sm:$0xff]
    %v145 = vld [vmem:[#allocation2 + $0x20] sm:$0xff]
    %v146 = vld [vmem:[#allocation2 + $0x28] sm:$0xff]
    %v147 = vld [vmem:[#allocation2 + $0x30] sm:$0xff]
    %v148 = vld [vmem:[#allocation2 + $0x38] sm:$0xff]
    %v149 = vld [vmem:[#allocation2 + $0x40] sm:$0xff]
    %v150 = vld [vmem:[#allocation2 + $0x48] sm:$0xff]
    %v151 = vld [vmem:[#allocation2 + $0x50] sm:$0xff]
    %v152 = vld [vmem:[#allocation2 + $0x58] sm:$0xff]
    %v153 = vld [vmem:[#allocation2 + $0x60] sm:$0xff]
    %v154 = vld [vmem:[#allocation2 + $0x68] sm:$0xff]
    %v155 = vld [vmem:[#allocation2 + $0x70] sm:$0xff]
    %v156 = vld [vmem:[#allocation2 + $0x78] sm:$0xff]
    %v157 = vld [vmem:[#allocation2 + $0x80] sm:$0xff]
    %v158 = vld [vmem:[#allocation2 + $0x88] sm:$0xff]
    %v159 = vld [vmem:[#allocation2 + $0x90] sm:$0xff]
    %v160 = vld [vmem:[#allocation2 + $0x98] sm:$0xff]
    %v161 = vld [vmem:[#allocation2 + $0xa0] sm:$0xff]
    %v162 = vld [vmem:[#allocation2 + $0xa8] sm:$0xff]
    %v163 = vld [vmem:[#allocation2 + $0xb0] sm:$0xff]
    %v164 = vld [vmem:[#allocation2 + $0xb8] sm:$0xff]
    %v165 = vld [vmem:[#allocation2 + $0xc0] sm:$0xff]
    %v166 = vld [vmem:[#allocation2 + $0xc8] sm:$0xff]
    %v167 = vld [vmem:[#allocation2 + $0xd0] sm:$0xff]
    %v168 = vld [vmem:[#allocation2 + $0xd8] sm:$0xff]
    %v169 = vld [vmem:[#allocation2 + $0xe0] sm:$0xff]
    %v170 = vld [vmem:[#allocation2 + $0xe8] sm:$0xff]
    %v171 = vld [vmem:[#allocation2 + $0xf0] sm:$0xff]
    %v172 = vld [vmem:[#allocation2 + $0xf8] sm:$0xff]
    %v173 = vpack.c.bf16 %v157, %v141
    %v174 = vpack.c.bf16 %v158, %v142
    %v175 = vpack.c.bf16 %v159, %v143
    %v176 = vpack.c.bf16 %v160, %v144
    %v177 = vpack.c.bf16 %v161, %v145
    %v178 = vpack.c.bf16 %v162, %v146
    %v179 = vpack.c.bf16 %v163, %v147
    %v180 = vpack.c.bf16 %v164, %v148
    %v181 = vpack.c.bf16 %v165, %v149
    %v182 = vpack.c.bf16 %v166, %v150
    %v183 = vpack.c.bf16 %v167, %v151
    %v184 = vpack.c.bf16 %v168, %v152
    %v185 = vpack.c.bf16 %v169, %v153
    %v186 = vpack.c.bf16 %v170, %v154
    %v187 = vpack.c.bf16 %v171, %v155
    %v188 = vpack.c.bf16 %v172, %v156
    %v189 = vld [vmem:[%s3] sm:$0xf]
    %v190 = vld [vmem:[%s3 + $0x4] sm:$0xf]
    %v191 = vld [vmem:[%s3 + $0x8] sm:$0xf]
    %v192 = vld [vmem:[%s3 + $0xc] sm:$0xf]
    %v193 = vld [vmem:[%s3 + $0x10] sm:$0xf]
    %v194 = vld [vmem:[%s3 + $0x14] sm:$0xf]
    %v195 = vld [vmem:[%s3 + $0x18] sm:$0xf]
    %v196 = vld [vmem:[%s3 + $0x1c] sm:$0xf]
    %v197 = vld [vmem:[%s3 + $0x20] sm:$0xf]
    %v198 = vld [vmem:[%s3 + $0x24] sm:$0xf]
    %v199 = vld [vmem:[%s3 + $0x28] sm:$0xf]
    %v200 = vld [vmem:[%s3 + $0x2c] sm:$0xf]
    %v201 = vld [vmem:[%s3 + $0x30] sm:$0xf]
    %v202 = vld [vmem:[%s3 + $0x34] sm:$0xf]
    %v203 = vld [vmem:[%s3 + $0x38] sm:$0xf]
    %v204 = vld [vmem:[%s3 + $0x3c] sm:$0xf]
    %v205 = vld [vmem:[%s3 + $0x40] sm:$0xf]
    %v206 = vld [vmem:[%s3 + $0x44] sm:$0xf]
    %v207 = vld [vmem:[%s3 + $0x48] sm:$0xf]
    %v208 = vld [vmem:[%s3 + $0x4c] sm:$0xf]
    %v209 = vld [vmem:[%s3 + $0x50] sm:$0xf]
    %v210 = vld [vmem:[%s3 + $0x54] sm:$0xf]
    %v211 = vld [vmem:[%s3 + $0x58] sm:$0xf]
    %v212 = vld [vmem:[%s3 + $0x5c] sm:$0xf]
    %v213 = vld [vmem:[%s3 + $0x60] sm:$0xf]
    %v214 = vld [vmem:[%s3 + $0x64] sm:$0xf]
    %v215 = vld [vmem:[%s3 + $0x68] sm:$0xf]
    %v216 = vld [vmem:[%s3 + $0x6c] sm:$0xf]
    %v217 = vld [vmem:[%s3 + $0x70] sm:$0xf]
    %v218 = vld [vmem:[%s3 + $0x74] sm:$0xf]
    %v219 = vld [vmem:[%s3 + $0x78] sm:$0xf]
    %v220 = vld [vmem:[%s3 + $0x7c] sm:$0xf]
    %v221 = vld [vmem:[%s3 + $0x80] sm:$0xf]
    %v222 = vld [vmem:[%s3 + $0x84] sm:$0xf]
    %v223 = vld [vmem:[%s3 + $0x88] sm:$0xf]
    %v224 = vld [vmem:[%s3 + $0x8c] sm:$0xf]
    %v225 = vld [vmem:[%s3 + $0x90] sm:$0xf]
    %v226 = vld [vmem:[%s3 + $0x94] sm:$0xf]
    %v227 = vld [vmem:[%s3 + $0x98] sm:$0xf]
    %v228 = vld [vmem:[%s3 + $0x9c] sm:$0xf]
    %v229 = vld [vmem:[%s3 + $0xa0] sm:$0xf]
    %v230 = vld [vmem:[%s3 + $0xa4] sm:$0xf]
    %v231 = vld [vmem:[%s3 + $0xa8] sm:$0xf]
    %v232 = vld [vmem:[%s3 + $0xac] sm:$0xf]
    %v233 = vld [vmem:[%s3 + $0xb0] sm:$0xf]
    %v234 = vld [vmem:[%s3 + $0xb4] sm:$0xf]
    %v235 = vld [vmem:[%s3 + $0xb8] sm:$0xf]
    %v236 = vld [vmem:[%s3 + $0xbc] sm:$0xf]
    %v237 = vld [vmem:[%s3 + $0xc0] sm:$0xf]
    %v238 = vld [vmem:[%s3 + $0xc4] sm:$0xf]
    %v239 = vld [vmem:[%s3 + $0xc8] sm:$0xf]
    %v240 = vld [vmem:[%s3 + $0xcc] sm:$0xf]
    %v241 = vld [vmem:[%s3 + $0xd0] sm:$0xf]
    %v242 = vld [vmem:[%s3 + $0xd4] sm:$0xf]
    %v243 = vld [vmem:[%s3 + $0xd8] sm:$0xf]
    %v244 = vld [vmem:[%s3 + $0xdc] sm:$0xf]
    %v245 = vld [vmem:[%s3 + $0xe0] sm:$0xf]
    %v246 = vld [vmem:[%s3 + $0xe4] sm:$0xf]
    %v247 = vld [vmem:[%s3 + $0xe8] sm:$0xf]
    %v248 = vld [vmem:[%s3 + $0xec] sm:$0xf]
    %v249 = vld [vmem:[%s3 + $0xf0] sm:$0xf]
    %v250 = vld [vmem:[%s3 + $0xf4] sm:$0xf]
    %v251 = vld [vmem:[%s3 + $0xf8] sm:$0xf]
    %v252 = vld [vmem:[%s3 + $0xfc] sm:$0xf]
    %v253 = vld [vmem:[%s3 + $0x100] sm:$0xf]
    %v254 = vld [vmem:[%s3 + $0x104] sm:$0xf]
    %v255 = vld [vmem:[%s3 + $0x108] sm:$0xf]
    %v256 = vld [vmem:[%s3 + $0x10c] sm:$0xf]
    %v257 = vld [vmem:[%s3 + $0x110] sm:$0xf]
    %v258 = vld [vmem:[%s3 + $0x114] sm:$0xf]
    %v259 = vld [vmem:[%s3 + $0x118] sm:$0xf]
    %v260 = vld [vmem:[%s3 + $0x11c] sm:$0xf]
    %v261 = vld [vmem:[%s3 + $0x120] sm:$0xf]
    %v262 = vld [vmem:[%s3 + $0x124] sm:$0xf]
    %v263 = vld [vmem:[%s3 + $0x128] sm:$0xf]
    %v264 = vld [vmem:[%s3 + $0x12c] sm:$0xf]
    %v265 = vld [vmem:[%s3 + $0x130] sm:$0xf]
    %v266 = vld [vmem:[%s3 + $0x134] sm:$0xf]
    %v267 = vld [vmem:[%s3 + $0x138] sm:$0xf]
    %v268 = vld [vmem:[%s3 + $0x13c] sm:$0xf]
    %v269 = vld [vmem:[%s3 + $0x140] sm:$0xf]
    %v270 = vld [vmem:[%s3 + $0x144] sm:$0xf]
    %v271 = vld [vmem:[%s3 + $0x148] sm:$0xf]
    %v272 = vld [vmem:[%s3 + $0x14c] sm:$0xf]
    %v273 = vld [vmem:[%s3 + $0x150] sm:$0xf]
    %v274 = vld [vmem:[%s3 + $0x154] sm:$0xf]
    %v275 = vld [vmem:[%s3 + $0x158] sm:$0xf]
    %v276 = vld [vmem:[%s3 + $0x15c] sm:$0xf]
    %v277 = vld [vmem:[%s3 + $0x160] sm:$0xf]
    %v278 = vld [vmem:[%s3 + $0x164] sm:$0xf]
    %v279 = vld [vmem:[%s3 + $0x168] sm:$0xf]
    %v280 = vld [vmem:[%s3 + $0x16c] sm:$0xf]
    %v281 = vld [vmem:[%s3 + $0x170] sm:$0xf]
    %v282 = vld [vmem:[%s3 + $0x174] sm:$0xf]
    %v283 = vld [vmem:[%s3 + $0x178] sm:$0xf]
    %v284 = vld [vmem:[%s3 + $0x17c] sm:$0xf]
    %v285 = vld [vmem:[%s3 + $0x180] sm:$0xf]
    %v286 = vld [vmem:[%s3 + $0x184] sm:$0xf]
    %v287 = vld [vmem:[%s3 + $0x188] sm:$0xf]
    %v288 = vld [vmem:[%s3 + $0x18c] sm:$0xf]
    %v289 = vld [vmem:[%s3 + $0x190] sm:$0xf]
    %v290 = vld [vmem:[%s3 + $0x194] sm:$0xf]
    %v291 = vld [vmem:[%s3 + $0x198] sm:$0xf]
    %v292 = vld [vmem:[%s3 + $0x19c] sm:$0xf]
    %v293 = vld [vmem:[%s3 + $0x1a0] sm:$0xf]
    %v294 = vld [vmem:[%s3 + $0x1a4] sm:$0xf]
    %v295 = vld [vmem:[%s3 + $0x1a8] sm:$0xf]
    %v296 = vld [vmem:[%s3 + $0x1ac] sm:$0xf]
    %v297 = vld [vmem:[%s3 + $0x1b0] sm:$0xf]
    %v298 = vld [vmem:[%s3 + $0x1b4] sm:$0xf]
    %v299 = vld [vmem:[%s3 + $0x1b8] sm:$0xf]
    %v300 = vld [vmem:[%s3 + $0x1bc] sm:$0xf]
    %v301 = vld [vmem:[%s3 + $0x1c0] sm:$0xf]
    %v302 = vld [vmem:[%s3 + $0x1c4] sm:$0xf]
    %v303 = vld [vmem:[%s3 + $0x1c8] sm:$0xf]
    %v304 = vld [vmem:[%s3 + $0x1cc] sm:$0xf]
    %v305 = vld [vmem:[%s3 + $0x1d0] sm:$0xf]
    %v306 = vld [vmem:[%s3 + $0x1d4] sm:$0xf]
    %v307 = vld [vmem:[%s3 + $0x1d8] sm:$0xf]
    %v308 = vld [vmem:[%s3 + $0x1dc] sm:$0xf]
    %v309 = vld [vmem:[%s3 + $0x1e0] sm:$0xf]
    %v310 = vld [vmem:[%s3 + $0x1e4] sm:$0xf]
    %v311 = vld [vmem:[%s3 + $0x1e8] sm:$0xf]
    %v312 = vld [vmem:[%s3 + $0x1ec] sm:$0xf]
    %v313 = vld [vmem:[%s3 + $0x1f0] sm:$0xf]
    %v314 = vld [vmem:[%s3 + $0x1f4] sm:$0xf]
    %v315 = vld [vmem:[%s3 + $0x1f8] sm:$0xf]
    %v316 = vld [vmem:[%s3 + $0x1fc] sm:$0xf]
    %v317 = vld [vmem:[%s3 + $0x200] sm:$0xf]
    %v318 = vld [vmem:[%s3 + $0x204] sm:$0xf]
    %v319 = vld [vmem:[%s3 + $0x208] sm:$0xf]
    %v320 = vld [vmem:[%s3 + $0x20c] sm:$0xf]
    %v321 = vld [vmem:[%s3 + $0x210] sm:$0xf]
    %v322 = vld [vmem:[%s3 + $0x214] sm:$0xf]
    %v323 = vld [vmem:[%s3 + $0x218] sm:$0xf]
    %v324 = vld [vmem:[%s3 + $0x21c] sm:$0xf]
    %v325 = vld [vmem:[%s3 + $0x220] sm:$0xf]
    %v326 = vld [vmem:[%s3 + $0x224] sm:$0xf]
    %v327 = vld [vmem:[%s3 + $0x228] sm:$0xf]
    %v328 = vld [vmem:[%s3 + $0x22c] sm:$0xf]
    %v329 = vld [vmem:[%s3 + $0x230] sm:$0xf]
    %v330 = vld [vmem:[%s3 + $0x234] sm:$0xf]
    %v331 = vld [vmem:[%s3 + $0x238] sm:$0xf]
    %v332 = vld [vmem:[%s3 + $0x23c] sm:$0xf]
    %v333 = vld [vmem:[%s3 + $0x240] sm:$0xf]
    %v334 = vld [vmem:[%s3 + $0x244] sm:$0xf]
    %v335 = vld [vmem:[%s3 + $0x248] sm:$0xf]
    %v336 = vld [vmem:[%s3 + $0x24c] sm:$0xf]
    %v337 = vld [vmem:[%s3 + $0x250] sm:$0xf]
    %v338 = vld [vmem:[%s3 + $0x254] sm:$0xf]
    %v339 = vld [vmem:[%s3 + $0x258] sm:$0xf]
    %v340 = vld [vmem:[%s3 + $0x25c] sm:$0xf]
    %v341 = vld [vmem:[%s3 + $0x260] sm:$0xf]
    %v342 = vld [vmem:[%s3 + $0x264] sm:$0xf]
    %v343 = vld [vmem:[%s3 + $0x268] sm:$0xf]
    %v344 = vld [vmem:[%s3 + $0x26c] sm:$0xf]
    %v345 = vld [vmem:[%s3 + $0x270] sm:$0xf]
    %v346 = vld [vmem:[%s3 + $0x274] sm:$0xf]
    %v347 = vld [vmem:[%s3 + $0x278] sm:$0xf]
    %v348 = vld [vmem:[%s3 + $0x27c] sm:$0xf]
    %v349 = vld [vmem:[%s3 + $0x280] sm:$0xf]
    %v350 = vld [vmem:[%s3 + $0x284] sm:$0xf]
    %v351 = vld [vmem:[%s3 + $0x288] sm:$0xf]
    %v352 = vld [vmem:[%s3 + $0x28c] sm:$0xf]
    %v353 = vld [vmem:[%s3 + $0x290] sm:$0xf]
    %v354 = vld [vmem:[%s3 + $0x294] sm:$0xf]
    %v355 = vld [vmem:[%s3 + $0x298] sm:$0xf]
    %v356 = vld [vmem:[%s3 + $0x29c] sm:$0xf]
    %v357 = vld [vmem:[%s3 + $0x2a0] sm:$0xf]
    %v358 = vld [vmem:[%s3 + $0x2a4] sm:$0xf]
    %v359 = vld [vmem:[%s3 + $0x2a8] sm:$0xf]
    %v360 = vld [vmem:[%s3 + $0x2ac] sm:$0xf]
    %v361 = vld [vmem:[%s3 + $0x2b0] sm:$0xf]
    %v362 = vld [vmem:[%s3 + $0x2b4] sm:$0xf]
    %v363 = vld [vmem:[%s3 + $0x2b8] sm:$0xf]
    %v364 = vld [vmem:[%s3 + $0x2bc] sm:$0xf]
    %v365 = vld [vmem:[%s3 + $0x2c0] sm:$0xf]
    %v366 = vld [vmem:[%s3 + $0x2c4] sm:$0xf]
    %v367 = vld [vmem:[%s3 + $0x2c8] sm:$0xf]
    %v368 = vld [vmem:[%s3 + $0x2cc] sm:$0xf]
    %v369 = vld [vmem:[%s3 + $0x2d0] sm:$0xf]
    %v370 = vld [vmem:[%s3 + $0x2d4] sm:$0xf]
    %v371 = vld [vmem:[%s3 + $0x2d8] sm:$0xf]
    %v372 = vld [vmem:[%s3 + $0x2dc] sm:$0xf]
    %v373 = vld [vmem:[%s3 + $0x2e0] sm:$0xf]
    %v374 = vld [vmem:[%s3 + $0x2e4] sm:$0xf]
    %v375 = vld [vmem:[%s3 + $0x2e8] sm:$0xf]
    %v376 = vld [vmem:[%s3 + $0x2ec] sm:$0xf]
    %v377 = vld [vmem:[%s3 + $0x2f0] sm:$0xf]
    %v378 = vld [vmem:[%s3 + $0x2f4] sm:$0xf]
    %v379 = vld [vmem:[%s3 + $0x2f8] sm:$0xf]
    %v380 = vld [vmem:[%s3 + $0x2fc] sm:$0xf]
    %v381 = vld [vmem:[%s3 + $0x300] sm:$0xf]
    %v382 = vld [vmem:[%s3 + $0x304] sm:$0xf]
    %v383 = vld [vmem:[%s3 + $0x308] sm:$0xf]
    %v384 = vld [vmem:[%s3 + $0x30c] sm:$0xf]
    %v385 = vld [vmem:[%s3 + $0x310] sm:$0xf]
    %v386 = vld [vmem:[%s3 + $0x314] sm:$0xf]
    %v387 = vld [vmem:[%s3 + $0x318] sm:$0xf]
    %v388 = vld [vmem:[%s3 + $0x31c] sm:$0xf]
    %v389 = vld [vmem:[%s3 + $0x320] sm:$0xf]
    %v390 = vld [vmem:[%s3 + $0x324] sm:$0xf]
    %v391 = vld [vmem:[%s3 + $0x328] sm:$0xf]
    %v392 = vld [vmem:[%s3 + $0x32c] sm:$0xf]
    %v393 = vld [vmem:[%s3 + $0x330] sm:$0xf]
    %v394 = vld [vmem:[%s3 + $0x334] sm:$0xf]
    %v395 = vld [vmem:[%s3 + $0x338] sm:$0xf]
    %v396 = vld [vmem:[%s3 + $0x33c] sm:$0xf]
    %v397 = vld [vmem:[%s3 + $0x340] sm:$0xf]
    %v398 = vld [vmem:[%s3 + $0x344] sm:$0xf]
    %v399 = vld [vmem:[%s3 + $0x348] sm:$0xf]
    %v400 = vld [vmem:[%s3 + $0x34c] sm:$0xf]
    %v401 = vld [vmem:[%s3 + $0x350] sm:$0xf]
    %v402 = vld [vmem:[%s3 + $0x354] sm:$0xf]
    %v403 = vld [vmem:[%s3 + $0x358] sm:$0xf]
    %v404 = vld [vmem:[%s3 + $0x35c] sm:$0xf]
    %v405 = vld [vmem:[%s3 + $0x360] sm:$0xf]
    %v406 = vld [vmem:[%s3 + $0x364] sm:$0xf]
    %v407 = vld [vmem:[%s3 + $0x368] sm:$0xf]
    %v408 = vld [vmem:[%s3 + $0x36c] sm:$0xf]
    %v409 = vld [vmem:[%s3 + $0x370] sm:$0xf]
    %v410 = vld [vmem:[%s3 + $0x374] sm:$0xf]
    %v411 = vld [vmem:[%s3 + $0x378] sm:$0xf]
    %v412 = vld [vmem:[%s3 + $0x37c] sm:$0xf]
    %v413 = vld [vmem:[%s3 + $0x380] sm:$0xf]
    %v414 = vld [vmem:[%s3 + $0x384] sm:$0xf]
    %v415 = vld [vmem:[%s3 + $0x388] sm:$0xf]
    %v416 = vld [vmem:[%s3 + $0x38c] sm:$0xf]
    %v417 = vld [vmem:[%s3 + $0x390] sm:$0xf]
    %v418 = vld [vmem:[%s3 + $0x394] sm:$0xf]
    %v419 = vld [vmem:[%s3 + $0x398] sm:$0xf]
    %v420 = vld [vmem:[%s3 + $0x39c] sm:$0xf]
    %v421 = vld [vmem:[%s3 + $0x3a0] sm:$0xf]
    %v422 = vld [vmem:[%s3 + $0x3a4] sm:$0xf]
    %v423 = vld [vmem:[%s3 + $0x3a8] sm:$0xf]
    %v424 = vld [vmem:[%s3 + $0x3ac] sm:$0xf]
    %v425 = vld [vmem:[%s3 + $0x3b0] sm:$0xf]
    %v426 = vld [vmem:[%s3 + $0x3b4] sm:$0xf]
    %v427 = vld [vmem:[%s3 + $0x3b8] sm:$0xf]
    %v428 = vld [vmem:[%s3 + $0x3bc] sm:$0xf]
    %v429 = vld [vmem:[%s3 + $0x3c0] sm:$0xf]
    %v430 = vld [vmem:[%s3 + $0x3c4] sm:$0xf]
    %v431 = vld [vmem:[%s3 + $0x3c8] sm:$0xf]
    %v432 = vld [vmem:[%s3 + $0x3cc] sm:$0xf]
    %v433 = vld [vmem:[%s3 + $0x3d0] sm:$0xf]
    %v434 = vld [vmem:[%s3 + $0x3d4] sm:$0xf]
    %v435 = vld [vmem:[%s3 + $0x3d8] sm:$0xf]
    %v436 = vld [vmem:[%s3 + $0x3dc] sm:$0xf]
    %v437 = vld [vmem:[%s3 + $0x3e0] sm:$0xf]
    %v438 = vld [vmem:[%s3 + $0x3e4] sm:$0xf]
    %v439 = vld [vmem:[%s3 + $0x3e8] sm:$0xf]
    %v440 = vld [vmem:[%s3 + $0x3ec] sm:$0xf]
    %v441 = vld [vmem:[%s3 + $0x3f0] sm:$0xf]
    %v442 = vld [vmem:[%s3 + $0x3f4] sm:$0xf]
    %v443 = vld [vmem:[%s3 + $0x3f8] sm:$0xf]
    %v444 = vld [vmem:[%s3 + $0x3fc] sm:$0xf]
    %v445 = vld [vmem:[%s4] sm:$0x1]
    %v447 = vperm.slane %v445, 0
    %v705 = vunpack.c.l.b16 %v189
    %v706 = vunpack.c.l.b16 %v190
    %v707 = vunpack.c.l.b16 %v191
    %v708 = vunpack.c.l.b16 %v192
    %v709 = vunpack.c.l.b16 %v193
    %v710 = vunpack.c.l.b16 %v194
    %v711 = vunpack.c.l.b16 %v195
    %v712 = vunpack.c.l.b16 %v196
    %v713 = vunpack.c.l.b16 %v197
    %v714 = vunpack.c.l.b16 %v198
    %v715 = vunpack.c.l.b16 %v199
    %v716 = vunpack.c.l.b16 %v200
    %v717 = vunpack.c.l.b16 %v201
    %v718 = vunpack.c.l.b16 %v202
    %v719 = vunpack.c.l.b16 %v203
    %v720 = vunpack.c.l.b16 %v204
    %v721 = vunpack.c.l.b16 %v205
    %v722 = vunpack.c.l.b16 %v206
    %v723 = vunpack.c.l.b16 %v207
    %v724 = vunpack.c.l.b16 %v208
    %v725 = vunpack.c.l.b16 %v209
    %v726 = vunpack.c.l.b16 %v210
    %v727 = vunpack.c.l.b16 %v211
    %v728 = vunpack.c.l.b16 %v212
    %v729 = vunpack.c.l.b16 %v213
    %v730 = vunpack.c.l.b16 %v214
    %v731 = vunpack.c.l.b16 %v215
    %v732 = vunpack.c.l.b16 %v216
    %v733 = vunpack.c.l.b16 %v217
    %v734 = vunpack.c.l.b16 %v218
    %v735 = vunpack.c.l.b16 %v219
    %v736 = vunpack.c.l.b16 %v220
    %v737 = vunpack.c.l.b16 %v221
    %v738 = vunpack.c.l.b16 %v222
    %v739 = vunpack.c.l.b16 %v223
    %v740 = vunpack.c.l.b16 %v224
    %v741 = vunpack.c.l.b16 %v225
    %v742 = vunpack.c.l.b16 %v226
    %v743 = vunpack.c.l.b16 %v227
    %v744 = vunpack.c.l.b16 %v228
    %v745 = vunpack.c.l.b16 %v229
    %v746 = vunpack.c.l.b16 %v230
    %v747 = vunpack.c.l.b16 %v231
    %v748 = vunpack.c.l.b16 %v232
    %v749 = vunpack.c.l.b16 %v233
    %v750 = vunpack.c.l.b16 %v234
    %v751 = vunpack.c.l.b16 %v235
    %v752 = vunpack.c.l.b16 %v236
    %v753 = vunpack.c.l.b16 %v237
    %v754 = vunpack.c.l.b16 %v238
    %v755 = vunpack.c.l.b16 %v239
    %v756 = vunpack.c.l.b16 %v240
    %v757 = vunpack.c.l.b16 %v241
    %v758 = vunpack.c.l.b16 %v242
    %v759 = vunpack.c.l.b16 %v243
    %v760 = vunpack.c.l.b16 %v244
    %v761 = vunpack.c.l.b16 %v245
    %v762 = vunpack.c.l.b16 %v246
    %v763 = vunpack.c.l.b16 %v247
    %v764 = vunpack.c.l.b16 %v248
    %v765 = vunpack.c.l.b16 %v249
    %v766 = vunpack.c.l.b16 %v250
    %v767 = vunpack.c.l.b16 %v251
    %v768 = vunpack.c.l.b16 %v252
    %v769 = vunpack.c.l.b16 %v253
    %v770 = vunpack.c.l.b16 %v254
    %v771 = vunpack.c.l.b16 %v255
    %v772 = vunpack.c.l.b16 %v256
    %v773 = vunpack.c.l.b16 %v257
    %v774 = vunpack.c.l.b16 %v258
    %v775 = vunpack.c.l.b16 %v259
    %v776 = vunpack.c.l.b16 %v260
    %v777 = vunpack.c.l.b16 %v261
    %v778 = vunpack.c.l.b16 %v262
    %v779 = vunpack.c.l.b16 %v263
    %v780 = vunpack.c.l.b16 %v264
    %v781 = vunpack.c.l.b16 %v265
    %v782 = vunpack.c.l.b16 %v266
    %v783 = vunpack.c.l.b16 %v267
    %v784 = vunpack.c.l.b16 %v268
    %v785 = vunpack.c.l.b16 %v269
    %v786 = vunpack.c.l.b16 %v270
    %v787 = vunpack.c.l.b16 %v271
    %v788 = vunpack.c.l.b16 %v272
    %v789 = vunpack.c.l.b16 %v273
    %v790 = vunpack.c.l.b16 %v274
    %v791 = vunpack.c.l.b16 %v275
    %v792 = vunpack.c.l.b16 %v276
    %v793 = vunpack.c.l.b16 %v277
    %v794 = vunpack.c.l.b16 %v278
    %v795 = vunpack.c.l.b16 %v279
    %v796 = vunpack.c.l.b16 %v280
    %v797 = vunpack.c.l.b16 %v281
    %v798 = vunpack.c.l.b16 %v282
    %v799 = vunpack.c.l.b16 %v283
    %v800 = vunpack.c.l.b16 %v284
    %v801 = vunpack.c.l.b16 %v285
    %v802 = vunpack.c.l.b16 %v286
    %v803 = vunpack.c.l.b16 %v287
    %v804 = vunpack.c.l.b16 %v288
    %v805 = vunpack.c.l.b16 %v289
    %v806 = vunpack.c.l.b16 %v290
    %v807 = vunpack.c.l.b16 %v291
    %v808 = vunpack.c.l.b16 %v292
    %v809 = vunpack.c.l.b16 %v293
    %v810 = vunpack.c.l.b16 %v294
    %v811 = vunpack.c.l.b16 %v295
    %v812 = vunpack.c.l.b16 %v296
    %v813 = vunpack.c.l.b16 %v297
    %v814 = vunpack.c.l.b16 %v298
    %v815 = vunpack.c.l.b16 %v299
    %v816 = vunpack.c.l.b16 %v300
    %v817 = vunpack.c.l.b16 %v301
    %v818 = vunpack.c.l.b16 %v302
    %v819 = vunpack.c.l.b16 %v303
    %v820 = vunpack.c.l.b16 %v304
    %v821 = vunpack.c.l.b16 %v305
    %v822 = vunpack.c.l.b16 %v306
    %v823 = vunpack.c.l.b16 %v307
    %v824 = vunpack.c.l.b16 %v308
    %v825 = vunpack.c.l.b16 %v309
    %v826 = vunpack.c.l.b16 %v310
    %v827 = vunpack.c.l.b16 %v311
    %v828 = vunpack.c.l.b16 %v312
    %v829 = vunpack.c.l.b16 %v313
    %v830 = vunpack.c.l.b16 %v314
    %v831 = vunpack.c.l.b16 %v315
    %v832 = vunpack.c.l.b16 %v316
    %v833 = vunpack.c.l.b16 %v317
    %v834 = vunpack.c.l.b16 %v318
    %v835 = vunpack.c.l.b16 %v319
    %v836 = vunpack.c.l.b16 %v320
    %v837 = vunpack.c.l.b16 %v321
    %v838 = vunpack.c.l.b16 %v322
    %v839 = vunpack.c.l.b16 %v323
    %v840 = vunpack.c.l.b16 %v324
    %v841 = vunpack.c.l.b16 %v325
    %v842 = vunpack.c.l.b16 %v326
    %v843 = vunpack.c.l.b16 %v327
    %v844 = vunpack.c.l.b16 %v328
    %v845 = vunpack.c.l.b16 %v329
    %v846 = vunpack.c.l.b16 %v330
    %v847 = vunpack.c.l.b16 %v331
    %v848 = vunpack.c.l.b16 %v332
    %v849 = vunpack.c.l.b16 %v333
    %v850 = vunpack.c.l.b16 %v334
    %v851 = vunpack.c.l.b16 %v335
    %v852 = vunpack.c.l.b16 %v336
    %v853 = vunpack.c.l.b16 %v337
    %v854 = vunpack.c.l.b16 %v338
    %v855 = vunpack.c.l.b16 %v339
    %v856 = vunpack.c.l.b16 %v340
    %v857 = vunpack.c.l.b16 %v341
    %v858 = vunpack.c.l.b16 %v342
    %v859 = vunpack.c.l.b16 %v343
    %v860 = vunpack.c.l.b16 %v344
    %v861 = vunpack.c.l.b16 %v345
    %v862 = vunpack.c.l.b16 %v346
    %v863 = vunpack.c.l.b16 %v347
    %v864 = vunpack.c.l.b16 %v348
    %v865 = vunpack.c.l.b16 %v349
    %v866 = vunpack.c.l.b16 %v350
    %v867 = vunpack.c.l.b16 %v351
    %v868 = vunpack.c.l.b16 %v352
    %v869 = vunpack.c.l.b16 %v353
    %v870 = vunpack.c.l.b16 %v354
    %v871 = vunpack.c.l.b16 %v355
    %v872 = vunpack.c.l.b16 %v356
    %v873 = vunpack.c.l.b16 %v357
    %v874 = vunpack.c.l.b16 %v358
    %v875 = vunpack.c.l.b16 %v359
    %v876 = vunpack.c.l.b16 %v360
    %v877 = vunpack.c.l.b16 %v361
    %v878 = vunpack.c.l.b16 %v362
    %v879 = vunpack.c.l.b16 %v363
    %v880 = vunpack.c.l.b16 %v364
    %v881 = vunpack.c.l.b16 %v365
    %v882 = vunpack.c.l.b16 %v366
    %v883 = vunpack.c.l.b16 %v367
    %v884 = vunpack.c.l.b16 %v368
    %v885 = vunpack.c.l.b16 %v369
    %v886 = vunpack.c.l.b16 %v370
    %v887 = vunpack.c.l.b16 %v371
    %v888 = vunpack.c.l.b16 %v372
    %v889 = vunpack.c.l.b16 %v373
    %v890 = vunpack.c.l.b16 %v374
    %v891 = vunpack.c.l.b16 %v375
    %v892 = vunpack.c.l.b16 %v376
    %v893 = vunpack.c.l.b16 %v377
    %v894 = vunpack.c.l.b16 %v378
    %v895 = vunpack.c.l.b16 %v379
    %v896 = vunpack.c.l.b16 %v380
    %v897 = vunpack.c.l.b16 %v381
    %v898 = vunpack.c.l.b16 %v382
    %v899 = vunpack.c.l.b16 %v383
    %v900 = vunpack.c.l.b16 %v384
    %v901 = vunpack.c.l.b16 %v385
    %v902 = vunpack.c.l.b16 %v386
    %v903 = vunpack.c.l.b16 %v387
    %v904 = vunpack.c.l.b16 %v388
    %v905 = vunpack.c.l.b16 %v389
    %v906 = vunpack.c.l.b16 %v390
    %v907 = vunpack.c.l.b16 %v391
    %v908 = vunpack.c.l.b16 %v392
    %v909 = vunpack.c.l.b16 %v393
    %v910 = vunpack.c.l.b16 %v394
    %v911 = vunpack.c.l.b16 %v395
    %v912 = vunpack.c.l.b16 %v396
    %v913 = vunpack.c.l.b16 %v397
    %v914 = vunpack.c.l.b16 %v398
    %v915 = vunpack.c.l.b16 %v399
    %v916 = vunpack.c.l.b16 %v400
    %v917 = vunpack.c.l.b16 %v401
    %v918 = vunpack.c.l.b16 %v402
    %v919 = vunpack.c.l.b16 %v403
    %v920 = vunpack.c.l.b16 %v404
    %v921 = vunpack.c.l.b16 %v405
    %v922 = vunpack.c.l.b16 %v406
    %v923 = vunpack.c.l.b16 %v407
    %v924 = vunpack.c.l.b16 %v408
    %v925 = vunpack.c.l.b16 %v409
    %v926 = vunpack.c.l.b16 %v410
    %v927 = vunpack.c.l.b16 %v411
    %v928 = vunpack.c.l.b16 %v412
    %v929 = vunpack.c.l.b16 %v413
    %v930 = vunpack.c.l.b16 %v414
    %v931 = vunpack.c.l.b16 %v415
    %v932 = vunpack.c.l.b16 %v416
    %v933 = vunpack.c.l.b16 %v417
    %v934 = vunpack.c.l.b16 %v418
    %v935 = vunpack.c.l.b16 %v419
    %v936 = vunpack.c.l.b16 %v420
    %v937 = vunpack.c.l.b16 %v421
    %v938 = vunpack.c.l.b16 %v422
    %v939 = vunpack.c.l.b16 %v423
    %v940 = vunpack.c.l.b16 %v424
    %v941 = vunpack.c.l.b16 %v425
    %v942 = vunpack.c.l.b16 %v426
    %v943 = vunpack.c.l.b16 %v427
    %v944 = vunpack.c.l.b16 %v428
    %v945 = vunpack.c.l.b16 %v429
    %v946 = vunpack.c.l.b16 %v430
    %v947 = vunpack.c.l.b16 %v431
    %v948 = vunpack.c.l.b16 %v432
    %v949 = vunpack.c.l.b16 %v433
    %v950 = vunpack.c.l.b16 %v434
    %v951 = vunpack.c.l.b16 %v435
    %v952 = vunpack.c.l.b16 %v436
    %v953 = vunpack.c.l.b16 %v437
    %v954 = vunpack.c.l.b16 %v438
    %v955 = vunpack.c.l.b16 %v439
    %v956 = vunpack.c.l.b16 %v440
    %v957 = vunpack.c.l.b16 %v441
    %v958 = vunpack.c.l.b16 %v442
    %v959 = vunpack.c.l.b16 %v443
    %v960 = vunpack.c.l.b16 %v444
    %v961 = vpack.c.b16 %v706, %v705
    %v962 = vpack.c.b16 %v708, %v707
    %v963 = vpack.c.b16 %v710, %v709
    %v964 = vpack.c.b16 %v712, %v711
    %v965 = vpack.c.b16 %v714, %v713
    %v966 = vpack.c.b16 %v716, %v715
    %v967 = vpack.c.b16 %v718, %v717
    %v968 = vpack.c.b16 %v720, %v719
    %v969 = vpack.c.b16 %v722, %v721
    %v970 = vpack.c.b16 %v724, %v723
    %v971 = vpack.c.b16 %v726, %v725
    %v972 = vpack.c.b16 %v728, %v727
    %v973 = vpack.c.b16 %v730, %v729
    %v974 = vpack.c.b16 %v732, %v731
    %v975 = vpack.c.b16 %v734, %v733
    %v976 = vpack.c.b16 %v736, %v735
    %v977 = vpack.c.b16 %v738, %v737
    %v978 = vpack.c.b16 %v740, %v739
    %v979 = vpack.c.b16 %v742, %v741
    %v980 = vpack.c.b16 %v744, %v743
    %v981 = vpack.c.b16 %v746, %v745
    %v982 = vpack.c.b16 %v748, %v747
    %v983 = vpack.c.b16 %v750, %v749
    %v984 = vpack.c.b16 %v752, %v751
    %v985 = vpack.c.b16 %v754, %v753
    %v986 = vpack.c.b16 %v756, %v755
    %v987 = vpack.c.b16 %v758, %v757
    %v988 = vpack.c.b16 %v760, %v759
    %v989 = vpack.c.b16 %v762, %v761
    %v990 = vpack.c.b16 %v764, %v763
    %v991 = vpack.c.b16 %v766, %v765
    %v992 = vpack.c.b16 %v768, %v767
    %v993 = vpack.c.b16 %v770, %v769
    %v994 = vpack.c.b16 %v772, %v771
    %v995 = vpack.c.b16 %v774, %v773
    %v996 = vpack.c.b16 %v776, %v775
    %v997 = vpack.c.b16 %v778, %v777
    %v998 = vpack.c.b16 %v780, %v779
    %v999 = vpack.c.b16 %v782, %v781
    %v1000 = vpack.c.b16 %v784, %v783
    %v1001 = vpack.c.b16 %v786, %v785
    %v1002 = vpack.c.b16 %v788, %v787
    %v1003 = vpack.c.b16 %v790, %v789
    %v1004 = vpack.c.b16 %v792, %v791
    %v1005 = vpack.c.b16 %v794, %v793
    %v1006 = vpack.c.b16 %v796, %v795
    %v1007 = vpack.c.b16 %v798, %v797
    %v1008 = vpack.c.b16 %v800, %v799
    %v1009 = vpack.c.b16 %v802, %v801
    %v1010 = vpack.c.b16 %v804, %v803
    %v1011 = vpack.c.b16 %v806, %v805
    %v1012 = vpack.c.b16 %v808, %v807
    %v1013 = vpack.c.b16 %v810, %v809
    %v1014 = vpack.c.b16 %v812, %v811
    %v1015 = vpack.c.b16 %v814, %v813
    %v1016 = vpack.c.b16 %v816, %v815
    %v1017 = vpack.c.b16 %v818, %v817
    %v1018 = vpack.c.b16 %v820, %v819
    %v1019 = vpack.c.b16 %v822, %v821
    %v1020 = vpack.c.b16 %v824, %v823
    %v1021 = vpack.c.b16 %v826, %v825
    %v1022 = vpack.c.b16 %v828, %v827
    %v1023 = vpack.c.b16 %v830, %v829
    %v1024 = vpack.c.b16 %v832, %v831
    %v1025 = vpack.c.b16 %v834, %v833
    %v1026 = vpack.c.b16 %v836, %v835
    %v1027 = vpack.c.b16 %v838, %v837
    %v1028 = vpack.c.b16 %v840, %v839
    %v1029 = vpack.c.b16 %v842, %v841
    %v1030 = vpack.c.b16 %v844, %v843
    %v1031 = vpack.c.b16 %v846, %v845
    %v1032 = vpack.c.b16 %v848, %v847
    %v1033 = vpack.c.b16 %v850, %v849
    %v1034 = vpack.c.b16 %v852, %v851
    %v1035 = vpack.c.b16 %v854, %v853
    %v1036 = vpack.c.b16 %v856, %v855
    %v1037 = vpack.c.b16 %v858, %v857
    %v1038 = vpack.c.b16 %v860, %v859
    %v1039 = vpack.c.b16 %v862, %v861
    %v1040 = vpack.c.b16 %v864, %v863
    %v1041 = vpack.c.b16 %v866, %v865
    %v1042 = vpack.c.b16 %v868, %v867
    %v1043 = vpack.c.b16 %v870, %v869
    %v1044 = vpack.c.b16 %v872, %v871
    %v1045 = vpack.c.b16 %v874, %v873
    %v1046 = vpack.c.b16 %v876, %v875
    %v1047 = vpack.c.b16 %v878, %v877
    %v1048 = vpack.c.b16 %v880, %v879
    %v1049 = vpack.c.b16 %v882, %v881
    %v1050 = vpack.c.b16 %v884, %v883
    %v1051 = vpack.c.b16 %v886, %v885
    %v1052 = vpack.c.b16 %v888, %v887
    %v1053 = vpack.c.b16 %v890, %v889
    %v1054 = vpack.c.b16 %v892, %v891
    %v1055 = vpack.c.b16 %v894, %v893
    %v1056 = vpack.c.b16 %v896, %v895
    %v1057 = vpack.c.b16 %v898, %v897
    %v1058 = vpack.c.b16 %v900, %v899
    %v1059 = vpack.c.b16 %v902, %v901
    %v1060 = vpack.c.b16 %v904, %v903
    %v1061 = vpack.c.b16 %v906, %v905
    %v1062 = vpack.c.b16 %v908, %v907
    %v1063 = vpack.c.b16 %v910, %v909
    %v1064 = vpack.c.b16 %v912, %v911
    %v1065 = vpack.c.b16 %v914, %v913
    %v1066 = vpack.c.b16 %v916, %v915
    %v1067 = vpack.c.b16 %v918, %v917
    %v1068 = vpack.c.b16 %v920, %v919
    %v1069 = vpack.c.b16 %v922, %v921
    %v1070 = vpack.c.b16 %v924, %v923
    %v1071 = vpack.c.b16 %v926, %v925
    %v1072 = vpack.c.b16 %v928, %v927
    %v1073 = vpack.c.b16 %v930, %v929
    %v1074 = vpack.c.b16 %v932, %v931
    %v1075 = vpack.c.b16 %v934, %v933
    %v1076 = vpack.c.b16 %v936, %v935
    %v1077 = vpack.c.b16 %v938, %v937
    %v1078 = vpack.c.b16 %v940, %v939
    %v1079 = vpack.c.b16 %v942, %v941
    %v1080 = vpack.c.b16 %v944, %v943
    %v1081 = vpack.c.b16 %v946, %v945
    %v1082 = vpack.c.b16 %v948, %v947
    %v1083 = vpack.c.b16 %v950, %v949
    %v1084 = vpack.c.b16 %v952, %v951
    %v1085 = vpack.c.b16 %v954, %v953
    %v1086 = vpack.c.b16 %v956, %v955
    %v1087 = vpack.c.b16 %v958, %v957
    %v1088 = vpack.c.b16 %v960, %v959
    %1217 = vmatpush.bf16.msra.mxu0 %v968
    %1218 = vmatpush.bf16.msra.mxu0 %v967
    %1219 = vmatpush.bf16.msra.mxu0 %v966
    %1220 = vmatpush.bf16.msra.mxu0 %v965
    %1221 = vmatpush.bf16.msra.mxu0 %v964
    %1222 = vmatpush.bf16.msra.mxu0 %v963
    %1223 = vmatpush.bf16.msra.mxu0 %v962
    %1224 = vmatpush.bf16.msra.mxu0 %v961
    %1225 = vmatmul.bf16.gmra.mxu0 %v173
    %v1226 = vpop.f32.mrf.mxu0
    %v1227 = vadd.f32 %v447, %v1226
    %v1228 = vpop.f32.mrf.mxu0
    %v1229 = vadd.f32 %v447, %v1228
    %1230 = vdwg.mxu0
    %1231 = vmatpush.bf16.msra.mxu0 %v976
    %1232 = vmatpush.bf16.msra.mxu0 %v975
    %1233 = vmatpush.bf16.msra.mxu0 %v974
    %1234 = vmatpush.bf16.msra.mxu0 %v973
    %1235 = vmatpush.bf16.msra.mxu0 %v972
    %1236 = vmatpush.bf16.msra.mxu0 %v971
    %1237 = vmatpush.bf16.msra.mxu0 %v970
    %1238 = vmatpush.bf16.msra.mxu0 %v969
    %1239 = vmatmul.bf16.gmra.mxu0 %v174
    %v1240 = vpop.f32.mrf.mxu0
    %v1241 = vadd.f32 %v1227, %v1240
    %v1242 = vpop.f32.mrf.mxu0
    %v1243 = vadd.f32 %v1229, %v1242
    %1244 = vdwg.mxu0
    %1245 = vmatpush.bf16.msra.mxu0 %v984
    %1246 = vmatpush.bf16.msra.mxu0 %v983
    %1247 = vmatpush.bf16.msra.mxu0 %v982
    %1248 = vmatpush.bf16.msra.mxu0 %v981
    %1249 = vmatpush.bf16.msra.mxu0 %v980
    %1250 = vmatpush.bf16.msra.mxu0 %v979
    %1251 = vmatpush.bf16.msra.mxu0 %v978
    %1252 = vmatpush.bf16.msra.mxu0 %v977
    %1253 = vmatmul.bf16.gmra.mxu0 %v175
    %v1254 = vpop.f32.mrf.mxu0
    %v1255 = vadd.f32 %v1241, %v1254
    %v1256 = vpop.f32.mrf.mxu0
    %v1257 = vadd.f32 %v1243, %v1256
    %1258 = vdwg.mxu0
    %1259 = vmatpush.bf16.msra.mxu0 %v992
    %1260 = vmatpush.bf16.msra.mxu0 %v991
    %1261 = vmatpush.bf16.msra.mxu0 %v990
    %1262 = vmatpush.bf16.msra.mxu0 %v989
    %1263 = vmatpush.bf16.msra.mxu0 %v988
    %1264 = vmatpush.bf16.msra.mxu0 %v987
    %1265 = vmatpush.bf16.msra.mxu0 %v986
    %1266 = vmatpush.bf16.msra.mxu0 %v985
    %1267 = vmatmul.bf16.gmra.mxu0 %v176
    %v1268 = vpop.f32.mrf.mxu0
    %v1269 = vadd.f32 %v1255, %v1268
    %v1270 = vpop.f32.mrf.mxu0
    %v1271 = vadd.f32 %v1257, %v1270
    %1272 = vdwg.mxu0
    %1273 = vmatpush.bf16.msra.mxu0 %v1000
    %1274 = vmatpush.bf16.msra.mxu0 %v999
    %1275 = vmatpush.bf16.msra.mxu0 %v998
    %1276 = vmatpush.bf16.msra.mxu0 %v997
    %1277 = vmatpush.bf16.msra.mxu0 %v996
    %1278 = vmatpush.bf16.msra.mxu0 %v995
    %1279 = vmatpush.bf16.msra.mxu0 %v994
    %1280 = vmatpush.bf16.msra.mxu0 %v993
    %1281 = vmatmul.bf16.gmra.mxu0 %v177
    %v1282 = vpop.f32.mrf.mxu0
    %v1283 = vadd.f32 %v1269, %v1282
    %v1284 = vpop.f32.mrf.mxu0
    %v1285 = vadd.f32 %v1271, %v1284
    %1286 = vdwg.mxu0
    %1287 = vmatpush.bf16.msra.mxu0 %v1008
    %1288 = vmatpush.bf16.msra.mxu0 %v1007
    %1289 = vmatpush.bf16.msra.mxu0 %v1006
    %1290 = vmatpush.bf16.msra.mxu0 %v1005
    %1291 = vmatpush.bf16.msra.mxu0 %v1004
    %1292 = vmatpush.bf16.msra.mxu0 %v1003
    %1293 = vmatpush.bf16.msra.mxu0 %v1002
    %1294 = vmatpush.bf16.msra.mxu0 %v1001
    %1295 = vmatmul.bf16.gmra.mxu0 %v178
    %v1296 = vpop.f32.mrf.mxu0
    %v1297 = vadd.f32 %v1283, %v1296
    %v1298 = vpop.f32.mrf.mxu0
    %v1299 = vadd.f32 %v1285, %v1298
    %1300 = vdwg.mxu0
    %1301 = vmatpush.bf16.msra.mxu0 %v1016
    %1302 = vmatpush.bf16.msra.mxu0 %v1015
    %1303 = vmatpush.bf16.msra.mxu0 %v1014
    %1304 = vmatpush.bf16.msra.mxu0 %v1013
    %1305 = vmatpush.bf16.msra.mxu0 %v1012
    %1306 = vmatpush.bf16.msra.mxu0 %v1011
    %1307 = vmatpush.bf16.msra.mxu0 %v1010
    %1308 = vmatpush.bf16.msra.mxu0 %v1009
    %1309 = vmatmul.bf16.gmra.mxu0 %v179
    %v1310 = vpop.f32.mrf.mxu0
    %v1311 = vadd.f32 %v1297, %v1310
    %v1312 = vpop.f32.mrf.mxu0
    %v1313 = vadd.f32 %v1299, %v1312
    %1314 = vdwg.mxu0
    %1315 = vmatpush.bf16.msra.mxu0 %v1024
    %1316 = vmatpush.bf16.msra.mxu0 %v1023
    %1317 = vmatpush.bf16.msra.mxu0 %v1022
    %1318 = vmatpush.bf16.msra.mxu0 %v1021
    %1319 = vmatpush.bf16.msra.mxu0 %v1020
    %1320 = vmatpush.bf16.msra.mxu0 %v1019
    %1321 = vmatpush.bf16.msra.mxu0 %v1018
    %1322 = vmatpush.bf16.msra.mxu0 %v1017
    %1323 = vmatmul.bf16.gmra.mxu0 %v180
    %v1324 = vpop.f32.mrf.mxu0
    %v1325 = vadd.f32 %v1311, %v1324
    %v1326 = vpop.f32.mrf.mxu0
    %v1327 = vadd.f32 %v1313, %v1326
    %1328 = vdwg.mxu0
    %1329 = vmatpush.bf16.msra.mxu0 %v1032
    %1330 = vmatpush.bf16.msra.mxu0 %v1031
    %1331 = vmatpush.bf16.msra.mxu0 %v1030
    %1332 = vmatpush.bf16.msra.mxu0 %v1029
    %1333 = vmatpush.bf16.msra.mxu0 %v1028
    %1334 = vmatpush.bf16.msra.mxu0 %v1027
    %1335 = vmatpush.bf16.msra.mxu0 %v1026
    %1336 = vmatpush.bf16.msra.mxu0 %v1025
    %1337 = vmatmul.bf16.gmra.mxu0 %v181
    %v1338 = vpop.f32.mrf.mxu0
    %v1339 = vadd.f32 %v1325, %v1338
    %v1340 = vpop.f32.mrf.mxu0
    %v1341 = vadd.f32 %v1327, %v1340
    %1342 = vdwg.mxu0
    %1343 = vmatpush.bf16.msra.mxu0 %v1040
    %1344 = vmatpush.bf16.msra.mxu0 %v1039
    %1345 = vmatpush.bf16.msra.mxu0 %v1038
    %1346 = vmatpush.bf16.msra.mxu0 %v1037
    %1347 = vmatpush.bf16.msra.mxu0 %v1036
    %1348 = vmatpush.bf16.msra.mxu0 %v1035
    %1349 = vmatpush.bf16.msra.mxu0 %v1034
    %1350 = vmatpush.bf16.msra.mxu0 %v1033
    %1351 = vmatmul.bf16.gmra.mxu0 %v182
    %v1352 = vpop.f32.mrf.mxu0
    %v1353 = vadd.f32 %v1339, %v1352
    %v1354 = vpop.f32.mrf.mxu0
    %v1355 = vadd.f32 %v1341, %v1354
    %1356 = vdwg.mxu0
    %1357 = vmatpush.bf16.msra.mxu0 %v1048
    %1358 = vmatpush.bf16.msra.mxu0 %v1047
    %1359 = vmatpush.bf16.msra.mxu0 %v1046
    %1360 = vmatpush.bf16.msra.mxu0 %v1045
    %1361 = vmatpush.bf16.msra.mxu0 %v1044
    %1362 = vmatpush.bf16.msra.mxu0 %v1043
    %1363 = vmatpush.bf16.msra.mxu0 %v1042
    %1364 = vmatpush.bf16.msra.mxu0 %v1041
    %1365 = vmatmul.bf16.gmra.mxu0 %v183
    %v1366 = vpop.f32.mrf.mxu0
    %v1367 = vadd.f32 %v1353, %v1366
    %v1368 = vpop.f32.mrf.mxu0
    %v1369 = vadd.f32 %v1355, %v1368
    %1370 = vdwg.mxu0
    %1371 = vmatpush.bf16.msra.mxu0 %v1056
    %1372 = vmatpush.bf16.msra.mxu0 %v1055
    %1373 = vmatpush.bf16.msra.mxu0 %v1054
    %1374 = vmatpush.bf16.msra.mxu0 %v1053
    %1375 = vmatpush.bf16.msra.mxu0 %v1052
    %1376 = vmatpush.bf16.msra.mxu0 %v1051
    %1377 = vmatpush.bf16.msra.mxu0 %v1050
    %1378 = vmatpush.bf16.msra.mxu0 %v1049
    %1379 = vmatmul.bf16.gmra.mxu0 %v184
    %v1380 = vpop.f32.mrf.mxu0
    %v1381 = vadd.f32 %v1367, %v1380
    %v1382 = vpop.f32.mrf.mxu0
    %v1383 = vadd.f32 %v1369, %v1382
    %1384 = vdwg.mxu0
    %1385 = vmatpush.bf16.msra.mxu0 %v1064
    %1386 = vmatpush.bf16.msra.mxu0 %v1063
    %1387 = vmatpush.bf16.msra.mxu0 %v1062
    %1388 = vmatpush.bf16.msra.mxu0 %v1061
    %1389 = vmatpush.bf16.msra.mxu0 %v1060
    %1390 = vmatpush.bf16.msra.mxu0 %v1059
    %1391 = vmatpush.bf16.msra.mxu0 %v1058
    %1392 = vmatpush.bf16.msra.mxu0 %v1057
    %1393 = vmatmul.bf16.gmra.mxu0 %v185
    %v1394 = vpop.f32.mrf.mxu0
    %v1395 = vadd.f32 %v1381, %v1394
    %v1396 = vpop.f32.mrf.mxu0
    %v1397 = vadd.f32 %v1383, %v1396
    %1398 = vdwg.mxu0
    %1399 = vmatpush.bf16.msra.mxu0 %v1072
    %1400 = vmatpush.bf16.msra.mxu0 %v1071
    %1401 = vmatpush.bf16.msra.mxu0 %v1070
    %1402 = vmatpush.bf16.msra.mxu0 %v1069
    %1403 = vmatpush.bf16.msra.mxu0 %v1068
    %1404 = vmatpush.bf16.msra.mxu0 %v1067
    %1405 = vmatpush.bf16.msra.mxu0 %v1066
    %1406 = vmatpush.bf16.msra.mxu0 %v1065
    %1407 = vmatmul.bf16.gmra.mxu0 %v186
    %v1408 = vpop.f32.mrf.mxu0
    %v1409 = vadd.f32 %v1395, %v1408
    %v1410 = vpop.f32.mrf.mxu0
    %v1411 = vadd.f32 %v1397, %v1410
    %1412 = vdwg.mxu0
    %1413 = vmatpush.bf16.msra.mxu0 %v1080
    %1414 = vmatpush.bf16.msra.mxu0 %v1079
    %1415 = vmatpush.bf16.msra.mxu0 %v1078
    %1416 = vmatpush.bf16.msra.mxu0 %v1077
    %1417 = vmatpush.bf16.msra.mxu0 %v1076
    %1418 = vmatpush.bf16.msra.mxu0 %v1075
    %1419 = vmatpush.bf16.msra.mxu0 %v1074
    %1420 = vmatpush.bf16.msra.mxu0 %v1073
    %1421 = vmatmul.bf16.gmra.mxu0 %v187
    %v1422 = vpop.f32.mrf.mxu0
    %v1423 = vadd.f32 %v1409, %v1422
    %v1424 = vpop.f32.mrf.mxu0
    %v1425 = vadd.f32 %v1411, %v1424
    %1426 = vdwg.mxu0
    %1427 = vmatpush.bf16.msra.mxu0 %v1088
    %1428 = vmatpush.bf16.msra.mxu0 %v1087
    %1429 = vmatpush.bf16.msra.mxu0 %v1086
    %1430 = vmatpush.bf16.msra.mxu0 %v1085
    %1431 = vmatpush.bf16.msra.mxu0 %v1084
    %1432 = vmatpush.bf16.msra.mxu0 %v1083
    %1433 = vmatpush.bf16.msra.mxu0 %v1082
    %1434 = vmatpush.bf16.msra.mxu0 %v1081
    %1435 = vmatmul.bf16.gmra.mxu0 %v188
    %v1436 = vpop.f32.mrf.mxu0
    %v1437 = vadd.f32 %v1423, %v1436
    %v1438 = vpop.f32.mrf.mxu0
    %v1439 = vadd.f32 %v1425, %v1438
    %1440 = vdwg.mxu0
    %v1441 = vld [vmem:[#allocation9] sm:$0xff]
    %v1442 = vld [vmem:[#allocation9 + $0x8] sm:$0xff]
    %v1443 = vadd.f32 %v1437, %v1441
    %v1444 = vadd.f32 %v1439, %v1442
    %v1445 = vld [vmem:[#allocation9 + $0x10] sm:$0x1]
    %v1446 = vld [vmem:[#allocation9 + $0x11] sm:$0x1]
    %vm1447 = vcmask 261120
    %v1448 = vsel %vm1447, %v1443, 0.0
    %1449 = vadd.xlane.f32.xlu0 %v1448
    %v1450 = vpop.xlane.xlu0 %1449
    %v1451 = vsel %vm1447, %v1444, 0.0
    %1452 = vadd.xlane.f32.xlu0 %v1451
    %v1453 = vpop.xlane.xlu0 %1452
    %v1454 = vrcp.pop 32.0
    %v1455 = vmul.f32 32.0, %v1454
    %v1456 = vsub.f32 1.0, %v1455
    %v1457 = vmul.f32 %v1454, %v1456
    %v1458 = vadd.f32 %v1454, %v1457
    %vm1459 = vweird.f32 %v1454
    %v1460 = vsel %vm1459, %v1454, %v1458
    %v1461 = vmul.f32 %v1450, %v1460
    %v1462 = vmul.f32 %v1453, %v1460
    %v1463 = vsub.f32 %v1443, %v1461
    %v1464 = vsub.f32 %v1444, %v1462
    %v1465 = vmul.f32 %v1463, %v1463
    %v1466 = vmul.f32 %v1464, %v1464
    %v1467 = vsel %vm1447, %v1465, 0.0
    %1468 = vadd.xlane.f32.xlu0 %v1467
    %v1469 = vpop.xlane.xlu0 %1468
    %v1470 = vsel %vm1447, %v1466, 0.0
    %1471 = vadd.xlane.f32.xlu0 %v1470
    %v1472 = vpop.xlane.xlu0 %1471
    %v1473 = vmul.f32 %v1469, %v1460
    %v1474 = vmul.f32 %v1472, %v1460
    %v1475 = vadd.f32 %v1473, 1e-05
    %v1476 = vadd.f32 %v1474, 1e-05
    %v1477 = vrsqrt.pop %v1475
    %v1478 = vmul.f32 %v1477, %v1475
    %v1479 = vmul.f32 %v1478, %v1477
    %v1480 = vmul.f32 0.5, %v1479
    %v1481 = vsub.f32 1.5, %v1480
    %v1482 = vmul.f32 %v1477, %v1481
    %vm1483 = vweird.f32 %v1475
    %vm1484 = vweird.f32 %v1477
    %vm1485 = vmor %vm1483, %vm1484
    %v1486 = vsel %vm1485, %v1477, %v1482
    %v1487 = vrsqrt.pop %v1476
    %v1488 = vmul.f32 %v1487, %v1476
    %v1489 = vmul.f32 %v1488, %v1487
    %v1490 = vmul.f32 0.5, %v1489
    %v1491 = vsub.f32 1.5, %v1490
    %v1492 = vmul.f32 %v1487, %v1491
    %vm1493 = vweird.f32 %v1476
    %vm1494 = vweird.f32 %v1487
    %vm1495 = vmor %vm1493, %vm1494
    %v1496 = vsel %vm1495, %v1487, %v1492
    %v1497 = vmul.f32 %v1463, %v1486
    %v1498 = vmul.f32 %v1464, %v1496
    %v1499 = vperm.slane %v1445, 0
    %v1500 = vmul.f32 %v1497, %v1499
    %v1501 = vmul.f32 %v1498, %v1499
    %v1502 = vperm.slane %v1446, 0
    %v1503 = vadd.f32 %v1500, %v1502
    %v1504 = vadd.f32 %v1501, %v1502
    %v1505 = vld [vmem:[#allocation7] sm:$0xf]
    %v1506 = vld [vmem:[#allocation7 + $0x4] sm:$0xf]
    %v1507 = vld [vmem:[#allocation7 + $0x8] sm:$0xf]
    %v1508 = vld [vmem:[#allocation7 + $0xc] sm:$0xf]
    %v1509 = vpack.c.bf16 %v1504, %v1503
    %v1510 = vld [vmem:[#allocation9 + $0x12] sm:$0x1]
    %v1511 = vperm.slane %v1510, 0
    %v1516 = vunpack.c.l.b16 %v1505
    %v1517 = vunpack.c.l.b16 %v1506
    %v1518 = vunpack.c.l.b16 %v1507
    %v1519 = vunpack.c.l.b16 %v1508
    %v1520 = vpack.c.b16 %v1517, %v1516
    %v1521 = vpack.c.b16 %v1519, %v1518
    %v1525 = vsel %vm1447, %v1509, 0
    %1527 = vmatpush.bf16.msra.mxu0 0
    %1528 = vmatpush.bf16.msra.mxu0 0
    %1529 = vmatpush.bf16.msra.mxu0 0
    %1530 = vmatpush.bf16.msra.mxu0 0
    %1531 = vmatpush.bf16.msra.mxu0 0
    %1532 = vmatpush.bf16.msra.mxu0 0
    %1533 = vmatpush.bf16.msra.mxu0 %v1521
    %1534 = vmatpush.bf16.msra.mxu0 %v1520
    %1535 = vmatmul.bf16.gmra.mxu0 %v1525
    %v1536 = vpop.f32.mrf.mxu0
    %v1537 = vadd.f32 %v1511, %v1536
    %v1538 = vpop.f32.mrf.mxu0
    %v1539 = vadd.f32 %v1511, %v1538
    %1540 = vdwg.mxu0
    %v1541 = vpack.c.bf16 %v1539, %v1537
    %1543 = vrot.lane.b32.xlu0 %v1541, 96
    %v1544 = vpop.permute.xlu0 %1543
    %vm1545 = vcmask 64512
    %v1547 = vsel %vm1545, %v1541, 0
    %v1550 = vsel %vm1545, %v1544, 0
    %1552 = vmatpush.bf16.xpose.msra.mxu0 0
    %1553 = vmatpush.bf16.xpose.msra.mxu0 0
    %1554 = vmatpush.bf16.xpose.msra.mxu0 0
    %1555 = vmatpush.bf16.xpose.msra.mxu0 0
    %1556 = vmatpush.bf16.xpose.msra.mxu0 0
    %1557 = vmatpush.bf16.xpose.msra.mxu0 0
    %1558 = vmatpush.bf16.xpose.msra.mxu0 0
    %1559 = vmatpush.bf16.xpose.msra.mxu0 %v1550
    %1560 = vmatmul.bf16.gmra.mxu0 %v1547
    %v1561 = vpop.f32.mrf.mxu0
    %v1562 = vadd.f32 %v139, %v1561
    %v1563 = vpop.f32.mrf.mxu0
    %v1564 = vadd.f32 %v140, %v1563
    %1565 = vdwg.mxu0
    %vm1566 = vcmask 130048
    %v1567 = vsel %vm1566, %v1562, -inf
    %1568 = vmax.xlane.f32.xlu0 %v1567
    %v1569 = vpop.xlane.xlu0 %1568
    %v1570 = vsel %vm1566, %v1564, -inf
    %1571 = vmax.xlane.f32.xlu0 %v1570
    %v1572 = vpop.xlane.xlu0 %1571
    %v1573 = vsub.f32 %v1562, %v1569
    %v1574 = vsub.f32 %v1564, %v1572
    %v1575 = vmul.f32 %v1573, 1.442695
    %v1576 = vpow.pop %v1575
    %v1577 = vmul.f32 %v1574, 1.442695
    %v1578 = vpow.pop %v1577
    %v1579 = vsel %vm1566, %v1576, 0.0
    %1580 = vadd.xlane.f32.xlu0 %v1579
    %v1581 = vpop.xlane.xlu0 %1580
    %v1582 = vsel %vm1566, %v1578, 0.0
    %1583 = vadd.xlane.f32.xlu0 %v1582
    %v1584 = vpop.xlane.xlu0 %1583
    %v1585 = vrcp.pop %v1581
    %v1586 = vrcp.pop %v1584
    %v1587 = vmul.f32 %v1576, %v1585
    %v1588 = vmul.f32 %v1578, %v1586
    %v1589 = vpack.c.bf16 %v1588, %v1587
    %1590 = vrot.lane.b32.xlu0 %v1541, 64
    %v1591 = vpop.permute.xlu0 %1590
    %v1594 = vsel %vm1566, %v1589, 0
    %1596 = vmatpush.bf16.msra.mxu0 0
    %1597 = vmatpush.bf16.msra.mxu0 0
    %1598 = vmatpush.bf16.msra.mxu0 0
    %1599 = vmatpush.bf16.msra.mxu0 0
    %1600 = vmatpush.bf16.msra.mxu0 0
    %1601 = vmatpush.bf16.msra.mxu0 0
    %1602 = vmatpush.bf16.msra.mxu0 0
    %1603 = vmatpush.bf16.msra.mxu0 %v1591
    %1604 = vmatmul.bf16.gmra.mxu0 %v1594
    %v1605 = vpop.f32.mrf.mxu0
    %v1606 = vadd.f32 0.0, %v1605
    %v1607 = vpop.f32.mrf.mxu0
    %v1608 = vadd.f32 0.0, %v1607
    %1609 = vdwg.mxu0
    %1610 = vrot.lane.b32.xlu0 %v1541, 120
    %v1611 = vpop.permute.xlu0 %1610
    %1612 = vrot.lane.b32.xlu0 %v1541, 88
    %v1613 = vpop.permute.xlu0 %1612
    %v1615 = vsel %vm1545, %v1611, 0
    %v1618 = vsel %vm1545, %v1613, 0
    %1620 = vmatpush.bf16.xpose.msra.mxu0 0
    %1621 = vmatpush.bf16.xpose.msra.mxu0 0
    %1622 = vmatpush.bf16.xpose.msra.mxu0 0
    %1623 = vmatpush.bf16.xpose.msra.mxu0 0
    %1624 = vmatpush.bf16.xpose.msra.mxu0 0
    %1625 = vmatpush.bf16.xpose.msra.mxu0 0
    %1626 = vmatpush.bf16.xpose.msra.mxu0 0
    %1627 = vmatpush.bf16.xpose.msra.mxu0 %v1618
    %1628 = vmatmul.bf16.gmra.mxu0 %v1615
    %v1629 = vpop.f32.mrf.mxu0
    %v1630 = vadd.f32 %v139, %v1629
    %v1631 = vpop.f32.mrf.mxu0
    %v1632 = vadd.f32 %v140, %v1631
    %1633 = vdwg.mxu0
    %v1634 = vsel %vm1566, %v1630, -inf
    %1635 = vmax.xlane.f32.xlu0 %v1634
    %v1636 = vpop.xlane.xlu0 %1635
    %v1637 = vsel %vm1566, %v1632, -inf
    %1638 = vmax.xlane.f32.xlu0 %v1637
    %v1639 = vpop.xlane.xlu0 %1638
    %v1640 = vsub.f32 %v1630, %v1636
    %v1641 = vsub.f32 %v1632, %v1639
    %v1642 = vmul.f32 %v1640, 1.442695
    %v1643 = vpow.pop %v1642
    %v1644 = vmul.f32 %v1641, 1.442695
    %v1645 = vpow.pop %v1644
    %v1646 = vsel %vm1566, %v1643, 0.0
    %1647 = vadd.xlane.f32.xlu0 %v1646
    %v1648 = vpop.xlane.xlu0 %1647
    %v1649 = vsel %vm1566, %v1645, 0.0
    %1650 = vadd.xlane.f32.xlu0 %v1649
    %v1651 = vpop.xlane.xlu0 %1650
    %v1652 = vrcp.pop %v1648
    %v1653 = vrcp.pop %v1651
    %v1654 = vmul.f32 %v1643, %v1652
    %v1655 = vmul.f32 %v1645, %v1653
    %v1656 = vpack.c.bf16 %v1655, %v1654
    %1657 = vrot.lane.b32.xlu0 %v1541, 56
    %v1658 = vpop.permute.xlu0 %1657
    %v1661 = vsel %vm1566, %v1656, 0
    %1663 = vmatpush.bf16.msra.mxu0 0
    %1664 = vmatpush.bf16.msra.mxu0 0
    %1665 = vmatpush.bf16.msra.mxu0 0
    %1666 = vmatpush.bf16.msra.mxu0 0
    %1667 = vmatpush.bf16.msra.mxu0 0
    %1668 = vmatpush.bf16.msra.mxu0 0
    %1669 = vmatpush.bf16.msra.mxu0 0
    %1670 = vmatpush.bf16.msra.mxu0 %v1658
    %1671 = vmatmul.bf16.gmra.mxu0 %v1661
    %v1672 = vpop.f32.mrf.mxu0
    %v1673 = vadd.f32 0.0, %v1672
    %v1674 = vpop.f32.mrf.mxu0
    %v1675 = vadd.f32 0.0, %v1674
    %1676 = vdwg.mxu0
    %1677 = vrot.lane.b32.xlu0 %v1541, 112
    %v1678 = vpop.permute.xlu0 %1677
    %1679 = vrot.lane.b32.xlu0 %v1541, 80
    %v1680 = vpop.permute.xlu0 %1679
    %v1682 = vsel %vm1545, %v1678, 0
    %v1685 = vsel %vm1545, %v1680, 0
    %1687 = vmatpush.bf16.xpose.msra.mxu0 0
    %1688 = vmatpush.bf16.xpose.msra.mxu0 0
    %1689 = vmatpush.bf16.xpose.msra.mxu0 0
    %1690 = vmatpush.bf16.xpose.msra.mxu0 0
    %1691 = vmatpush.bf16.xpose.msra.mxu0 0
    %1692 = vmatpush.bf16.xpose.msra.mxu0 0
    %1693 = vmatpush.bf16.xpose.msra.mxu0 0
    %1694 = vmatpush.bf16.xpose.msra.mxu0 %v1685
    %1695 = vmatmul.bf16.gmra.mxu0 %v1682
    %v1696 = vpop.f32.mrf.mxu0
    %v1697 = vadd.f32 %v139, %v1696
    %v1698 = vpop.f32.mrf.mxu0
    %v1699 = vadd.f32 %v140, %v1698
    %1700 = vdwg.mxu0
    %v1701 = vsel %vm1566, %v1697, -inf
    %1702 = vmax.xlane.f32.xlu0 %v1701
    %v1703 = vpop.xlane.xlu0 %1702
    %v1704 = vsel %vm1566, %v1699, -inf
    %1705 = vmax.xlane.f32.xlu0 %v1704
    %v1706 = vpop.xlane.xlu0 %1705
    %v1707 = vsub.f32 %v1697, %v1703
    %v1708 = vsub.f32 %v1699, %v1706
    %v1709 = vmul.f32 %v1707, 1.442695
    %v1710 = vpow.pop %v1709
    %v1711 = vmul.f32 %v1708, 1.442695
    %v1712 = vpow.pop %v1711
    %v1713 = vsel %vm1566, %v1710, 0.0
    %1714 = vadd.xlane.f32.xlu0 %v1713
    %v1715 = vpop.xlane.xlu0 %1714
    %v1716 = vsel %vm1566, %v1712, 0.0
    %1717 = vadd.xlane.f32.xlu0 %v1716
    %v1718 = vpop.xlane.xlu0 %1717
    %v1719 = vrcp.pop %v1715
    %v1720 = vrcp.pop %v1718
    %v1721 = vmul.f32 %v1710, %v1719
    %v1722 = vmul.f32 %v1712, %v1720
    %v1723 = vpack.c.bf16 %v1722, %v1721
    %1724 = vrot.lane.b32.xlu0 %v1541, 48
    %v1725 = vpop.permute.xlu0 %1724
    %v1728 = vsel %vm1566, %v1723, 0
    %1730 = vmatpush.bf16.msra.mxu0 0
    %1731 = vmatpush.bf16.msra.mxu0 0
    %1732 = vmatpush.bf16.msra.mxu0 0
    %1733 = vmatpush.bf16.msra.mxu0 0
    %1734 = vmatpush.bf16.msra.mxu0 0
    %1735 = vmatpush.bf16.msra.mxu0 0
    %1736 = vmatpush.bf16.msra.mxu0 0
    %1737 = vmatpush.bf16.msra.mxu0 %v1725
    %1738 = vmatmul.bf16.gmra.mxu0 %v1728
    %v1739 = vpop.f32.mrf.mxu0
    %v1740 = vadd.f32 0.0, %v1739
    %v1741 = vpop.f32.mrf.mxu0
    %v1742 = vadd.f32 0.0, %v1741
    %1743 = vdwg.mxu0
    %1744 = vrot.lane.b32.xlu0 %v1541, 104
    %v1745 = vpop.permute.xlu0 %1744
    %1746 = vrot.lane.b32.xlu0 %v1541, 72
    %v1747 = vpop.permute.xlu0 %1746
    %v1749 = vsel %vm1545, %v1745, 0
    %v1752 = vsel %vm1545, %v1747, 0
    %1754 = vmatpush.bf16.xpose.msra.mxu0 0
    %1755 = vmatpush.bf16.xpose.msra.mxu0 0
    %1756 = vmatpush.bf16.xpose.msra.mxu0 0
    %1757 = vmatpush.bf16.xpose.msra.mxu0 0
    %1758 = vmatpush.bf16.xpose.msra.mxu0 0
    %1759 = vmatpush.bf16.xpose.msra.mxu0 0
    %1760 = vmatpush.bf16.xpose.msra.mxu0 0
    %1761 = vmatpush.bf16.xpose.msra.mxu0 %v1752
    %1762 = vmatmul.bf16.gmra.mxu0 %v1749
    %v1763 = vpop.f32.mrf.mxu0
    %v1764 = vadd.f32 %v139, %v1763
    %v1765 = vpop.f32.mrf.mxu0
    %v1766 = vadd.f32 %v140, %v1765
    %1767 = vdwg.mxu0
    %v1768 = vsel %vm1566, %v1764, -inf
    %1769 = vmax.xlane.f32.xlu0 %v1768
    %v1770 = vpop.xlane.xlu0 %1769
    %v1771 = vsel %vm1566, %v1766, -inf
    %1772 = vmax.xlane.f32.xlu0 %v1771
    %v1773 = vpop.xlane.xlu0 %1772
    %v1774 = vsub.f32 %v1764, %v1770
    %v1775 = vsub.f32 %v1766, %v1773
    %v1776 = vmul.f32 %v1774, 1.442695
    %v1777 = vpow.pop %v1776
    %v1778 = vmul.f32 %v1775, 1.442695
    %v1779 = vpow.pop %v1778
    %v1780 = vsel %vm1566, %v1777, 0.0
    %1781 = vadd.xlane.f32.xlu0 %v1780
    %v1782 = vpop.xlane.xlu0 %1781
    %v1783 = vsel %vm1566, %v1779, 0.0
    %1784 = vadd.xlane.f32.xlu0 %v1783
    %v1785 = vpop.xlane.xlu0 %1784
    %v1786 = vrcp.pop %v1782
    %v1787 = vrcp.pop %v1785
    %v1788 = vmul.f32 %v1777, %v1786
    %v1789 = vmul.f32 %v1779, %v1787
    %v1790 = vpack.c.bf16 %v1789, %v1788
    %1791 = vrot.lane.b32.xlu0 %v1541, 40
    %v1792 = vpop.permute.xlu0 %1791
    %v1795 = vsel %vm1566, %v1790, 0
    %1797 = vmatpush.bf16.msra.mxu0 0
    %1798 = vmatpush.bf16.msra.mxu0 0
    %1799 = vmatpush.bf16.msra.mxu0 0
    %1800 = vmatpush.bf16.msra.mxu0 0
    %1801 = vmatpush.bf16.msra.mxu0 0
    %1802 = vmatpush.bf16.msra.mxu0 0
    %1803 = vmatpush.bf16.msra.mxu0 0
    %1804 = vmatpush.bf16.msra.mxu0 %v1792
    %1805 = vmatmul.bf16.gmra.mxu0 %v1795
    %v1806 = vpop.f32.mrf.mxu0
    %v1807 = vadd.f32 0.0, %v1806
    %v1808 = vpop.f32.mrf.mxu0
    %v1809 = vadd.f32 0.0, %v1808
    %1810 = vdwg.mxu0
    %1813 = vrot.lane.b32.xlu0 %v1673, 8
    %v1814 = vpop.permute.xlu0 %1813
    %1815 = vrot.lane.b32.xlu0 %v1675, 8
    %v1816 = vpop.permute.xlu0 %1815
    %1821 = vrot.lane.b32.xlu0 %v1740, 16
    %v1822 = vpop.permute.xlu0 %1821
    %1823 = vrot.lane.b32.xlu0 %v1742, 16
    %v1824 = vpop.permute.xlu0 %1823
    %1829 = vrot.lane.b32.xlu0 %v1807, 24
    %v1830 = vpop.permute.xlu0 %1829
    %1831 = vrot.lane.b32.xlu0 %v1809, 24
    %v1832 = vpop.permute.xlu0 %1831
    %v1835 = vsel %vm1545, %v1606, %v1814
    %v1836 = vsel %vm1545, %v1608, %v1816
    %v1837 = vsel %vm1566, %v1835, %v1822
    %v1838 = vsel %vm1566, %v1836, %v1824
    %vm1839 = vcmask 195584
    %v1840 = vsel %vm1839, %v1837, %v1830
    %v1841 = vsel %vm1839, %v1838, %v1832
    %v1842 = vld [vmem:[#allocation7 + $0x10] sm:$0xf]
    %v1843 = vld [vmem:[#allocation7 + $0x14] sm:$0xf]
    %v1844 = vld [vmem:[#allocation7 + $0x18] sm:$0xf]
    %v1845 = vld [vmem:[#allocation7 + $0x1c] sm:$0xf]
    %v1846 = vpack.c.bf16 %v1841, %v1840
    %v1851 = vunpack.c.l.b16 %v1842
    %v1852 = vunpack.c.l.b16 %v1843
    %v1853 = vunpack.c.l.b16 %v1844
    %v1854 = vunpack.c.l.b16 %v1845
    %v1855 = vpack.c.b16 %v1852, %v1851
    %v1856 = vpack.c.b16 %v1854, %v1853
    %v1860 = vsel %vm1447, %v1846, 0
    %1862 = vmatpush.bf16.msra.mxu0 0
    %1863 = vmatpush.bf16.msra.mxu0 0
    %1864 = vmatpush.bf16.msra.mxu0 0
    %1865 = vmatpush.bf16.msra.mxu0 0
    %1866 = vmatpush.bf16.msra.mxu0 0
    %1867 = vmatpush.bf16.msra.mxu0 0
    %1868 = vmatpush.bf16.msra.mxu0 %v1856
    %1869 = vmatpush.bf16.msra.mxu0 %v1855
    %1870 = vmatmul.bf16.gmra.mxu0 %v1860
    %v1871 = vpop.f32.mrf.mxu0
    %v1872 = vadd.f32 0.0, %v1871
    %v1873 = vpop.f32.mrf.mxu0
    %v1874 = vadd.f32 0.0, %v1873
    %1875 = vdwg.mxu0
    %v1876 = vadd.f32 %v1443, %v1872
    %v1877 = vadd.f32 %v1444, %v1874
    %v1878 = vld [vmem:[#allocation9 + $0x13] sm:$0x1]
    %v1879 = vperm.slane %v1878, 0
    %v1880 = vadd.f32 %v1876, %v1879
    %v1881 = vadd.f32 %v1877, %v1879
    %v1882 = vld [vmem:[#allocation9 + $0x14] sm:$0x1]
    %v1883 = vld [vmem:[#allocation9 + $0x15] sm:$0x1]
    %v1884 = vsel %vm1447, %v1880, 0.0
    %1885 = vadd.xlane.f32.xlu0 %v1884
    %v1886 = vpop.xlane.xlu0 %1885
    %v1887 = vsel %vm1447, %v1881, 0.0
    %1888 = vadd.xlane.f32.xlu0 %v1887
    %v1889 = vpop.xlane.xlu0 %1888
    %v1890 = vmul.f32 %v1886, %v1460
    %v1891 = vmul.f32 %v1889, %v1460
    %v1892 = vsub.f32 %v1880, %v1890
    %v1893 = vsub.f32 %v1881, %v1891
    %v1894 = vmul.f32 %v1892, %v1892
    %v1895 = vmul.f32 %v1893, %v1893
    %v1896 = vsel %vm1447, %v1894, 0.0
    %1897 = vadd.xlane.f32.xlu0 %v1896
    %v1898 = vpop.xlane.xlu0 %1897
    %v1899 = vsel %vm1447, %v1895, 0.0
    %1900 = vadd.xlane.f32.xlu0 %v1899
    %v1901 = vpop.xlane.xlu0 %1900
    %v1902 = vmul.f32 %v1898, %v1460
    %v1903 = vmul.f32 %v1901, %v1460
    %v1904 = vadd.f32 %v1902, 1e-05
    %v1905 = vadd.f32 %v1903, 1e-05
    %v1906 = vrsqrt.pop %v1904
    %v1907 = vmul.f32 %v1906, %v1904
    %v1908 = vmul.f32 %v1907, %v1906
    %v1909 = vmul.f32 0.5, %v1908
    %v1910 = vsub.f32 1.5, %v1909
    %v1911 = vmul.f32 %v1906, %v1910
    %vm1912 = vweird.f32 %v1904
    %vm1913 = vweird.f32 %v1906
    %vm1914 = vmor %vm1912, %vm1913
    %v1915 = vsel %vm1914, %v1906, %v1911
    %v1916 = vrsqrt.pop %v1905
    %v1917 = vmul.f32 %v1916, %v1905
    %v1918 = vmul.f32 %v1917, %v1916
    %v1919 = vmul.f32 0.5, %v1918
    %v1920 = vsub.f32 1.5, %v1919
    %v1921 = vmul.f32 %v1916, %v1920
    %vm1922 = vweird.f32 %v1905
    %vm1923 = vweird.f32 %v1916
    %vm1924 = vmor %vm1922, %vm1923
    %v1925 = vsel %vm1924, %v1916, %v1921
    %v1926 = vmul.f32 %v1892, %v1915
    %v1927 = vmul.f32 %v1893, %v1925
    %v1928 = vperm.slane %v1882, 0
    %v1929 = vmul.f32 %v1926, %v1928
    %v1930 = vmul.f32 %v1927, %v1928
    %v1931 = vperm.slane %v1883, 0
    %v1932 = vadd.f32 %v1929, %v1931
    %v1933 = vadd.f32 %v1930, %v1931
    %v1934 = vld [vmem:[#allocation7 + $0x20] sm:$0xf]
    %v1935 = vld [vmem:[#allocation7 + $0x24] sm:$0xf]
    %v1936 = vld [vmem:[#allocation7 + $0x28] sm:$0xf]
    %v1937 = vld [vmem:[#allocation7 + $0x2c] sm:$0xf]
    %v1938 = vpack.c.bf16 %v1933, %v1932
    %v1939 = vld [vmem:[#allocation9 + $0x16] sm:$0x1]
    %v1940 = vperm.slane %v1939, 0
    %v1945 = vunpack.c.l.b16 %v1934
    %v1946 = vunpack.c.l.b16 %v1935
    %v1947 = vunpack.c.l.b16 %v1936
    %v1948 = vunpack.c.l.b16 %v1937
    %v1949 = vpack.c.b16 %v1946, %v1945
    %v1950 = vpack.c.b16 %v1948, %v1947
    %v1954 = vsel %vm1447, %v1938, 0
    %1956 = vmatpush.bf16.msra.mxu0 0
    %1957 = vmatpush.bf16.msra.mxu0 0
    %1958 = vmatpush.bf16.msra.mxu0 0
    %1959 = vmatpush.bf16.msra.mxu0 0
    %1960 = vmatpush.bf16.msra.mxu0 0
    %1961 = vmatpush.bf16.msra.mxu0 0
    %1962 = vmatpush.bf16.msra.mxu0 %v1950
    %1963 = vmatpush.bf16.msra.mxu0 %v1949
    %1964 = vmatmul.bf16.gmra.mxu0 %v1954
    %v1965 = vpop.f32.mrf.mxu0
    %v1966 = vadd.f32 %v1940, %v1965
    %v1967 = vpop.f32.mrf.mxu0
    %v1968 = vadd.f32 %v1940, %v1967
    %1969 = vdwg.mxu0
    %v1970 = vmul.f32 %v1966, %v1966
    %v1971 = vmul.f32 %v1968, %v1968
    %v1972 = vmul.f32 %v1966, %v1970
    %v1973 = vmul.f32 %v1968, %v1971
    %v1974 = vmul.f32 %v1972, 0.044715
    %v1975 = vmul.f32 %v1973, 0.044715
    %v1976 = vadd.f32 %v1966, %v1974
    %v1977 = vadd.f32 %v1968, %v1975
    %v1978 = vmul.f32 %v1976, 0.7978846
    %v1979 = vmul.f32 %v1977, 0.7978846
    %v1980 = vtanh.pop %v1978
    %v1981 = vtanh.pop %v1979
    %v1982 = vadd.f32 %v1980, 1.0
    %v1983 = vadd.f32 %v1981, 1.0
    %v1984 = vmul.f32 %v1982, 0.5
    %v1985 = vmul.f32 %v1983, 0.5
    %v1986 = vmul.f32 %v1966, %v1984
    %v1987 = vmul.f32 %v1968, %v1985
    %v1988 = vld [vmem:[#allocation7 + $0x30] sm:$0xf]
    %v1989 = vld [vmem:[#allocation7 + $0x34] sm:$0xf]
    %v1990 = vld [vmem:[#allocation7 + $0x38] sm:$0xf]
    %v1991 = vld [vmem:[#allocation7 + $0x3c] sm:$0xf]
    %v1992 = vld [vmem:[#allocation7 + $0x40] sm:$0xf]
    %v1993 = vld [vmem:[#allocation7 + $0x44] sm:$0xf]
    %v1994 = vld [vmem:[#allocation7 + $0x48] sm:$0xf]
    %v1995 = vld [vmem:[#allocation7 + $0x4c] sm:$0xf]
    %v1996 = vld [vmem:[#allocation7 + $0x50] sm:$0xf]
    %v1997 = vld [vmem:[#allocation7 + $0x54] sm:$0xf]
    %v1998 = vld [vmem:[#allocation7 + $0x58] sm:$0xf]
    %v1999 = vld [vmem:[#allocation7 + $0x5c] sm:$0xf]
    %v2000 = vld [vmem:[#allocation7 + $0x60] sm:$0xf]
    %v2001 = vld [vmem:[#allocation7 + $0x64] sm:$0xf]
    %v2002 = vld [vmem:[#allocation7 + $0x68] sm:$0xf]
    %v2003 = vld [vmem:[#allocation7 + $0x6c] sm:$0xf]
    %v2004 = vpack.c.bf16 %v1987, %v1986
    %v2021 = vunpack.c.l.b16 %v1988
    %v2022 = vunpack.c.l.b16 %v1989
    %v2023 = vunpack.c.l.b16 %v1990
    %v2024 = vunpack.c.l.b16 %v1991
    %v2025 = vunpack.c.l.b16 %v1992
    %v2026 = vunpack.c.l.b16 %v1993
    %v2027 = vunpack.c.l.b16 %v1994
    %v2028 = vunpack.c.l.b16 %v1995
    %v2029 = vunpack.c.l.b16 %v1996
    %v2030 = vunpack.c.l.b16 %v1997
    %v2031 = vunpack.c.l.b16 %v1998
    %v2032 = vunpack.c.l.b16 %v1999
    %v2033 = vunpack.c.l.b16 %v2000
    %v2034 = vunpack.c.l.b16 %v2001
    %v2035 = vunpack.c.l.b16 %v2002
    %v2036 = vunpack.c.l.b16 %v2003
    %v2037 = vpack.c.b16 %v2022, %v2021
    %v2038 = vpack.c.b16 %v2024, %v2023
    %v2039 = vpack.c.b16 %v2026, %v2025
    %v2040 = vpack.c.b16 %v2028, %v2027
    %v2041 = vpack.c.b16 %v2030, %v2029
    %v2042 = vpack.c.b16 %v2032, %v2031
    %v2043 = vpack.c.b16 %v2034, %v2033
    %v2044 = vpack.c.b16 %v2036, %v2035
    %2053 = vmatpush.bf16.msra.mxu0 %v2044
    %2054 = vmatpush.bf16.msra.mxu0 %v2043
    %2055 = vmatpush.bf16.msra.mxu0 %v2042
    %2056 = vmatpush.bf16.msra.mxu0 %v2041
    %2057 = vmatpush.bf16.msra.mxu0 %v2040
    %2058 = vmatpush.bf16.msra.mxu0 %v2039
    %2059 = vmatpush.bf16.msra.mxu0 %v2038
    %2060 = vmatpush.bf16.msra.mxu0 %v2037
    %2061 = vmatmul.bf16.gmra.mxu0 %v2004
    %v2062 = vpop.f32.mrf.mxu0
    %v2063 = vadd.f32 0.0, %v2062
    %v2064 = vpop.f32.mrf.mxu0
    %v2065 = vadd.f32 0.0, %v2064
    %2066 = vdwg.mxu0
    %v2067 = vadd.f32 %v1880, %v2063
    %v2068 = vadd.f32 %v1881, %v2065
    %v2069 = vld [vmem:[#allocation9 + $0x17] sm:$0x1]
    %v2070 = vperm.slane %v2069, 0
    %v2071 = vadd.f32 %v2067, %v2070
    %v2072 = vadd.f32 %v2068, %v2070
    %v2073 = vld [vmem:[#allocation9 + $0x18] sm:$0x1]
    %v2074 = vld [vmem:[#allocation9 + $0x19] sm:$0x1]
    %v2075 = vsel %vm1447, %v2071, 0.0
    %2076 = vadd.xlane.f32.xlu0 %v2075
    %v2077 = vpop.xlane.xlu0 %2076
    %v2078 = vsel %vm1447, %v2072, 0.0
    %2079 = vadd.xlane.f32.xlu0 %v2078
    %v2080 = vpop.xlane.xlu0 %2079
    %v2081 = vmul.f32 %v2077, %v1460
    %v2082 = vmul.f32 %v2080, %v1460
    %v2083 = vsub.f32 %v2071, %v2081
    %v2084 = vsub.f32 %v2072, %v2082
    %v2085 = vmul.f32 %v2083, %v2083
    %v2086 = vmul.f32 %v2084, %v2084
    %v2087 = vsel %vm1447, %v2085, 0.0
    %2088 = vadd.xlane.f32.xlu0 %v2087
    %v2089 = vpop.xlane.xlu0 %2088
    %v2090 = vsel %vm1447, %v2086, 0.0
    %2091 = vadd.xlane.f32.xlu0 %v2090
    %v2092 = vpop.xlane.xlu0 %2091
    %v2093 = vmul.f32 %v2089, %v1460
    %v2094 = vmul.f32 %v2092, %v1460
    %v2095 = vadd.f32 %v2093, 1e-05
    %v2096 = vadd.f32 %v2094, 1e-05
    %v2097 = vrsqrt.pop %v2095
    %v2098 = vmul.f32 %v2097, %v2095
    %v2099 = vmul.f32 %v2098, %v2097
    %v2100 = vmul.f32 0.5, %v2099
    %v2101 = vsub.f32 1.5, %v2100
    %v2102 = vmul.f32 %v2097, %v2101
    %vm2103 = vweird.f32 %v2095
    %vm2104 = vweird.f32 %v2097
    %vm2105 = vmor %vm2103, %vm2104
    %v2106 = vsel %vm2105, %v2097, %v2102
    %v2107 = vrsqrt.pop %v2096
    %v2108 = vmul.f32 %v2107, %v2096
    %v2109 = vmul.f32 %v2108, %v2107
    %v2110 = vmul.f32 0.5, %v2109
    %v2111 = vsub.f32 1.5, %v2110
    %v2112 = vmul.f32 %v2107, %v2111
    %vm2113 = vweird.f32 %v2096
    %vm2114 = vweird.f32 %v2107
    %vm2115 = vmor %vm2113, %vm2114
    %v2116 = vsel %vm2115, %v2107, %v2112
    %v2117 = vmul.f32 %v2083, %v2106
    %v2118 = vmul.f32 %v2084, %v2116
    %v2119 = vperm.slane %v2073, 0
    %v2120 = vmul.f32 %v2117, %v2119
    %v2121 = vmul.f32 %v2118, %v2119
    %v2122 = vperm.slane %v2074, 0
    %v2123 = vadd.f32 %v2120, %v2122
    %v2124 = vadd.f32 %v2121, %v2122
    %v2125 = vld [vmem:[#allocation7 + $0x70] sm:$0xf]
    %v2126 = vld [vmem:[#allocation7 + $0x74] sm:$0xf]
    %v2127 = vld [vmem:[#allocation7 + $0x78] sm:$0xf]
    %v2128 = vld [vmem:[#allocation7 + $0x7c] sm:$0xf]
    %v2129 = vpack.c.bf16 %v2124, %v2123
    %v2130 = vld [vmem:[#allocation9 + $0x1a] sm:$0x1]
    %v2131 = vperm.slane %v2130, 0
    %v2136 = vunpack.c.l.b16 %v2125
    %v2137 = vunpack.c.l.b16 %v2126
    %v2138 = vunpack.c.l.b16 %v2127
    %v2139 = vunpack.c.l.b16 %v2128
    %v2140 = vpack.c.b16 %v2137, %v2136
    %v2141 = vpack.c.b16 %v2139, %v2138
    %v2145 = vsel %vm1447, %v2129, 0
    %2147 = vmatpush.bf16.msra.mxu0 0
    %2148 = vmatpush.bf16.msra.mxu0 0
    %2149 = vmatpush.bf16.msra.mxu0 0
    %2150 = vmatpush.bf16.msra.mxu0 0
    %2151 = vmatpush.bf16.msra.mxu0 0
    %2152 = vmatpush.bf16.msra.mxu0 0
    %2153 = vmatpush.bf16.msra.mxu0 %v2141
    %2154 = vmatpush.bf16.msra.mxu0 %v2140
    %2155 = vmatmul.bf16.gmra.mxu0 %v2145
    %v2156 = vpop.f32.mrf.mxu0
    %v2157 = vadd.f32 %v2131, %v2156
    %v2158 = vpop.f32.mrf.mxu0
    %v2159 = vadd.f32 %v2131, %v2158
    %2160 = vdwg.mxu0
    %v2161 = vpack.c.bf16 %v2159, %v2157
    %2163 = vrot.lane.b32.xlu0 %v2161, 96
    %v2164 = vpop.permute.xlu0 %2163
    %v2166 = vsel %vm1545, %v2161, 0
    %v2169 = vsel %vm1545, %v2164, 0
    %2171 = vmatpush.bf16.xpose.msra.mxu0 0
    %2172 = vmatpush.bf16.xpose.msra.mxu0 0
    %2173 = vmatpush.bf16.xpose.msra.mxu0 0
    %2174 = vmatpush.bf16.xpose.msra.mxu0 0
    %2175 = vmatpush.bf16.xpose.msra.mxu0 0
    %2176 = vmatpush.bf16.xpose.msra.mxu0 0
    %2177 = vmatpush.bf16.xpose.msra.mxu0 0
    %2178 = vmatpush.bf16.xpose.msra.mxu0 %v2169
    %2179 = vmatmul.bf16.gmra.mxu0 %v2166
    %v2180 = vpop.f32.mrf.mxu0
    %v2181 = vadd.f32 %v139, %v2180
    %v2182 = vpop.f32.mrf.mxu0
    %v2183 = vadd.f32 %v140, %v2182
    %2184 = vdwg.mxu0
    %v2185 = vsel %vm1566, %v2181, -inf
    %2186 = vmax.xlane.f32.xlu0 %v2185
    %v2187 = vpop.xlane.xlu0 %2186
    %v2188 = vsel %vm1566, %v2183, -inf
    %2189 = vmax.xlane.f32.xlu0 %v2188
    %v2190 = vpop.xlane.xlu0 %2189
    %v2191 = vsub.f32 %v2181, %v2187
    %v2192 = vsub.f32 %v2183, %v2190
    %v2193 = vmul.f32 %v2191, 1.442695
    %v2194 = vpow.pop %v2193
    %v2195 = vmul.f32 %v2192, 1.442695
    %v2196 = vpow.pop %v2195
    %v2197 = vsel %vm1566, %v2194, 0.0
    %2198 = vadd.xlane.f32.xlu0 %v2197
    %v2199 = vpop.xlane.xlu0 %2198
    %v2200 = vsel %vm1566, %v2196, 0.0
    %2201 = vadd.xlane.f32.xlu0 %v2200
    %v2202 = vpop.xlane.xlu0 %2201
    %v2203 = vrcp.pop %v2199
    %v2204 = vrcp.pop %v2202
    %v2205 = vmul.f32 %v2194, %v2203
    %v2206 = vmul.f32 %v2196, %v2204
    %v2207 = vpack.c.bf16 %v2206, %v2205
    %2208 = vrot.lane.b32.xlu0 %v2161, 64
    %v2209 = vpop.permute.xlu0 %2208
    %v2212 = vsel %vm1566, %v2207, 0
    %2214 = vmatpush.bf16.msra.mxu0 0
    %2215 = vmatpush.bf16.msra.mxu0 0
    %2216 = vmatpush.bf16.msra.mxu0 0
    %2217 = vmatpush.bf16.msra.mxu0 0
    %2218 = vmatpush.bf16.msra.mxu0 0
    %2219 = vmatpush.bf16.msra.mxu0 0
    %2220 = vmatpush.bf16.msra.mxu0 0
    %2221 = vmatpush.bf16.msra.mxu0 %v2209
    %2222 = vmatmul.bf16.gmra.mxu0 %v2212
    %v2223 = vpop.f32.mrf.mxu0
    %v2224 = vadd.f32 0.0, %v2223
    %v2225 = vpop.f32.mrf.mxu0
    %v2226 = vadd.f32 0.0, %v2225
    %2227 = vdwg.mxu0
    %2228 = vrot.lane.b32.xlu0 %v2161, 120
    %v2229 = vpop.permute.xlu0 %2228
    %2230 = vrot.lane.b32.xlu0 %v2161, 88
    %v2231 = vpop.permute.xlu0 %2230
    %v2233 = vsel %vm1545, %v2229, 0
    %v2236 = vsel %vm1545, %v2231, 0
    %2238 = vmatpush.bf16.xpose.msra.mxu0 0
    %2239 = vmatpush.bf16.xpose.msra.mxu0 0
    %2240 = vmatpush.bf16.xpose.msra.mxu0 0
    %2241 = vmatpush.bf16.xpose.msra.mxu0 0
    %2242 = vmatpush.bf16.xpose.msra.mxu0 0
    %2243 = vmatpush.bf16.xpose.msra.mxu0 0
    %2244 = vmatpush.bf16.xpose.msra.mxu0 0
    %2245 = vmatpush.bf16.xpose.msra.mxu0 %v2236
    %2246 = vmatmul.bf16.gmra.mxu0 %v2233
    %v2247 = vpop.f32.mrf.mxu0
    %v2248 = vadd.f32 %v139, %v2247
    %v2249 = vpop.f32.mrf.mxu0
    %v2250 = vadd.f32 %v140, %v2249
    %2251 = vdwg.mxu0
    %v2252 = vsel %vm1566, %v2248, -inf
    %2253 = vmax.xlane.f32.xlu0 %v2252
    %v2254 = vpop.xlane.xlu0 %2253
    %v2255 = vsel %vm1566, %v2250, -inf
    %2256 = vmax.xlane.f32.xlu0 %v2255
    %v2257 = vpop.xlane.xlu0 %2256
    %v2258 = vsub.f32 %v2248, %v2254
    %v2259 = vsub.f32 %v2250, %v2257
    %v2260 = vmul.f32 %v2258, 1.442695
    %v2261 = vpow.pop %v2260
    %v2262 = vmul.f32 %v2259, 1.442695
    %v2263 = vpow.pop %v2262
    %v2264 = vsel %vm1566, %v2261, 0.0
    %2265 = vadd.xlane.f32.xlu0 %v2264
    %v2266 = vpop.xlane.xlu0 %2265
    %v2267 = vsel %vm1566, %v2263, 0.0
    %2268 = vadd.xlane.f32.xlu0 %v2267
    %v2269 = vpop.xlane.xlu0 %2268
    %v2270 = vrcp.pop %v2266
    %v2271 = vrcp.pop %v2269
    %v2272 = vmul.f32 %v2261, %v2270
    %v2273 = vmul.f32 %v2263, %v2271
    %v2274 = vpack.c.bf16 %v2273, %v2272
    %2275 = vrot.lane.b32.xlu0 %v2161, 56
    %v2276 = vpop.permute.xlu0 %2275
    %v2279 = vsel %vm1566, %v2274, 0
    %2281 = vmatpush.bf16.msra.mxu0 0
    %2282 = vmatpush.bf16.msra.mxu0 0
    %2283 = vmatpush.bf16.msra.mxu0 0
    %2284 = vmatpush.bf16.msra.mxu0 0
    %2285 = vmatpush.bf16.msra.mxu0 0
    %2286 = vmatpush.bf16.msra.mxu0 0
    %2287 = vmatpush.bf16.msra.mxu0 0
    %2288 = vmatpush.bf16.msra.mxu0 %v2276
    %2289 = vmatmul.bf16.gmra.mxu0 %v2279
    %v2290 = vpop.f32.mrf.mxu0
    %v2291 = vadd.f32 0.0, %v2290
    %v2292 = vpop.f32.mrf.mxu0
    %v2293 = vadd.f32 0.0, %v2292
    %2294 = vdwg.mxu0
    %2295 = vrot.lane.b32.xlu0 %v2161, 112
    %v2296 = vpop.permute.xlu0 %2295
    %2297 = vrot.lane.b32.xlu0 %v2161, 80
    %v2298 = vpop.permute.xlu0 %2297
    %v2300 = vsel %vm1545, %v2296, 0
    %v2303 = vsel %vm1545, %v2298, 0
    %2305 = vmatpush.bf16.xpose.msra.mxu0 0
    %2306 = vmatpush.bf16.xpose.msra.mxu0 0
    %2307 = vmatpush.bf16.xpose.msra.mxu0 0
    %2308 = vmatpush.bf16.xpose.msra.mxu0 0
    %2309 = vmatpush.bf16.xpose.msra.mxu0 0
    %2310 = vmatpush.bf16.xpose.msra.mxu0 0
    %2311 = vmatpush.bf16.xpose.msra.mxu0 0
    %2312 = vmatpush.bf16.xpose.msra.mxu0 %v2303
    %2313 = vmatmul.bf16.gmra.mxu0 %v2300
    %v2314 = vpop.f32.mrf.mxu0
    %v2315 = vadd.f32 %v139, %v2314
    %v2316 = vpop.f32.mrf.mxu0
    %v2317 = vadd.f32 %v140, %v2316
    %2318 = vdwg.mxu0
    %v2319 = vsel %vm1566, %v2315, -inf
    %2320 = vmax.xlane.f32.xlu0 %v2319
    %v2321 = vpop.xlane.xlu0 %2320
    %v2322 = vsel %vm1566, %v2317, -inf
    %2323 = vmax.xlane.f32.xlu0 %v2322
    %v2324 = vpop.xlane.xlu0 %2323
    %v2325 = vsub.f32 %v2315, %v2321
    %v2326 = vsub.f32 %v2317, %v2324
    %v2327 = vmul.f32 %v2325, 1.442695
    %v2328 = vpow.pop %v2327
    %v2329 = vmul.f32 %v2326, 1.442695
    %v2330 = vpow.pop %v2329
    %v2331 = vsel %vm1566, %v2328, 0.0
    %2332 = vadd.xlane.f32.xlu0 %v2331
    %v2333 = vpop.xlane.xlu0 %2332
    %v2334 = vsel %vm1566, %v2330, 0.0
    %2335 = vadd.xlane.f32.xlu0 %v2334
    %v2336 = vpop.xlane.xlu0 %2335
    %v2337 = vrcp.pop %v2333
    %v2338 = vrcp.pop %v2336
    %v2339 = vmul.f32 %v2328, %v2337
    %v2340 = vmul.f32 %v2330, %v2338
    %v2341 = vpack.c.bf16 %v2340, %v2339
    %2342 = vrot.lane.b32.xlu0 %v2161, 48
    %v2343 = vpop.permute.xlu0 %2342
    %v2346 = vsel %vm1566, %v2341, 0
    %2348 = vmatpush.bf16.msra.mxu0 0
    %2349 = vmatpush.bf16.msra.mxu0 0
    %2350 = vmatpush.bf16.msra.mxu0 0
    %2351 = vmatpush.bf16.msra.mxu0 0
    %2352 = vmatpush.bf16.msra.mxu0 0
    %2353 = vmatpush.bf16.msra.mxu0 0
    %2354 = vmatpush.bf16.msra.mxu0 0
    %2355 = vmatpush.bf16.msra.mxu0 %v2343
    %2356 = vmatmul.bf16.gmra.mxu0 %v2346
    %v2357 = vpop.f32.mrf.mxu0
    %v2358 = vadd.f32 0.0, %v2357
    %v2359 = vpop.f32.mrf.mxu0
    %v2360 = vadd.f32 0.0, %v2359
    %2361 = vdwg.mxu0
    %2362 = vrot.lane.b32.xlu0 %v2161, 104
    %v2363 = vpop.permute.xlu0 %2362
    %2364 = vrot.lane.b32.xlu0 %v2161, 72
    %v2365 = vpop.permute.xlu0 %2364
    %v2367 = vsel %vm1545, %v2363, 0
    %v2370 = vsel %vm1545, %v2365, 0
    %2372 = vmatpush.bf16.xpose.msra.mxu0 0
    %2373 = vmatpush.bf16.xpose.msra.mxu0 0
    %2374 = vmatpush.bf16.xpose.msra.mxu0 0
    %2375 = vmatpush.bf16.xpose.msra.mxu0 0
    %2376 = vmatpush.bf16.xpose.msra.mxu0 0
    %2377 = vmatpush.bf16.xpose.msra.mxu0 0
    %2378 = vmatpush.bf16.xpose.msra.mxu0 0
    %2379 = vmatpush.bf16.xpose.msra.mxu0 %v2370
    %2380 = vmatmul.bf16.gmra.mxu0 %v2367
    %v2381 = vpop.f32.mrf.mxu0
    %v2382 = vadd.f32 %v139, %v2381
    %v2383 = vpop.f32.mrf.mxu0
    %v2384 = vadd.f32 %v140, %v2383
    %2385 = vdwg.mxu0
    %v2386 = vsel %vm1566, %v2382, -inf
    %2387 = vmax.xlane.f32.xlu0 %v2386
    %v2388 = vpop.xlane.xlu0 %2387
    %v2389 = vsel %vm1566, %v2384, -inf
    %2390 = vmax.xlane.f32.xlu0 %v2389
    %v2391 = vpop.xlane.xlu0 %2390
    %v2392 = vsub.f32 %v2382, %v2388
    %v2393 = vsub.f32 %v2384, %v2391
    %v2394 = vmul.f32 %v2392, 1.442695
    %v2395 = vpow.pop %v2394
    %v2396 = vmul.f32 %v2393, 1.442695
    %v2397 = vpow.pop %v2396
    %v2398 = vsel %vm1566, %v2395, 0.0
    %2399 = vadd.xlane.f32.xlu0 %v2398
    %v2400 = vpop.xlane.xlu0 %2399
    %v2401 = vsel %vm1566, %v2397, 0.0
    %2402 = vadd.xlane.f32.xlu0 %v2401
    %v2403 = vpop.xlane.xlu0 %2402
    %v2404 = vrcp.pop %v2400
    %v2405 = vrcp.pop %v2403
    %v2406 = vmul.f32 %v2395, %v2404
    %v2407 = vmul.f32 %v2397, %v2405
    %v2408 = vpack.c.bf16 %v2407, %v2406
    %2409 = vrot.lane.b32.xlu0 %v2161, 40
    %v2410 = vpop.permute.xlu0 %2409
    %v2413 = vsel %vm1566, %v2408, 0
    %2415 = vmatpush.bf16.msra.mxu0 0
    %2416 = vmatpush.bf16.msra.mxu0 0
    %2417 = vmatpush.bf16.msra.mxu0 0
    %2418 = vmatpush.bf16.msra.mxu0 0
    %2419 = vmatpush.bf16.msra.mxu0 0
    %2420 = vmatpush.bf16.msra.mxu0 0
    %2421 = vmatpush.bf16.msra.mxu0 0
    %2422 = vmatpush.bf16.msra.mxu0 %v2410
    %2423 = vmatmul.bf16.gmra.mxu0 %v2413
    %v2424 = vpop.f32.mrf.mxu0
    %v2425 = vadd.f32 0.0, %v2424
    %v2426 = vpop.f32.mrf.mxu0
    %v2427 = vadd.f32 0.0, %v2426
    %2428 = vdwg.mxu0
    %2431 = vrot.lane.b32.xlu0 %v2291, 8
    %v2432 = vpop.permute.xlu0 %2431
    %2433 = vrot.lane.b32.xlu0 %v2293, 8
    %v2434 = vpop.permute.xlu0 %2433
    %2439 = vrot.lane.b32.xlu0 %v2358, 16
    %v2440 = vpop.permute.xlu0 %2439
    %2441 = vrot.lane.b32.xlu0 %v2360, 16
    %v2442 = vpop.permute.xlu0 %2441
    %2447 = vrot.lane.b32.xlu0 %v2425, 24
    %v2448 = vpop.permute.xlu0 %2447
    %2449 = vrot.lane.b32.xlu0 %v2427, 24
    %v2450 = vpop.permute.xlu0 %2449
    %v2453 = vsel %vm1545, %v2224, %v2432
    %v2454 = vsel %vm1545, %v2226, %v2434
    %v2455 = vsel %vm1566, %v2453, %v2440
    %v2456 = vsel %vm1566, %v2454, %v2442
    %v2457 = vsel %vm1839, %v2455, %v2448
    %v2458 = vsel %vm1839, %v2456, %v2450
    %v2459 = vld [vmem:[#allocation7 + $0x80] sm:$0xf]
    %v2460 = vld [vmem:[#allocation7 + $0x84] sm:$0xf]
    %v2461 = vld [vmem:[#allocation7 + $0x88] sm:$0xf]
    %v2462 = vld [vmem:[#allocation7 + $0x8c] sm:$0xf]
    %v2463 = vpack.c.bf16 %v2458, %v2457
    %v2468 = vunpack.c.l.b16 %v2459
    %v2469 = vunpack.c.l.b16 %v2460
    %v2470 = vunpack.c.l.b16 %v2461
    %v2471 = vunpack.c.l.b16 %v2462
    %v2472 = vpack.c.b16 %v2469, %v2468
    %v2473 = vpack.c.b16 %v2471, %v2470
    %v2477 = vsel %vm1447, %v2463, 0
    %2479 = vmatpush.bf16.msra.mxu0 0
    %2480 = vmatpush.bf16.msra.mxu0 0
    %2481 = vmatpush.bf16.msra.mxu0 0
    %2482 = vmatpush.bf16.msra.mxu0 0
    %2483 = vmatpush.bf16.msra.mxu0 0
    %2484 = vmatpush.bf16.msra.mxu0 0
    %2485 = vmatpush.bf16.msra.mxu0 %v2473
    %2486 = vmatpush.bf16.msra.mxu0 %v2472
    %2487 = vmatmul.bf16.gmra.mxu0 %v2477
    %v2488 = vpop.f32.mrf.mxu0
    %v2489 = vadd.f32 0.0, %v2488
    %v2490 = vpop.f32.mrf.mxu0
    %v2491 = vadd.f32 0.0, %v2490
    %2492 = vdwg.mxu0
    %v2493 = vadd.f32 %v2071, %v2489
    %v2494 = vadd.f32 %v2072, %v2491
    %v2495 = vld [vmem:[#allocation9 + $0x1b] sm:$0x1]
    %v2496 = vperm.slane %v2495, 0
    %v2497 = vadd.f32 %v2493, %v2496
    %v2498 = vadd.f32 %v2494, %v2496
    %v2499 = vld [vmem:[#allocation9 + $0x1c] sm:$0x1]
    %v2500 = vld [vmem:[#allocation9 + $0x1d] sm:$0x1]
    %v2501 = vsel %vm1447, %v2497, 0.0
    %2502 = vadd.xlane.f32.xlu0 %v2501
    %v2503 = vpop.xlane.xlu0 %2502
    %v2504 = vsel %vm1447, %v2498, 0.0
    %2505 = vadd.xlane.f32.xlu0 %v2504
    %v2506 = vpop.xlane.xlu0 %2505
    %v2507 = vmul.f32 %v2503, %v1460
    %v2508 = vmul.f32 %v2506, %v1460
    %v2509 = vsub.f32 %v2497, %v2507
    %v2510 = vsub.f32 %v2498, %v2508
    %v2511 = vmul.f32 %v2509, %v2509
    %v2512 = vmul.f32 %v2510, %v2510
    %v2513 = vsel %vm1447, %v2511, 0.0
    %2514 = vadd.xlane.f32.xlu0 %v2513
    %v2515 = vpop.xlane.xlu0 %2514
    %v2516 = vsel %vm1447, %v2512, 0.0
    %2517 = vadd.xlane.f32.xlu0 %v2516
    %v2518 = vpop.xlane.xlu0 %2517
    %v2519 = vmul.f32 %v2515, %v1460
    %v2520 = vmul.f32 %v2518, %v1460
    %v2521 = vadd.f32 %v2519, 1e-05
    %v2522 = vadd.f32 %v2520, 1e-05
    %v2523 = vrsqrt.pop %v2521
    %v2524 = vmul.f32 %v2523, %v2521
    %v2525 = vmul.f32 %v2524, %v2523
    %v2526 = vmul.f32 0.5, %v2525
    %v2527 = vsub.f32 1.5, %v2526
    %v2528 = vmul.f32 %v2523, %v2527
    %vm2529 = vweird.f32 %v2521
    %vm2530 = vweird.f32 %v2523
    %vm2531 = vmor %vm2529, %vm2530
    %v2532 = vsel %vm2531, %v2523, %v2528
    %v2533 = vrsqrt.pop %v2522
    %v2534 = vmul.f32 %v2533, %v2522
    %v2535 = vmul.f32 %v2534, %v2533
    %v2536 = vmul.f32 0.5, %v2535
    %v2537 = vsub.f32 1.5, %v2536
    %v2538 = vmul.f32 %v2533, %v2537
    %vm2539 = vweird.f32 %v2522
    %vm2540 = vweird.f32 %v2533
    %vm2541 = vmor %vm2539, %vm2540
    %v2542 = vsel %vm2541, %v2533, %v2538
    %v2543 = vmul.f32 %v2509, %v2532
    %v2544 = vmul.f32 %v2510, %v2542
    %v2545 = vperm.slane %v2499, 0
    %v2546 = vmul.f32 %v2543, %v2545
    %v2547 = vmul.f32 %v2544, %v2545
    %v2548 = vperm.slane %v2500, 0
    %v2549 = vadd.f32 %v2546, %v2548
    %v2550 = vadd.f32 %v2547, %v2548
    %v2551 = vld [vmem:[#allocation7 + $0x90] sm:$0xf]
    %v2552 = vld [vmem:[#allocation7 + $0x94] sm:$0xf]
    %v2553 = vld [vmem:[#allocation7 + $0x98] sm:$0xf]
    %v2554 = vld [vmem:[#allocation7 + $0x9c] sm:$0xf]
    %v2555 = vpack.c.bf16 %v2550, %v2549
    %v2556 = vld [vmem:[#allocation9 + $0x1e] sm:$0x1]
    %v2557 = vperm.slane %v2556, 0
    %v2562 = vunpack.c.l.b16 %v2551
    %v2563 = vunpack.c.l.b16 %v2552
    %v2564 = vunpack.c.l.b16 %v2553
    %v2565 = vunpack.c.l.b16 %v2554
    %v2566 = vpack.c.b16 %v2563, %v2562
    %v2567 = vpack.c.b16 %v2565, %v2564
    %v2571 = vsel %vm1447, %v2555, 0
    %2573 = vmatpush.bf16.msra.mxu0 0
    %2574 = vmatpush.bf16.msra.mxu0 0
    %2575 = vmatpush.bf16.msra.mxu0 0
    %2576 = vmatpush.bf16.msra.mxu0 0
    %2577 = vmatpush.bf16.msra.mxu0 0
    %2578 = vmatpush.bf16.msra.mxu0 0
    %2579 = vmatpush.bf16.msra.mxu0 %v2567
    %2580 = vmatpush.bf16.msra.mxu0 %v2566
    %2581 = vmatmul.bf16.gmra.mxu0 %v2571
    %v2582 = vpop.f32.mrf.mxu0
    %v2583 = vadd.f32 %v2557, %v2582
    %v2584 = vpop.f32.mrf.mxu0
    %v2585 = vadd.f32 %v2557, %v2584
    %2586 = vdwg.mxu0
    %v2587 = vmul.f32 %v2583, %v2583
    %v2588 = vmul.f32 %v2585, %v2585
    %v2589 = vmul.f32 %v2583, %v2587
    %v2590 = vmul.f32 %v2585, %v2588
    %v2591 = vmul.f32 %v2589, 0.044715
    %v2592 = vmul.f32 %v2590, 0.044715
    %v2593 = vadd.f32 %v2583, %v2591
    %v2594 = vadd.f32 %v2585, %v2592
    %v2595 = vmul.f32 %v2593, 0.7978846
    %v2596 = vmul.f32 %v2594, 0.7978846
    %v2597 = vtanh.pop %v2595
    %v2598 = vtanh.pop %v2596
    %v2599 = vadd.f32 %v2597, 1.0
    %v2600 = vadd.f32 %v2598, 1.0
    %v2601 = vmul.f32 %v2599, 0.5
    %v2602 = vmul.f32 %v2600, 0.5
    %v2603 = vmul.f32 %v2583, %v2601
    %v2604 = vmul.f32 %v2585, %v2602
    %v2605 = vld [vmem:[#allocation7 + $0xa0] sm:$0xf]
    %v2606 = vld [vmem:[#allocation7 + $0xa4] sm:$0xf]
    %v2607 = vld [vmem:[#allocation7 + $0xa8] sm:$0xf]
    %v2608 = vld [vmem:[#allocation7 + $0xac] sm:$0xf]
    %v2609 = vld [vmem:[#allocation7 + $0xb0] sm:$0xf]
    %v2610 = vld [vmem:[#allocation7 + $0xb4] sm:$0xf]
    %v2611 = vld [vmem:[#allocation7 + $0xb8] sm:$0xf]
    %v2612 = vld [vmem:[#allocation7 + $0xbc] sm:$0xf]
    %v2613 = vld [vmem:[#allocation7 + $0xc0] sm:$0xf]
    %v2614 = vld [vmem:[#allocation7 + $0xc4] sm:$0xf]
    %v2615 = vld [vmem:[#allocation7 + $0xc8] sm:$0xf]
    %v2616 = vld [vmem:[#allocation7 + $0xcc] sm:$0xf]
    %v2617 = vld [vmem:[#allocation7 + $0xd0] sm:$0xf]
    %v2618 = vld [vmem:[#allocation7 + $0xd4] sm:$0xf]
    %v2619 = vld [vmem:[#allocation7 + $0xd8] sm:$0xf]
    %v2620 = vld [vmem:[#allocation7 + $0xdc] sm:$0xf]
    %v2621 = vpack.c.bf16 %v2604, %v2603
    %v2638 = vunpack.c.l.b16 %v2605
    %v2639 = vunpack.c.l.b16 %v2606
    %v2640 = vunpack.c.l.b16 %v2607
    %v2641 = vunpack.c.l.b16 %v2608
    %v2642 = vunpack.c.l.b16 %v2609
    %v2643 = vunpack.c.l.b16 %v2610
    %v2644 = vunpack.c.l.b16 %v2611
    %v2645 = vunpack.c.l.b16 %v2612
    %v2646 = vunpack.c.l.b16 %v2613
    %v2647 = vunpack.c.l.b16 %v2614
    %v2648 = vunpack.c.l.b16 %v2615
    %v2649 = vunpack.c.l.b16 %v2616
    %v2650 = vunpack.c.l.b16 %v2617
    %v2651 = vunpack.c.l.b16 %v2618
    %v2652 = vunpack.c.l.b16 %v2619
    %v2653 = vunpack.c.l.b16 %v2620
    %v2654 = vpack.c.b16 %v2639, %v2638
    %v2655 = vpack.c.b16 %v2641, %v2640
    %v2656 = vpack.c.b16 %v2643, %v2642
    %v2657 = vpack.c.b16 %v2645, %v2644
    %v2658 = vpack.c.b16 %v2647, %v2646
    %v2659 = vpack.c.b16 %v2649, %v2648
    %v2660 = vpack.c.b16 %v2651, %v2650
    %v2661 = vpack.c.b16 %v2653, %v2652
    %2670 = vmatpush.bf16.msra.mxu0 %v2661
    %2671 = vmatpush.bf16.msra.mxu0 %v2660
    %2672 = vmatpush.bf16.msra.mxu0 %v2659
    %2673 = vmatpush.bf16.msra.mxu0 %v2658
    %2674 = vmatpush.bf16.msra.mxu0 %v2657
    %2675 = vmatpush.bf16.msra.mxu0 %v2656
    %2676 = vmatpush.bf16.msra.mxu0 %v2655
    %2677 = vmatpush.bf16.msra.mxu0 %v2654
    %2678 = vmatmul.bf16.gmra.mxu0 %v2621
    %v2679 = vpop.f32.mrf.mxu0
    %v2680 = vadd.f32 0.0, %v2679
    %v2681 = vpop.f32.mrf.mxu0
    %v2682 = vadd.f32 0.0, %v2681
    %2683 = vdwg.mxu0
    %v2684 = vadd.f32 %v2497, %v2680
    %v2685 = vadd.f32 %v2498, %v2682
    %v2686 = vld [vmem:[#allocation9 + $0x1f] sm:$0x1]
    %v2687 = vperm.slane %v2686, 0
    %v2688 = vadd.f32 %v2684, %v2687
    %v2689 = vadd.f32 %v2685, %v2687
    %v2690 = vld [vmem:[#allocation9 + $0x20] sm:$0x1]
    %v2691 = vld [vmem:[#allocation9 + $0x21] sm:$0x1]
    %v2692 = vsel %vm1447, %v2688, 0.0
    %2693 = vadd.xlane.f32.xlu0 %v2692
    %v2694 = vpop.xlane.xlu0 %2693
    %v2695 = vsel %vm1447, %v2689, 0.0
    %2696 = vadd.xlane.f32.xlu0 %v2695
    %v2697 = vpop.xlane.xlu0 %2696
    %v2698 = vmul.f32 %v2694, %v1460
    %v2699 = vmul.f32 %v2697, %v1460
    %v2700 = vsub.f32 %v2688, %v2698
    %v2701 = vsub.f32 %v2689, %v2699
    %v2702 = vmul.f32 %v2700, %v2700
    %v2703 = vmul.f32 %v2701, %v2701
    %v2704 = vsel %vm1447, %v2702, 0.0
    %2705 = vadd.xlane.f32.xlu0 %v2704
    %v2706 = vpop.xlane.xlu0 %2705
    %v2707 = vsel %vm1447, %v2703, 0.0
    %2708 = vadd.xlane.f32.xlu0 %v2707
    %v2709 = vpop.xlane.xlu0 %2708
    %v2710 = vmul.f32 %v2706, %v1460
    %v2711 = vmul.f32 %v2709, %v1460
    %v2712 = vadd.f32 %v2710, 1e-05
    %v2713 = vadd.f32 %v2711, 1e-05
    %v2714 = vrsqrt.pop %v2712
    %v2715 = vmul.f32 %v2714, %v2712
    %v2716 = vmul.f32 %v2715, %v2714
    %v2717 = vmul.f32 0.5, %v2716
    %v2718 = vsub.f32 1.5, %v2717
    %v2719 = vmul.f32 %v2714, %v2718
    %vm2720 = vweird.f32 %v2712
    %vm2721 = vweird.f32 %v2714
    %vm2722 = vmor %vm2720, %vm2721
    %v2723 = vsel %vm2722, %v2714, %v2719
    %v2724 = vrsqrt.pop %v2713
    %v2725 = vmul.f32 %v2724, %v2713
    %v2726 = vmul.f32 %v2725, %v2724
    %v2727 = vmul.f32 0.5, %v2726
    %v2728 = vsub.f32 1.5, %v2727
    %v2729 = vmul.f32 %v2724, %v2728
    %vm2730 = vweird.f32 %v2713
    %vm2731 = vweird.f32 %v2724
    %vm2732 = vmor %vm2730, %vm2731
    %v2733 = vsel %vm2732, %v2724, %v2729
    %v2734 = vmul.f32 %v2700, %v2723
    %v2735 = vmul.f32 %v2701, %v2733
    %v2736 = vperm.slane %v2690, 0
    %v2737 = vmul.f32 %v2734, %v2736
    %v2738 = vmul.f32 %v2735, %v2736
    %v2739 = vperm.slane %v2691, 0
    %v2740 = vadd.f32 %v2737, %v2739
    %v2741 = vadd.f32 %v2738, %v2739
    %v2742 = vld [vmem:[%s8] sm:$0xff]
    %v2743 = vld [vmem:[%s8 + $0x10] sm:$0xff]
    %2746 = vrot.lane.b32.xlu0 %v2742, 32
    %v2747 = vpop.permute.xlu0 %2746
    %2748 = vrot.lane.b32.xlu0 %v2743, 32
    %v2749 = vpop.permute.xlu0 %2748
    %v2752 = vadd.f32 %v1437, %v2747
    %v2753 = vadd.f32 %v1439, %v2749
    %v2754 = vld [vmem:[%s8 + $0x20] ss:$0 sm:$0xff]
    %v2755 = vld [vmem:[%s8 + $0x21] ss:$0 sm:$0xff]
    %2758 = vrot.lane.b32.xlu0 %v2752, 96
    %v2759 = vpop.permute.xlu0 %2758
    %2760 = vrot.lane.b32.xlu0 %v2753, 96
    %v2761 = vpop.permute.xlu0 %2760
    %vm2764 = vcmask 523264
    %v2765 = vsel %vm2764, %v2759, 0.0
    %2766 = vadd.xlane.f32.xlu0 %v2765
    %v2767 = vpop.xlane.xlu0 %2766
    %v2768 = vsel %vm2764, %v2761, 0.0
    %2769 = vadd.xlane.f32.xlu0 %v2768
    %v2770 = vpop.xlane.xlu0 %2769
    %v2771 = vrcp.pop 64.0
    %v2772 = vmul.f32 64.0, %v2771
    %v2773 = vsub.f32 1.0, %v2772
    %v2774 = vmul.f32 %v2771, %v2773
    %v2775 = vadd.f32 %v2771, %v2774
    %vm2776 = vweird.f32 %v2771
    %v2777 = vsel %vm2776, %v2771, %v2775
    %v2778 = vmul.f32 %v2767, %v2777
    %v2779 = vmul.f32 %v2770, %v2777
    %v2780 = vsub.f32 %v2752, %v2778
    %v2781 = vsub.f32 %v2753, %v2779
    %v2782 = vmul.f32 %v2780, %v2780
    %v2783 = vmul.f32 %v2781, %v2781
    %2786 = vrot.lane.b32.xlu0 %v2782, 96
    %v2787 = vpop.permute.xlu0 %2786
    %2788 = vrot.lane.b32.xlu0 %v2783, 96
    %v2789 = vpop.permute.xlu0 %2788
    %v2792 = vsel %vm2764, %v2787, 0.0
    %2793 = vadd.xlane.f32.xlu0 %v2792
    %v2794 = vpop.xlane.xlu0 %2793
    %v2795 = vsel %vm2764, %v2789, 0.0
    %2796 = vadd.xlane.f32.xlu0 %v2795
    %v2797 = vpop.xlane.xlu0 %2796
    %v2798 = vmul.f32 %v2794, %v2777
    %v2799 = vmul.f32 %v2797, %v2777
    %v2800 = vadd.f32 %v2798, 1e-05
    %v2801 = vadd.f32 %v2799, 1e-05
    %v2802 = vrsqrt.pop %v2800
    %v2803 = vmul.f32 %v2802, %v2800
    %v2804 = vmul.f32 %v2803, %v2802
    %v2805 = vmul.f32 0.5, %v2804
    %v2806 = vsub.f32 1.5, %v2805
    %v2807 = vmul.f32 %v2802, %v2806
    %vm2808 = vweird.f32 %v2800
    %vm2809 = vweird.f32 %v2802
    %vm2810 = vmor %vm2808, %vm2809
    %v2811 = vsel %vm2810, %v2802, %v2807
    %v2812 = vrsqrt.pop %v2801
    %v2813 = vmul.f32 %v2812, %v2801
    %v2814 = vmul.f32 %v2813, %v2812
    %v2815 = vmul.f32 0.5, %v2814
    %v2816 = vsub.f32 1.5, %v2815
    %v2817 = vmul.f32 %v2812, %v2816
    %vm2818 = vweird.f32 %v2801
    %vm2819 = vweird.f32 %v2812
    %vm2820 = vmor %vm2818, %vm2819
    %v2821 = vsel %vm2820, %v2812, %v2817
    %v2822 = vmul.f32 %v2780, %v2811
    %v2823 = vmul.f32 %v2781, %v2821
    %2825 = vrot.lane.b32.xlu0 %v2754, 32
    %v2826 = vpop.permute.xlu0 %2825
    %v2828 = vmul.f32 %v2822, %v2826
    %v2829 = vmul.f32 %v2823, %v2826
    %2831 = vrot.lane.b32.xlu0 %v2755, 32
    %v2832 = vpop.permute.xlu0 %2831
    %v2834 = vadd.f32 %v2828, %v2832
    %v2835 = vadd.f32 %v2829, %v2832
    %v2836 = vld [vmem:[%s7] sm:$0xff]
    %v2837 = vld [vmem:[%s7 + $0x8] sm:$0xff]
    %v2838 = vld [vmem:[%s7 + $0x10] sm:$0xff]
    %v2839 = vld [vmem:[%s7 + $0x18] sm:$0xff]
    %v2840 = vld [vmem:[%s7 + $0x20] sm:$0xff]
    %v2841 = vld [vmem:[%s7 + $0x28] sm:$0xff]
    %v2842 = vld [vmem:[%s7 + $0x30] sm:$0xff]
    %v2843 = vld [vmem:[%s7 + $0x38] sm:$0xff]
    %v2844 = vpack.c.bf16 %v2835, %v2834
    %s2845 = scalar_lea.vmem %s8, 34
    %v2846 = vld [vmem:[%s2845] ss:$8 sm:$0x3]
    %v2848 = vperm.slane %v2846, 0
    %v2849 = vperm.slane %v2846, 1
    %2853 = vrot.lane.b32.xlu0 %v2844, 96
    %v2854 = vpop.permute.xlu0 %2853
    %v2863 = vunpack.c.l.b16 %v2836
    %v2864 = vunpack.c.h.b16 %v2836
    %v2865 = vunpack.c.l.b16 %v2837
    %v2866 = vunpack.c.h.b16 %v2837
    %v2867 = vunpack.c.l.b16 %v2838
    %v2868 = vunpack.c.h.b16 %v2838
    %v2869 = vunpack.c.l.b16 %v2839
    %v2870 = vunpack.c.h.b16 %v2839
    %v2871 = vunpack.c.l.b16 %v2840
    %v2872 = vunpack.c.h.b16 %v2840
    %v2873 = vunpack.c.l.b16 %v2841
    %v2874 = vunpack.c.h.b16 %v2841
    %v2875 = vunpack.c.l.b16 %v2842
    %v2876 = vunpack.c.h.b16 %v2842
    %v2877 = vunpack.c.l.b16 %v2843
    %v2878 = vunpack.c.h.b16 %v2843
    %v2879 = vpack.c.b16 %v2865, %v2863
    %v2880 = vpack.c.b16 %v2866, %v2864
    %v2881 = vpack.c.b16 %v2869, %v2867
    %v2882 = vpack.c.b16 %v2870, %v2868
    %v2883 = vpack.c.b16 %v2873, %v2871
    %v2884 = vpack.c.b16 %v2874, %v2872
    %v2885 = vpack.c.b16 %v2877, %v2875
    %v2886 = vpack.c.b16 %v2878, %v2876
    %v2896 = vsel %vm2764, %v2854, 0
    %2898 = vmatpush.bf16.msra.mxu0 0
    %2899 = vmatpush.bf16.msra.mxu0 0
    %2900 = vmatpush.bf16.msra.mxu0 0
    %2901 = vmatpush.bf16.msra.mxu0 0
    %2902 = vmatpush.bf16.msra.mxu0 %v2885
    %2903 = vmatpush.bf16.msra.mxu0 %v2883
    %2904 = vmatpush.bf16.msra.mxu0 %v2881
    %2905 = vmatpush.bf16.msra.mxu0 %v2879
    %2906 = vmatmul.bf16.gmra.mxu0 %v2896
    %v2907 = vpop.f32.mrf.mxu0
    %v2908 = vadd.f32 %v2848, %v2907
    %v2909 = vpop.f32.mrf.mxu0
    %v2910 = vadd.f32 %v2848, %v2909
    %2911 = vdwg.mxu0
    %2912 = vmatpush.bf16.msra.mxu0 0
    %2913 = vmatpush.bf16.msra.mxu0 0
    %2914 = vmatpush.bf16.msra.mxu0 0
    %2915 = vmatpush.bf16.msra.mxu0 0
    %2916 = vmatpush.bf16.msra.mxu0 %v2886
    %2917 = vmatpush.bf16.msra.mxu0 %v2884
    %2918 = vmatpush.bf16.msra.mxu0 %v2882
    %2919 = vmatpush.bf16.msra.mxu0 %v2880
    %2920 = vmatmul.bf16.gmra.mxu0 %v2896
    %v2921 = vpop.f32.mrf.mxu0
    %v2922 = vadd.f32 %v2849, %v2921
    %v2923 = vpop.f32.mrf.mxu0
    %v2924 = vadd.f32 %v2849, %v2923
    %2925 = vdwg.mxu0
    %v2926 = vpack.c.bf16 %v2910, %v2908
    %v2927 = vpack.c.bf16 %v2924, %v2922
    %2929 = vrot.lane.b32.xlu0 %v2926, 64
    %v2930 = vpop.permute.xlu0 %2929
    %v2932 = vsel %vm1566, %v2926, 0
    %v2935 = vsel %vm1566, %v2930, 0
    %2937 = vmatpush.bf16.xpose.msra.mxu0 0
    %2938 = vmatpush.bf16.xpose.msra.mxu0 0
    %2939 = vmatpush.bf16.xpose.msra.mxu0 0
    %2940 = vmatpush.bf16.xpose.msra.mxu0 0
    %2941 = vmatpush.bf16.xpose.msra.mxu0 0
    %2942 = vmatpush.bf16.xpose.msra.mxu0 0
    %2943 = vmatpush.bf16.xpose.msra.mxu0 0
    %2944 = vmatpush.bf16.xpose.msra.mxu0 %v2935
    %2945 = vmatmul.bf16.gmra.mxu0 %v2932
    %v2946 = vpop.f32.mrf.mxu0
    %v2947 = vadd.f32 %v139, %v2946
    %v2948 = vpop.f32.mrf.mxu0
    %v2949 = vadd.f32 %v140, %v2948
    %2950 = vdwg.mxu0
    %v2951 = vsel %vm1566, %v2947, -inf
    %2952 = vmax.xlane.f32.xlu0 %v2951
    %v2953 = vpop.xlane.xlu0 %2952
    %v2954 = vsel %vm1566, %v2949, -inf
    %2955 = vmax.xlane.f32.xlu0 %v2954
    %v2956 = vpop.xlane.xlu0 %2955
    %v2957 = vsub.f32 %v2947, %v2953
    %v2958 = vsub.f32 %v2949, %v2956
    %v2959 = vmul.f32 %v2957, 1.442695
    %v2960 = vpow.pop %v2959
    %v2961 = vmul.f32 %v2958, 1.442695
    %v2962 = vpow.pop %v2961
    %v2963 = vsel %vm1566, %v2960, 0.0
    %2964 = vadd.xlane.f32.xlu0 %v2963
    %v2965 = vpop.xlane.xlu0 %2964
    %v2966 = vsel %vm1566, %v2962, 0.0
    %2967 = vadd.xlane.f32.xlu0 %v2966
    %v2968 = vpop.xlane.xlu0 %2967
    %v2969 = vrcp.pop %v2965
    %v2970 = vrcp.pop %v2968
    %v2971 = vmul.f32 %v2960, %v2969
    %v2972 = vmul.f32 %v2962, %v2970
    %v2973 = vpack.c.bf16 %v2972, %v2971
    %v2975 = vsel %vm1566, %v2973, 0
    %2977 = vmatpush.bf16.msra.mxu0 0
    %2978 = vmatpush.bf16.msra.mxu0 0
    %2979 = vmatpush.bf16.msra.mxu0 0
    %2980 = vmatpush.bf16.msra.mxu0 0
    %2981 = vmatpush.bf16.msra.mxu0 0
    %2982 = vmatpush.bf16.msra.mxu0 0
    %2983 = vmatpush.bf16.msra.mxu0 0
    %2984 = vmatpush.bf16.msra.mxu0 %v2927
    %2985 = vmatmul.bf16.gmra.mxu0 %v2975
    %v2986 = vpop.f32.mrf.mxu0
    %v2987 = vadd.f32 0.0, %v2986
    %v2988 = vpop.f32.mrf.mxu0
    %v2989 = vadd.f32 0.0, %v2988
    %2990 = vdwg.mxu0
    %2991 = vrot.lane.b32.xlu0 %v2926, 112
    %v2992 = vpop.permute.xlu0 %2991
    %2993 = vrot.lane.b32.xlu0 %v2926, 48
    %v2994 = vpop.permute.xlu0 %2993
    %v2996 = vsel %vm1566, %v2992, 0
    %v2999 = vsel %vm1566, %v2994, 0
    %3001 = vmatpush.bf16.xpose.msra.mxu0 0
    %3002 = vmatpush.bf16.xpose.msra.mxu0 0
    %3003 = vmatpush.bf16.xpose.msra.mxu0 0
    %3004 = vmatpush.bf16.xpose.msra.mxu0 0
    %3005 = vmatpush.bf16.xpose.msra.mxu0 0
    %3006 = vmatpush.bf16.xpose.msra.mxu0 0
    %3007 = vmatpush.bf16.xpose.msra.mxu0 0
    %3008 = vmatpush.bf16.xpose.msra.mxu0 %v2999
    %3009 = vmatmul.bf16.gmra.mxu0 %v2996
    %v3010 = vpop.f32.mrf.mxu0
    %v3011 = vadd.f32 %v139, %v3010
    %v3012 = vpop.f32.mrf.mxu0
    %v3013 = vadd.f32 %v140, %v3012
    %3014 = vdwg.mxu0
    %v3015 = vsel %vm1566, %v3011, -inf
    %3016 = vmax.xlane.f32.xlu0 %v3015
    %v3017 = vpop.xlane.xlu0 %3016
    %v3018 = vsel %vm1566, %v3013, -inf
    %3019 = vmax.xlane.f32.xlu0 %v3018
    %v3020 = vpop.xlane.xlu0 %3019
    %v3021 = vsub.f32 %v3011, %v3017
    %v3022 = vsub.f32 %v3013, %v3020
    %v3023 = vmul.f32 %v3021, 1.442695
    %v3024 = vpow.pop %v3023
    %v3025 = vmul.f32 %v3022, 1.442695
    %v3026 = vpow.pop %v3025
    %v3027 = vsel %vm1566, %v3024, 0.0
    %3028 = vadd.xlane.f32.xlu0 %v3027
    %v3029 = vpop.xlane.xlu0 %3028
    %v3030 = vsel %vm1566, %v3026, 0.0
    %3031 = vadd.xlane.f32.xlu0 %v3030
    %v3032 = vpop.xlane.xlu0 %3031
    %v3033 = vrcp.pop %v3029
    %v3034 = vrcp.pop %v3032
    %v3035 = vmul.f32 %v3024, %v3033
    %v3036 = vmul.f32 %v3026, %v3034
    %v3037 = vpack.c.bf16 %v3036, %v3035
    %3039 = vrot.lane.b32.xlu0 %v2927, 112
    %v3040 = vpop.permute.xlu0 %3039
    %v3043 = vsel %vm1566, %v3037, 0
    %3045 = vmatpush.bf16.msra.mxu0 0
    %3046 = vmatpush.bf16.msra.mxu0 0
    %3047 = vmatpush.bf16.msra.mxu0 0
    %3048 = vmatpush.bf16.msra.mxu0 0
    %3049 = vmatpush.bf16.msra.mxu0 0
    %3050 = vmatpush.bf16.msra.mxu0 0
    %3051 = vmatpush.bf16.msra.mxu0 0
    %3052 = vmatpush.bf16.msra.mxu0 %v3040
    %3053 = vmatmul.bf16.gmra.mxu0 %v3043
    %v3054 = vpop.f32.mrf.mxu0
    %v3055 = vadd.f32 0.0, %v3054
    %v3056 = vpop.f32.mrf.mxu0
    %v3057 = vadd.f32 0.0, %v3056
    %3058 = vdwg.mxu0
    %3059 = vrot.lane.b32.xlu0 %v2926, 96
    %v3060 = vpop.permute.xlu0 %3059
    %3061 = vrot.lane.b32.xlu0 %v2926, 32
    %v3062 = vpop.permute.xlu0 %3061
    %v3064 = vsel %vm1566, %v3060, 0
    %v3067 = vsel %vm1566, %v3062, 0
    %3069 = vmatpush.bf16.xpose.msra.mxu0 0
    %3070 = vmatpush.bf16.xpose.msra.mxu0 0
    %3071 = vmatpush.bf16.xpose.msra.mxu0 0
    %3072 = vmatpush.bf16.xpose.msra.mxu0 0
    %3073 = vmatpush.bf16.xpose.msra.mxu0 0
    %3074 = vmatpush.bf16.xpose.msra.mxu0 0
    %3075 = vmatpush.bf16.xpose.msra.mxu0 0
    %3076 = vmatpush.bf16.xpose.msra.mxu0 %v3067
    %3077 = vmatmul.bf16.gmra.mxu0 %v3064
    %v3078 = vpop.f32.mrf.mxu0
    %v3079 = vadd.f32 %v139, %v3078
    %v3080 = vpop.f32.mrf.mxu0
    %v3081 = vadd.f32 %v140, %v3080
    %3082 = vdwg.mxu0
    %v3083 = vsel %vm1566, %v3079, -inf
    %3084 = vmax.xlane.f32.xlu0 %v3083
    %v3085 = vpop.xlane.xlu0 %3084
    %v3086 = vsel %vm1566, %v3081, -inf
    %3087 = vmax.xlane.f32.xlu0 %v3086
    %v3088 = vpop.xlane.xlu0 %3087
    %v3089 = vsub.f32 %v3079, %v3085
    %v3090 = vsub.f32 %v3081, %v3088
    %v3091 = vmul.f32 %v3089, 1.442695
    %v3092 = vpow.pop %v3091
    %v3093 = vmul.f32 %v3090, 1.442695
    %v3094 = vpow.pop %v3093
    %v3095 = vsel %vm1566, %v3092, 0.0
    %3096 = vadd.xlane.f32.xlu0 %v3095
    %v3097 = vpop.xlane.xlu0 %3096
    %v3098 = vsel %vm1566, %v3094, 0.0
    %3099 = vadd.xlane.f32.xlu0 %v3098
    %v3100 = vpop.xlane.xlu0 %3099
    %v3101 = vrcp.pop %v3097
    %v3102 = vrcp.pop %v3100
    %v3103 = vmul.f32 %v3092, %v3101
    %v3104 = vmul.f32 %v3094, %v3102
    %v3105 = vpack.c.bf16 %v3104, %v3103
    %3106 = vrot.lane.b32.xlu0 %v2927, 96
    %v3107 = vpop.permute.xlu0 %3106
    %v3110 = vsel %vm1566, %v3105, 0
    %3112 = vmatpush.bf16.msra.mxu0 0
    %3113 = vmatpush.bf16.msra.mxu0 0
    %3114 = vmatpush.bf16.msra.mxu0 0
    %3115 = vmatpush.bf16.msra.mxu0 0
    %3116 = vmatpush.bf16.msra.mxu0 0
    %3117 = vmatpush.bf16.msra.mxu0 0
    %3118 = vmatpush.bf16.msra.mxu0 0
    %3119 = vmatpush.bf16.msra.mxu0 %v3107
    %3120 = vmatmul.bf16.gmra.mxu0 %v3110
    %v3121 = vpop.f32.mrf.mxu0
    %v3122 = vadd.f32 0.0, %v3121
    %v3123 = vpop.f32.mrf.mxu0
    %v3124 = vadd.f32 0.0, %v3123
    %3125 = vdwg.mxu0
    %3126 = vrot.lane.b32.xlu0 %v2926, 80
    %v3127 = vpop.permute.xlu0 %3126
    %3128 = vrot.lane.b32.xlu0 %v2926, 16
    %v3129 = vpop.permute.xlu0 %3128
    %v3131 = vsel %vm1566, %v3127, 0
    %v3134 = vsel %vm1566, %v3129, 0
    %3136 = vmatpush.bf16.xpose.msra.mxu0 0
    %3137 = vmatpush.bf16.xpose.msra.mxu0 0
    %3138 = vmatpush.bf16.xpose.msra.mxu0 0
    %3139 = vmatpush.bf16.xpose.msra.mxu0 0
    %3140 = vmatpush.bf16.xpose.msra.mxu0 0
    %3141 = vmatpush.bf16.xpose.msra.mxu0 0
    %3142 = vmatpush.bf16.xpose.msra.mxu0 0
    %3143 = vmatpush.bf16.xpose.msra.mxu0 %v3134
    %3144 = vmatmul.bf16.gmra.mxu0 %v3131
    %v3145 = vpop.f32.mrf.mxu0
    %v3146 = vadd.f32 %v139, %v3145
    %v3147 = vpop.f32.mrf.mxu0
    %v3148 = vadd.f32 %v140, %v3147
    %3149 = vdwg.mxu0
    %v3150 = vsel %vm1566, %v3146, -inf
    %3151 = vmax.xlane.f32.xlu0 %v3150
    %v3152 = vpop.xlane.xlu0 %3151
    %v3153 = vsel %vm1566, %v3148, -inf
    %3154 = vmax.xlane.f32.xlu0 %v3153
    %v3155 = vpop.xlane.xlu0 %3154
    %v3156 = vsub.f32 %v3146, %v3152
    %v3157 = vsub.f32 %v3148, %v3155
    %v3158 = vmul.f32 %v3156, 1.442695
    %v3159 = vpow.pop %v3158
    %v3160 = vmul.f32 %v3157, 1.442695
    %v3161 = vpow.pop %v3160
    %v3162 = vsel %vm1566, %v3159, 0.0
    %3163 = vadd.xlane.f32.xlu0 %v3162
    %v3164 = vpop.xlane.xlu0 %3163
    %v3165 = vsel %vm1566, %v3161, 0.0
    %3166 = vadd.xlane.f32.xlu0 %v3165
    %v3167 = vpop.xlane.xlu0 %3166
    %v3168 = vrcp.pop %v3164
    %v3169 = vrcp.pop %v3167
    %v3170 = vmul.f32 %v3159, %v3168
    %v3171 = vmul.f32 %v3161, %v3169
    %v3172 = vpack.c.bf16 %v3171, %v3170
    %3173 = vrot.lane.b32.xlu0 %v2927, 80
    %v3174 = vpop.permute.xlu0 %3173
    %v3177 = vsel %vm1566, %v3172, 0
    %3179 = vmatpush.bf16.msra.mxu0 0
    %3180 = vmatpush.bf16.msra.mxu0 0
    %3181 = vmatpush.bf16.msra.mxu0 0
    %3182 = vmatpush.bf16.msra.mxu0 0
    %3183 = vmatpush.bf16.msra.mxu0 0
    %3184 = vmatpush.bf16.msra.mxu0 0
    %3185 = vmatpush.bf16.msra.mxu0 0
    %3186 = vmatpush.bf16.msra.mxu0 %v3174
    %3187 = vmatmul.bf16.gmra.mxu0 %v3177
    %v3188 = vpop.f32.mrf.mxu0
    %v3189 = vadd.f32 0.0, %v3188
    %v3190 = vpop.f32.mrf.mxu0
    %v3191 = vadd.f32 0.0, %v3190
    %3192 = vdwg.mxu0
    %3195 = vrot.lane.b32.xlu0 %v3055, 16
    %v3196 = vpop.permute.xlu0 %3195
    %3197 = vrot.lane.b32.xlu0 %v3057, 16
    %v3198 = vpop.permute.xlu0 %3197
    %3203 = vrot.lane.b32.xlu0 %v3122, 32
    %v3204 = vpop.permute.xlu0 %3203
    %3205 = vrot.lane.b32.xlu0 %v3124, 32
    %v3206 = vpop.permute.xlu0 %3205
    %3211 = vrot.lane.b32.xlu0 %v3189, 48
    %v3212 = vpop.permute.xlu0 %3211
    %3213 = vrot.lane.b32.xlu0 %v3191, 48
    %v3214 = vpop.permute.xlu0 %3213
    %v3217 = vsel %vm1566, %v2987, %v3196
    %v3218 = vsel %vm1566, %v2989, %v3198
    %v3219 = vsel %vm1447, %v3217, %v3204
    %v3220 = vsel %vm1447, %v3218, %v3206
    %vm3221 = vcmask 392192
    %v3222 = vsel %vm3221, %v3219, %v3212
    %v3223 = vsel %vm3221, %v3220, %v3214
    %v3224 = vld [vmem:[%s7 + $0x40] sm:$0xf]
    %v3225 = vld [vmem:[%s7 + $0x48] sm:$0xf]
    %v3226 = vld [vmem:[%s7 + $0x50] sm:$0xf]
    %v3227 = vld [vmem:[%s7 + $0x58] sm:$0xf]
    %v3228 = vld [vmem:[%s7 + $0x60] sm:$0xf]
    %v3229 = vld [vmem:[%s7 + $0x68] sm:$0xf]
    %v3230 = vld [vmem:[%s7 + $0x70] sm:$0xf]
    %v3231 = vld [vmem:[%s7 + $0x78] sm:$0xf]
    %v3232 = vpack.c.bf16 %v3223, %v3222
    %v3241 = vunpack.c.l.b16 %v3224
    %v3242 = vunpack.c.l.b16 %v3225
    %v3243 = vunpack.c.l.b16 %v3226
    %v3244 = vunpack.c.l.b16 %v3227
    %v3245 = vunpack.c.l.b16 %v3228
    %v3246 = vunpack.c.l.b16 %v3229
    %v3247 = vunpack.c.l.b16 %v3230
    %v3248 = vunpack.c.l.b16 %v3231
    %v3249 = vpack.c.b16 %v3242, %v3241
    %v3250 = vpack.c.b16 %v3244, %v3243
    %v3251 = vpack.c.b16 %v3246, %v3245
    %v3252 = vpack.c.b16 %v3248, %v3247
    %v3258 = vsel %vm2764, %v3232, 0
    %3260 = vmatpush.bf16.msra.mxu0 0
    %3261 = vmatpush.bf16.msra.mxu0 0
    %3262 = vmatpush.bf16.msra.mxu0 0
    %3263 = vmatpush.bf16.msra.mxu0 0
    %3264 = vmatpush.bf16.msra.mxu0 %v3252
    %3265 = vmatpush.bf16.msra.mxu0 %v3251
    %3266 = vmatpush.bf16.msra.mxu0 %v3250
    %3267 = vmatpush.bf16.msra.mxu0 %v3249
    %3268 = vmatmul.bf16.gmra.mxu0 %v3258
    %v3269 = vpop.f32.mrf.mxu0
    %v3270 = vadd.f32 0.0, %v3269
    %v3271 = vpop.f32.mrf.mxu0
    %v3272 = vadd.f32 0.0, %v3271
    %3273 = vdwg.mxu0
    %3276 = vrot.lane.b32.xlu0 %v3270, 32
    %v3277 = vpop.permute.xlu0 %3276
    %3278 = vrot.lane.b32.xlu0 %v3272, 32
    %v3279 = vpop.permute.xlu0 %3278
    %v3282 = vadd.f32 %v2752, %v3277
    %v3283 = vadd.f32 %v2753, %v3279
    %v3284 = vld [vmem:[%s8 + $0x23] ss:$0 sm:$0xff]
    %3286 = vrot.lane.b32.xlu0 %v3284, 32
    %v3287 = vpop.permute.xlu0 %3286
    %v3289 = vadd.f32 %v3282, %v3287
    %v3290 = vadd.f32 %v3283, %v3287
    %v3291 = vld [vmem:[%s8 + $0x24] ss:$0 sm:$0xff]
    %v3292 = vld [vmem:[%s8 + $0x25] ss:$0 sm:$0xff]
    %3295 = vrot.lane.b32.xlu0 %v3289, 96
    %v3296 = vpop.permute.xlu0 %3295
    %3297 = vrot.lane.b32.xlu0 %v3290, 96
    %v3298 = vpop.permute.xlu0 %3297
    %v3301 = vsel %vm2764, %v3296, 0.0
    %3302 = vadd.xlane.f32.xlu0 %v3301
    %v3303 = vpop.xlane.xlu0 %3302
    %v3304 = vsel %vm2764, %v3298, 0.0
    %3305 = vadd.xlane.f32.xlu0 %v3304
    %v3306 = vpop.xlane.xlu0 %3305
    %v3307 = vmul.f32 %v3303, %v2777
    %v3308 = vmul.f32 %v3306, %v2777
    %v3309 = vsub.f32 %v3289, %v3307
    %v3310 = vsub.f32 %v3290, %v3308
    %v3311 = vmul.f32 %v3309, %v3309
    %v3312 = vmul.f32 %v3310, %v3310
    %3315 = vrot.lane.b32.xlu0 %v3311, 96
    %v3316 = vpop.permute.xlu0 %3315
    %3317 = vrot.lane.b32.xlu0 %v3312, 96
    %v3318 = vpop.permute.xlu0 %3317
    %v3321 = vsel %vm2764, %v3316, 0.0
    %3322 = vadd.xlane.f32.xlu0 %v3321
    %v3323 = vpop.xlane.xlu0 %3322
    %v3324 = vsel %vm2764, %v3318, 0.0
    %3325 = vadd.xlane.f32.xlu0 %v3324
    %v3326 = vpop.xlane.xlu0 %3325
    %v3327 = vmul.f32 %v3323, %v2777
    %v3328 = vmul.f32 %v3326, %v2777
    %v3329 = vadd.f32 %v3327, 1e-05
    %v3330 = vadd.f32 %v3328, 1e-05
    %v3331 = vrsqrt.pop %v3329
    %v3332 = vmul.f32 %v3331, %v3329
    %v3333 = vmul.f32 %v3332, %v3331
    %v3334 = vmul.f32 0.5, %v3333
    %v3335 = vsub.f32 1.5, %v3334
    %v3336 = vmul.f32 %v3331, %v3335
    %vm3337 = vweird.f32 %v3329
    %vm3338 = vweird.f32 %v3331
    %vm3339 = vmor %vm3337, %vm3338
    %v3340 = vsel %vm3339, %v3331, %v3336
    %v3341 = vrsqrt.pop %v3330
    %v3342 = vmul.f32 %v3341, %v3330
    %v3343 = vmul.f32 %v3342, %v3341
    %v3344 = vmul.f32 0.5, %v3343
    %v3345 = vsub.f32 1.5, %v3344
    %v3346 = vmul.f32 %v3341, %v3345
    %vm3347 = vweird.f32 %v3330
    %vm3348 = vweird.f32 %v3341
    %vm3349 = vmor %vm3347, %vm3348
    %v3350 = vsel %vm3349, %v3341, %v3346
    %v3351 = vmul.f32 %v3309, %v3340
    %v3352 = vmul.f32 %v3310, %v3350
    %3354 = vrot.lane.b32.xlu0 %v3291, 32
    %v3355 = vpop.permute.xlu0 %3354
    %v3357 = vmul.f32 %v3351, %v3355
    %v3358 = vmul.f32 %v3352, %v3355
    %3360 = vrot.lane.b32.xlu0 %v3292, 32
    %v3361 = vpop.permute.xlu0 %3360
    %v3363 = vadd.f32 %v3357, %v3361
    %v3364 = vadd.f32 %v3358, %v3361
    %v3365 = vld [vmem:[%s7 + $0x80] sm:$0xff]
    %v3366 = vld [vmem:[%s7 + $0x88] sm:$0xff]
    %v3367 = vld [vmem:[%s7 + $0x90] sm:$0xff]
    %v3368 = vld [vmem:[%s7 + $0x98] sm:$0xff]
    %v3369 = vld [vmem:[%s7 + $0xa0] sm:$0xff]
    %v3370 = vld [vmem:[%s7 + $0xa8] sm:$0xff]
    %v3371 = vld [vmem:[%s7 + $0xb0] sm:$0xff]
    %v3372 = vld [vmem:[%s7 + $0xb8] sm:$0xff]
    %v3373 = vpack.c.bf16 %v3364, %v3363
    %s3374 = scalar_lea.vmem %s8, 38
    %v3375 = vld [vmem:[%s3374] ss:$8 sm:$0x3]
    %v3377 = vperm.slane %v3375, 0
    %v3378 = vperm.slane %v3375, 1
    %3382 = vrot.lane.b32.xlu0 %v3373, 96
    %v3383 = vpop.permute.xlu0 %3382
    %v3392 = vunpack.c.l.b16 %v3365
    %v3393 = vunpack.c.h.b16 %v3365
    %v3394 = vunpack.c.l.b16 %v3366
    %v3395 = vunpack.c.h.b16 %v3366
    %v3396 = vunpack.c.l.b16 %v3367
    %v3397 = vunpack.c.h.b16 %v3367
    %v3398 = vunpack.c.l.b16 %v3368
    %v3399 = vunpack.c.h.b16 %v3368
    %v3400 = vunpack.c.l.b16 %v3369
    %v3401 = vunpack.c.h.b16 %v3369
    %v3402 = vunpack.c.l.b16 %v3370
    %v3403 = vunpack.c.h.b16 %v3370
    %v3404 = vunpack.c.l.b16 %v3371
    %v3405 = vunpack.c.h.b16 %v3371
    %v3406 = vunpack.c.l.b16 %v3372
    %v3407 = vunpack.c.h.b16 %v3372
    %v3408 = vpack.c.b16 %v3394, %v3392
    %v3409 = vpack.c.b16 %v3395, %v3393
    %v3410 = vpack.c.b16 %v3398, %v3396
    %v3411 = vpack.c.b16 %v3399, %v3397
    %v3412 = vpack.c.b16 %v3402, %v3400
    %v3413 = vpack.c.b16 %v3403, %v3401
    %v3414 = vpack.c.b16 %v3406, %v3404
    %v3415 = vpack.c.b16 %v3407, %v3405
    %v3425 = vsel %vm2764, %v3383, 0
    %3427 = vmatpush.bf16.msra.mxu0 0
    %3428 = vmatpush.bf16.msra.mxu0 0
    %3429 = vmatpush.bf16.msra.mxu0 0
    %3430 = vmatpush.bf16.msra.mxu0 0
    %3431 = vmatpush.bf16.msra.mxu0 %v3414
    %3432 = vmatpush.bf16.msra.mxu0 %v3412
    %3433 = vmatpush.bf16.msra.mxu0 %v3410
    %3434 = vmatpush.bf16.msra.mxu0 %v3408
    %3435 = vmatmul.bf16.gmra.mxu0 %v3425
    %v3436 = vpop.f32.mrf.mxu0
    %v3437 = vadd.f32 %v3377, %v3436
    %v3438 = vpop.f32.mrf.mxu0
    %v3439 = vadd.f32 %v3377, %v3438
    %3440 = vdwg.mxu0
    %3441 = vmatpush.bf16.msra.mxu0 0
    %3442 = vmatpush.bf16.msra.mxu0 0
    %3443 = vmatpush.bf16.msra.mxu0 0
    %3444 = vmatpush.bf16.msra.mxu0 0
    %3445 = vmatpush.bf16.msra.mxu0 %v3415
    %3446 = vmatpush.bf16.msra.mxu0 %v3413
    %3447 = vmatpush.bf16.msra.mxu0 %v3411
    %3448 = vmatpush.bf16.msra.mxu0 %v3409
    %3449 = vmatmul.bf16.gmra.mxu0 %v3425
    %v3450 = vpop.f32.mrf.mxu0
    %v3451 = vadd.f32 %v3378, %v3450
    %v3452 = vpop.f32.mrf.mxu0
    %v3453 = vadd.f32 %v3378, %v3452
    %3454 = vdwg.mxu0
    %v3455 = vmul.f32 %v3437, %v3437
    %v3456 = vmul.f32 %v3451, %v3451
    %v3457 = vmul.f32 %v3439, %v3439
    %v3458 = vmul.f32 %v3453, %v3453
    %v3459 = vmul.f32 %v3437, %v3455
    %v3460 = vmul.f32 %v3451, %v3456
    %v3461 = vmul.f32 %v3439, %v3457
    %v3462 = vmul.f32 %v3453, %v3458
    %v3463 = vmul.f32 %v3459, 0.044715
    %v3464 = vmul.f32 %v3460, 0.044715
    %v3465 = vmul.f32 %v3461, 0.044715
    %v3466 = vmul.f32 %v3462, 0.044715
    %v3467 = vadd.f32 %v3437, %v3463
    %v3468 = vadd.f32 %v3451, %v3464
    %v3469 = vadd.f32 %v3439, %v3465
    %v3470 = vadd.f32 %v3453, %v3466
    %v3471 = vmul.f32 %v3467, 0.7978846
    %v3472 = vmul.f32 %v3468, 0.7978846
    %v3473 = vmul.f32 %v3469, 0.7978846
    %v3474 = vmul.f32 %v3470, 0.7978846
    %v3475 = vtanh.pop %v3471
    %v3476 = vtanh.pop %v3472
    %v3477 = vtanh.pop %v3473
    %v3478 = vtanh.pop %v3474
    %v3479 = vadd.f32 %v3475, 1.0
    %v3480 = vadd.f32 %v3476, 1.0
    %v3481 = vadd.f32 %v3477, 1.0
    %v3482 = vadd.f32 %v3478, 1.0
    %v3483 = vmul.f32 %v3479, 0.5
    %v3484 = vmul.f32 %v3480, 0.5
    %v3485 = vmul.f32 %v3481, 0.5
    %v3486 = vmul.f32 %v3482, 0.5
    %v3487 = vmul.f32 %v3437, %v3483
    %v3488 = vmul.f32 %v3451, %v3484
    %v3489 = vmul.f32 %v3439, %v3485
    %v3490 = vmul.f32 %v3453, %v3486
    %v3491 = vld [vmem:[%s7 + $0xc0] sm:$0xf]
    %v3492 = vld [vmem:[%s7 + $0xc8] sm:$0xf]
    %v3493 = vld [vmem:[%s7 + $0xd0] sm:$0xf]
    %v3494 = vld [vmem:[%s7 + $0xd8] sm:$0xf]
    %v3495 = vld [vmem:[%s7 + $0xe0] sm:$0xf]
    %v3496 = vld [vmem:[%s7 + $0xe8] sm:$0xf]
    %v3497 = vld [vmem:[%s7 + $0xf0] sm:$0xf]
    %v3498 = vld [vmem:[%s7 + $0xf8] sm:$0xf]
    %v3499 = vld [vmem:[%s7 + $0x100] sm:$0xf]
    %v3500 = vld [vmem:[%s7 + $0x108] sm:$0xf]
    %v3501 = vld [vmem:[%s7 + $0x110] sm:$0xf]
    %v3502 = vld [vmem:[%s7 + $0x118] sm:$0xf]
    %v3503 = vld [vmem:[%s7 + $0x120] sm:$0xf]
    %v3504 = vld [vmem:[%s7 + $0x128] sm:$0xf]
    %v3505 = vld [vmem:[%s7 + $0x130] sm:$0xf]
    %v3506 = vld [vmem:[%s7 + $0x138] sm:$0xf]
    %v3507 = vld [vmem:[%s7 + $0x140] sm:$0xf]
    %v3508 = vld [vmem:[%s7 + $0x148] sm:$0xf]
    %v3509 = vld [vmem:[%s7 + $0x150] sm:$0xf]
    %v3510 = vld [vmem:[%s7 + $0x158] sm:$0xf]
    %v3511 = vld [vmem:[%s7 + $0x160] sm:$0xf]
    %v3512 = vld [vmem:[%s7 + $0x168] sm:$0xf]
    %v3513 = vld [vmem:[%s7 + $0x170] sm:$0xf]
    %v3514 = vld [vmem:[%s7 + $0x178] sm:$0xf]
    %v3515 = vld [vmem:[%s7 + $0x180] sm:$0xf]
    %v3516 = vld [vmem:[%s7 + $0x188] sm:$0xf]
    %v3517 = vld [vmem:[%s7 + $0x190] sm:$0xf]
    %v3518 = vld [vmem:[%s7 + $0x198] sm:$0xf]
    %v3519 = vld [vmem:[%s7 + $0x1a0] sm:$0xf]
    %v3520 = vld [vmem:[%s7 + $0x1a8] sm:$0xf]
    %v3521 = vld [vmem:[%s7 + $0x1b0] sm:$0xf]
    %v3522 = vld [vmem:[%s7 + $0x1b8] sm:$0xf]
    %v3523 = vpack.c.bf16 %v3489, %v3487
    %v3524 = vpack.c.bf16 %v3490, %v3488
    %v3557 = vunpack.c.l.b16 %v3491
    %v3558 = vunpack.c.l.b16 %v3492
    %v3559 = vunpack.c.l.b16 %v3493
    %v3560 = vunpack.c.l.b16 %v3494
    %v3561 = vunpack.c.l.b16 %v3495
    %v3562 = vunpack.c.l.b16 %v3496
    %v3563 = vunpack.c.l.b16 %v3497
    %v3564 = vunpack.c.l.b16 %v3498
    %v3565 = vunpack.c.l.b16 %v3499
    %v3566 = vunpack.c.l.b16 %v3500
    %v3567 = vunpack.c.l.b16 %v3501
    %v3568 = vunpack.c.l.b16 %v3502
    %v3569 = vunpack.c.l.b16 %v3503
    %v3570 = vunpack.c.l.b16 %v3504
    %v3571 = vunpack.c.l.b16 %v3505
    %v3572 = vunpack.c.l.b16 %v3506
    %v3573 = vunpack.c.l.b16 %v3507
    %v3574 = vunpack.c.l.b16 %v3508
    %v3575 = vunpack.c.l.b16 %v3509
    %v3576 = vunpack.c.l.b16 %v3510
    %v3577 = vunpack.c.l.b16 %v3511
    %v3578 = vunpack.c.l.b16 %v3512
    %v3579 = vunpack.c.l.b16 %v3513
    %v3580 = vunpack.c.l.b16 %v3514
    %v3581 = vunpack.c.l.b16 %v3515
    %v3582 = vunpack.c.l.b16 %v3516
    %v3583 = vunpack.c.l.b16 %v3517
    %v3584 = vunpack.c.l.b16 %v3518
    %v3585 = vunpack.c.l.b16 %v3519
    %v3586 = vunpack.c.l.b16 %v3520
    %v3587 = vunpack.c.l.b16 %v3521
    %v3588 = vunpack.c.l.b16 %v3522
    %v3589 = vpack.c.b16 %v3558, %v3557
    %v3590 = vpack.c.b16 %v3560, %v3559
    %v3591 = vpack.c.b16 %v3562, %v3561
    %v3592 = vpack.c.b16 %v3564, %v3563
    %v3593 = vpack.c.b16 %v3566, %v3565
    %v3594 = vpack.c.b16 %v3568, %v3567
    %v3595 = vpack.c.b16 %v3570, %v3569
    %v3596 = vpack.c.b16 %v3572, %v3571
    %v3597 = vpack.c.b16 %v3574, %v3573
    %v3598 = vpack.c.b16 %v3576, %v3575
    %v3599 = vpack.c.b16 %v3578, %v3577
    %v3600 = vpack.c.b16 %v3580, %v3579
    %v3601 = vpack.c.b16 %v3582, %v3581
    %v3602 = vpack.c.b16 %v3584, %v3583
    %v3603 = vpack.c.b16 %v3586, %v3585
    %v3604 = vpack.c.b16 %v3588, %v3587
    %3621 = vmatpush.bf16.msra.mxu0 %v3596
    %3622 = vmatpush.bf16.msra.mxu0 %v3595
    %3623 = vmatpush.bf16.msra.mxu0 %v3594
    %3624 = vmatpush.bf16.msra.mxu0 %v3593
    %3625 = vmatpush.bf16.msra.mxu0 %v3592
    %3626 = vmatpush.bf16.msra.mxu0 %v3591
    %3627 = vmatpush.bf16.msra.mxu0 %v3590
    %3628 = vmatpush.bf16.msra.mxu0 %v3589
    %3629 = vmatmul.bf16.gmra.mxu0 %v3523
    %v3630 = vpop.f32.mrf.mxu0
    %v3631 = vadd.f32 0.0, %v3630
    %v3632 = vpop.f32.mrf.mxu0
    %v3633 = vadd.f32 0.0, %v3632
    %3634 = vdwg.mxu0
    %3635 = vmatpush.bf16.msra.mxu0 %v3604
    %3636 = vmatpush.bf16.msra.mxu0 %v3603
    %3637 = vmatpush.bf16.msra.mxu0 %v3602
    %3638 = vmatpush.bf16.msra.mxu0 %v3601
    %3639 = vmatpush.bf16.msra.mxu0 %v3600
    %3640 = vmatpush.bf16.msra.mxu0 %v3599
    %3641 = vmatpush.bf16.msra.mxu0 %v3598
    %3642 = vmatpush.bf16.msra.mxu0 %v3597
    %3643 = vmatmul.bf16.gmra.mxu0 %v3524
    %v3644 = vpop.f32.mrf.mxu0
    %v3645 = vadd.f32 %v3631, %v3644
    %v3646 = vpop.f32.mrf.mxu0
    %v3647 = vadd.f32 %v3633, %v3646
    %3648 = vdwg.mxu0
    %3651 = vrot.lane.b32.xlu0 %v3645, 32
    %v3652 = vpop.permute.xlu0 %3651
    %3653 = vrot.lane.b32.xlu0 %v3647, 32
    %v3654 = vpop.permute.xlu0 %3653
    %v3657 = vadd.f32 %v3289, %v3652
    %v3658 = vadd.f32 %v3290, %v3654
    %v3659 = vld [vmem:[%s8 + $0x27] ss:$0 sm:$0xff]
    %3661 = vrot.lane.b32.xlu0 %v3659, 32
    %v3662 = vpop.permute.xlu0 %3661
    %v3664 = vadd.f32 %v3657, %v3662
    %v3665 = vadd.f32 %v3658, %v3662
    %v3666 = vld [vmem:[%s8 + $0x30] ss:$0 sm:$0xff]
    %v3667 = vld [vmem:[%s8 + $0x31] ss:$0 sm:$0xff]
    %3670 = vrot.lane.b32.xlu0 %v3664, 96
    %v3671 = vpop.permute.xlu0 %3670
    %3672 = vrot.lane.b32.xlu0 %v3665, 96
    %v3673 = vpop.permute.xlu0 %3672
    %v3676 = vsel %vm2764, %v3671, 0.0
    %3677 = vadd.xlane.f32.xlu0 %v3676
    %v3678 = vpop.xlane.xlu0 %3677
    %v3679 = vsel %vm2764, %v3673, 0.0
    %3680 = vadd.xlane.f32.xlu0 %v3679
    %v3681 = vpop.xlane.xlu0 %3680
    %v3682 = vmul.f32 %v3678, %v2777
    %v3683 = vmul.f32 %v3681, %v2777
    %v3684 = vsub.f32 %v3664, %v3682
    %v3685 = vsub.f32 %v3665, %v3683
    %v3686 = vmul.f32 %v3684, %v3684
    %v3687 = vmul.f32 %v3685, %v3685
    %3690 = vrot.lane.b32.xlu0 %v3686, 96
    %v3691 = vpop.permute.xlu0 %3690
    %3692 = vrot.lane.b32.xlu0 %v3687, 96
    %v3693 = vpop.permute.xlu0 %3692
    %v3696 = vsel %vm2764, %v3691, 0.0
    %3697 = vadd.xlane.f32.xlu0 %v3696
    %v3698 = vpop.xlane.xlu0 %3697
    %v3699 = vsel %vm2764, %v3693, 0.0
    %3700 = vadd.xlane.f32.xlu0 %v3699
    %v3701 = vpop.xlane.xlu0 %3700
    %v3702 = vmul.f32 %v3698, %v2777
    %v3703 = vmul.f32 %v3701, %v2777
    %v3704 = vadd.f32 %v3702, 1e-05
    %v3705 = vadd.f32 %v3703, 1e-05
    %v3706 = vrsqrt.pop %v3704
    %v3707 = vmul.f32 %v3706, %v3704
    %v3708 = vmul.f32 %v3707, %v3706
    %v3709 = vmul.f32 0.5, %v3708
    %v3710 = vsub.f32 1.5, %v3709
    %v3711 = vmul.f32 %v3706, %v3710
    %vm3712 = vweird.f32 %v3704
    %vm3713 = vweird.f32 %v3706
    %vm3714 = vmor %vm3712, %vm3713
    %v3715 = vsel %vm3714, %v3706, %v3711
    %v3716 = vrsqrt.pop %v3705
    %v3717 = vmul.f32 %v3716, %v3705
    %v3718 = vmul.f32 %v3717, %v3716
    %v3719 = vmul.f32 0.5, %v3718
    %v3720 = vsub.f32 1.5, %v3719
    %v3721 = vmul.f32 %v3716, %v3720
    %vm3722 = vweird.f32 %v3705
    %vm3723 = vweird.f32 %v3716
    %vm3724 = vmor %vm3722, %vm3723
    %v3725 = vsel %vm3724, %v3716, %v3721
    %v3726 = vmul.f32 %v3684, %v3715
    %v3727 = vmul.f32 %v3685, %v3725
    %3729 = vrot.lane.b32.xlu0 %v3666, 32
    %v3730 = vpop.permute.xlu0 %3729
    %v3732 = vmul.f32 %v3726, %v3730
    %v3733 = vmul.f32 %v3727, %v3730
    %3735 = vrot.lane.b32.xlu0 %v3667, 32
    %v3736 = vpop.permute.xlu0 %3735
    %v3738 = vadd.f32 %v3732, %v3736
    %v3739 = vadd.f32 %v3733, %v3736
    %v3740 = vld [vmem:[%s7 + $0x1c0] sm:$0xff]
    %v3741 = vld [vmem:[%s7 + $0x1c8] sm:$0xff]
    %v3742 = vld [vmem:[%s7 + $0x1d0] sm:$0xff]
    %v3743 = vld [vmem:[%s7 + $0x1d8] sm:$0xff]
    %v3744 = vld [vmem:[%s7 + $0x1e0] sm:$0xff]
    %v3745 = vld [vmem:[%s7 + $0x1e8] sm:$0xff]
    %v3746 = vld [vmem:[%s7 + $0x1f0] sm:$0xff]
    %v3747 = vld [vmem:[%s7 + $0x1f8] sm:$0xff]
    %v3748 = vpack.c.bf16 %v3739, %v3738
    %s3749 = scalar_lea.vmem %s8, 50
    %v3750 = vld [vmem:[%s3749] ss:$8 sm:$0x3]
    %v3752 = vperm.slane %v3750, 0
    %v3753 = vperm.slane %v3750, 1
    %3757 = vrot.lane.b32.xlu0 %v3748, 96
    %v3758 = vpop.permute.xlu0 %3757
    %v3767 = vunpack.c.l.b16 %v3740
    %v3768 = vunpack.c.h.b16 %v3740
    %v3769 = vunpack.c.l.b16 %v3741
    %v3770 = vunpack.c.h.b16 %v3741
    %v3771 = vunpack.c.l.b16 %v3742
    %v3772 = vunpack.c.h.b16 %v3742
    %v3773 = vunpack.c.l.b16 %v3743
    %v3774 = vunpack.c.h.b16 %v3743
    %v3775 = vunpack.c.l.b16 %v3744
    %v3776 = vunpack.c.h.b16 %v3744
    %v3777 = vunpack.c.l.b16 %v3745
    %v3778 = vunpack.c.h.b16 %v3745
    %v3779 = vunpack.c.l.b16 %v3746
    %v3780 = vunpack.c.h.b16 %v3746
    %v3781 = vunpack.c.l.b16 %v3747
    %v3782 = vunpack.c.h.b16 %v3747
    %v3783 = vpack.c.b16 %v3769, %v3767
    %v3784 = vpack.c.b16 %v3770, %v3768
    %v3785 = vpack.c.b16 %v3773, %v3771
    %v3786 = vpack.c.b16 %v3774, %v3772
    %v3787 = vpack.c.b16 %v3777, %v3775
    %v3788 = vpack.c.b16 %v3778, %v3776
    %v3789 = vpack.c.b16 %v3781, %v3779
    %v3790 = vpack.c.b16 %v3782, %v3780
    %v3800 = vsel %vm2764, %v3758, 0
    %3802 = vmatpush.bf16.msra.mxu0 0
    %3803 = vmatpush.bf16.msra.mxu0 0
    %3804 = vmatpush.bf16.msra.mxu0 0
    %3805 = vmatpush.bf16.msra.mxu0 0
    %3806 = vmatpush.bf16.msra.mxu0 %v3789
    %3807 = vmatpush.bf16.msra.mxu0 %v3787
    %3808 = vmatpush.bf16.msra.mxu0 %v3785
    %3809 = vmatpush.bf16.msra.mxu0 %v3783
    %3810 = vmatmul.bf16.gmra.mxu0 %v3800
    %v3811 = vpop.f32.mrf.mxu0
    %v3812 = vadd.f32 %v3752, %v3811
    %v3813 = vpop.f32.mrf.mxu0
    %v3814 = vadd.f32 %v3752, %v3813
    %3815 = vdwg.mxu0
    %3816 = vmatpush.bf16.msra.mxu0 0
    %3817 = vmatpush.bf16.msra.mxu0 0
    %3818 = vmatpush.bf16.msra.mxu0 0
    %3819 = vmatpush.bf16.msra.mxu0 0
    %3820 = vmatpush.bf16.msra.mxu0 %v3790
    %3821 = vmatpush.bf16.msra.mxu0 %v3788
    %3822 = vmatpush.bf16.msra.mxu0 %v3786
    %3823 = vmatpush.bf16.msra.mxu0 %v3784
    %3824 = vmatmul.bf16.gmra.mxu0 %v3800
    %v3825 = vpop.f32.mrf.mxu0
    %v3826 = vadd.f32 %v3753, %v3825
    %v3827 = vpop.f32.mrf.mxu0
    %v3828 = vadd.f32 %v3753, %v3827
    %3829 = vdwg.mxu0
    %v3830 = vpack.c.bf16 %v3814, %v3812
    %v3831 = vpack.c.bf16 %v3828, %v3826
    %3833 = vrot.lane.b32.xlu0 %v3830, 64
    %v3834 = vpop.permute.xlu0 %3833
    %v3836 = vsel %vm1566, %v3830, 0
    %v3839 = vsel %vm1566, %v3834, 0
    %3841 = vmatpush.bf16.xpose.msra.mxu0 0
    %3842 = vmatpush.bf16.xpose.msra.mxu0 0
    %3843 = vmatpush.bf16.xpose.msra.mxu0 0
    %3844 = vmatpush.bf16.xpose.msra.mxu0 0
    %3845 = vmatpush.bf16.xpose.msra.mxu0 0
    %3846 = vmatpush.bf16.xpose.msra.mxu0 0
    %3847 = vmatpush.bf16.xpose.msra.mxu0 0
    %3848 = vmatpush.bf16.xpose.msra.mxu0 %v3839
    %3849 = vmatmul.bf16.gmra.mxu0 %v3836
    %v3850 = vpop.f32.mrf.mxu0
    %v3851 = vadd.f32 %v139, %v3850
    %v3852 = vpop.f32.mrf.mxu0
    %v3853 = vadd.f32 %v140, %v3852
    %3854 = vdwg.mxu0
    %v3855 = vsel %vm1566, %v3851, -inf
    %3856 = vmax.xlane.f32.xlu0 %v3855
    %v3857 = vpop.xlane.xlu0 %3856
    %v3858 = vsel %vm1566, %v3853, -inf
    %3859 = vmax.xlane.f32.xlu0 %v3858
    %v3860 = vpop.xlane.xlu0 %3859
    %v3861 = vsub.f32 %v3851, %v3857
    %v3862 = vsub.f32 %v3853, %v3860
    %v3863 = vmul.f32 %v3861, 1.442695
    %v3864 = vpow.pop %v3863
    %v3865 = vmul.f32 %v3862, 1.442695
    %v3866 = vpow.pop %v3865
    %v3867 = vsel %vm1566, %v3864, 0.0
    %3868 = vadd.xlane.f32.xlu0 %v3867
    %v3869 = vpop.xlane.xlu0 %3868
    %v3870 = vsel %vm1566, %v3866, 0.0
    %3871 = vadd.xlane.f32.xlu0 %v3870
    %v3872 = vpop.xlane.xlu0 %3871
    %v3873 = vrcp.pop %v3869
    %v3874 = vrcp.pop %v3872
    %v3875 = vmul.f32 %v3864, %v3873
    %v3876 = vmul.f32 %v3866, %v3874
    %v3877 = vpack.c.bf16 %v3876, %v3875
    %v3879 = vsel %vm1566, %v3877, 0
    %3881 = vmatpush.bf16.msra.mxu0 0
    %3882 = vmatpush.bf16.msra.mxu0 0
    %3883 = vmatpush.bf16.msra.mxu0 0
    %3884 = vmatpush.bf16.msra.mxu0 0
    %3885 = vmatpush.bf16.msra.mxu0 0
    %3886 = vmatpush.bf16.msra.mxu0 0
    %3887 = vmatpush.bf16.msra.mxu0 0
    %3888 = vmatpush.bf16.msra.mxu0 %v3831
    %3889 = vmatmul.bf16.gmra.mxu0 %v3879
    %v3890 = vpop.f32.mrf.mxu0
    %v3891 = vadd.f32 0.0, %v3890
    %v3892 = vpop.f32.mrf.mxu0
    %v3893 = vadd.f32 0.0, %v3892
    %3894 = vdwg.mxu0
    %3895 = vrot.lane.b32.xlu0 %v3830, 112
    %v3896 = vpop.permute.xlu0 %3895
    %3897 = vrot.lane.b32.xlu0 %v3830, 48
    %v3898 = vpop.permute.xlu0 %3897
    %v3900 = vsel %vm1566, %v3896, 0
    %v3903 = vsel %vm1566, %v3898, 0
    %3905 = vmatpush.bf16.xpose.msra.mxu0 0
    %3906 = vmatpush.bf16.xpose.msra.mxu0 0
    %3907 = vmatpush.bf16.xpose.msra.mxu0 0
    %3908 = vmatpush.bf16.xpose.msra.mxu0 0
    %3909 = vmatpush.bf16.xpose.msra.mxu0 0
    %3910 = vmatpush.bf16.xpose.msra.mxu0 0
    %3911 = vmatpush.bf16.xpose.msra.mxu0 0
    %3912 = vmatpush.bf16.xpose.msra.mxu0 %v3903
    %3913 = vmatmul.bf16.gmra.mxu0 %v3900
    %v3914 = vpop.f32.mrf.mxu0
    %v3915 = vadd.f32 %v139, %v3914
    %v3916 = vpop.f32.mrf.mxu0
    %v3917 = vadd.f32 %v140, %v3916
    %3918 = vdwg.mxu0
    %v3919 = vsel %vm1566, %v3915, -inf
    %3920 = vmax.xlane.f32.xlu0 %v3919
    %v3921 = vpop.xlane.xlu0 %3920
    %v3922 = vsel %vm1566, %v3917, -inf
    %3923 = vmax.xlane.f32.xlu0 %v3922
    %v3924 = vpop.xlane.xlu0 %3923
    %v3925 = vsub.f32 %v3915, %v3921
    %v3926 = vsub.f32 %v3917, %v3924
    %v3927 = vmul.f32 %v3925, 1.442695
    %v3928 = vpow.pop %v3927
    %v3929 = vmul.f32 %v3926, 1.442695
    %v3930 = vpow.pop %v3929
    %v3931 = vsel %vm1566, %v3928, 0.0
    %3932 = vadd.xlane.f32.xlu0 %v3931
    %v3933 = vpop.xlane.xlu0 %3932
    %v3934 = vsel %vm1566, %v3930, 0.0
    %3935 = vadd.xlane.f32.xlu0 %v3934
    %v3936 = vpop.xlane.xlu0 %3935
    %v3937 = vrcp.pop %v3933
    %v3938 = vrcp.pop %v3936
    %v3939 = vmul.f32 %v3928, %v3937
    %v3940 = vmul.f32 %v3930, %v3938
    %v3941 = vpack.c.bf16 %v3940, %v3939
    %3943 = vrot.lane.b32.xlu0 %v3831, 112
    %v3944 = vpop.permute.xlu0 %3943
    %v3947 = vsel %vm1566, %v3941, 0
    %3949 = vmatpush.bf16.msra.mxu0 0
    %3950 = vmatpush.bf16.msra.mxu0 0
    %3951 = vmatpush.bf16.msra.mxu0 0
    %3952 = vmatpush.bf16.msra.mxu0 0
    %3953 = vmatpush.bf16.msra.mxu0 0
    %3954 = vmatpush.bf16.msra.mxu0 0
    %3955 = vmatpush.bf16.msra.mxu0 0
    %3956 = vmatpush.bf16.msra.mxu0 %v3944
    %3957 = vmatmul.bf16.gmra.mxu0 %v3947
    %v3958 = vpop.f32.mrf.mxu0
    %v3959 = vadd.f32 0.0, %v3958
    %v3960 = vpop.f32.mrf.mxu0
    %v3961 = vadd.f32 0.0, %v3960
    %3962 = vdwg.mxu0
    %3963 = vrot.lane.b32.xlu0 %v3830, 96
    %v3964 = vpop.permute.xlu0 %3963
    %3965 = vrot.lane.b32.xlu0 %v3830, 32
    %v3966 = vpop.permute.xlu0 %3965
    %v3968 = vsel %vm1566, %v3964, 0
    %v3971 = vsel %vm1566, %v3966, 0
    %3973 = vmatpush.bf16.xpose.msra.mxu0 0
    %3974 = vmatpush.bf16.xpose.msra.mxu0 0
    %3975 = vmatpush.bf16.xpose.msra.mxu0 0
    %3976 = vmatpush.bf16.xpose.msra.mxu0 0
    %3977 = vmatpush.bf16.xpose.msra.mxu0 0
    %3978 = vmatpush.bf16.xpose.msra.mxu0 0
    %3979 = vmatpush.bf16.xpose.msra.mxu0 0
    %3980 = vmatpush.bf16.xpose.msra.mxu0 %v3971
    %3981 = vmatmul.bf16.gmra.mxu0 %v3968
    %v3982 = vpop.f32.mrf.mxu0
    %v3983 = vadd.f32 %v139, %v3982
    %v3984 = vpop.f32.mrf.mxu0
    %v3985 = vadd.f32 %v140, %v3984
    %3986 = vdwg.mxu0
    %v3987 = vsel %vm1566, %v3983, -inf
    %3988 = vmax.xlane.f32.xlu0 %v3987
    %v3989 = vpop.xlane.xlu0 %3988
    %v3990 = vsel %vm1566, %v3985, -inf
    %3991 = vmax.xlane.f32.xlu0 %v3990
    %v3992 = vpop.xlane.xlu0 %3991
    %v3993 = vsub.f32 %v3983, %v3989
    %v3994 = vsub.f32 %v3985, %v3992
    %v3995 = vmul.f32 %v3993, 1.442695
    %v3996 = vpow.pop %v3995
    %v3997 = vmul.f32 %v3994, 1.442695
    %v3998 = vpow.pop %v3997
    %v3999 = vsel %vm1566, %v3996, 0.0
    %4000 = vadd.xlane.f32.xlu0 %v3999
    %v4001 = vpop.xlane.xlu0 %4000
    %v4002 = vsel %vm1566, %v3998, 0.0
    %4003 = vadd.xlane.f32.xlu0 %v4002
    %v4004 = vpop.xlane.xlu0 %4003
    %v4005 = vrcp.pop %v4001
    %v4006 = vrcp.pop %v4004
    %v4007 = vmul.f32 %v3996, %v4005
    %v4008 = vmul.f32 %v3998, %v4006
    %v4009 = vpack.c.bf16 %v4008, %v4007
    %4010 = vrot.lane.b32.xlu0 %v3831, 96
    %v4011 = vpop.permute.xlu0 %4010
    %v4014 = vsel %vm1566, %v4009, 0
    %4016 = vmatpush.bf16.msra.mxu0 0
    %4017 = vmatpush.bf16.msra.mxu0 0
    %4018 = vmatpush.bf16.msra.mxu0 0
    %4019 = vmatpush.bf16.msra.mxu0 0
    %4020 = vmatpush.bf16.msra.mxu0 0
    %4021 = vmatpush.bf16.msra.mxu0 0
    %4022 = vmatpush.bf16.msra.mxu0 0
    %4023 = vmatpush.bf16.msra.mxu0 %v4011
    %4024 = vmatmul.bf16.gmra.mxu0 %v4014
    %v4025 = vpop.f32.mrf.mxu0
    %v4026 = vadd.f32 0.0, %v4025
    %v4027 = vpop.f32.mrf.mxu0
    %v4028 = vadd.f32 0.0, %v4027
    %4029 = vdwg.mxu0
    %4030 = vrot.lane.b32.xlu0 %v3830, 80
    %v4031 = vpop.permute.xlu0 %4030
    %4032 = vrot.lane.b32.xlu0 %v3830, 16
    %v4033 = vpop.permute.xlu0 %4032
    %v4035 = vsel %vm1566, %v4031, 0
    %v4038 = vsel %vm1566, %v4033, 0
    %4040 = vmatpush.bf16.xpose.msra.mxu0 0
    %4041 = vmatpush.bf16.xpose.msra.mxu0 0
    %4042 = vmatpush.bf16.xpose.msra.mxu0 0
    %4043 = vmatpush.bf16.xpose.msra.mxu0 0
    %4044 = vmatpush.bf16.xpose.msra.mxu0 0
    %4045 = vmatpush.bf16.xpose.msra.mxu0 0
    %4046 = vmatpush.bf16.xpose.msra.mxu0 0
    %4047 = vmatpush.bf16.xpose.msra.mxu0 %v4038
    %4048 = vmatmul.bf16.gmra.mxu0 %v4035
    %v4049 = vpop.f32.mrf.mxu0
    %v4050 = vadd.f32 %v139, %v4049
    %v4051 = vpop.f32.mrf.mxu0
    %v4052 = vadd.f32 %v140, %v4051
    %4053 = vdwg.mxu0
    %v4054 = vsel %vm1566, %v4050, -inf
    %4055 = vmax.xlane.f32.xlu0 %v4054
    %v4056 = vpop.xlane.xlu0 %4055
    %v4057 = vsel %vm1566, %v4052, -inf
    %4058 = vmax.xlane.f32.xlu0 %v4057
    %v4059 = vpop.xlane.xlu0 %4058
    %v4060 = vsub.f32 %v4050, %v4056
    %v4061 = vsub.f32 %v4052, %v4059
    %v4062 = vmul.f32 %v4060, 1.442695
    %v4063 = vpow.pop %v4062
    %v4064 = vmul.f32 %v4061, 1.442695
    %v4065 = vpow.pop %v4064
    %v4066 = vsel %vm1566, %v4063, 0.0
    %4067 = vadd.xlane.f32.xlu0 %v4066
    %v4068 = vpop.xlane.xlu0 %4067
    %v4069 = vsel %vm1566, %v4065, 0.0
    %4070 = vadd.xlane.f32.xlu0 %v4069
    %v4071 = vpop.xlane.xlu0 %4070
    %v4072 = vrcp.pop %v4068
    %v4073 = vrcp.pop %v4071
    %v4074 = vmul.f32 %v4063, %v4072
    %v4075 = vmul.f32 %v4065, %v4073
    %v4076 = vpack.c.bf16 %v4075, %v4074
    %4077 = vrot.lane.b32.xlu0 %v3831, 80
    %v4078 = vpop.permute.xlu0 %4077
    %v4081 = vsel %vm1566, %v4076, 0
    %4083 = vmatpush.bf16.msra.mxu0 0
    %4084 = vmatpush.bf16.msra.mxu0 0
    %4085 = vmatpush.bf16.msra.mxu0 0
    %4086 = vmatpush.bf16.msra.mxu0 0
    %4087 = vmatpush.bf16.msra.mxu0 0
    %4088 = vmatpush.bf16.msra.mxu0 0
    %4089 = vmatpush.bf16.msra.mxu0 0
    %4090 = vmatpush.bf16.msra.mxu0 %v4078
    %4091 = vmatmul.bf16.gmra.mxu0 %v4081
    %v4092 = vpop.f32.mrf.mxu0
    %v4093 = vadd.f32 0.0, %v4092
    %v4094 = vpop.f32.mrf.mxu0
    %v4095 = vadd.f32 0.0, %v4094
    %4096 = vdwg.mxu0
    %4099 = vrot.lane.b32.xlu0 %v3959, 16
    %v4100 = vpop.permute.xlu0 %4099
    %4101 = vrot.lane.b32.xlu0 %v3961, 16
    %v4102 = vpop.permute.xlu0 %4101
    %4107 = vrot.lane.b32.xlu0 %v4026, 32
    %v4108 = vpop.permute.xlu0 %4107
    %4109 = vrot.lane.b32.xlu0 %v4028, 32
    %v4110 = vpop.permute.xlu0 %4109
    %4115 = vrot.lane.b32.xlu0 %v4093, 48
    %v4116 = vpop.permute.xlu0 %4115
    %4117 = vrot.lane.b32.xlu0 %v4095, 48
    %v4118 = vpop.permute.xlu0 %4117
    %v4121 = vsel %vm1566, %v3891, %v4100
    %v4122 = vsel %vm1566, %v3893, %v4102
    %v4123 = vsel %vm1447, %v4121, %v4108
    %v4124 = vsel %vm1447, %v4122, %v4110
    %v4125 = vsel %vm3221, %v4123, %v4116
    %v4126 = vsel %vm3221, %v4124, %v4118
    %v4127 = vld [vmem:[%s7 + $0x200] sm:$0xf]
    %v4128 = vld [vmem:[%s7 + $0x208] sm:$0xf]
    %v4129 = vld [vmem:[%s7 + $0x210] sm:$0xf]
    %v4130 = vld [vmem:[%s7 + $0x218] sm:$0xf]
    %v4131 = vld [vmem:[%s7 + $0x220] sm:$0xf]
    %v4132 = vld [vmem:[%s7 + $0x228] sm:$0xf]
    %v4133 = vld [vmem:[%s7 + $0x230] sm:$0xf]
    %v4134 = vld [vmem:[%s7 + $0x238] sm:$0xf]
    %v4135 = vpack.c.bf16 %v4126, %v4125
    %v4144 = vunpack.c.l.b16 %v4127
    %v4145 = vunpack.c.l.b16 %v4128
    %v4146 = vunpack.c.l.b16 %v4129
    %v4147 = vunpack.c.l.b16 %v4130
    %v4148 = vunpack.c.l.b16 %v4131
    %v4149 = vunpack.c.l.b16 %v4132
    %v4150 = vunpack.c.l.b16 %v4133
    %v4151 = vunpack.c.l.b16 %v4134
    %v4152 = vpack.c.b16 %v4145, %v4144
    %v4153 = vpack.c.b16 %v4147, %v4146
    %v4154 = vpack.c.b16 %v4149, %v4148
    %v4155 = vpack.c.b16 %v4151, %v4150
    %v4161 = vsel %vm2764, %v4135, 0
    %4163 = vmatpush.bf16.msra.mxu0 0
    %4164 = vmatpush.bf16.msra.mxu0 0
    %4165 = vmatpush.bf16.msra.mxu0 0
    %4166 = vmatpush.bf16.msra.mxu0 0
    %4167 = vmatpush.bf16.msra.mxu0 %v4155
    %4168 = vmatpush.bf16.msra.mxu0 %v4154
    %4169 = vmatpush.bf16.msra.mxu0 %v4153
    %4170 = vmatpush.bf16.msra.mxu0 %v4152
    %4171 = vmatmul.bf16.gmra.mxu0 %v4161
    %v4172 = vpop.f32.mrf.mxu0
    %v4173 = vadd.f32 0.0, %v4172
    %v4174 = vpop.f32.mrf.mxu0
    %v4175 = vadd.f32 0.0, %v4174
    %4176 = vdwg.mxu0
    %4179 = vrot.lane.b32.xlu0 %v4173, 32
    %v4180 = vpop.permute.xlu0 %4179
    %4181 = vrot.lane.b32.xlu0 %v4175, 32
    %v4182 = vpop.permute.xlu0 %4181
    %v4185 = vadd.f32 %v3664, %v4180
    %v4186 = vadd.f32 %v3665, %v4182
    %v4187 = vld [vmem:[%s8 + $0x33] ss:$0 sm:$0xff]
    %4189 = vrot.lane.b32.xlu0 %v4187, 32
    %v4190 = vpop.permute.xlu0 %4189
    %v4192 = vadd.f32 %v4185, %v4190
    %v4193 = vadd.f32 %v4186, %v4190
    %v4194 = vld [vmem:[%s8 + $0x34] ss:$0 sm:$0xff]
    %v4195 = vld [vmem:[%s8 + $0x35] ss:$0 sm:$0xff]
    %4198 = vrot.lane.b32.xlu0 %v4192, 96
    %v4199 = vpop.permute.xlu0 %4198
    %4200 = vrot.lane.b32.xlu0 %v4193, 96
    %v4201 = vpop.permute.xlu0 %4200
    %v4204 = vsel %vm2764, %v4199, 0.0
    %4205 = vadd.xlane.f32.xlu0 %v4204
    %v4206 = vpop.xlane.xlu0 %4205
    %v4207 = vsel %vm2764, %v4201, 0.0
    %4208 = vadd.xlane.f32.xlu0 %v4207
    %v4209 = vpop.xlane.xlu0 %4208
    %v4210 = vmul.f32 %v4206, %v2777
    %v4211 = vmul.f32 %v4209, %v2777
    %v4212 = vsub.f32 %v4192, %v4210
    %v4213 = vsub.f32 %v4193, %v4211
    %v4214 = vmul.f32 %v4212, %v4212
    %v4215 = vmul.f32 %v4213, %v4213
    %4218 = vrot.lane.b32.xlu0 %v4214, 96
    %v4219 = vpop.permute.xlu0 %4218
    %4220 = vrot.lane.b32.xlu0 %v4215, 96
    %v4221 = vpop.permute.xlu0 %4220
    %v4224 = vsel %vm2764, %v4219, 0.0
    %4225 = vadd.xlane.f32.xlu0 %v4224
    %v4226 = vpop.xlane.xlu0 %4225
    %v4227 = vsel %vm2764, %v4221, 0.0
    %4228 = vadd.xlane.f32.xlu0 %v4227
    %v4229 = vpop.xlane.xlu0 %4228
    %v4230 = vmul.f32 %v4226, %v2777
    %v4231 = vmul.f32 %v4229, %v2777
    %v4232 = vadd.f32 %v4230, 1e-05
    %v4233 = vadd.f32 %v4231, 1e-05
    %v4234 = vrsqrt.pop %v4232
    %v4235 = vmul.f32 %v4234, %v4232
    %v4236 = vmul.f32 %v4235, %v4234
    %v4237 = vmul.f32 0.5, %v4236
    %v4238 = vsub.f32 1.5, %v4237
    %v4239 = vmul.f32 %v4234, %v4238
    %vm4240 = vweird.f32 %v4232
    %vm4241 = vweird.f32 %v4234
    %vm4242 = vmor %vm4240, %vm4241
    %v4243 = vsel %vm4242, %v4234, %v4239
    %v4244 = vrsqrt.pop %v4233
    %v4245 = vmul.f32 %v4244, %v4233
    %v4246 = vmul.f32 %v4245, %v4244
    %v4247 = vmul.f32 0.5, %v4246
    %v4248 = vsub.f32 1.5, %v4247
    %v4249 = vmul.f32 %v4244, %v4248
    %vm4250 = vweird.f32 %v4233
    %vm4251 = vweird.f32 %v4244
    %vm4252 = vmor %vm4250, %vm4251
    %v4253 = vsel %vm4252, %v4244, %v4249
    %v4254 = vmul.f32 %v4212, %v4243
    %v4255 = vmul.f32 %v4213, %v4253
    %4257 = vrot.lane.b32.xlu0 %v4194, 32
    %v4258 = vpop.permute.xlu0 %4257
    %v4260 = vmul.f32 %v4254, %v4258
    %v4261 = vmul.f32 %v4255, %v4258
    %4263 = vrot.lane.b32.xlu0 %v4195, 32
    %v4264 = vpop.permute.xlu0 %4263
    %v4266 = vadd.f32 %v4260, %v4264
    %v4267 = vadd.f32 %v4261, %v4264
    %v4268 = vld [vmem:[%s7 + $0x240] sm:$0xff]
    %v4269 = vld [vmem:[%s7 + $0x248] sm:$0xff]
    %v4270 = vld [vmem:[%s7 + $0x250] sm:$0xff]
    %v4271 = vld [vmem:[%s7 + $0x258] sm:$0xff]
    %v4272 = vld [vmem:[%s7 + $0x260] sm:$0xff]
    %v4273 = vld [vmem:[%s7 + $0x268] sm:$0xff]
    %v4274 = vld [vmem:[%s7 + $0x270] sm:$0xff]
    %v4275 = vld [vmem:[%s7 + $0x278] sm:$0xff]
    %v4276 = vpack.c.bf16 %v4267, %v4266
    %s4277 = scalar_lea.vmem %s8, 54
    %v4278 = vld [vmem:[%s4277] ss:$8 sm:$0x3]
    %v4280 = vperm.slane %v4278, 0
    %v4281 = vperm.slane %v4278, 1
    %4285 = vrot.lane.b32.xlu0 %v4276, 96
    %v4286 = vpop.permute.xlu0 %4285
    %v4295 = vunpack.c.l.b16 %v4268
    %v4296 = vunpack.c.h.b16 %v4268
    %v4297 = vunpack.c.l.b16 %v4269
    %v4298 = vunpack.c.h.b16 %v4269
    %v4299 = vunpack.c.l.b16 %v4270
    %v4300 = vunpack.c.h.b16 %v4270
    %v4301 = vunpack.c.l.b16 %v4271
    %v4302 = vunpack.c.h.b16 %v4271
    %v4303 = vunpack.c.l.b16 %v4272
    %v4304 = vunpack.c.h.b16 %v4272
    %v4305 = vunpack.c.l.b16 %v4273
    %v4306 = vunpack.c.h.b16 %v4273
    %v4307 = vunpack.c.l.b16 %v4274
    %v4308 = vunpack.c.h.b16 %v4274
    %v4309 = vunpack.c.l.b16 %v4275
    %v4310 = vunpack.c.h.b16 %v4275
    %v4311 = vpack.c.b16 %v4297, %v4295
    %v4312 = vpack.c.b16 %v4298, %v4296
    %v4313 = vpack.c.b16 %v4301, %v4299
    %v4314 = vpack.c.b16 %v4302, %v4300
    %v4315 = vpack.c.b16 %v4305, %v4303
    %v4316 = vpack.c.b16 %v4306, %v4304
    %v4317 = vpack.c.b16 %v4309, %v4307
    %v4318 = vpack.c.b16 %v4310, %v4308
    %v4328 = vsel %vm2764, %v4286, 0
    %4330 = vmatpush.bf16.msra.mxu0 0
    %4331 = vmatpush.bf16.msra.mxu0 0
    %4332 = vmatpush.bf16.msra.mxu0 0
    %4333 = vmatpush.bf16.msra.mxu0 0
    %4334 = vmatpush.bf16.msra.mxu0 %v4317
    %4335 = vmatpush.bf16.msra.mxu0 %v4315
    %4336 = vmatpush.bf16.msra.mxu0 %v4313
    %4337 = vmatpush.bf16.msra.mxu0 %v4311
    %4338 = vmatmul.bf16.gmra.mxu0 %v4328
    %v4339 = vpop.f32.mrf.mxu0
    %v4340 = vadd.f32 %v4280, %v4339
    %v4341 = vpop.f32.mrf.mxu0
    %v4342 = vadd.f32 %v4280, %v4341
    %4343 = vdwg.mxu0
    %4344 = vmatpush.bf16.msra.mxu0 0
    %4345 = vmatpush.bf16.msra.mxu0 0
    %4346 = vmatpush.bf16.msra.mxu0 0
    %4347 = vmatpush.bf16.msra.mxu0 0
    %4348 = vmatpush.bf16.msra.mxu0 %v4318
    %4349 = vmatpush.bf16.msra.mxu0 %v4316
    %4350 = vmatpush.bf16.msra.mxu0 %v4314
    %4351 = vmatpush.bf16.msra.mxu0 %v4312
    %4352 = vmatmul.bf16.gmra.mxu0 %v4328
    %v4353 = vpop.f32.mrf.mxu0
    %v4354 = vadd.f32 %v4281, %v4353
    %v4355 = vpop.f32.mrf.mxu0
    %v4356 = vadd.f32 %v4281, %v4355
    %4357 = vdwg.mxu0
    %v4358 = vmul.f32 %v4340, %v4340
    %v4359 = vmul.f32 %v4354, %v4354
    %v4360 = vmul.f32 %v4342, %v4342
    %v4361 = vmul.f32 %v4356, %v4356
    %v4362 = vmul.f32 %v4340, %v4358
    %v4363 = vmul.f32 %v4354, %v4359
    %v4364 = vmul.f32 %v4342, %v4360
    %v4365 = vmul.f32 %v4356, %v4361
    %v4366 = vmul.f32 %v4362, 0.044715
    %v4367 = vmul.f32 %v4363, 0.044715
    %v4368 = vmul.f32 %v4364, 0.044715
    %v4369 = vmul.f32 %v4365, 0.044715
    %v4370 = vadd.f32 %v4340, %v4366
    %v4371 = vadd.f32 %v4354, %v4367
    %v4372 = vadd.f32 %v4342, %v4368
    %v4373 = vadd.f32 %v4356, %v4369
    %v4374 = vmul.f32 %v4370, 0.7978846
    %v4375 = vmul.f32 %v4371, 0.7978846
    %v4376 = vmul.f32 %v4372, 0.7978846
    %v4377 = vmul.f32 %v4373, 0.7978846
    %v4378 = vtanh.pop %v4374
    %v4379 = vtanh.pop %v4375
    %v4380 = vtanh.pop %v4376
    %v4381 = vtanh.pop %v4377
    %v4382 = vadd.f32 %v4378, 1.0
    %v4383 = vadd.f32 %v4379, 1.0
    %v4384 = vadd.f32 %v4380, 1.0
    %v4385 = vadd.f32 %v4381, 1.0
    %v4386 = vmul.f32 %v4382, 0.5
    %v4387 = vmul.f32 %v4383, 0.5
    %v4388 = vmul.f32 %v4384, 0.5
    %v4389 = vmul.f32 %v4385, 0.5
    %v4390 = vmul.f32 %v4340, %v4386
    %v4391 = vmul.f32 %v4354, %v4387
    %v4392 = vmul.f32 %v4342, %v4388
    %v4393 = vmul.f32 %v4356, %v4389
    %v4394 = vld [vmem:[%s7 + $0x280] sm:$0xf]
    %v4395 = vld [vmem:[%s7 + $0x288] sm:$0xf]
    %v4396 = vld [vmem:[%s7 + $0x290] sm:$0xf]
    %v4397 = vld [vmem:[%s7 + $0x298] sm:$0xf]
    %v4398 = vld [vmem:[%s7 + $0x2a0] sm:$0xf]
    %v4399 = vld [vmem:[%s7 + $0x2a8] sm:$0xf]
    %v4400 = vld [vmem:[%s7 + $0x2b0] sm:$0xf]
    %v4401 = vld [vmem:[%s7 + $0x2b8] sm:$0xf]
    %v4402 = vld [vmem:[%s7 + $0x2c0] sm:$0xf]
    %v4403 = vld [vmem:[%s7 + $0x2c8] sm:$0xf]
    %v4404 = vld [vmem:[%s7 + $0x2d0] sm:$0xf]
    %v4405 = vld [vmem:[%s7 + $0x2d8] sm:$0xf]
    %v4406 = vld [vmem:[%s7 + $0x2e0] sm:$0xf]
    %v4407 = vld [vmem:[%s7 + $0x2e8] sm:$0xf]
    %v4408 = vld [vmem:[%s7 + $0x2f0] sm:$0xf]
    %v4409 = vld [vmem:[%s7 + $0x2f8] sm:$0xf]
    %v4410 = vld [vmem:[%s7 + $0x300] sm:$0xf]
    %v4411 = vld [vmem:[%s7 + $0x308] sm:$0xf]
    %v4412 = vld [vmem:[%s7 + $0x310] sm:$0xf]
    %v4413 = vld [vmem:[%s7 + $0x318] sm:$0xf]
    %v4414 = vld [vmem:[%s7 + $0x320] sm:$0xf]
    %v4415 = vld [vmem:[%s7 + $0x328] sm:$0xf]
    %v4416 = vld [vmem:[%s7 + $0x330] sm:$0xf]
    %v4417 = vld [vmem:[%s7 + $0x338] sm:$0xf]
    %v4418 = vld [vmem:[%s7 + $0x340] sm:$0xf]
    %v4419 = vld [vmem:[%s7 + $0x348] sm:$0xf]
    %v4420 = vld [vmem:[%s7 + $0x350] sm:$0xf]
    %v4421 = vld [vmem:[%s7 + $0x358] sm:$0xf]
    %v4422 = vld [vmem:[%s7 + $0x360] sm:$0xf]
    %v4423 = vld [vmem:[%s7 + $0x368] sm:$0xf]
    %v4424 = vld [vmem:[%s7 + $0x370] sm:$0xf]
    %v4425 = vld [vmem:[%s7 + $0x378] sm:$0xf]
    %v4426 = vpack.c.bf16 %v4392, %v4390
    %v4427 = vpack.c.bf16 %v4393, %v4391
    %v4460 = vunpack.c.l.b16 %v4394
    %v4461 = vunpack.c.l.b16 %v4395
    %v4462 = vunpack.c.l.b16 %v4396
    %v4463 = vunpack.c.l.b16 %v4397
    %v4464 = vunpack.c.l.b16 %v4398
    %v4465 = vunpack.c.l.b16 %v4399
    %v4466 = vunpack.c.l.b16 %v4400
    %v4467 = vunpack.c.l.b16 %v4401
    %v4468 = vunpack.c.l.b16 %v4402
    %v4469 = vunpack.c.l.b16 %v4403
    %v4470 = vunpack.c.l.b16 %v4404
    %v4471 = vunpack.c.l.b16 %v4405
    %v4472 = vunpack.c.l.b16 %v4406
    %v4473 = vunpack.c.l.b16 %v4407
    %v4474 = vunpack.c.l.b16 %v4408
    %v4475 = vunpack.c.l.b16 %v4409
    %v4476 = vunpack.c.l.b16 %v4410
    %v4477 = vunpack.c.l.b16 %v4411
    %v4478 = vunpack.c.l.b16 %v4412
    %v4479 = vunpack.c.l.b16 %v4413
    %v4480 = vunpack.c.l.b16 %v4414
    %v4481 = vunpack.c.l.b16 %v4415
    %v4482 = vunpack.c.l.b16 %v4416
    %v4483 = vunpack.c.l.b16 %v4417
    %v4484 = vunpack.c.l.b16 %v4418
    %v4485 = vunpack.c.l.b16 %v4419
    %v4486 = vunpack.c.l.b16 %v4420
    %v4487 = vunpack.c.l.b16 %v4421
    %v4488 = vunpack.c.l.b16 %v4422
    %v4489 = vunpack.c.l.b16 %v4423
    %v4490 = vunpack.c.l.b16 %v4424
    %v4491 = vunpack.c.l.b16 %v4425
    %v4492 = vpack.c.b16 %v4461, %v4460
    %v4493 = vpack.c.b16 %v4463, %v4462
    %v4494 = vpack.c.b16 %v4465, %v4464
    %v4495 = vpack.c.b16 %v4467, %v4466
    %v4496 = vpack.c.b16 %v4469, %v4468
    %v4497 = vpack.c.b16 %v4471, %v4470
    %v4498 = vpack.c.b16 %v4473, %v4472
    %v4499 = vpack.c.b16 %v4475, %v4474
    %v4500 = vpack.c.b16 %v4477, %v4476
    %v4501 = vpack.c.b16 %v4479, %v4478
    %v4502 = vpack.c.b16 %v4481, %v4480
    %v4503 = vpack.c.b16 %v4483, %v4482
    %v4504 = vpack.c.b16 %v4485, %v4484
    %v4505 = vpack.c.b16 %v4487, %v4486
    %v4506 = vpack.c.b16 %v4489, %v4488
    %v4507 = vpack.c.b16 %v4491, %v4490
    %4524 = vmatpush.bf16.msra.mxu0 %v4499
    %4525 = vmatpush.bf16.msra.mxu0 %v4498
    %4526 = vmatpush.bf16.msra.mxu0 %v4497
    %4527 = vmatpush.bf16.msra.mxu0 %v4496
    %4528 = vmatpush.bf16.msra.mxu0 %v4495
    %4529 = vmatpush.bf16.msra.mxu0 %v4494
    %4530 = vmatpush.bf16.msra.mxu0 %v4493
    %4531 = vmatpush.bf16.msra.mxu0 %v4492
    %4532 = vmatmul.bf16.gmra.mxu0 %v4426
    %v4533 = vpop.f32.mrf.mxu0
    %v4534 = vadd.f32 0.0, %v4533
    %v4535 = vpop.f32.mrf.mxu0
    %v4536 = vadd.f32 0.0, %v4535
    %4537 = vdwg.mxu0
    %4538 = vmatpush.bf16.msra.mxu0 %v4507
    %4539 = vmatpush.bf16.msra.mxu0 %v4506
    %4540 = vmatpush.bf16.msra.mxu0 %v4505
    %4541 = vmatpush.bf16.msra.mxu0 %v4504
    %4542 = vmatpush.bf16.msra.mxu0 %v4503
    %4543 = vmatpush.bf16.msra.mxu0 %v4502
    %4544 = vmatpush.bf16.msra.mxu0 %v4501
    %4545 = vmatpush.bf16.msra.mxu0 %v4500
    %4546 = vmatmul.bf16.gmra.mxu0 %v4427
    %v4547 = vpop.f32.mrf.mxu0
    %v4548 = vadd.f32 %v4534, %v4547
    %v4549 = vpop.f32.mrf.mxu0
    %v4550 = vadd.f32 %v4536, %v4549
    %4551 = vdwg.mxu0
    %4554 = vrot.lane.b32.xlu0 %v4548, 32
    %v4555 = vpop.permute.xlu0 %4554
    %4556 = vrot.lane.b32.xlu0 %v4550, 32
    %v4557 = vpop.permute.xlu0 %4556
    %v4560 = vadd.f32 %v4192, %v4555
    %v4561 = vadd.f32 %v4193, %v4557
    %v4562 = vld [vmem:[%s8 + $0x37] ss:$0 sm:$0xff]
    %4564 = vrot.lane.b32.xlu0 %v4562, 32
    %v4565 = vpop.permute.xlu0 %4564
    %v4567 = vadd.f32 %v4560, %v4565
    %v4568 = vadd.f32 %v4561, %v4565
    %v4569 = vld [vmem:[%s8 + $0x40] ss:$0 sm:$0xff]
    %v4570 = vld [vmem:[%s8 + $0x41] ss:$0 sm:$0xff]
    %4573 = vrot.lane.b32.xlu0 %v4567, 96
    %v4574 = vpop.permute.xlu0 %4573
    %4575 = vrot.lane.b32.xlu0 %v4568, 96
    %v4576 = vpop.permute.xlu0 %4575
    %v4579 = vsel %vm2764, %v4574, 0.0
    %4580 = vadd.xlane.f32.xlu0 %v4579
    %v4581 = vpop.xlane.xlu0 %4580
    %v4582 = vsel %vm2764, %v4576, 0.0
    %4583 = vadd.xlane.f32.xlu0 %v4582
    %v4584 = vpop.xlane.xlu0 %4583
    %v4585 = vmul.f32 %v4581, %v2777
    %v4586 = vmul.f32 %v4584, %v2777
    %v4587 = vsub.f32 %v4567, %v4585
    %v4588 = vsub.f32 %v4568, %v4586
    %v4589 = vmul.f32 %v4587, %v4587
    %v4590 = vmul.f32 %v4588, %v4588
    %4593 = vrot.lane.b32.xlu0 %v4589, 96
    %v4594 = vpop.permute.xlu0 %4593
    %4595 = vrot.lane.b32.xlu0 %v4590, 96
    %v4596 = vpop.permute.xlu0 %4595
    %v4599 = vsel %vm2764, %v4594, 0.0
    %4600 = vadd.xlane.f32.xlu0 %v4599
    %v4601 = vpop.xlane.xlu0 %4600
    %v4602 = vsel %vm2764, %v4596, 0.0
    %4603 = vadd.xlane.f32.xlu0 %v4602
    %v4604 = vpop.xlane.xlu0 %4603
    %v4605 = vmul.f32 %v4601, %v2777
    %v4606 = vmul.f32 %v4604, %v2777
    %v4607 = vadd.f32 %v4605, 1e-05
    %v4608 = vadd.f32 %v4606, 1e-05
    %v4609 = vrsqrt.pop %v4607
    %v4610 = vmul.f32 %v4609, %v4607
    %v4611 = vmul.f32 %v4610, %v4609
    %v4612 = vmul.f32 0.5, %v4611
    %v4613 = vsub.f32 1.5, %v4612
    %v4614 = vmul.f32 %v4609, %v4613
    %vm4615 = vweird.f32 %v4607
    %vm4616 = vweird.f32 %v4609
    %vm4617 = vmor %vm4615, %vm4616
    %v4618 = vsel %vm4617, %v4609, %v4614
    %v4619 = vrsqrt.pop %v4608
    %v4620 = vmul.f32 %v4619, %v4608
    %v4621 = vmul.f32 %v4620, %v4619
    %v4622 = vmul.f32 0.5, %v4621
    %v4623 = vsub.f32 1.5, %v4622
    %v4624 = vmul.f32 %v4619, %v4623
    %vm4625 = vweird.f32 %v4608
    %vm4626 = vweird.f32 %v4619
    %vm4627 = vmor %vm4625, %vm4626
    %v4628 = vsel %vm4627, %v4619, %v4624
    %v4629 = vmul.f32 %v4587, %v4618
    %v4630 = vmul.f32 %v4588, %v4628
    %4632 = vrot.lane.b32.xlu0 %v4569, 32
    %v4633 = vpop.permute.xlu0 %4632
    %v4635 = vmul.f32 %v4629, %v4633
    %v4636 = vmul.f32 %v4630, %v4633
    %4638 = vrot.lane.b32.xlu0 %v4570, 32
    %v4639 = vpop.permute.xlu0 %4638
    %v4641 = vadd.f32 %v4635, %v4639
    %v4642 = vadd.f32 %v4636, %v4639
    %v4643 = vld [vmem:[%s7 + $0x380] sm:$0xff]
    %v4644 = vld [vmem:[%s7 + $0x388] sm:$0xff]
    %v4645 = vld [vmem:[%s7 + $0x390] sm:$0xff]
    %v4646 = vld [vmem:[%s7 + $0x398] sm:$0xff]
    %v4647 = vld [vmem:[%s7 + $0x3a0] sm:$0xff]
    %v4648 = vld [vmem:[%s7 + $0x3a8] sm:$0xff]
    %v4649 = vld [vmem:[%s7 + $0x3b0] sm:$0xff]
    %v4650 = vld [vmem:[%s7 + $0x3b8] sm:$0xff]
    %v4651 = vpack.c.bf16 %v4642, %v4641
    %s4652 = scalar_lea.vmem %s8, 66
    %v4653 = vld [vmem:[%s4652] ss:$8 sm:$0x3]
    %v4655 = vperm.slane %v4653, 0
    %v4656 = vperm.slane %v4653, 1
    %4660 = vrot.lane.b32.xlu0 %v4651, 96
    %v4661 = vpop.permute.xlu0 %4660
    %v4670 = vunpack.c.l.b16 %v4643
    %v4671 = vunpack.c.h.b16 %v4643
    %v4672 = vunpack.c.l.b16 %v4644
    %v4673 = vunpack.c.h.b16 %v4644
    %v4674 = vunpack.c.l.b16 %v4645
    %v4675 = vunpack.c.h.b16 %v4645
    %v4676 = vunpack.c.l.b16 %v4646
    %v4677 = vunpack.c.h.b16 %v4646
    %v4678 = vunpack.c.l.b16 %v4647
    %v4679 = vunpack.c.h.b16 %v4647
    %v4680 = vunpack.c.l.b16 %v4648
    %v4681 = vunpack.c.h.b16 %v4648
    %v4682 = vunpack.c.l.b16 %v4649
    %v4683 = vunpack.c.h.b16 %v4649
    %v4684 = vunpack.c.l.b16 %v4650
    %v4685 = vunpack.c.h.b16 %v4650
    %v4686 = vpack.c.b16 %v4672, %v4670
    %v4687 = vpack.c.b16 %v4673, %v4671
    %v4688 = vpack.c.b16 %v4676, %v4674
    %v4689 = vpack.c.b16 %v4677, %v4675
    %v4690 = vpack.c.b16 %v4680, %v4678
    %v4691 = vpack.c.b16 %v4681, %v4679
    %v4692 = vpack.c.b16 %v4684, %v4682
    %v4693 = vpack.c.b16 %v4685, %v4683
    %v4703 = vsel %vm2764, %v4661, 0
    %4705 = vmatpush.bf16.msra.mxu0 0
    %4706 = vmatpush.bf16.msra.mxu0 0
    %4707 = vmatpush.bf16.msra.mxu0 0
    %4708 = vmatpush.bf16.msra.mxu0 0
    %4709 = vmatpush.bf16.msra.mxu0 %v4692
    %4710 = vmatpush.bf16.msra.mxu0 %v4690
    %4711 = vmatpush.bf16.msra.mxu0 %v4688
    %4712 = vmatpush.bf16.msra.mxu0 %v4686
    %4713 = vmatmul.bf16.gmra.mxu0 %v4703
    %v4714 = vpop.f32.mrf.mxu0
    %v4715 = vadd.f32 %v4655, %v4714
    %v4716 = vpop.f32.mrf.mxu0
    %v4717 = vadd.f32 %v4655, %v4716
    %4718 = vdwg.mxu0
    %4719 = vmatpush.bf16.msra.mxu0 0
    %4720 = vmatpush.bf16.msra.mxu0 0
    %4721 = vmatpush.bf16.msra.mxu0 0
    %4722 = vmatpush.bf16.msra.mxu0 0
    %4723 = vmatpush.bf16.msra.mxu0 %v4693
    %4724 = vmatpush.bf16.msra.mxu0 %v4691
    %4725 = vmatpush.bf16.msra.mxu0 %v4689
    %4726 = vmatpush.bf16.msra.mxu0 %v4687
    %4727 = vmatmul.bf16.gmra.mxu0 %v4703
    %v4728 = vpop.f32.mrf.mxu0
    %v4729 = vadd.f32 %v4656, %v4728
    %v4730 = vpop.f32.mrf.mxu0
    %v4731 = vadd.f32 %v4656, %v4730
    %4732 = vdwg.mxu0
    %v4733 = vpack.c.bf16 %v4717, %v4715
    %v4734 = vpack.c.bf16 %v4731, %v4729
    %4736 = vrot.lane.b32.xlu0 %v4733, 64
    %v4737 = vpop.permute.xlu0 %4736
    %v4739 = vsel %vm1566, %v4733, 0
    %v4742 = vsel %vm1566, %v4737, 0
    %4744 = vmatpush.bf16.xpose.msra.mxu0 0
    %4745 = vmatpush.bf16.xpose.msra.mxu0 0
    %4746 = vmatpush.bf16.xpose.msra.mxu0 0
    %4747 = vmatpush.bf16.xpose.msra.mxu0 0
    %4748 = vmatpush.bf16.xpose.msra.mxu0 0
    %4749 = vmatpush.bf16.xpose.msra.mxu0 0
    %4750 = vmatpush.bf16.xpose.msra.mxu0 0
    %4751 = vmatpush.bf16.xpose.msra.mxu0 %v4742
    %4752 = vmatmul.bf16.gmra.mxu0 %v4739
    %v4753 = vpop.f32.mrf.mxu0
    %v4754 = vadd.f32 %v139, %v4753
    %v4755 = vpop.f32.mrf.mxu0
    %v4756 = vadd.f32 %v140, %v4755
    %4757 = vdwg.mxu0
    %v4758 = vsel %vm1566, %v4754, -inf
    %4759 = vmax.xlane.f32.xlu0 %v4758
    %v4760 = vpop.xlane.xlu0 %4759
    %v4761 = vsel %vm1566, %v4756, -inf
    %4762 = vmax.xlane.f32.xlu0 %v4761
    %v4763 = vpop.xlane.xlu0 %4762
    %v4764 = vsub.f32 %v4754, %v4760
    %v4765 = vsub.f32 %v4756, %v4763
    %v4766 = vmul.f32 %v4764, 1.442695
    %v4767 = vpow.pop %v4766
    %v4768 = vmul.f32 %v4765, 1.442695
    %v4769 = vpow.pop %v4768
    %v4770 = vsel %vm1566, %v4767, 0.0
    %4771 = vadd.xlane.f32.xlu0 %v4770
    %v4772 = vpop.xlane.xlu0 %4771
    %v4773 = vsel %vm1566, %v4769, 0.0
    %4774 = vadd.xlane.f32.xlu0 %v4773
    %v4775 = vpop.xlane.xlu0 %4774
    %v4776 = vrcp.pop %v4772
    %v4777 = vrcp.pop %v4775
    %v4778 = vmul.f32 %v4767, %v4776
    %v4779 = vmul.f32 %v4769, %v4777
    %v4780 = vpack.c.bf16 %v4779, %v4778
    %v4782 = vsel %vm1566, %v4780, 0
    %4784 = vmatpush.bf16.msra.mxu0 0
    %4785 = vmatpush.bf16.msra.mxu0 0
    %4786 = vmatpush.bf16.msra.mxu0 0
    %4787 = vmatpush.bf16.msra.mxu0 0
    %4788 = vmatpush.bf16.msra.mxu0 0
    %4789 = vmatpush.bf16.msra.mxu0 0
    %4790 = vmatpush.bf16.msra.mxu0 0
    %4791 = vmatpush.bf16.msra.mxu0 %v4734
    %4792 = vmatmul.bf16.gmra.mxu0 %v4782
    %v4793 = vpop.f32.mrf.mxu0
    %v4794 = vadd.f32 0.0, %v4793
    %v4795 = vpop.f32.mrf.mxu0
    %v4796 = vadd.f32 0.0, %v4795
    %4797 = vdwg.mxu0
    %4798 = vrot.lane.b32.xlu0 %v4733, 112
    %v4799 = vpop.permute.xlu0 %4798
    %4800 = vrot.lane.b32.xlu0 %v4733, 48
    %v4801 = vpop.permute.xlu0 %4800
    %v4803 = vsel %vm1566, %v4799, 0
    %v4806 = vsel %vm1566, %v4801, 0
    %4808 = vmatpush.bf16.xpose.msra.mxu0 0
    %4809 = vmatpush.bf16.xpose.msra.mxu0 0
    %4810 = vmatpush.bf16.xpose.msra.mxu0 0
    %4811 = vmatpush.bf16.xpose.msra.mxu0 0
    %4812 = vmatpush.bf16.xpose.msra.mxu0 0
    %4813 = vmatpush.bf16.xpose.msra.mxu0 0
    %4814 = vmatpush.bf16.xpose.msra.mxu0 0
    %4815 = vmatpush.bf16.xpose.msra.mxu0 %v4806
    %4816 = vmatmul.bf16.gmra.mxu0 %v4803
    %v4817 = vpop.f32.mrf.mxu0
    %v4818 = vadd.f32 %v139, %v4817
    %v4819 = vpop.f32.mrf.mxu0
    %v4820 = vadd.f32 %v140, %v4819
    %4821 = vdwg.mxu0
    %v4822 = vsel %vm1566, %v4818, -inf
    %4823 = vmax.xlane.f32.xlu0 %v4822
    %v4824 = vpop.xlane.xlu0 %4823
    %v4825 = vsel %vm1566, %v4820, -inf
    %4826 = vmax.xlane.f32.xlu0 %v4825
    %v4827 = vpop.xlane.xlu0 %4826
    %v4828 = vsub.f32 %v4818, %v4824
    %v4829 = vsub.f32 %v4820, %v4827
    %v4830 = vmul.f32 %v4828, 1.442695
    %v4831 = vpow.pop %v4830
    %v4832 = vmul.f32 %v4829, 1.442695
    %v4833 = vpow.pop %v4832
    %v4834 = vsel %vm1566, %v4831, 0.0
    %4835 = vadd.xlane.f32.xlu0 %v4834
    %v4836 = vpop.xlane.xlu0 %4835
    %v4837 = vsel %vm1566, %v4833, 0.0
    %4838 = vadd.xlane.f32.xlu0 %v4837
    %v4839 = vpop.xlane.xlu0 %4838
    %v4840 = vrcp.pop %v4836
    %v4841 = vrcp.pop %v4839
    %v4842 = vmul.f32 %v4831, %v4840
    %v4843 = vmul.f32 %v4833, %v4841
    %v4844 = vpack.c.bf16 %v4843, %v4842
    %4846 = vrot.lane.b32.xlu0 %v4734, 112
    %v4847 = vpop.permute.xlu0 %4846
    %v4850 = vsel %vm1566, %v4844, 0
    %4852 = vmatpush.bf16.msra.mxu0 0
    %4853 = vmatpush.bf16.msra.mxu0 0
    %4854 = vmatpush.bf16.msra.mxu0 0
    %4855 = vmatpush.bf16.msra.mxu0 0
    %4856 = vmatpush.bf16.msra.mxu0 0
    %4857 = vmatpush.bf16.msra.mxu0 0
    %4858 = vmatpush.bf16.msra.mxu0 0
    %4859 = vmatpush.bf16.msra.mxu0 %v4847
    %4860 = vmatmul.bf16.gmra.mxu0 %v4850
    %v4861 = vpop.f32.mrf.mxu0
    %v4862 = vadd.f32 0.0, %v4861
    %v4863 = vpop.f32.mrf.mxu0
    %v4864 = vadd.f32 0.0, %v4863
    %4865 = vdwg.mxu0
    %4866 = vrot.lane.b32.xlu0 %v4733, 96
    %v4867 = vpop.permute.xlu0 %4866
    %4868 = vrot.lane.b32.xlu0 %v4733, 32
    %v4869 = vpop.permute.xlu0 %4868
    %v4871 = vsel %vm1566, %v4867, 0
    %v4874 = vsel %vm1566, %v4869, 0
    %4876 = vmatpush.bf16.xpose.msra.mxu0 0
    %4877 = vmatpush.bf16.xpose.msra.mxu0 0
    %4878 = vmatpush.bf16.xpose.msra.mxu0 0
    %4879 = vmatpush.bf16.xpose.msra.mxu0 0
    %4880 = vmatpush.bf16.xpose.msra.mxu0 0
    %4881 = vmatpush.bf16.xpose.msra.mxu0 0
    %4882 = vmatpush.bf16.xpose.msra.mxu0 0
    %4883 = vmatpush.bf16.xpose.msra.mxu0 %v4874
    %4884 = vmatmul.bf16.gmra.mxu0 %v4871
    %v4885 = vpop.f32.mrf.mxu0
    %v4886 = vadd.f32 %v139, %v4885
    %v4887 = vpop.f32.mrf.mxu0
    %v4888 = vadd.f32 %v140, %v4887
    %4889 = vdwg.mxu0
    %v4890 = vsel %vm1566, %v4886, -inf
    %4891 = vmax.xlane.f32.xlu0 %v4890
    %v4892 = vpop.xlane.xlu0 %4891
    %v4893 = vsel %vm1566, %v4888, -inf
    %4894 = vmax.xlane.f32.xlu0 %v4893
    %v4895 = vpop.xlane.xlu0 %4894
    %v4896 = vsub.f32 %v4886, %v4892
    %v4897 = vsub.f32 %v4888, %v4895
    %v4898 = vmul.f32 %v4896, 1.442695
    %v4899 = vpow.pop %v4898
    %v4900 = vmul.f32 %v4897, 1.442695
    %v4901 = vpow.pop %v4900
    %v4902 = vsel %vm1566, %v4899, 0.0
    %4903 = vadd.xlane.f32.xlu0 %v4902
    %v4904 = vpop.xlane.xlu0 %4903
    %v4905 = vsel %vm1566, %v4901, 0.0
    %4906 = vadd.xlane.f32.xlu0 %v4905
    %v4907 = vpop.xlane.xlu0 %4906
    %v4908 = vrcp.pop %v4904
    %v4909 = vrcp.pop %v4907
    %v4910 = vmul.f32 %v4899, %v4908
    %v4911 = vmul.f32 %v4901, %v4909
    %v4912 = vpack.c.bf16 %v4911, %v4910
    %4913 = vrot.lane.b32.xlu0 %v4734, 96
    %v4914 = vpop.permute.xlu0 %4913
    %v4917 = vsel %vm1566, %v4912, 0
    %4919 = vmatpush.bf16.msra.mxu0 0
    %4920 = vmatpush.bf16.msra.mxu0 0
    %4921 = vmatpush.bf16.msra.mxu0 0
    %4922 = vmatpush.bf16.msra.mxu0 0
    %4923 = vmatpush.bf16.msra.mxu0 0
    %4924 = vmatpush.bf16.msra.mxu0 0
    %4925 = vmatpush.bf16.msra.mxu0 0
    %4926 = vmatpush.bf16.msra.mxu0 %v4914
    %4927 = vmatmul.bf16.gmra.mxu0 %v4917
    %v4928 = vpop.f32.mrf.mxu0
    %v4929 = vadd.f32 0.0, %v4928
    %v4930 = vpop.f32.mrf.mxu0
    %v4931 = vadd.f32 0.0, %v4930
    %4932 = vdwg.mxu0
    %4933 = vrot.lane.b32.xlu0 %v4733, 80
    %v4934 = vpop.permute.xlu0 %4933
    %4935 = vrot.lane.b32.xlu0 %v4733, 16
    %v4936 = vpop.permute.xlu0 %4935
    %v4938 = vsel %vm1566, %v4934, 0
    %v4941 = vsel %vm1566, %v4936, 0
    %4943 = vmatpush.bf16.xpose.msra.mxu0 0
    %4944 = vmatpush.bf16.xpose.msra.mxu0 0
    %4945 = vmatpush.bf16.xpose.msra.mxu0 0
    %4946 = vmatpush.bf16.xpose.msra.mxu0 0
    %4947 = vmatpush.bf16.xpose.msra.mxu0 0
    %4948 = vmatpush.bf16.xpose.msra.mxu0 0
    %4949 = vmatpush.bf16.xpose.msra.mxu0 0
    %4950 = vmatpush.bf16.xpose.msra.mxu0 %v4941
    %4951 = vmatmul.bf16.gmra.mxu0 %v4938
    %v4952 = vpop.f32.mrf.mxu0
    %v4953 = vadd.f32 %v139, %v4952
    %v4954 = vpop.f32.mrf.mxu0
    %v4955 = vadd.f32 %v140, %v4954
    %4956 = vdwg.mxu0
    %v4957 = vsel %vm1566, %v4953, -inf
    %4958 = vmax.xlane.f32.xlu0 %v4957
    %v4959 = vpop.xlane.xlu0 %4958
    %v4960 = vsel %vm1566, %v4955, -inf
    %4961 = vmax.xlane.f32.xlu0 %v4960
    %v4962 = vpop.xlane.xlu0 %4961
    %v4963 = vsub.f32 %v4953, %v4959
    %v4964 = vsub.f32 %v4955, %v4962
    %v4965 = vmul.f32 %v4963, 1.442695
    %v4966 = vpow.pop %v4965
    %v4967 = vmul.f32 %v4964, 1.442695
    %v4968 = vpow.pop %v4967
    %v4969 = vsel %vm1566, %v4966, 0.0
    %4970 = vadd.xlane.f32.xlu0 %v4969
    %v4971 = vpop.xlane.xlu0 %4970
    %v4972 = vsel %vm1566, %v4968, 0.0
    %4973 = vadd.xlane.f32.xlu0 %v4972
    %v4974 = vpop.xlane.xlu0 %4973
    %v4975 = vrcp.pop %v4971
    %v4976 = vrcp.pop %v4974
    %v4977 = vmul.f32 %v4966, %v4975
    %v4978 = vmul.f32 %v4968, %v4976
    %v4979 = vpack.c.bf16 %v4978, %v4977
    %4980 = vrot.lane.b32.xlu0 %v4734, 80
    %v4981 = vpop.permute.xlu0 %4980
    %v4984 = vsel %vm1566, %v4979, 0
    %4986 = vmatpush.bf16.msra.mxu0 0
    %4987 = vmatpush.bf16.msra.mxu0 0
    %4988 = vmatpush.bf16.msra.mxu0 0
    %4989 = vmatpush.bf16.msra.mxu0 0
    %4990 = vmatpush.bf16.msra.mxu0 0
    %4991 = vmatpush.bf16.msra.mxu0 0
    %4992 = vmatpush.bf16.msra.mxu0 0
    %4993 = vmatpush.bf16.msra.mxu0 %v4981
    %4994 = vmatmul.bf16.gmra.mxu0 %v4984
    %v4995 = vpop.f32.mrf.mxu0
    %v4996 = vadd.f32 0.0, %v4995
    %v4997 = vpop.f32.mrf.mxu0
    %v4998 = vadd.f32 0.0, %v4997
    %4999 = vdwg.mxu0
    %5002 = vrot.lane.b32.xlu0 %v4862, 16
    %v5003 = vpop.permute.xlu0 %5002
    %5004 = vrot.lane.b32.xlu0 %v4864, 16
    %v5005 = vpop.permute.xlu0 %5004
    %5010 = vrot.lane.b32.xlu0 %v4929, 32
    %v5011 = vpop.permute.xlu0 %5010
    %5012 = vrot.lane.b32.xlu0 %v4931, 32
    %v5013 = vpop.permute.xlu0 %5012
    %5018 = vrot.lane.b32.xlu0 %v4996, 48
    %v5019 = vpop.permute.xlu0 %5018
    %5020 = vrot.lane.b32.xlu0 %v4998, 48
    %v5021 = vpop.permute.xlu0 %5020
    %v5024 = vsel %vm1566, %v4794, %v5003
    %v5025 = vsel %vm1566, %v4796, %v5005
    %v5026 = vsel %vm1447, %v5024, %v5011
    %v5027 = vsel %vm1447, %v5025, %v5013
    %v5028 = vsel %vm3221, %v5026, %v5019
    %v5029 = vsel %vm3221, %v5027, %v5021
    %v5030 = vld [vmem:[%s7 + $0x3c0] sm:$0xf]
    %v5031 = vld [vmem:[%s7 + $0x3c8] sm:$0xf]
    %v5032 = vld [vmem:[%s7 + $0x3d0] sm:$0xf]
    %v5033 = vld [vmem:[%s7 + $0x3d8] sm:$0xf]
    %v5034 = vld [vmem:[%s7 + $0x3e0] sm:$0xf]
    %v5035 = vld [vmem:[%s7 + $0x3e8] sm:$0xf]
    %v5036 = vld [vmem:[%s7 + $0x3f0] sm:$0xf]
    %v5037 = vld [vmem:[%s7 + $0x3f8] sm:$0xf]
    %v5038 = vpack.c.bf16 %v5029, %v5028
    %v5047 = vunpack.c.l.b16 %v5030
    %v5048 = vunpack.c.l.b16 %v5031
    %v5049 = vunpack.c.l.b16 %v5032
    %v5050 = vunpack.c.l.b16 %v5033
    %v5051 = vunpack.c.l.b16 %v5034
    %v5052 = vunpack.c.l.b16 %v5035
    %v5053 = vunpack.c.l.b16 %v5036
    %v5054 = vunpack.c.l.b16 %v5037
    %v5055 = vpack.c.b16 %v5048, %v5047
    %v5056 = vpack.c.b16 %v5050, %v5049
    %v5057 = vpack.c.b16 %v5052, %v5051
    %v5058 = vpack.c.b16 %v5054, %v5053
    %v5064 = vsel %vm2764, %v5038, 0
    %5066 = vmatpush.bf16.msra.mxu0 0
    %5067 = vmatpush.bf16.msra.mxu0 0
    %5068 = vmatpush.bf16.msra.mxu0 0
    %5069 = vmatpush.bf16.msra.mxu0 0
    %5070 = vmatpush.bf16.msra.mxu0 %v5058
    %5071 = vmatpush.bf16.msra.mxu0 %v5057
    %5072 = vmatpush.bf16.msra.mxu0 %v5056
    %5073 = vmatpush.bf16.msra.mxu0 %v5055
    %5074 = vmatmul.bf16.gmra.mxu0 %v5064
    %v5075 = vpop.f32.mrf.mxu0
    %v5076 = vadd.f32 0.0, %v5075
    %v5077 = vpop.f32.mrf.mxu0
    %v5078 = vadd.f32 0.0, %v5077
    %5079 = vdwg.mxu0
    %5082 = vrot.lane.b32.xlu0 %v5076, 32
    %v5083 = vpop.permute.xlu0 %5082
    %5084 = vrot.lane.b32.xlu0 %v5078, 32
    %v5085 = vpop.permute.xlu0 %5084
    %v5088 = vadd.f32 %v4567, %v5083
    %v5089 = vadd.f32 %v4568, %v5085
    %v5090 = vld [vmem:[%s8 + $0x43] ss:$0 sm:$0xff]
    %5092 = vrot.lane.b32.xlu0 %v5090, 32
    %v5093 = vpop.permute.xlu0 %5092
    %v5095 = vadd.f32 %v5088, %v5093
    %v5096 = vadd.f32 %v5089, %v5093
    %v5097 = vld [vmem:[%s8 + $0x44] ss:$0 sm:$0xff]
    %v5098 = vld [vmem:[%s8 + $0x45] ss:$0 sm:$0xff]
    %5101 = vrot.lane.b32.xlu0 %v5095, 96
    %v5102 = vpop.permute.xlu0 %5101
    %5103 = vrot.lane.b32.xlu0 %v5096, 96
    %v5104 = vpop.permute.xlu0 %5103
    %v5107 = vsel %vm2764, %v5102, 0.0
    %5108 = vadd.xlane.f32.xlu0 %v5107
    %v5109 = vpop.xlane.xlu0 %5108
    %v5110 = vsel %vm2764, %v5104, 0.0
    %5111 = vadd.xlane.f32.xlu0 %v5110
    %v5112 = vpop.xlane.xlu0 %5111
    %v5113 = vmul.f32 %v5109, %v2777
    %v5114 = vmul.f32 %v5112, %v2777
    %v5115 = vsub.f32 %v5095, %v5113
    %v5116 = vsub.f32 %v5096, %v5114
    %v5117 = vmul.f32 %v5115, %v5115
    %v5118 = vmul.f32 %v5116, %v5116
    %5121 = vrot.lane.b32.xlu0 %v5117, 96
    %v5122 = vpop.permute.xlu0 %5121
    %5123 = vrot.lane.b32.xlu0 %v5118, 96
    %v5124 = vpop.permute.xlu0 %5123
    %v5127 = vsel %vm2764, %v5122, 0.0
    %5128 = vadd.xlane.f32.xlu0 %v5127
    %v5129 = vpop.xlane.xlu0 %5128
    %v5130 = vsel %vm2764, %v5124, 0.0
    %5131 = vadd.xlane.f32.xlu0 %v5130
    %v5132 = vpop.xlane.xlu0 %5131
    %v5133 = vmul.f32 %v5129, %v2777
    %v5134 = vmul.f32 %v5132, %v2777
    %v5135 = vadd.f32 %v5133, 1e-05
    %v5136 = vadd.f32 %v5134, 1e-05
    %v5137 = vrsqrt.pop %v5135
    %v5138 = vmul.f32 %v5137, %v5135
    %v5139 = vmul.f32 %v5138, %v5137
    %v5140 = vmul.f32 0.5, %v5139
    %v5141 = vsub.f32 1.5, %v5140
    %v5142 = vmul.f32 %v5137, %v5141
    %vm5143 = vweird.f32 %v5135
    %vm5144 = vweird.f32 %v5137
    %vm5145 = vmor %vm5143, %vm5144
    %v5146 = vsel %vm5145, %v5137, %v5142
    %v5147 = vrsqrt.pop %v5136
    %v5148 = vmul.f32 %v5147, %v5136
    %v5149 = vmul.f32 %v5148, %v5147
    %v5150 = vmul.f32 0.5, %v5149
    %v5151 = vsub.f32 1.5, %v5150
    %v5152 = vmul.f32 %v5147, %v5151
    %vm5153 = vweird.f32 %v5136
    %vm5154 = vweird.f32 %v5147
    %vm5155 = vmor %vm5153, %vm5154
    %v5156 = vsel %vm5155, %v5147, %v5152
    %v5157 = vmul.f32 %v5115, %v5146
    %v5158 = vmul.f32 %v5116, %v5156
    %5160 = vrot.lane.b32.xlu0 %v5097, 32
    %v5161 = vpop.permute.xlu0 %5160
    %v5163 = vmul.f32 %v5157, %v5161
    %v5164 = vmul.f32 %v5158, %v5161
    %5166 = vrot.lane.b32.xlu0 %v5098, 32
    %v5167 = vpop.permute.xlu0 %5166
    %v5169 = vadd.f32 %v5163, %v5167
    %v5170 = vadd.f32 %v5164, %v5167
    %v5171 = vld [vmem:[%s7 + $0x400] sm:$0xff]
    %v5172 = vld [vmem:[%s7 + $0x408] sm:$0xff]
    %v5173 = vld [vmem:[%s7 + $0x410] sm:$0xff]
    %v5174 = vld [vmem:[%s7 + $0x418] sm:$0xff]
    %v5175 = vld [vmem:[%s7 + $0x420] sm:$0xff]
    %v5176 = vld [vmem:[%s7 + $0x428] sm:$0xff]
    %v5177 = vld [vmem:[%s7 + $0x430] sm:$0xff]
    %v5178 = vld [vmem:[%s7 + $0x438] sm:$0xff]
    %v5179 = vpack.c.bf16 %v5170, %v5169
    %s5180 = scalar_lea.vmem %s8, 70
    %v5181 = vld [vmem:[%s5180] ss:$8 sm:$0x3]
    %v5183 = vperm.slane %v5181, 0
    %v5184 = vperm.slane %v5181, 1
    %5188 = vrot.lane.b32.xlu0 %v5179, 96
    %v5189 = vpop.permute.xlu0 %5188
    %v5198 = vunpack.c.l.b16 %v5171
    %v5199 = vunpack.c.h.b16 %v5171
    %v5200 = vunpack.c.l.b16 %v5172
    %v5201 = vunpack.c.h.b16 %v5172
    %v5202 = vunpack.c.l.b16 %v5173
    %v5203 = vunpack.c.h.b16 %v5173
    %v5204 = vunpack.c.l.b16 %v5174
    %v5205 = vunpack.c.h.b16 %v5174
    %v5206 = vunpack.c.l.b16 %v5175
    %v5207 = vunpack.c.h.b16 %v5175
    %v5208 = vunpack.c.l.b16 %v5176
    %v5209 = vunpack.c.h.b16 %v5176
    %v5210 = vunpack.c.l.b16 %v5177
    %v5211 = vunpack.c.h.b16 %v5177
    %v5212 = vunpack.c.l.b16 %v5178
    %v5213 = vunpack.c.h.b16 %v5178
    %v5214 = vpack.c.b16 %v5200, %v5198
    %v5215 = vpack.c.b16 %v5201, %v5199
    %v5216 = vpack.c.b16 %v5204, %v5202
    %v5217 = vpack.c.b16 %v5205, %v5203
    %v5218 = vpack.c.b16 %v5208, %v5206
    %v5219 = vpack.c.b16 %v5209, %v5207
    %v5220 = vpack.c.b16 %v5212, %v5210
    %v5221 = vpack.c.b16 %v5213, %v5211
    %v5231 = vsel %vm2764, %v5189, 0
    %5233 = vmatpush.bf16.msra.mxu0 0
    %5234 = vmatpush.bf16.msra.mxu0 0
    %5235 = vmatpush.bf16.msra.mxu0 0
    %5236 = vmatpush.bf16.msra.mxu0 0
    %5237 = vmatpush.bf16.msra.mxu0 %v5220
    %5238 = vmatpush.bf16.msra.mxu0 %v5218
    %5239 = vmatpush.bf16.msra.mxu0 %v5216
    %5240 = vmatpush.bf16.msra.mxu0 %v5214
    %5241 = vmatmul.bf16.gmra.mxu0 %v5231
    %v5242 = vpop.f32.mrf.mxu0
    %v5243 = vadd.f32 %v5183, %v5242
    %v5244 = vpop.f32.mrf.mxu0
    %v5245 = vadd.f32 %v5183, %v5244
    %5246 = vdwg.mxu0
    %5247 = vmatpush.bf16.msra.mxu0 0
    %5248 = vmatpush.bf16.msra.mxu0 0
    %5249 = vmatpush.bf16.msra.mxu0 0
    %5250 = vmatpush.bf16.msra.mxu0 0
    %5251 = vmatpush.bf16.msra.mxu0 %v5221
    %5252 = vmatpush.bf16.msra.mxu0 %v5219
    %5253 = vmatpush.bf16.msra.mxu0 %v5217
    %5254 = vmatpush.bf16.msra.mxu0 %v5215
    %5255 = vmatmul.bf16.gmra.mxu0 %v5231
    %v5256 = vpop.f32.mrf.mxu0
    %v5257 = vadd.f32 %v5184, %v5256
    %v5258 = vpop.f32.mrf.mxu0
    %v5259 = vadd.f32 %v5184, %v5258
    %5260 = vdwg.mxu0
    %v5261 = vmul.f32 %v5243, %v5243
    %v5262 = vmul.f32 %v5257, %v5257
    %v5263 = vmul.f32 %v5245, %v5245
    %v5264 = vmul.f32 %v5259, %v5259
    %v5265 = vmul.f32 %v5243, %v5261
    %v5266 = vmul.f32 %v5257, %v5262
    %v5267 = vmul.f32 %v5245, %v5263
    %v5268 = vmul.f32 %v5259, %v5264
    %v5269 = vmul.f32 %v5265, 0.044715
    %v5270 = vmul.f32 %v5266, 0.044715
    %v5271 = vmul.f32 %v5267, 0.044715
    %v5272 = vmul.f32 %v5268, 0.044715
    %v5273 = vadd.f32 %v5243, %v5269
    %v5274 = vadd.f32 %v5257, %v5270
    %v5275 = vadd.f32 %v5245, %v5271
    %v5276 = vadd.f32 %v5259, %v5272
    %v5277 = vmul.f32 %v5273, 0.7978846
    %v5278 = vmul.f32 %v5274, 0.7978846
    %v5279 = vmul.f32 %v5275, 0.7978846
    %v5280 = vmul.f32 %v5276, 0.7978846
    %v5281 = vtanh.pop %v5277
    %v5282 = vtanh.pop %v5278
    %v5283 = vtanh.pop %v5279
    %v5284 = vtanh.pop %v5280
    %v5285 = vadd.f32 %v5281, 1.0
    %v5286 = vadd.f32 %v5282, 1.0
    %v5287 = vadd.f32 %v5283, 1.0
    %v5288 = vadd.f32 %v5284, 1.0
    %v5289 = vmul.f32 %v5285, 0.5
    %v5290 = vmul.f32 %v5286, 0.5
    %v5291 = vmul.f32 %v5287, 0.5
    %v5292 = vmul.f32 %v5288, 0.5
    %v5293 = vmul.f32 %v5243, %v5289
    %v5294 = vmul.f32 %v5257, %v5290
    %v5295 = vmul.f32 %v5245, %v5291
    %v5296 = vmul.f32 %v5259, %v5292
    %v5297 = vld [vmem:[%s7 + $0x440] sm:$0xf]
    %v5298 = vld [vmem:[%s7 + $0x448] sm:$0xf]
    %v5299 = vld [vmem:[%s7 + $0x450] sm:$0xf]
    %v5300 = vld [vmem:[%s7 + $0x458] sm:$0xf]
    %v5301 = vld [vmem:[%s7 + $0x460] sm:$0xf]
    %v5302 = vld [vmem:[%s7 + $0x468] sm:$0xf]
    %v5303 = vld [vmem:[%s7 + $0x470] sm:$0xf]
    %v5304 = vld [vmem:[%s7 + $0x478] sm:$0xf]
    %v5305 = vld [vmem:[%s7 + $0x480] sm:$0xf]
    %v5306 = vld [vmem:[%s7 + $0x488] sm:$0xf]
    %v5307 = vld [vmem:[%s7 + $0x490] sm:$0xf]
    %v5308 = vld [vmem:[%s7 + $0x498] sm:$0xf]
    %v5309 = vld [vmem:[%s7 + $0x4a0] sm:$0xf]
    %v5310 = vld [vmem:[%s7 + $0x4a8] sm:$0xf]
    %v5311 = vld [vmem:[%s7 + $0x4b0] sm:$0xf]
    %v5312 = vld [vmem:[%s7 + $0x4b8] sm:$0xf]
    %v5313 = vld [vmem:[%s7 + $0x4c0] sm:$0xf]
    %v5314 = vld [vmem:[%s7 + $0x4c8] sm:$0xf]
    %v5315 = vld [vmem:[%s7 + $0x4d0] sm:$0xf]
    %v5316 = vld [vmem:[%s7 + $0x4d8] sm:$0xf]
    %v5317 = vld [vmem:[%s7 + $0x4e0] sm:$0xf]
    %v5318 = vld [vmem:[%s7 + $0x4e8] sm:$0xf]
    %v5319 = vld [vmem:[%s7 + $0x4f0] sm:$0xf]
    %v5320 = vld [vmem:[%s7 + $0x4f8] sm:$0xf]
    %v5321 = vld [vmem:[%s7 + $0x500] sm:$0xf]
    %v5322 = vld [vmem:[%s7 + $0x508] sm:$0xf]
    %v5323 = vld [vmem:[%s7 + $0x510] sm:$0xf]
    %v5324 = vld [vmem:[%s7 + $0x518] sm:$0xf]
    %v5325 = vld [vmem:[%s7 + $0x520] sm:$0xf]
    %v5326 = vld [vmem:[%s7 + $0x528] sm:$0xf]
    %v5327 = vld [vmem:[%s7 + $0x530] sm:$0xf]
    %v5328 = vld [vmem:[%s7 + $0x538] sm:$0xf]
    %v5329 = vpack.c.bf16 %v5295, %v5293
    %v5330 = vpack.c.bf16 %v5296, %v5294
    %v5363 = vunpack.c.l.b16 %v5297
    %v5364 = vunpack.c.l.b16 %v5298
    %v5365 = vunpack.c.l.b16 %v5299
    %v5366 = vunpack.c.l.b16 %v5300
    %v5367 = vunpack.c.l.b16 %v5301
    %v5368 = vunpack.c.l.b16 %v5302
    %v5369 = vunpack.c.l.b16 %v5303
    %v5370 = vunpack.c.l.b16 %v5304
    %v5371 = vunpack.c.l.b16 %v5305
    %v5372 = vunpack.c.l.b16 %v5306
    %v5373 = vunpack.c.l.b16 %v5307
    %v5374 = vunpack.c.l.b16 %v5308
    %v5375 = vunpack.c.l.b16 %v5309
    %v5376 = vunpack.c.l.b16 %v5310
    %v5377 = vunpack.c.l.b16 %v5311
    %v5378 = vunpack.c.l.b16 %v5312
    %v5379 = vunpack.c.l.b16 %v5313
    %v5380 = vunpack.c.l.b16 %v5314
    %v5381 = vunpack.c.l.b16 %v5315
    %v5382 = vunpack.c.l.b16 %v5316
    %v5383 = vunpack.c.l.b16 %v5317
    %v5384 = vunpack.c.l.b16 %v5318
    %v5385 = vunpack.c.l.b16 %v5319
    %v5386 = vunpack.c.l.b16 %v5320
    %v5387 = vunpack.c.l.b16 %v5321
    %v5388 = vunpack.c.l.b16 %v5322
    %v5389 = vunpack.c.l.b16 %v5323
    %v5390 = vunpack.c.l.b16 %v5324
    %v5391 = vunpack.c.l.b16 %v5325
    %v5392 = vunpack.c.l.b16 %v5326
    %v5393 = vunpack.c.l.b16 %v5327
    %v5394 = vunpack.c.l.b16 %v5328
    %v5395 = vpack.c.b16 %v5364, %v5363
    %v5396 = vpack.c.b16 %v5366, %v5365
    %v5397 = vpack.c.b16 %v5368, %v5367
    %v5398 = vpack.c.b16 %v5370, %v5369
    %v5399 = vpack.c.b16 %v5372, %v5371
    %v5400 = vpack.c.b16 %v5374, %v5373
    %v5401 = vpack.c.b16 %v5376, %v5375
    %v5402 = vpack.c.b16 %v5378, %v5377
    %v5403 = vpack.c.b16 %v5380, %v5379
    %v5404 = vpack.c.b16 %v5382, %v5381
    %v5405 = vpack.c.b16 %v5384, %v5383
    %v5406 = vpack.c.b16 %v5386, %v5385
    %v5407 = vpack.c.b16 %v5388, %v5387
    %v5408 = vpack.c.b16 %v5390, %v5389
    %v5409 = vpack.c.b16 %v5392, %v5391
    %v5410 = vpack.c.b16 %v5394, %v5393
    %5427 = vmatpush.bf16.msra.mxu0 %v5402
    %5428 = vmatpush.bf16.msra.mxu0 %v5401
    %5429 = vmatpush.bf16.msra.mxu0 %v5400
    %5430 = vmatpush.bf16.msra.mxu0 %v5399
    %5431 = vmatpush.bf16.msra.mxu0 %v5398
    %5432 = vmatpush.bf16.msra.mxu0 %v5397
    %5433 = vmatpush.bf16.msra.mxu0 %v5396
    %5434 = vmatpush.bf16.msra.mxu0 %v5395
    %5435 = vmatmul.bf16.gmra.mxu0 %v5329
    %v5436 = vpop.f32.mrf.mxu0
    %v5437 = vadd.f32 0.0, %v5436
    %v5438 = vpop.f32.mrf.mxu0
    %v5439 = vadd.f32 0.0, %v5438
    %5440 = vdwg.mxu0
    %5441 = vmatpush.bf16.msra.mxu0 %v5410
    %5442 = vmatpush.bf16.msra.mxu0 %v5409
    %5443 = vmatpush.bf16.msra.mxu0 %v5408
    %5444 = vmatpush.bf16.msra.mxu0 %v5407
    %5445 = vmatpush.bf16.msra.mxu0 %v5406
    %5446 = vmatpush.bf16.msra.mxu0 %v5405
    %5447 = vmatpush.bf16.msra.mxu0 %v5404
    %5448 = vmatpush.bf16.msra.mxu0 %v5403
    %5449 = vmatmul.bf16.gmra.mxu0 %v5330
    %v5450 = vpop.f32.mrf.mxu0
    %v5451 = vadd.f32 %v5437, %v5450
    %v5452 = vpop.f32.mrf.mxu0
    %v5453 = vadd.f32 %v5439, %v5452
    %5454 = vdwg.mxu0
    %5457 = vrot.lane.b32.xlu0 %v5451, 32
    %v5458 = vpop.permute.xlu0 %5457
    %5459 = vrot.lane.b32.xlu0 %v5453, 32
    %v5460 = vpop.permute.xlu0 %5459
    %v5463 = vadd.f32 %v5095, %v5458
    %v5464 = vadd.f32 %v5096, %v5460
    %v5465 = vld [vmem:[%s8 + $0x47] ss:$0 sm:$0xff]
    %5467 = vrot.lane.b32.xlu0 %v5465, 32
    %v5468 = vpop.permute.xlu0 %5467
    %v5470 = vadd.f32 %v5463, %v5468
    %v5471 = vadd.f32 %v5464, %v5468
    %v5472 = vld [vmem:[%s8 + $0x50] ss:$0 sm:$0xff]
    %v5473 = vld [vmem:[%s8 + $0x51] ss:$0 sm:$0xff]
    %5476 = vrot.lane.b32.xlu0 %v5470, 96
    %v5477 = vpop.permute.xlu0 %5476
    %5478 = vrot.lane.b32.xlu0 %v5471, 96
    %v5479 = vpop.permute.xlu0 %5478
    %v5482 = vsel %vm2764, %v5477, 0.0
    %5483 = vadd.xlane.f32.xlu0 %v5482
    %v5484 = vpop.xlane.xlu0 %5483
    %v5485 = vsel %vm2764, %v5479, 0.0
    %5486 = vadd.xlane.f32.xlu0 %v5485
    %v5487 = vpop.xlane.xlu0 %5486
    %v5488 = vmul.f32 %v5484, %v2777
    %v5489 = vmul.f32 %v5487, %v2777
    %v5490 = vsub.f32 %v5470, %v5488
    %v5491 = vsub.f32 %v5471, %v5489
    %v5492 = vmul.f32 %v5490, %v5490
    %v5493 = vmul.f32 %v5491, %v5491
    %5496 = vrot.lane.b32.xlu0 %v5492, 96
    %v5497 = vpop.permute.xlu0 %5496
    %5498 = vrot.lane.b32.xlu0 %v5493, 96
    %v5499 = vpop.permute.xlu0 %5498
    %v5502 = vsel %vm2764, %v5497, 0.0
    %5503 = vadd.xlane.f32.xlu0 %v5502
    %v5504 = vpop.xlane.xlu0 %5503
    %v5505 = vsel %vm2764, %v5499, 0.0
    %5506 = vadd.xlane.f32.xlu0 %v5505
    %v5507 = vpop.xlane.xlu0 %5506
    %v5508 = vmul.f32 %v5504, %v2777
    %v5509 = vmul.f32 %v5507, %v2777
    %v5510 = vadd.f32 %v5508, 1e-05
    %v5511 = vadd.f32 %v5509, 1e-05
    %v5512 = vrsqrt.pop %v5510
    %v5513 = vmul.f32 %v5512, %v5510
    %v5514 = vmul.f32 %v5513, %v5512
    %v5515 = vmul.f32 0.5, %v5514
    %v5516 = vsub.f32 1.5, %v5515
    %v5517 = vmul.f32 %v5512, %v5516
    %vm5518 = vweird.f32 %v5510
    %vm5519 = vweird.f32 %v5512
    %vm5520 = vmor %vm5518, %vm5519
    %v5521 = vsel %vm5520, %v5512, %v5517
    %v5522 = vrsqrt.pop %v5511
    %v5523 = vmul.f32 %v5522, %v5511
    %v5524 = vmul.f32 %v5523, %v5522
    %v5525 = vmul.f32 0.5, %v5524
    %v5526 = vsub.f32 1.5, %v5525
    %v5527 = vmul.f32 %v5522, %v5526
    %vm5528 = vweird.f32 %v5511
    %vm5529 = vweird.f32 %v5522
    %vm5530 = vmor %vm5528, %vm5529
    %v5531 = vsel %vm5530, %v5522, %v5527
    %v5532 = vmul.f32 %v5490, %v5521
    %v5533 = vmul.f32 %v5491, %v5531
    %5535 = vrot.lane.b32.xlu0 %v5472, 32
    %v5536 = vpop.permute.xlu0 %5535
    %v5538 = vmul.f32 %v5532, %v5536
    %v5539 = vmul.f32 %v5533, %v5536
    %5541 = vrot.lane.b32.xlu0 %v5473, 32
    %v5542 = vpop.permute.xlu0 %5541
    %v5544 = vadd.f32 %v5538, %v5542
    %v5545 = vadd.f32 %v5539, %v5542
    %v5546 = vld [vmem:[%s9] sm:$0xf]
    %v5547 = vld [vmem:[%s9 + $0x4] sm:$0xf]
    %v5548 = vld [vmem:[%s9 + $0x8] sm:$0xf]
    %v5549 = vld [vmem:[%s9 + $0xc] sm:$0xf]
    %v5550 = vpack.c.bf16 %v2741, %v2740
    %v5551 = vld [vmem:[#allocation10 + $0x10] sm:$0x1]
    %v5552 = vperm.slane %v5551, 0
    %v5557 = vunpack.c.l.b16 %v5546
    %v5558 = vunpack.c.l.b16 %v5547
    %v5559 = vunpack.c.l.b16 %v5548
    %v5560 = vunpack.c.l.b16 %v5549
    %v5561 = vpack.c.b16 %v5558, %v5557
    %v5562 = vpack.c.b16 %v5560, %v5559
    %v5566 = vsel %vm1447, %v5550, 0
    %5568 = vmatpush.bf16.msra.mxu0 0
    %5569 = vmatpush.bf16.msra.mxu0 0
    %5570 = vmatpush.bf16.msra.mxu0 0
    %5571 = vmatpush.bf16.msra.mxu0 0
    %5572 = vmatpush.bf16.msra.mxu0 0
    %5573 = vmatpush.bf16.msra.mxu0 0
    %5574 = vmatpush.bf16.msra.mxu0 %v5562
    %5575 = vmatpush.bf16.msra.mxu0 %v5561
    %5576 = vmatmul.bf16.gmra.mxu0 %v5566
    %v5577 = vpop.f32.mrf.mxu0
    %v5578 = vadd.f32 %v5552, %v5577
    %v5579 = vpop.f32.mrf.mxu0
    %v5580 = vadd.f32 %v5552, %v5579
    %5581 = vdwg.mxu0
    %v5582 = vld [vmem:[#allocation10] sm:$0xff]
    %v5583 = vld [vmem:[#allocation10 + $0x8] sm:$0xff]
    %v5584 = vadd.f32 %v5578, %v5582
    %v5585 = vadd.f32 %v5580, %v5583
    %v5586 = vld [vmem:[#allocation10 + $0x11] sm:$0x1]
    %v5587 = vld [vmem:[#allocation10 + $0x12] sm:$0x1]
    %v5588 = vsel %vm1566, %v5584, 0.0
    %5589 = vadd.xlane.f32.xlu0 %v5588
    %v5590 = vpop.xlane.xlu0 %5589
    %v5591 = vsel %vm1566, %v5585, 0.0
    %5592 = vadd.xlane.f32.xlu0 %v5591
    %v5593 = vpop.xlane.xlu0 %5592
    %v5594 = vrcp.pop 16.0
    %v5595 = vmul.f32 16.0, %v5594
    %v5596 = vsub.f32 1.0, %v5595
    %v5597 = vmul.f32 %v5594, %v5596
    %v5598 = vadd.f32 %v5594, %v5597
    %vm5599 = vweird.f32 %v5594
    %v5600 = vsel %vm5599, %v5594, %v5598
    %v5601 = vmul.f32 %v5590, %v5600
    %v5602 = vmul.f32 %v5593, %v5600
    %v5603 = vsub.f32 %v5584, %v5601
    %v5604 = vsub.f32 %v5585, %v5602
    %v5605 = vmul.f32 %v5603, %v5603
    %v5606 = vmul.f32 %v5604, %v5604
    %v5607 = vsel %vm1566, %v5605, 0.0
    %5608 = vadd.xlane.f32.xlu0 %v5607
    %v5609 = vpop.xlane.xlu0 %5608
    %v5610 = vsel %vm1566, %v5606, 0.0
    %5611 = vadd.xlane.f32.xlu0 %v5610
    %v5612 = vpop.xlane.xlu0 %5611
    %v5613 = vmul.f32 %v5609, %v5600
    %v5614 = vmul.f32 %v5612, %v5600
    %v5615 = vadd.f32 %v5613, 1e-05
    %v5616 = vadd.f32 %v5614, 1e-05
    %v5617 = vrsqrt.pop %v5615
    %v5618 = vmul.f32 %v5617, %v5615
    %v5619 = vmul.f32 %v5618, %v5617
    %v5620 = vmul.f32 0.5, %v5619
    %v5621 = vsub.f32 1.5, %v5620
    %v5622 = vmul.f32 %v5617, %v5621
    %vm5623 = vweird.f32 %v5615
    %vm5624 = vweird.f32 %v5617
    %vm5625 = vmor %vm5623, %vm5624
    %v5626 = vsel %vm5625, %v5617, %v5622
    %v5627 = vrsqrt.pop %v5616
    %v5628 = vmul.f32 %v5627, %v5616
    %v5629 = vmul.f32 %v5628, %v5627
    %v5630 = vmul.f32 0.5, %v5629
    %v5631 = vsub.f32 1.5, %v5630
    %v5632 = vmul.f32 %v5627, %v5631
    %vm5633 = vweird.f32 %v5616
    %vm5634 = vweird.f32 %v5627
    %vm5635 = vmor %vm5633, %vm5634
    %v5636 = vsel %vm5635, %v5627, %v5632
    %v5637 = vmul.f32 %v5603, %v5626
    %v5638 = vmul.f32 %v5604, %v5636
    %v5639 = vperm.slane %v5586, 0
    %v5640 = vmul.f32 %v5637, %v5639
    %v5641 = vmul.f32 %v5638, %v5639
    %v5642 = vperm.slane %v5587, 0
    %v5643 = vadd.f32 %v5640, %v5642
    %v5644 = vadd.f32 %v5641, %v5642
    %v5645 = vld [vmem:[%s9 + $0x10] sm:$0xf]
    %v5646 = vld [vmem:[%s9 + $0x14] sm:$0xf]
    %v5647 = vpack.c.bf16 %v5644, %v5643
    %v5648 = vld [vmem:[#allocation10 + $0x13] sm:$0x1]
    %v5649 = vperm.slane %v5648, 0
    %v5652 = vunpack.c.l.b16 %v5645
    %v5653 = vunpack.c.l.b16 %v5646
    %v5654 = vpack.c.b16 %v5653, %v5652
    %v5657 = vsel %vm1566, %v5647, 0
    %5659 = vmatpush.bf16.msra.mxu0 0
    %5660 = vmatpush.bf16.msra.mxu0 0
    %5661 = vmatpush.bf16.msra.mxu0 0
    %5662 = vmatpush.bf16.msra.mxu0 0
    %5663 = vmatpush.bf16.msra.mxu0 0
    %5664 = vmatpush.bf16.msra.mxu0 0
    %5665 = vmatpush.bf16.msra.mxu0 0
    %5666 = vmatpush.bf16.msra.mxu0 %v5654
    %5667 = vmatmul.bf16.gmra.mxu0 %v5657
    %v5668 = vpop.f32.mrf.mxu0
    %v5669 = vadd.f32 %v5649, %v5668
    %v5670 = vpop.f32.mrf.mxu0
    %v5671 = vadd.f32 %v5649, %v5670
    %5672 = vdwg.mxu0
    %v5673 = vpack.c.bf16 %v5671, %v5669
    %5675 = vrot.lane.b32.xlu0 %v5673, 112
    %v5676 = vpop.permute.xlu0 %5675
    %vm5677 = vcmask 31744
    %v5679 = vsel %vm5677, %v5673, 0
    %v5682 = vsel %vm5677, %v5676, 0
    %5684 = vmatpush.bf16.xpose.msra.mxu0 0
    %5685 = vmatpush.bf16.xpose.msra.mxu0 0
    %5686 = vmatpush.bf16.xpose.msra.mxu0 0
    %5687 = vmatpush.bf16.xpose.msra.mxu0 0
    %5688 = vmatpush.bf16.xpose.msra.mxu0 0
    %5689 = vmatpush.bf16.xpose.msra.mxu0 0
    %5690 = vmatpush.bf16.xpose.msra.mxu0 0
    %5691 = vmatpush.bf16.xpose.msra.mxu0 %v5682
    %5692 = vmatmul.bf16.gmra.mxu0 %v5679
    %v5693 = vpop.f32.mrf.mxu0
    %v5694 = vadd.f32 %v139, %v5693
    %v5695 = vpop.f32.mrf.mxu0
    %v5696 = vadd.f32 %v140, %v5695
    %5697 = vdwg.mxu0
    %v5698 = vsel %vm1566, %v5694, -inf
    %5699 = vmax.xlane.f32.xlu0 %v5698
    %v5700 = vpop.xlane.xlu0 %5699
    %v5701 = vsel %vm1566, %v5696, -inf
    %5702 = vmax.xlane.f32.xlu0 %v5701
    %v5703 = vpop.xlane.xlu0 %5702
    %v5704 = vsub.f32 %v5694, %v5700
    %v5705 = vsub.f32 %v5696, %v5703
    %v5706 = vmul.f32 %v5704, 1.442695
    %v5707 = vpow.pop %v5706
    %v5708 = vmul.f32 %v5705, 1.442695
    %v5709 = vpow.pop %v5708
    %v5710 = vsel %vm1566, %v5707, 0.0
    %5711 = vadd.xlane.f32.xlu0 %v5710
    %v5712 = vpop.xlane.xlu0 %5711
    %v5713 = vsel %vm1566, %v5709, 0.0
    %5714 = vadd.xlane.f32.xlu0 %v5713
    %v5715 = vpop.xlane.xlu0 %5714
    %v5716 = vrcp.pop %v5712
    %v5717 = vrcp.pop %v5715
    %v5718 = vmul.f32 %v5707, %v5716
    %v5719 = vmul.f32 %v5709, %v5717
    %v5720 = vpack.c.bf16 %v5719, %v5718
    %5721 = vrot.lane.b32.xlu0 %v5673, 96
    %v5722 = vpop.permute.xlu0 %5721
    %v5725 = vsel %vm1566, %v5720, 0
    %5727 = vmatpush.bf16.msra.mxu0 0
    %5728 = vmatpush.bf16.msra.mxu0 0
    %5729 = vmatpush.bf16.msra.mxu0 0
    %5730 = vmatpush.bf16.msra.mxu0 0
    %5731 = vmatpush.bf16.msra.mxu0 0
    %5732 = vmatpush.bf16.msra.mxu0 0
    %5733 = vmatpush.bf16.msra.mxu0 0
    %5734 = vmatpush.bf16.msra.mxu0 %v5722
    %5735 = vmatmul.bf16.gmra.mxu0 %v5725
    %v5736 = vpop.f32.mrf.mxu0
    %v5737 = vadd.f32 0.0, %v5736
    %v5738 = vpop.f32.mrf.mxu0
    %v5739 = vadd.f32 0.0, %v5738
    %5740 = vdwg.mxu0
    %5741 = vrot.lane.b32.xlu0 %v5673, 124
    %v5742 = vpop.permute.xlu0 %5741
    %5743 = vrot.lane.b32.xlu0 %v5673, 108
    %v5744 = vpop.permute.xlu0 %5743
    %v5746 = vsel %vm5677, %v5742, 0
    %v5749 = vsel %vm5677, %v5744, 0
    %5751 = vmatpush.bf16.xpose.msra.mxu0 0
    %5752 = vmatpush.bf16.xpose.msra.mxu0 0
    %5753 = vmatpush.bf16.xpose.msra.mxu0 0
    %5754 = vmatpush.bf16.xpose.msra.mxu0 0
    %5755 = vmatpush.bf16.xpose.msra.mxu0 0
    %5756 = vmatpush.bf16.xpose.msra.mxu0 0
    %5757 = vmatpush.bf16.xpose.msra.mxu0 0
    %5758 = vmatpush.bf16.xpose.msra.mxu0 %v5749
    %5759 = vmatmul.bf16.gmra.mxu0 %v5746
    %v5760 = vpop.f32.mrf.mxu0
    %v5761 = vadd.f32 %v139, %v5760
    %v5762 = vpop.f32.mrf.mxu0
    %v5763 = vadd.f32 %v140, %v5762
    %5764 = vdwg.mxu0
    %v5765 = vsel %vm1566, %v5761, -inf
    %5766 = vmax.xlane.f32.xlu0 %v5765
    %v5767 = vpop.xlane.xlu0 %5766
    %v5768 = vsel %vm1566, %v5763, -inf
    %5769 = vmax.xlane.f32.xlu0 %v5768
    %v5770 = vpop.xlane.xlu0 %5769
    %v5771 = vsub.f32 %v5761, %v5767
    %v5772 = vsub.f32 %v5763, %v5770
    %v5773 = vmul.f32 %v5771, 1.442695
    %v5774 = vpow.pop %v5773
    %v5775 = vmul.f32 %v5772, 1.442695
    %v5776 = vpow.pop %v5775
    %v5777 = vsel %vm1566, %v5774, 0.0
    %5778 = vadd.xlane.f32.xlu0 %v5777
    %v5779 = vpop.xlane.xlu0 %5778
    %v5780 = vsel %vm1566, %v5776, 0.0
    %5781 = vadd.xlane.f32.xlu0 %v5780
    %v5782 = vpop.xlane.xlu0 %5781
    %v5783 = vrcp.pop %v5779
    %v5784 = vrcp.pop %v5782
    %v5785 = vmul.f32 %v5774, %v5783
    %v5786 = vmul.f32 %v5776, %v5784
    %v5787 = vpack.c.bf16 %v5786, %v5785
    %5788 = vrot.lane.b32.xlu0 %v5673, 92
    %v5789 = vpop.permute.xlu0 %5788
    %v5792 = vsel %vm1566, %v5787, 0
    %5794 = vmatpush.bf16.msra.mxu0 0
    %5795 = vmatpush.bf16.msra.mxu0 0
    %5796 = vmatpush.bf16.msra.mxu0 0
    %5797 = vmatpush.bf16.msra.mxu0 0
    %5798 = vmatpush.bf16.msra.mxu0 0
    %5799 = vmatpush.bf16.msra.mxu0 0
    %5800 = vmatpush.bf16.msra.mxu0 0
    %5801 = vmatpush.bf16.msra.mxu0 %v5789
    %5802 = vmatmul.bf16.gmra.mxu0 %v5792
    %v5803 = vpop.f32.mrf.mxu0
    %v5804 = vadd.f32 0.0, %v5803
    %v5805 = vpop.f32.mrf.mxu0
    %v5806 = vadd.f32 0.0, %v5805
    %5807 = vdwg.mxu0
    %5808 = vrot.lane.b32.xlu0 %v5673, 120
    %v5809 = vpop.permute.xlu0 %5808
    %5810 = vrot.lane.b32.xlu0 %v5673, 104
    %v5811 = vpop.permute.xlu0 %5810
    %v5813 = vsel %vm5677, %v5809, 0
    %v5816 = vsel %vm5677, %v5811, 0
    %5818 = vmatpush.bf16.xpose.msra.mxu0 0
    %5819 = vmatpush.bf16.xpose.msra.mxu0 0
    %5820 = vmatpush.bf16.xpose.msra.mxu0 0
    %5821 = vmatpush.bf16.xpose.msra.mxu0 0
    %5822 = vmatpush.bf16.xpose.msra.mxu0 0
    %5823 = vmatpush.bf16.xpose.msra.mxu0 0
    %5824 = vmatpush.bf16.xpose.msra.mxu0 0
    %5825 = vmatpush.bf16.xpose.msra.mxu0 %v5816
    %5826 = vmatmul.bf16.gmra.mxu0 %v5813
    %v5827 = vpop.f32.mrf.mxu0
    %v5828 = vadd.f32 %v139, %v5827
    %v5829 = vpop.f32.mrf.mxu0
    %v5830 = vadd.f32 %v140, %v5829
    %5831 = vdwg.mxu0
    %v5832 = vsel %vm1566, %v5828, -inf
    %5833 = vmax.xlane.f32.xlu0 %v5832
    %v5834 = vpop.xlane.xlu0 %5833
    %v5835 = vsel %vm1566, %v5830, -inf
    %5836 = vmax.xlane.f32.xlu0 %v5835
    %v5837 = vpop.xlane.xlu0 %5836
    %v5838 = vsub.f32 %v5828, %v5834
    %v5839 = vsub.f32 %v5830, %v5837
    %v5840 = vmul.f32 %v5838, 1.442695
    %v5841 = vpow.pop %v5840
    %v5842 = vmul.f32 %v5839, 1.442695
    %v5843 = vpow.pop %v5842
    %v5844 = vsel %vm1566, %v5841, 0.0
    %5845 = vadd.xlane.f32.xlu0 %v5844
    %v5846 = vpop.xlane.xlu0 %5845
    %v5847 = vsel %vm1566, %v5843, 0.0
    %5848 = vadd.xlane.f32.xlu0 %v5847
    %v5849 = vpop.xlane.xlu0 %5848
    %v5850 = vrcp.pop %v5846
    %v5851 = vrcp.pop %v5849
    %v5852 = vmul.f32 %v5841, %v5850
    %v5853 = vmul.f32 %v5843, %v5851
    %v5854 = vpack.c.bf16 %v5853, %v5852
    %5855 = vrot.lane.b32.xlu0 %v5673, 88
    %v5856 = vpop.permute.xlu0 %5855
    %v5859 = vsel %vm1566, %v5854, 0
    %5861 = vmatpush.bf16.msra.mxu0 0
    %5862 = vmatpush.bf16.msra.mxu0 0
    %5863 = vmatpush.bf16.msra.mxu0 0
    %5864 = vmatpush.bf16.msra.mxu0 0
    %5865 = vmatpush.bf16.msra.mxu0 0
    %5866 = vmatpush.bf16.msra.mxu0 0
    %5867 = vmatpush.bf16.msra.mxu0 0
    %5868 = vmatpush.bf16.msra.mxu0 %v5856
    %5869 = vmatmul.bf16.gmra.mxu0 %v5859
    %v5870 = vpop.f32.mrf.mxu0
    %v5871 = vadd.f32 0.0, %v5870
    %v5872 = vpop.f32.mrf.mxu0
    %v5873 = vadd.f32 0.0, %v5872
    %5874 = vdwg.mxu0
    %5875 = vrot.lane.b32.xlu0 %v5673, 116
    %v5876 = vpop.permute.xlu0 %5875
    %5877 = vrot.lane.b32.xlu0 %v5673, 100
    %v5878 = vpop.permute.xlu0 %5877
    %v5880 = vsel %vm5677, %v5876, 0
    %v5883 = vsel %vm5677, %v5878, 0
    %5885 = vmatpush.bf16.xpose.msra.mxu0 0
    %5886 = vmatpush.bf16.xpose.msra.mxu0 0
    %5887 = vmatpush.bf16.xpose.msra.mxu0 0
    %5888 = vmatpush.bf16.xpose.msra.mxu0 0
    %5889 = vmatpush.bf16.xpose.msra.mxu0 0
    %5890 = vmatpush.bf16.xpose.msra.mxu0 0
    %5891 = vmatpush.bf16.xpose.msra.mxu0 0
    %5892 = vmatpush.bf16.xpose.msra.mxu0 %v5883
    %5893 = vmatmul.bf16.gmra.mxu0 %v5880
    %v5894 = vpop.f32.mrf.mxu0
    %v5895 = vadd.f32 %v139, %v5894
    %v5896 = vpop.f32.mrf.mxu0
    %v5897 = vadd.f32 %v140, %v5896
    %5898 = vdwg.mxu0
    %v5899 = vsel %vm1566, %v5895, -inf
    %5900 = vmax.xlane.f32.xlu0 %v5899
    %v5901 = vpop.xlane.xlu0 %5900
    %v5902 = vsel %vm1566, %v5897, -inf
    %5903 = vmax.xlane.f32.xlu0 %v5902
    %v5904 = vpop.xlane.xlu0 %5903
    %v5905 = vsub.f32 %v5895, %v5901
    %v5906 = vsub.f32 %v5897, %v5904
    %v5907 = vmul.f32 %v5905, 1.442695
    %v5908 = vpow.pop %v5907
    %v5909 = vmul.f32 %v5906, 1.442695
    %v5910 = vpow.pop %v5909
    %v5911 = vsel %vm1566, %v5908, 0.0
    %5912 = vadd.xlane.f32.xlu0 %v5911
    %v5913 = vpop.xlane.xlu0 %5912
    %v5914 = vsel %vm1566, %v5910, 0.0
    %5915 = vadd.xlane.f32.xlu0 %v5914
    %v5916 = vpop.xlane.xlu0 %5915
    %v5917 = vrcp.pop %v5913
    %v5918 = vrcp.pop %v5916
    %v5919 = vmul.f32 %v5908, %v5917
    %v5920 = vmul.f32 %v5910, %v5918
    %v5921 = vpack.c.bf16 %v5920, %v5919
    %5922 = vrot.lane.b32.xlu0 %v5673, 84
    %v5923 = vpop.permute.xlu0 %5922
    %v5926 = vsel %vm1566, %v5921, 0
    %5928 = vmatpush.bf16.msra.mxu0 0
    %5929 = vmatpush.bf16.msra.mxu0 0
    %5930 = vmatpush.bf16.msra.mxu0 0
    %5931 = vmatpush.bf16.msra.mxu0 0
    %5932 = vmatpush.bf16.msra.mxu0 0
    %5933 = vmatpush.bf16.msra.mxu0 0
    %5934 = vmatpush.bf16.msra.mxu0 0
    %5935 = vmatpush.bf16.msra.mxu0 %v5923
    %5936 = vmatmul.bf16.gmra.mxu0 %v5926
    %v5937 = vpop.f32.mrf.mxu0
    %v5938 = vadd.f32 0.0, %v5937
    %v5939 = vpop.f32.mrf.mxu0
    %v5940 = vadd.f32 0.0, %v5939
    %5941 = vdwg.mxu0
    %5944 = vrot.lane.b32.xlu0 %v5804, 4
    %v5945 = vpop.permute.xlu0 %5944
    %5946 = vrot.lane.b32.xlu0 %v5806, 4
    %v5947 = vpop.permute.xlu0 %5946
    %5952 = vrot.lane.b32.xlu0 %v5871, 8
    %v5953 = vpop.permute.xlu0 %5952
    %5954 = vrot.lane.b32.xlu0 %v5873, 8
    %v5955 = vpop.permute.xlu0 %5954
    %5960 = vrot.lane.b32.xlu0 %v5938, 12
    %v5961 = vpop.permute.xlu0 %5960
    %5962 = vrot.lane.b32.xlu0 %v5940, 12
    %v5963 = vpop.permute.xlu0 %5962
    %v5966 = vsel %vm5677, %v5737, %v5945
    %v5967 = vsel %vm5677, %v5739, %v5947
    %v5968 = vsel %vm1545, %v5966, %v5953
    %v5969 = vsel %vm1545, %v5967, %v5955
    %vm5970 = vcmask 97280
    %v5971 = vsel %vm5970, %v5968, %v5961
    %v5972 = vsel %vm5970, %v5969, %v5963
    %v5973 = vld [vmem:[%s9 + $0x18] sm:$0xf]
    %v5974 = vld [vmem:[%s9 + $0x1c] sm:$0xf]
    %v5975 = vpack.c.bf16 %v5972, %v5971
    %v5978 = vunpack.c.l.b16 %v5973
    %v5979 = vunpack.c.l.b16 %v5974
    %v5980 = vpack.c.b16 %v5979, %v5978
    %v5983 = vsel %vm1566, %v5975, 0
    %5985 = vmatpush.bf16.msra.mxu0 0
    %5986 = vmatpush.bf16.msra.mxu0 0
    %5987 = vmatpush.bf16.msra.mxu0 0
    %5988 = vmatpush.bf16.msra.mxu0 0
    %5989 = vmatpush.bf16.msra.mxu0 0
    %5990 = vmatpush.bf16.msra.mxu0 0
    %5991 = vmatpush.bf16.msra.mxu0 0
    %5992 = vmatpush.bf16.msra.mxu0 %v5980
    %5993 = vmatmul.bf16.gmra.mxu0 %v5983
    %v5994 = vpop.f32.mrf.mxu0
    %v5995 = vadd.f32 0.0, %v5994
    %v5996 = vpop.f32.mrf.mxu0
    %v5997 = vadd.f32 0.0, %v5996
    %5998 = vdwg.mxu0
    %v5999 = vadd.f32 %v5584, %v5995
    %v6000 = vadd.f32 %v5585, %v5997
    %v6001 = vld [vmem:[#allocation10 + $0x14] sm:$0x1]
    %v6002 = vperm.slane %v6001, 0
    %v6003 = vadd.f32 %v5999, %v6002
    %v6004 = vadd.f32 %v6000, %v6002
    %v6005 = vld [vmem:[#allocation10 + $0x15] sm:$0x1]
    %v6006 = vld [vmem:[#allocation10 + $0x16] sm:$0x1]
    %v6007 = vsel %vm1566, %v6003, 0.0
    %6008 = vadd.xlane.f32.xlu0 %v6007
    %v6009 = vpop.xlane.xlu0 %6008
    %v6010 = vsel %vm1566, %v6004, 0.0
    %6011 = vadd.xlane.f32.xlu0 %v6010
    %v6012 = vpop.xlane.xlu0 %6011
    %v6013 = vmul.f32 %v6009, %v5600
    %v6014 = vmul.f32 %v6012, %v5600
    %v6015 = vsub.f32 %v6003, %v6013
    %v6016 = vsub.f32 %v6004, %v6014
    %v6017 = vmul.f32 %v6015, %v6015
    %v6018 = vmul.f32 %v6016, %v6016
    %v6019 = vsel %vm1566, %v6017, 0.0
    %6020 = vadd.xlane.f32.xlu0 %v6019
    %v6021 = vpop.xlane.xlu0 %6020
    %v6022 = vsel %vm1566, %v6018, 0.0
    %6023 = vadd.xlane.f32.xlu0 %v6022
    %v6024 = vpop.xlane.xlu0 %6023
    %v6025 = vmul.f32 %v6021, %v5600
    %v6026 = vmul.f32 %v6024, %v5600
    %v6027 = vadd.f32 %v6025, 1e-05
    %v6028 = vadd.f32 %v6026, 1e-05
    %v6029 = vrsqrt.pop %v6027
    %v6030 = vmul.f32 %v6029, %v6027
    %v6031 = vmul.f32 %v6030, %v6029
    %v6032 = vmul.f32 0.5, %v6031
    %v6033 = vsub.f32 1.5, %v6032
    %v6034 = vmul.f32 %v6029, %v6033
    %vm6035 = vweird.f32 %v6027
    %vm6036 = vweird.f32 %v6029
    %vm6037 = vmor %vm6035, %vm6036
    %v6038 = vsel %vm6037, %v6029, %v6034
    %v6039 = vrsqrt.pop %v6028
    %v6040 = vmul.f32 %v6039, %v6028
    %v6041 = vmul.f32 %v6040, %v6039
    %v6042 = vmul.f32 0.5, %v6041
    %v6043 = vsub.f32 1.5, %v6042
    %v6044 = vmul.f32 %v6039, %v6043
    %vm6045 = vweird.f32 %v6028
    %vm6046 = vweird.f32 %v6039
    %vm6047 = vmor %vm6045, %vm6046
    %v6048 = vsel %vm6047, %v6039, %v6044
    %v6049 = vmul.f32 %v6015, %v6038
    %v6050 = vmul.f32 %v6016, %v6048
    %v6051 = vperm.slane %v6005, 0
    %v6052 = vmul.f32 %v6049, %v6051
    %v6053 = vmul.f32 %v6050, %v6051
    %v6054 = vperm.slane %v6006, 0
    %v6055 = vadd.f32 %v6052, %v6054
    %v6056 = vadd.f32 %v6053, %v6054
    %v6057 = vld [vmem:[%s9 + $0x20] sm:$0xf]
    %v6058 = vld [vmem:[%s9 + $0x24] sm:$0xf]
    %v6059 = vpack.c.bf16 %v6056, %v6055
    %v6060 = vld [vmem:[#allocation10 + $0x17] sm:$0x1]
    %v6061 = vperm.slane %v6060, 0
    %v6064 = vunpack.c.l.b16 %v6057
    %v6065 = vunpack.c.l.b16 %v6058
    %v6066 = vpack.c.b16 %v6065, %v6064
    %v6069 = vsel %vm1566, %v6059, 0
    %6071 = vmatpush.bf16.msra.mxu0 0
    %6072 = vmatpush.bf16.msra.mxu0 0
    %6073 = vmatpush.bf16.msra.mxu0 0
    %6074 = vmatpush.bf16.msra.mxu0 0
    %6075 = vmatpush.bf16.msra.mxu0 0
    %6076 = vmatpush.bf16.msra.mxu0 0
    %6077 = vmatpush.bf16.msra.mxu0 0
    %6078 = vmatpush.bf16.msra.mxu0 %v6066
    %6079 = vmatmul.bf16.gmra.mxu0 %v6069
    %v6080 = vpop.f32.mrf.mxu0
    %v6081 = vadd.f32 %v6061, %v6080
    %v6082 = vpop.f32.mrf.mxu0
    %v6083 = vadd.f32 %v6061, %v6082
    %6084 = vdwg.mxu0
    %v6085 = vmul.f32 %v6081, %v6081
    %v6086 = vmul.f32 %v6083, %v6083
    %v6087 = vmul.f32 %v6081, %v6085
    %v6088 = vmul.f32 %v6083, %v6086
    %v6089 = vmul.f32 %v6087, 0.044715
    %v6090 = vmul.f32 %v6088, 0.044715
    %v6091 = vadd.f32 %v6081, %v6089
    %v6092 = vadd.f32 %v6083, %v6090
    %v6093 = vmul.f32 %v6091, 0.7978846
    %v6094 = vmul.f32 %v6092, 0.7978846
    %v6095 = vtanh.pop %v6093
    %v6096 = vtanh.pop %v6094
    %v6097 = vadd.f32 %v6095, 1.0
    %v6098 = vadd.f32 %v6096, 1.0
    %v6099 = vmul.f32 %v6097, 0.5
    %v6100 = vmul.f32 %v6098, 0.5
    %v6101 = vmul.f32 %v6081, %v6099
    %v6102 = vmul.f32 %v6083, %v6100
    %v6103 = vld [vmem:[%s9 + $0x28] sm:$0xf]
    %v6104 = vld [vmem:[%s9 + $0x2c] sm:$0xf]
    %v6105 = vld [vmem:[%s9 + $0x30] sm:$0xf]
    %v6106 = vld [vmem:[%s9 + $0x34] sm:$0xf]
    %v6107 = vld [vmem:[%s9 + $0x38] sm:$0xf]
    %v6108 = vld [vmem:[%s9 + $0x3c] sm:$0xf]
    %v6109 = vld [vmem:[%s9 + $0x40] sm:$0xf]
    %v6110 = vld [vmem:[%s9 + $0x44] sm:$0xf]
    %v6111 = vpack.c.bf16 %v6102, %v6101
    %v6120 = vunpack.c.l.b16 %v6103
    %v6121 = vunpack.c.l.b16 %v6104
    %v6122 = vunpack.c.l.b16 %v6105
    %v6123 = vunpack.c.l.b16 %v6106
    %v6124 = vunpack.c.l.b16 %v6107
    %v6125 = vunpack.c.l.b16 %v6108
    %v6126 = vunpack.c.l.b16 %v6109
    %v6127 = vunpack.c.l.b16 %v6110
    %v6128 = vpack.c.b16 %v6121, %v6120
    %v6129 = vpack.c.b16 %v6123, %v6122
    %v6130 = vpack.c.b16 %v6125, %v6124
    %v6131 = vpack.c.b16 %v6127, %v6126
    %v6137 = vsel %vm2764, %v6111, 0
    %6139 = vmatpush.bf16.msra.mxu0 0
    %6140 = vmatpush.bf16.msra.mxu0 0
    %6141 = vmatpush.bf16.msra.mxu0 0
    %6142 = vmatpush.bf16.msra.mxu0 0
    %6143 = vmatpush.bf16.msra.mxu0 %v6131
    %6144 = vmatpush.bf16.msra.mxu0 %v6130
    %6145 = vmatpush.bf16.msra.mxu0 %v6129
    %6146 = vmatpush.bf16.msra.mxu0 %v6128
    %6147 = vmatmul.bf16.gmra.mxu0 %v6137
    %v6148 = vpop.f32.mrf.mxu0
    %v6149 = vadd.f32 0.0, %v6148
    %v6150 = vpop.f32.mrf.mxu0
    %v6151 = vadd.f32 0.0, %v6150
    %6152 = vdwg.mxu0
    %v6153 = vadd.f32 %v6003, %v6149
    %v6154 = vadd.f32 %v6004, %v6151
    %v6155 = vld [vmem:[#allocation10 + $0x18] sm:$0x1]
    %v6156 = vperm.slane %v6155, 0
    %v6157 = vadd.f32 %v6153, %v6156
    %v6158 = vadd.f32 %v6154, %v6156
    %v6159 = vld [vmem:[#allocation10 + $0x19] sm:$0x1]
    %v6160 = vld [vmem:[#allocation10 + $0x1a] sm:$0x1]
    %v6161 = vsel %vm1566, %v6157, 0.0
    %6162 = vadd.xlane.f32.xlu0 %v6161
    %v6163 = vpop.xlane.xlu0 %6162
    %v6164 = vsel %vm1566, %v6158, 0.0
    %6165 = vadd.xlane.f32.xlu0 %v6164
    %v6166 = vpop.xlane.xlu0 %6165
    %v6167 = vmul.f32 %v6163, %v5600
    %v6168 = vmul.f32 %v6166, %v5600
    %v6169 = vsub.f32 %v6157, %v6167
    %v6170 = vsub.f32 %v6158, %v6168
    %v6171 = vmul.f32 %v6169, %v6169
    %v6172 = vmul.f32 %v6170, %v6170
    %v6173 = vsel %vm1566, %v6171, 0.0
    %6174 = vadd.xlane.f32.xlu0 %v6173
    %v6175 = vpop.xlane.xlu0 %6174
    %v6176 = vsel %vm1566, %v6172, 0.0
    %6177 = vadd.xlane.f32.xlu0 %v6176
    %v6178 = vpop.xlane.xlu0 %6177
    %v6179 = vmul.f32 %v6175, %v5600
    %v6180 = vmul.f32 %v6178, %v5600
    %v6181 = vadd.f32 %v6179, 1e-05
    %v6182 = vadd.f32 %v6180, 1e-05
    %v6183 = vrsqrt.pop %v6181
    %v6184 = vmul.f32 %v6183, %v6181
    %v6185 = vmul.f32 %v6184, %v6183
    %v6186 = vmul.f32 0.5, %v6185
    %v6187 = vsub.f32 1.5, %v6186
    %v6188 = vmul.f32 %v6183, %v6187
    %vm6189 = vweird.f32 %v6181
    %vm6190 = vweird.f32 %v6183
    %vm6191 = vmor %vm6189, %vm6190
    %v6192 = vsel %vm6191, %v6183, %v6188
    %v6193 = vrsqrt.pop %v6182
    %v6194 = vmul.f32 %v6193, %v6182
    %v6195 = vmul.f32 %v6194, %v6193
    %v6196 = vmul.f32 0.5, %v6195
    %v6197 = vsub.f32 1.5, %v6196
    %v6198 = vmul.f32 %v6193, %v6197
    %vm6199 = vweird.f32 %v6182
    %vm6200 = vweird.f32 %v6193
    %vm6201 = vmor %vm6199, %vm6200
    %v6202 = vsel %vm6201, %v6193, %v6198
    %v6203 = vmul.f32 %v6169, %v6192
    %v6204 = vmul.f32 %v6170, %v6202
    %v6205 = vperm.slane %v6159, 0
    %v6206 = vmul.f32 %v6203, %v6205
    %v6207 = vmul.f32 %v6204, %v6205
    %v6208 = vperm.slane %v6160, 0
    %v6209 = vadd.f32 %v6206, %v6208
    %v6210 = vadd.f32 %v6207, %v6208
    %v6211 = vld [vmem:[#allocation4] sm:$0xff]
    %v6212 = vld [vmem:[#allocation4 + $0x8] sm:$0xff]
    %6215 = vrot.lane.b32.xlu0 %v5544, 96
    %v6216 = vpop.permute.xlu0 %6215
    %6217 = vrot.lane.b32.xlu0 %v5545, 96
    %v6218 = vpop.permute.xlu0 %6217
    %v6221 = vadd.f32 %v6211, %v6216
    %v6222 = vadd.f32 %v6212, %v6218
    %v6223 = vld [vmem:[%s12 + $0x20] ss:$0 sm:$0xff]
    %v6224 = vld [vmem:[%s12 + $0x21] ss:$0 sm:$0xff]
    %v6225 = vsel %vm2764, %v6221, 0.0
    %6226 = vadd.xlane.f32.xlu0 %v6225
    %v6227 = vpop.xlane.xlu0 %6226
    %v6228 = vsel %vm2764, %v6222, 0.0
    %6229 = vadd.xlane.f32.xlu0 %v6228
    %v6230 = vpop.xlane.xlu0 %6229
    %v6231 = vmul.f32 %v6227, %v2777
    %v6232 = vmul.f32 %v6230, %v2777
    %v6233 = vsub.f32 %v6221, %v6231
    %v6234 = vsub.f32 %v6222, %v6232
    %v6235 = vmul.f32 %v6233, %v6233
    %v6236 = vmul.f32 %v6234, %v6234
    %v6237 = vsel %vm2764, %v6235, 0.0
    %6238 = vadd.xlane.f32.xlu0 %v6237
    %v6239 = vpop.xlane.xlu0 %6238
    %v6240 = vsel %vm2764, %v6236, 0.0
    %6241 = vadd.xlane.f32.xlu0 %v6240
    %v6242 = vpop.xlane.xlu0 %6241
    %v6243 = vmul.f32 %v6239, %v2777
    %v6244 = vmul.f32 %v6242, %v2777
    %v6245 = vadd.f32 %v6243, 1e-05
    %v6246 = vadd.f32 %v6244, 1e-05
    %v6247 = vrsqrt.pop %v6245
    %v6248 = vmul.f32 %v6247, %v6245
    %v6249 = vmul.f32 %v6248, %v6247
    %v6250 = vmul.f32 0.5, %v6249
    %v6251 = vsub.f32 1.5, %v6250
    %v6252 = vmul.f32 %v6247, %v6251
    %vm6253 = vweird.f32 %v6245
    %vm6254 = vweird.f32 %v6247
    %vm6255 = vmor %vm6253, %vm6254
    %v6256 = vsel %vm6255, %v6247, %v6252
    %v6257 = vrsqrt.pop %v6246
    %v6258 = vmul.f32 %v6257, %v6246
    %v6259 = vmul.f32 %v6258, %v6257
    %v6260 = vmul.f32 0.5, %v6259
    %v6261 = vsub.f32 1.5, %v6260
    %v6262 = vmul.f32 %v6257, %v6261
    %vm6263 = vweird.f32 %v6246
    %vm6264 = vweird.f32 %v6257
    %vm6265 = vmor %vm6263, %vm6264
    %v6266 = vsel %vm6265, %v6257, %v6262
    %v6267 = vmul.f32 %v6233, %v6256
    %v6268 = vmul.f32 %v6234, %v6266
    %v6269 = vmul.f32 %v6267, %v6223
    %v6270 = vmul.f32 %v6268, %v6223
    %v6271 = vadd.f32 %v6269, %v6224
    %v6272 = vadd.f32 %v6270, %v6224
    %v6273 = vld [vmem:[%s11] sm:$0xf]
    %v6274 = vld [vmem:[%s11 + $0x8] sm:$0xf]
    %v6275 = vld [vmem:[%s11 + $0x10] sm:$0xf]
    %v6276 = vld [vmem:[%s11 + $0x18] sm:$0xf]
    %v6277 = vld [vmem:[%s11 + $0x20] sm:$0xf]
    %v6278 = vld [vmem:[%s11 + $0x28] sm:$0xf]
    %v6279 = vld [vmem:[%s11 + $0x30] sm:$0xf]
    %v6280 = vld [vmem:[%s11 + $0x38] sm:$0xf]
    %v6281 = vpack.c.bf16 %v6272, %v6271
    %v6282 = vld [vmem:[%s12 + $0x22] ss:$0 sm:$0xff]
    %v6291 = vunpack.c.l.b16 %v6273
    %v6292 = vunpack.c.l.b16 %v6274
    %v6293 = vunpack.c.l.b16 %v6275
    %v6294 = vunpack.c.l.b16 %v6276
    %v6295 = vunpack.c.l.b16 %v6277
    %v6296 = vunpack.c.l.b16 %v6278
    %v6297 = vunpack.c.l.b16 %v6279
    %v6298 = vunpack.c.l.b16 %v6280
    %v6299 = vpack.c.b16 %v6292, %v6291
    %v6300 = vpack.c.b16 %v6294, %v6293
    %v6301 = vpack.c.b16 %v6296, %v6295
    %v6302 = vpack.c.b16 %v6298, %v6297
    %v6308 = vsel %vm2764, %v6281, 0
    %6310 = vmatpush.bf16.msra.mxu0 0
    %6311 = vmatpush.bf16.msra.mxu0 0
    %6312 = vmatpush.bf16.msra.mxu0 0
    %6313 = vmatpush.bf16.msra.mxu0 0
    %6314 = vmatpush.bf16.msra.mxu0 %v6302
    %6315 = vmatpush.bf16.msra.mxu0 %v6301
    %6316 = vmatpush.bf16.msra.mxu0 %v6300
    %6317 = vmatpush.bf16.msra.mxu0 %v6299
    %6318 = vmatmul.bf16.gmra.mxu0 %v6308
    %v6319 = vpop.f32.mrf.mxu0
    %v6320 = vadd.f32 %v6282, %v6319
    %v6321 = vpop.f32.mrf.mxu0
    %v6322 = vadd.f32 %v6282, %v6321
    %6323 = vdwg.mxu0
    %v6324 = vld [vmem:[%s12] sm:$0xff]
    %v6325 = vld [vmem:[%s12 + $0x10] sm:$0xff]
    %v6326 = vadd.f32 %v6320, %v6324
    %v6327 = vadd.f32 %v6322, %v6325
    %v6328 = vld [vmem:[%s12 + $0x23] ss:$0 sm:$0xff]
    %v6329 = vld [vmem:[%s12 + $0x24] ss:$0 sm:$0xff]
    %v6330 = vsel %vm1447, %v6326, 0.0
    %6331 = vadd.xlane.f32.xlu0 %v6330
    %v6332 = vpop.xlane.xlu0 %6331
    %v6333 = vsel %vm1447, %v6327, 0.0
    %6334 = vadd.xlane.f32.xlu0 %v6333
    %v6335 = vpop.xlane.xlu0 %6334
    %v6336 = vmul.f32 %v6332, %v1460
    %v6337 = vmul.f32 %v6335, %v1460
    %v6338 = vsub.f32 %v6326, %v6336
    %v6339 = vsub.f32 %v6327, %v6337
    %v6340 = vmul.f32 %v6338, %v6338
    %v6341 = vmul.f32 %v6339, %v6339
    %v6342 = vsel %vm1447, %v6340, 0.0
    %6343 = vadd.xlane.f32.xlu0 %v6342
    %v6344 = vpop.xlane.xlu0 %6343
    %v6345 = vsel %vm1447, %v6341, 0.0
    %6346 = vadd.xlane.f32.xlu0 %v6345
    %v6347 = vpop.xlane.xlu0 %6346
    %v6348 = vmul.f32 %v6344, %v1460
    %v6349 = vmul.f32 %v6347, %v1460
    %v6350 = vadd.f32 %v6348, 1e-05
    %v6351 = vadd.f32 %v6349, 1e-05
    %v6352 = vrsqrt.pop %v6350
    %v6353 = vmul.f32 %v6352, %v6350
    %v6354 = vmul.f32 %v6353, %v6352
    %v6355 = vmul.f32 0.5, %v6354
    %v6356 = vsub.f32 1.5, %v6355
    %v6357 = vmul.f32 %v6352, %v6356
    %vm6358 = vweird.f32 %v6350
    %vm6359 = vweird.f32 %v6352
    %vm6360 = vmor %vm6358, %vm6359
    %v6361 = vsel %vm6360, %v6352, %v6357
    %v6362 = vrsqrt.pop %v6351
    %v6363 = vmul.f32 %v6362, %v6351
    %v6364 = vmul.f32 %v6363, %v6362
    %v6365 = vmul.f32 0.5, %v6364
    %v6366 = vsub.f32 1.5, %v6365
    %v6367 = vmul.f32 %v6362, %v6366
    %vm6368 = vweird.f32 %v6351
    %vm6369 = vweird.f32 %v6362
    %vm6370 = vmor %vm6368, %vm6369
    %v6371 = vsel %vm6370, %v6362, %v6367
    %v6372 = vmul.f32 %v6338, %v6361
    %v6373 = vmul.f32 %v6339, %v6371
    %v6374 = vmul.f32 %v6372, %v6328
    %v6375 = vmul.f32 %v6373, %v6328
    %v6376 = vadd.f32 %v6374, %v6329
    %v6377 = vadd.f32 %v6375, %v6329
    %v6378 = vld [vmem:[%s11 + $0x40] sm:$0xf]
    %v6379 = vld [vmem:[%s11 + $0x48] sm:$0xf]
    %v6380 = vld [vmem:[%s11 + $0x50] sm:$0xf]
    %v6381 = vld [vmem:[%s11 + $0x58] sm:$0xf]
    %v6382 = vpack.c.bf16 %v6377, %v6376
    %v6383 = vld [vmem:[%s12 + $0x25] ss:$0 sm:$0xff]
    %v6388 = vunpack.c.l.b16 %v6378
    %v6389 = vunpack.c.l.b16 %v6379
    %v6390 = vunpack.c.l.b16 %v6380
    %v6391 = vunpack.c.l.b16 %v6381
    %v6392 = vpack.c.b16 %v6389, %v6388
    %v6393 = vpack.c.b16 %v6391, %v6390
    %v6397 = vsel %vm1447, %v6382, 0
    %6399 = vmatpush.bf16.msra.mxu0 0
    %6400 = vmatpush.bf16.msra.mxu0 0
    %6401 = vmatpush.bf16.msra.mxu0 0
    %6402 = vmatpush.bf16.msra.mxu0 0
    %6403 = vmatpush.bf16.msra.mxu0 0
    %6404 = vmatpush.bf16.msra.mxu0 0
    %6405 = vmatpush.bf16.msra.mxu0 %v6393
    %6406 = vmatpush.bf16.msra.mxu0 %v6392
    %6407 = vmatmul.bf16.gmra.mxu0 %v6397
    %v6408 = vpop.f32.mrf.mxu0
    %v6409 = vadd.f32 %v6383, %v6408
    %v6410 = vpop.f32.mrf.mxu0
    %v6411 = vadd.f32 %v6383, %v6410
    %6412 = vdwg.mxu0
    %v6413 = vpack.c.bf16 %v6411, %v6409
    %6415 = vrot.lane.b32.xlu0 %v6413, 96
    %v6416 = vpop.permute.xlu0 %6415
    %v6418 = vsel %vm1545, %v6413, 0
    %v6421 = vsel %vm1545, %v6416, 0
    %6423 = vmatpush.bf16.xpose.msra.mxu0 0
    %6424 = vmatpush.bf16.xpose.msra.mxu0 0
    %6425 = vmatpush.bf16.xpose.msra.mxu0 0
    %6426 = vmatpush.bf16.xpose.msra.mxu0 0
    %6427 = vmatpush.bf16.xpose.msra.mxu0 0
    %6428 = vmatpush.bf16.xpose.msra.mxu0 0
    %6429 = vmatpush.bf16.xpose.msra.mxu0 0
    %6430 = vmatpush.bf16.xpose.msra.mxu0 %v6421
    %6431 = vmatmul.bf16.gmra.mxu0 %v6418
    %v6432 = vpop.f32.mrf.mxu0
    %v6433 = vadd.f32 %v139, %v6432
    %v6434 = vpop.f32.mrf.mxu0
    %v6435 = vadd.f32 %v140, %v6434
    %6436 = vdwg.mxu0
    %v6437 = vsel %vm1566, %v6433, -inf
    %6438 = vmax.xlane.f32.xlu0 %v6437
    %v6439 = vpop.xlane.xlu0 %6438
    %v6440 = vsel %vm1566, %v6435, -inf
    %6441 = vmax.xlane.f32.xlu0 %v6440
    %v6442 = vpop.xlane.xlu0 %6441
    %v6443 = vsub.f32 %v6433, %v6439
    %v6444 = vsub.f32 %v6435, %v6442
    %v6445 = vmul.f32 %v6443, 1.442695
    %v6446 = vpow.pop %v6445
    %v6447 = vmul.f32 %v6444, 1.442695
    %v6448 = vpow.pop %v6447
    %v6449 = vsel %vm1566, %v6446, 0.0
    %6450 = vadd.xlane.f32.xlu0 %v6449
    %v6451 = vpop.xlane.xlu0 %6450
    %v6452 = vsel %vm1566, %v6448, 0.0
    %6453 = vadd.xlane.f32.xlu0 %v6452
    %v6454 = vpop.xlane.xlu0 %6453
    %v6455 = vrcp.pop %v6451
    %v6456 = vrcp.pop %v6454
    %v6457 = vmul.f32 %v6446, %v6455
    %v6458 = vmul.f32 %v6448, %v6456
    %v6459 = vpack.c.bf16 %v6458, %v6457
    %6460 = vrot.lane.b32.xlu0 %v6413, 64
    %v6461 = vpop.permute.xlu0 %6460
    %v6464 = vsel %vm1566, %v6459, 0
    %6466 = vmatpush.bf16.msra.mxu0 0
    %6467 = vmatpush.bf16.msra.mxu0 0
    %6468 = vmatpush.bf16.msra.mxu0 0
    %6469 = vmatpush.bf16.msra.mxu0 0
    %6470 = vmatpush.bf16.msra.mxu0 0
    %6471 = vmatpush.bf16.msra.mxu0 0
    %6472 = vmatpush.bf16.msra.mxu0 0
    %6473 = vmatpush.bf16.msra.mxu0 %v6461
    %6474 = vmatmul.bf16.gmra.mxu0 %v6464
    %v6475 = vpop.f32.mrf.mxu0
    %v6476 = vadd.f32 0.0, %v6475
    %v6477 = vpop.f32.mrf.mxu0
    %v6478 = vadd.f32 0.0, %v6477
    %6479 = vdwg.mxu0
    %6480 = vrot.lane.b32.xlu0 %v6413, 120
    %v6481 = vpop.permute.xlu0 %6480
    %6482 = vrot.lane.b32.xlu0 %v6413, 88
    %v6483 = vpop.permute.xlu0 %6482
    %v6485 = vsel %vm1545, %v6481, 0
    %v6488 = vsel %vm1545, %v6483, 0
    %6490 = vmatpush.bf16.xpose.msra.mxu0 0
    %6491 = vmatpush.bf16.xpose.msra.mxu0 0
    %6492 = vmatpush.bf16.xpose.msra.mxu0 0
    %6493 = vmatpush.bf16.xpose.msra.mxu0 0
    %6494 = vmatpush.bf16.xpose.msra.mxu0 0
    %6495 = vmatpush.bf16.xpose.msra.mxu0 0
    %6496 = vmatpush.bf16.xpose.msra.mxu0 0
    %6497 = vmatpush.bf16.xpose.msra.mxu0 %v6488
    %6498 = vmatmul.bf16.gmra.mxu0 %v6485
    %v6499 = vpop.f32.mrf.mxu0
    %v6500 = vadd.f32 %v139, %v6499
    %v6501 = vpop.f32.mrf.mxu0
    %v6502 = vadd.f32 %v140, %v6501
    %6503 = vdwg.mxu0
    %v6504 = vsel %vm1566, %v6500, -inf
    %6505 = vmax.xlane.f32.xlu0 %v6504
    %v6506 = vpop.xlane.xlu0 %6505
    %v6507 = vsel %vm1566, %v6502, -inf
    %6508 = vmax.xlane.f32.xlu0 %v6507
    %v6509 = vpop.xlane.xlu0 %6508
    %v6510 = vsub.f32 %v6500, %v6506
    %v6511 = vsub.f32 %v6502, %v6509
    %v6512 = vmul.f32 %v6510, 1.442695
    %v6513 = vpow.pop %v6512
    %v6514 = vmul.f32 %v6511, 1.442695
    %v6515 = vpow.pop %v6514
    %v6516 = vsel %vm1566, %v6513, 0.0
    %6517 = vadd.xlane.f32.xlu0 %v6516
    %v6518 = vpop.xlane.xlu0 %6517
    %v6519 = vsel %vm1566, %v6515, 0.0
    %6520 = vadd.xlane.f32.xlu0 %v6519
    %v6521 = vpop.xlane.xlu0 %6520
    %v6522 = vrcp.pop %v6518
    %v6523 = vrcp.pop %v6521
    %v6524 = vmul.f32 %v6513, %v6522
    %v6525 = vmul.f32 %v6515, %v6523
    %v6526 = vpack.c.bf16 %v6525, %v6524
    %6527 = vrot.lane.b32.xlu0 %v6413, 56
    %v6528 = vpop.permute.xlu0 %6527
    %v6531 = vsel %vm1566, %v6526, 0
    %6533 = vmatpush.bf16.msra.mxu0 0
    %6534 = vmatpush.bf16.msra.mxu0 0
    %6535 = vmatpush.bf16.msra.mxu0 0
    %6536 = vmatpush.bf16.msra.mxu0 0
    %6537 = vmatpush.bf16.msra.mxu0 0
    %6538 = vmatpush.bf16.msra.mxu0 0
    %6539 = vmatpush.bf16.msra.mxu0 0
    %6540 = vmatpush.bf16.msra.mxu0 %v6528
    %6541 = vmatmul.bf16.gmra.mxu0 %v6531
    %v6542 = vpop.f32.mrf.mxu0
    %v6543 = vadd.f32 0.0, %v6542
    %v6544 = vpop.f32.mrf.mxu0
    %v6545 = vadd.f32 0.0, %v6544
    %6546 = vdwg.mxu0
    %6547 = vrot.lane.b32.xlu0 %v6413, 112
    %v6548 = vpop.permute.xlu0 %6547
    %6549 = vrot.lane.b32.xlu0 %v6413, 80
    %v6550 = vpop.permute.xlu0 %6549
    %v6552 = vsel %vm1545, %v6548, 0
    %v6555 = vsel %vm1545, %v6550, 0
    %6557 = vmatpush.bf16.xpose.msra.mxu0 0
    %6558 = vmatpush.bf16.xpose.msra.mxu0 0
    %6559 = vmatpush.bf16.xpose.msra.mxu0 0
    %6560 = vmatpush.bf16.xpose.msra.mxu0 0
    %6561 = vmatpush.bf16.xpose.msra.mxu0 0
    %6562 = vmatpush.bf16.xpose.msra.mxu0 0
    %6563 = vmatpush.bf16.xpose.msra.mxu0 0
    %6564 = vmatpush.bf16.xpose.msra.mxu0 %v6555
    %6565 = vmatmul.bf16.gmra.mxu0 %v6552
    %v6566 = vpop.f32.mrf.mxu0
    %v6567 = vadd.f32 %v139, %v6566
    %v6568 = vpop.f32.mrf.mxu0
    %v6569 = vadd.f32 %v140, %v6568
    %6570 = vdwg.mxu0
    %v6571 = vsel %vm1566, %v6567, -inf
    %6572 = vmax.xlane.f32.xlu0 %v6571
    %v6573 = vpop.xlane.xlu0 %6572
    %v6574 = vsel %vm1566, %v6569, -inf
    %6575 = vmax.xlane.f32.xlu0 %v6574
    %v6576 = vpop.xlane.xlu0 %6575
    %v6577 = vsub.f32 %v6567, %v6573
    %v6578 = vsub.f32 %v6569, %v6576
    %v6579 = vmul.f32 %v6577, 1.442695
    %v6580 = vpow.pop %v6579
    %v6581 = vmul.f32 %v6578, 1.442695
    %v6582 = vpow.pop %v6581
    %v6583 = vsel %vm1566, %v6580, 0.0
    %6584 = vadd.xlane.f32.xlu0 %v6583
    %v6585 = vpop.xlane.xlu0 %6584
    %v6586 = vsel %vm1566, %v6582, 0.0
    %6587 = vadd.xlane.f32.xlu0 %v6586
    %v6588 = vpop.xlane.xlu0 %6587
    %v6589 = vrcp.pop %v6585
    %v6590 = vrcp.pop %v6588
    %v6591 = vmul.f32 %v6580, %v6589
    %v6592 = vmul.f32 %v6582, %v6590
    %v6593 = vpack.c.bf16 %v6592, %v6591
    %6594 = vrot.lane.b32.xlu0 %v6413, 48
    %v6595 = vpop.permute.xlu0 %6594
    %v6598 = vsel %vm1566, %v6593, 0
    %6600 = vmatpush.bf16.msra.mxu0 0
    %6601 = vmatpush.bf16.msra.mxu0 0
    %6602 = vmatpush.bf16.msra.mxu0 0
    %6603 = vmatpush.bf16.msra.mxu0 0
    %6604 = vmatpush.bf16.msra.mxu0 0
    %6605 = vmatpush.bf16.msra.mxu0 0
    %6606 = vmatpush.bf16.msra.mxu0 0
    %6607 = vmatpush.bf16.msra.mxu0 %v6595
    %6608 = vmatmul.bf16.gmra.mxu0 %v6598
    %v6609 = vpop.f32.mrf.mxu0
    %v6610 = vadd.f32 0.0, %v6609
    %v6611 = vpop.f32.mrf.mxu0
    %v6612 = vadd.f32 0.0, %v6611
    %6613 = vdwg.mxu0
    %6614 = vrot.lane.b32.xlu0 %v6413, 104
    %v6615 = vpop.permute.xlu0 %6614
    %6616 = vrot.lane.b32.xlu0 %v6413, 72
    %v6617 = vpop.permute.xlu0 %6616
    %v6619 = vsel %vm1545, %v6615, 0
    %v6622 = vsel %vm1545, %v6617, 0
    %6624 = vmatpush.bf16.xpose.msra.mxu0 0
    %6625 = vmatpush.bf16.xpose.msra.mxu0 0
    %6626 = vmatpush.bf16.xpose.msra.mxu0 0
    %6627 = vmatpush.bf16.xpose.msra.mxu0 0
    %6628 = vmatpush.bf16.xpose.msra.mxu0 0
    %6629 = vmatpush.bf16.xpose.msra.mxu0 0
    %6630 = vmatpush.bf16.xpose.msra.mxu0 0
    %6631 = vmatpush.bf16.xpose.msra.mxu0 %v6622
    %6632 = vmatmul.bf16.gmra.mxu0 %v6619
    %v6633 = vpop.f32.mrf.mxu0
    %v6634 = vadd.f32 %v139, %v6633
    %v6635 = vpop.f32.mrf.mxu0
    %v6636 = vadd.f32 %v140, %v6635
    %6637 = vdwg.mxu0
    %v6638 = vsel %vm1566, %v6634, -inf
    %6639 = vmax.xlane.f32.xlu0 %v6638
    %v6640 = vpop.xlane.xlu0 %6639
    %v6641 = vsel %vm1566, %v6636, -inf
    %6642 = vmax.xlane.f32.xlu0 %v6641
    %v6643 = vpop.xlane.xlu0 %6642
    %v6644 = vsub.f32 %v6634, %v6640
    %v6645 = vsub.f32 %v6636, %v6643
    %v6646 = vmul.f32 %v6644, 1.442695
    %v6647 = vpow.pop %v6646
    %v6648 = vmul.f32 %v6645, 1.442695
    %v6649 = vpow.pop %v6648
    %v6650 = vsel %vm1566, %v6647, 0.0
    %6651 = vadd.xlane.f32.xlu0 %v6650
    %v6652 = vpop.xlane.xlu0 %6651
    %v6653 = vsel %vm1566, %v6649, 0.0
    %6654 = vadd.xlane.f32.xlu0 %v6653
    %v6655 = vpop.xlane.xlu0 %6654
    %v6656 = vrcp.pop %v6652
    %v6657 = vrcp.pop %v6655
    %v6658 = vmul.f32 %v6647, %v6656
    %v6659 = vmul.f32 %v6649, %v6657
    %v6660 = vpack.c.bf16 %v6659, %v6658
    %6661 = vrot.lane.b32.xlu0 %v6413, 40
    %v6662 = vpop.permute.xlu0 %6661
    %v6665 = vsel %vm1566, %v6660, 0
    %6667 = vmatpush.bf16.msra.mxu0 0
    %6668 = vmatpush.bf16.msra.mxu0 0
    %6669 = vmatpush.bf16.msra.mxu0 0
    %6670 = vmatpush.bf16.msra.mxu0 0
    %6671 = vmatpush.bf16.msra.mxu0 0
    %6672 = vmatpush.bf16.msra.mxu0 0
    %6673 = vmatpush.bf16.msra.mxu0 0
    %6674 = vmatpush.bf16.msra.mxu0 %v6662
    %6675 = vmatmul.bf16.gmra.mxu0 %v6665
    %v6676 = vpop.f32.mrf.mxu0
    %v6677 = vadd.f32 0.0, %v6676
    %v6678 = vpop.f32.mrf.mxu0
    %v6679 = vadd.f32 0.0, %v6678
    %6680 = vdwg.mxu0
    %6683 = vrot.lane.b32.xlu0 %v6543, 8
    %v6684 = vpop.permute.xlu0 %6683
    %6685 = vrot.lane.b32.xlu0 %v6545, 8
    %v6686 = vpop.permute.xlu0 %6685
    %6691 = vrot.lane.b32.xlu0 %v6610, 16
    %v6692 = vpop.permute.xlu0 %6691
    %6693 = vrot.lane.b32.xlu0 %v6612, 16
    %v6694 = vpop.permute.xlu0 %6693
    %6699 = vrot.lane.b32.xlu0 %v6677, 24
    %v6700 = vpop.permute.xlu0 %6699
    %6701 = vrot.lane.b32.xlu0 %v6679, 24
    %v6702 = vpop.permute.xlu0 %6701
    %v6705 = vsel %vm1545, %v6476, %v6684
    %v6706 = vsel %vm1545, %v6478, %v6686
    %v6707 = vsel %vm1566, %v6705, %v6692
    %v6708 = vsel %vm1566, %v6706, %v6694
    %v6709 = vsel %vm1839, %v6707, %v6700
    %v6710 = vsel %vm1839, %v6708, %v6702
    %v6711 = vld [vmem:[%s11 + $0x60] sm:$0xf]
    %v6712 = vld [vmem:[%s11 + $0x68] sm:$0xf]
    %v6713 = vld [vmem:[%s11 + $0x70] sm:$0xf]
    %v6714 = vld [vmem:[%s11 + $0x78] sm:$0xf]
    %v6715 = vpack.c.bf16 %v6710, %v6709
    %v6720 = vunpack.c.l.b16 %v6711
    %v6721 = vunpack.c.l.b16 %v6712
    %v6722 = vunpack.c.l.b16 %v6713
    %v6723 = vunpack.c.l.b16 %v6714
    %v6724 = vpack.c.b16 %v6721, %v6720
    %v6725 = vpack.c.b16 %v6723, %v6722
    %v6729 = vsel %vm1447, %v6715, 0
    %6731 = vmatpush.bf16.msra.mxu0 0
    %6732 = vmatpush.bf16.msra.mxu0 0
    %6733 = vmatpush.bf16.msra.mxu0 0
    %6734 = vmatpush.bf16.msra.mxu0 0
    %6735 = vmatpush.bf16.msra.mxu0 0
    %6736 = vmatpush.bf16.msra.mxu0 0
    %6737 = vmatpush.bf16.msra.mxu0 %v6725
    %6738 = vmatpush.bf16.msra.mxu0 %v6724
    %6739 = vmatmul.bf16.gmra.mxu0 %v6729
    %v6740 = vpop.f32.mrf.mxu0
    %v6741 = vadd.f32 0.0, %v6740
    %v6742 = vpop.f32.mrf.mxu0
    %v6743 = vadd.f32 0.0, %v6742
    %6744 = vdwg.mxu0
    %v6745 = vadd.f32 %v6326, %v6741
    %v6746 = vadd.f32 %v6327, %v6743
    %v6747 = vld [vmem:[%s12 + $0x26] ss:$0 sm:$0xff]
    %v6748 = vadd.f32 %v6745, %v6747
    %v6749 = vadd.f32 %v6746, %v6747
    %v6750 = vld [vmem:[%s12 + $0x27] ss:$0 sm:$0xff]
    %v6751 = vld [vmem:[%s12 + $0x30] ss:$0 sm:$0xff]
    %v6752 = vsel %vm1447, %v6748, 0.0
    %6753 = vadd.xlane.f32.xlu0 %v6752
    %v6754 = vpop.xlane.xlu0 %6753
    %v6755 = vsel %vm1447, %v6749, 0.0
    %6756 = vadd.xlane.f32.xlu0 %v6755
    %v6757 = vpop.xlane.xlu0 %6756
    %v6758 = vmul.f32 %v6754, %v1460
    %v6759 = vmul.f32 %v6757, %v1460
    %v6760 = vsub.f32 %v6748, %v6758
    %v6761 = vsub.f32 %v6749, %v6759
    %v6762 = vmul.f32 %v6760, %v6760
    %v6763 = vmul.f32 %v6761, %v6761
    %v6764 = vsel %vm1447, %v6762, 0.0
    %6765 = vadd.xlane.f32.xlu0 %v6764
    %v6766 = vpop.xlane.xlu0 %6765
    %v6767 = vsel %vm1447, %v6763, 0.0
    %6768 = vadd.xlane.f32.xlu0 %v6767
    %v6769 = vpop.xlane.xlu0 %6768
    %v6770 = vmul.f32 %v6766, %v1460
    %v6771 = vmul.f32 %v6769, %v1460
    %v6772 = vadd.f32 %v6770, 1e-05
    %v6773 = vadd.f32 %v6771, 1e-05
    %v6774 = vrsqrt.pop %v6772
    %v6775 = vmul.f32 %v6774, %v6772
    %v6776 = vmul.f32 %v6775, %v6774
    %v6777 = vmul.f32 0.5, %v6776
    %v6778 = vsub.f32 1.5, %v6777
    %v6779 = vmul.f32 %v6774, %v6778
    %vm6780 = vweird.f32 %v6772
    %vm6781 = vweird.f32 %v6774
    %vm6782 = vmor %vm6780, %vm6781
    %v6783 = vsel %vm6782, %v6774, %v6779
    %v6784 = vrsqrt.pop %v6773
    %v6785 = vmul.f32 %v6784, %v6773
    %v6786 = vmul.f32 %v6785, %v6784
    %v6787 = vmul.f32 0.5, %v6786
    %v6788 = vsub.f32 1.5, %v6787
    %v6789 = vmul.f32 %v6784, %v6788
    %vm6790 = vweird.f32 %v6773
    %vm6791 = vweird.f32 %v6784
    %vm6792 = vmor %vm6790, %vm6791
    %v6793 = vsel %vm6792, %v6784, %v6789
    %v6794 = vmul.f32 %v6760, %v6783
    %v6795 = vmul.f32 %v6761, %v6793
    %v6796 = vmul.f32 %v6794, %v6750
    %v6797 = vmul.f32 %v6795, %v6750
    %v6798 = vadd.f32 %v6796, %v6751
    %v6799 = vadd.f32 %v6797, %v6751
    %v6800 = vld [vmem:[%s11 + $0x80] sm:$0xff]
    %v6801 = vld [vmem:[%s11 + $0x88] sm:$0xff]
    %v6802 = vld [vmem:[%s11 + $0x90] sm:$0xff]
    %v6803 = vld [vmem:[%s11 + $0x98] sm:$0xff]
    %v6804 = vpack.c.bf16 %v6799, %v6798
    %s6805 = scalar_lea.vmem %s12, 49
    %v6806 = vld [vmem:[%s6805] ss:$8 sm:$0x3]
    %v6808 = vperm.slane %v6806, 0
    %v6809 = vperm.slane %v6806, 1
    %v6816 = vunpack.c.l.b16 %v6800
    %v6817 = vunpack.c.h.b16 %v6800
    %v6818 = vunpack.c.l.b16 %v6801
    %v6819 = vunpack.c.h.b16 %v6801
    %v6820 = vunpack.c.l.b16 %v6802
    %v6821 = vunpack.c.h.b16 %v6802
    %v6822 = vunpack.c.l.b16 %v6803
    %v6823 = vunpack.c.h.b16 %v6803
    %v6824 = vpack.c.b16 %v6818, %v6816
    %v6825 = vpack.c.b16 %v6819, %v6817
    %v6826 = vpack.c.b16 %v6822, %v6820
    %v6827 = vpack.c.b16 %v6823, %v6821
    %v6833 = vsel %vm1447, %v6804, 0
    %6835 = vmatpush.bf16.msra.mxu0 0
    %6836 = vmatpush.bf16.msra.mxu0 0
    %6837 = vmatpush.bf16.msra.mxu0 0
    %6838 = vmatpush.bf16.msra.mxu0 0
    %6839 = vmatpush.bf16.msra.mxu0 0
    %6840 = vmatpush.bf16.msra.mxu0 0
    %6841 = vmatpush.bf16.msra.mxu0 %v6826
    %6842 = vmatpush.bf16.msra.mxu0 %v6824
    %6843 = vmatmul.bf16.gmra.mxu0 %v6833
    %v6844 = vpop.f32.mrf.mxu0
    %v6845 = vadd.f32 %v6808, %v6844
    %v6846 = vpop.f32.mrf.mxu0
    %v6847 = vadd.f32 %v6808, %v6846
    %6848 = vdwg.mxu0
    %6849 = vmatpush.bf16.msra.mxu0 0
    %6850 = vmatpush.bf16.msra.mxu0 0
    %6851 = vmatpush.bf16.msra.mxu0 0
    %6852 = vmatpush.bf16.msra.mxu0 0
    %6853 = vmatpush.bf16.msra.mxu0 0
    %6854 = vmatpush.bf16.msra.mxu0 0
    %6855 = vmatpush.bf16.msra.mxu0 %v6827
    %6856 = vmatpush.bf16.msra.mxu0 %v6825
    %6857 = vmatmul.bf16.gmra.mxu0 %v6833
    %v6858 = vpop.f32.mrf.mxu0
    %v6859 = vadd.f32 %v6809, %v6858
    %v6860 = vpop.f32.mrf.mxu0
    %v6861 = vadd.f32 %v6809, %v6860
    %6862 = vdwg.mxu0
    %v6863 = vmul.f32 %v6845, %v6845
    %v6864 = vmul.f32 %v6859, %v6859
    %v6865 = vmul.f32 %v6847, %v6847
    %v6866 = vmul.f32 %v6861, %v6861
    %v6867 = vmul.f32 %v6845, %v6863
    %v6868 = vmul.f32 %v6859, %v6864
    %v6869 = vmul.f32 %v6847, %v6865
    %v6870 = vmul.f32 %v6861, %v6866
    %v6871 = vmul.f32 %v6867, 0.044715
    %v6872 = vmul.f32 %v6868, 0.044715
    %v6873 = vmul.f32 %v6869, 0.044715
    %v6874 = vmul.f32 %v6870, 0.044715
    %v6875 = vadd.f32 %v6845, %v6871
    %v6876 = vadd.f32 %v6859, %v6872
    %v6877 = vadd.f32 %v6847, %v6873
    %v6878 = vadd.f32 %v6861, %v6874
    %v6879 = vmul.f32 %v6875, 0.7978846
    %v6880 = vmul.f32 %v6876, 0.7978846
    %v6881 = vmul.f32 %v6877, 0.7978846
    %v6882 = vmul.f32 %v6878, 0.7978846
    %v6883 = vtanh.pop %v6879
    %v6884 = vtanh.pop %v6880
    %v6885 = vtanh.pop %v6881
    %v6886 = vtanh.pop %v6882
    %v6887 = vadd.f32 %v6883, 1.0
    %v6888 = vadd.f32 %v6884, 1.0
    %v6889 = vadd.f32 %v6885, 1.0
    %v6890 = vadd.f32 %v6886, 1.0
    %v6891 = vmul.f32 %v6887, 0.5
    %v6892 = vmul.f32 %v6888, 0.5
    %v6893 = vmul.f32 %v6889, 0.5
    %v6894 = vmul.f32 %v6890, 0.5
    %v6895 = vmul.f32 %v6845, %v6891
    %v6896 = vmul.f32 %v6859, %v6892
    %v6897 = vmul.f32 %v6847, %v6893
    %v6898 = vmul.f32 %v6861, %v6894
    %v6899 = vld [vmem:[%s11 + $0xa0] sm:$0xf]
    %v6900 = vld [vmem:[%s11 + $0xa8] sm:$0xf]
    %v6901 = vld [vmem:[%s11 + $0xb0] sm:$0xf]
    %v6902 = vld [vmem:[%s11 + $0xb8] sm:$0xf]
    %v6903 = vld [vmem:[%s11 + $0xc0] sm:$0xf]
    %v6904 = vld [vmem:[%s11 + $0xc8] sm:$0xf]
    %v6905 = vld [vmem:[%s11 + $0xd0] sm:$0xf]
    %v6906 = vld [vmem:[%s11 + $0xd8] sm:$0xf]
    %v6907 = vld [vmem:[%s11 + $0xe0] sm:$0xf]
    %v6908 = vld [vmem:[%s11 + $0xe8] sm:$0xf]
    %v6909 = vld [vmem:[%s11 + $0xf0] sm:$0xf]
    %v6910 = vld [vmem:[%s11 + $0xf8] sm:$0xf]
    %v6911 = vld [vmem:[%s11 + $0x100] sm:$0xf]
    %v6912 = vld [vmem:[%s11 + $0x108] sm:$0xf]
    %v6913 = vld [vmem:[%s11 + $0x110] sm:$0xf]
    %v6914 = vld [vmem:[%s11 + $0x118] sm:$0xf]
    %v6915 = vld [vmem:[%s11 + $0x120] sm:$0xf]
    %v6916 = vld [vmem:[%s11 + $0x128] sm:$0xf]
    %v6917 = vld [vmem:[%s11 + $0x130] sm:$0xf]
    %v6918 = vld [vmem:[%s11 + $0x138] sm:$0xf]
    %v6919 = vld [vmem:[%s11 + $0x140] sm:$0xf]
    %v6920 = vld [vmem:[%s11 + $0x148] sm:$0xf]
    %v6921 = vld [vmem:[%s11 + $0x150] sm:$0xf]
    %v6922 = vld [vmem:[%s11 + $0x158] sm:$0xf]
    %v6923 = vld [vmem:[%s11 + $0x160] sm:$0xf]
    %v6924 = vld [vmem:[%s11 + $0x168] sm:$0xf]
    %v6925 = vld [vmem:[%s11 + $0x170] sm:$0xf]
    %v6926 = vld [vmem:[%s11 + $0x178] sm:$0xf]
    %v6927 = vld [vmem:[%s11 + $0x180] sm:$0xf]
    %v6928 = vld [vmem:[%s11 + $0x188] sm:$0xf]
    %v6929 = vld [vmem:[%s11 + $0x190] sm:$0xf]
    %v6930 = vld [vmem:[%s11 + $0x198] sm:$0xf]
    %v6931 = vpack.c.bf16 %v6897, %v6895
    %v6932 = vpack.c.bf16 %v6898, %v6896
    %v6965 = vunpack.c.l.b16 %v6899
    %v6966 = vunpack.c.l.b16 %v6900
    %v6967 = vunpack.c.l.b16 %v6901
    %v6968 = vunpack.c.l.b16 %v6902
    %v6969 = vunpack.c.l.b16 %v6903
    %v6970 = vunpack.c.l.b16 %v6904
    %v6971 = vunpack.c.l.b16 %v6905
    %v6972 = vunpack.c.l.b16 %v6906
    %v6973 = vunpack.c.l.b16 %v6907
    %v6974 = vunpack.c.l.b16 %v6908
    %v6975 = vunpack.c.l.b16 %v6909
    %v6976 = vunpack.c.l.b16 %v6910
    %v6977 = vunpack.c.l.b16 %v6911
    %v6978 = vunpack.c.l.b16 %v6912
    %v6979 = vunpack.c.l.b16 %v6913
    %v6980 = vunpack.c.l.b16 %v6914
    %v6981 = vunpack.c.l.b16 %v6915
    %v6982 = vunpack.c.l.b16 %v6916
    %v6983 = vunpack.c.l.b16 %v6917
    %v6984 = vunpack.c.l.b16 %v6918
    %v6985 = vunpack.c.l.b16 %v6919
    %v6986 = vunpack.c.l.b16 %v6920
    %v6987 = vunpack.c.l.b16 %v6921
    %v6988 = vunpack.c.l.b16 %v6922
    %v6989 = vunpack.c.l.b16 %v6923
    %v6990 = vunpack.c.l.b16 %v6924
    %v6991 = vunpack.c.l.b16 %v6925
    %v6992 = vunpack.c.l.b16 %v6926
    %v6993 = vunpack.c.l.b16 %v6927
    %v6994 = vunpack.c.l.b16 %v6928
    %v6995 = vunpack.c.l.b16 %v6929
    %v6996 = vunpack.c.l.b16 %v6930
    %v6997 = vpack.c.b16 %v6966, %v6965
    %v6998 = vpack.c.b16 %v6968, %v6967
    %v6999 = vpack.c.b16 %v6970, %v6969
    %v7000 = vpack.c.b16 %v6972, %v6971
    %v7001 = vpack.c.b16 %v6974, %v6973
    %v7002 = vpack.c.b16 %v6976, %v6975
    %v7003 = vpack.c.b16 %v6978, %v6977
    %v7004 = vpack.c.b16 %v6980, %v6979
    %v7005 = vpack.c.b16 %v6982, %v6981
    %v7006 = vpack.c.b16 %v6984, %v6983
    %v7007 = vpack.c.b16 %v6986, %v6985
    %v7008 = vpack.c.b16 %v6988, %v6987
    %v7009 = vpack.c.b16 %v6990, %v6989
    %v7010 = vpack.c.b16 %v6992, %v6991
    %v7011 = vpack.c.b16 %v6994, %v6993
    %v7012 = vpack.c.b16 %v6996, %v6995
    %7029 = vmatpush.bf16.msra.mxu0 %v7004
    %7030 = vmatpush.bf16.msra.mxu0 %v7003
    %7031 = vmatpush.bf16.msra.mxu0 %v7002
    %7032 = vmatpush.bf16.msra.mxu0 %v7001
    %7033 = vmatpush.bf16.msra.mxu0 %v7000
    %7034 = vmatpush.bf16.msra.mxu0 %v6999
    %7035 = vmatpush.bf16.msra.mxu0 %v6998
    %7036 = vmatpush.bf16.msra.mxu0 %v6997
    %7037 = vmatmul.bf16.gmra.mxu0 %v6931
    %v7038 = vpop.f32.mrf.mxu0
    %v7039 = vadd.f32 0.0, %v7038
    %v7040 = vpop.f32.mrf.mxu0
    %v7041 = vadd.f32 0.0, %v7040
    %7042 = vdwg.mxu0
    %7043 = vmatpush.bf16.msra.mxu0 %v7012
    %7044 = vmatpush.bf16.msra.mxu0 %v7011
    %7045 = vmatpush.bf16.msra.mxu0 %v7010
    %7046 = vmatpush.bf16.msra.mxu0 %v7009
    %7047 = vmatpush.bf16.msra.mxu0 %v7008
    %7048 = vmatpush.bf16.msra.mxu0 %v7007
    %7049 = vmatpush.bf16.msra.mxu0 %v7006
    %7050 = vmatpush.bf16.msra.mxu0 %v7005
    %7051 = vmatmul.bf16.gmra.mxu0 %v6932
    %v7052 = vpop.f32.mrf.mxu0
    %v7053 = vadd.f32 %v7039, %v7052
    %v7054 = vpop.f32.mrf.mxu0
    %v7055 = vadd.f32 %v7041, %v7054
    %7056 = vdwg.mxu0
    %v7057 = vadd.f32 %v6748, %v7053
    %v7058 = vadd.f32 %v6749, %v7055
    %v7059 = vld [vmem:[%s12 + $0x32] ss:$0 sm:$0xff]
    %v7060 = vadd.f32 %v7057, %v7059
    %v7061 = vadd.f32 %v7058, %v7059
    %v7062 = vld [vmem:[%s12 + $0x33] ss:$0 sm:$0xff]
    %v7063 = vld [vmem:[%s12 + $0x34] ss:$0 sm:$0xff]
    %v7064 = vsel %vm1447, %v7060, 0.0
    %7065 = vadd.xlane.f32.xlu0 %v7064
    %v7066 = vpop.xlane.xlu0 %7065
    %v7067 = vsel %vm1447, %v7061, 0.0
    %7068 = vadd.xlane.f32.xlu0 %v7067
    %v7069 = vpop.xlane.xlu0 %7068
    %v7070 = vmul.f32 %v7066, %v1460
    %v7071 = vmul.f32 %v7069, %v1460
    %v7072 = vsub.f32 %v7060, %v7070
    %v7073 = vsub.f32 %v7061, %v7071
    %v7074 = vmul.f32 %v7072, %v7072
    %v7075 = vmul.f32 %v7073, %v7073
    %v7076 = vsel %vm1447, %v7074, 0.0
    %7077 = vadd.xlane.f32.xlu0 %v7076
    %v7078 = vpop.xlane.xlu0 %7077
    %v7079 = vsel %vm1447, %v7075, 0.0
    %7080 = vadd.xlane.f32.xlu0 %v7079
    %v7081 = vpop.xlane.xlu0 %7080
    %v7082 = vmul.f32 %v7078, %v1460
    %v7083 = vmul.f32 %v7081, %v1460
    %v7084 = vadd.f32 %v7082, 1e-05
    %v7085 = vadd.f32 %v7083, 1e-05
    %v7086 = vrsqrt.pop %v7084
    %v7087 = vmul.f32 %v7086, %v7084
    %v7088 = vmul.f32 %v7087, %v7086
    %v7089 = vmul.f32 0.5, %v7088
    %v7090 = vsub.f32 1.5, %v7089
    %v7091 = vmul.f32 %v7086, %v7090
    %vm7092 = vweird.f32 %v7084
    %vm7093 = vweird.f32 %v7086
    %vm7094 = vmor %vm7092, %vm7093
    %v7095 = vsel %vm7094, %v7086, %v7091
    %v7096 = vrsqrt.pop %v7085
    %v7097 = vmul.f32 %v7096, %v7085
    %v7098 = vmul.f32 %v7097, %v7096
    %v7099 = vmul.f32 0.5, %v7098
    %v7100 = vsub.f32 1.5, %v7099
    %v7101 = vmul.f32 %v7096, %v7100
    %vm7102 = vweird.f32 %v7085
    %vm7103 = vweird.f32 %v7096
    %vm7104 = vmor %vm7102, %vm7103
    %v7105 = vsel %vm7104, %v7096, %v7101
    %v7106 = vmul.f32 %v7072, %v7095
    %v7107 = vmul.f32 %v7073, %v7105
    %v7108 = vmul.f32 %v7106, %v7062
    %v7109 = vmul.f32 %v7107, %v7062
    %v7110 = vadd.f32 %v7108, %v7063
    %v7111 = vadd.f32 %v7109, %v7063
    %7114 = vrot.lane.b32.xlu0 %v7110, 64
    %v7115 = vpop.permute.xlu0 %7114
    %7116 = vrot.lane.b32.xlu0 %v7111, 64
    %v7117 = vpop.permute.xlu0 %7116
    %v7120 = vsel %vm1566, %v6209, 0.0
    %v7121 = vsel %vm1566, %v6210, 0.0
    %v7122 = vsel %vm2764, %v7120, %v7115
    %v7123 = vsel %vm2764, %v7121, %v7117
    %vm7124 = vcmask 785408
    %v7125 = vsel %vm7124, %v7122, 0.0
    %v7126 = vsel %vm7124, %v7123, 0.0
    %7127 = vst [vmem:[%s13] sm:$0xff] %v7125
    %7128 = vst [vmem:[%s13 + $0x8] sm:$0xff] %v7126
    // Predicated region
    $region78: #{_fwd_full.1} parent=1 // pred_check
      _
    $region79: #{_fwd_full.1} parent=1 // pred_check_branch
      %7130 = sbr.rel (0) target = $region81
    $region80: #{_fwd_full.1} parent=1 // pred_region
      _
    $region81: #{_fwd_full.1} parent=1 // pred_fallthru
      _
    // Predicated region
    $region82: #{_fwd_full.1} parent=1 // pred_check
      _
    $region83: #{_fwd_full.1} parent=1 // pred_check_branch
      %7132 = sbr.rel (0) target = $region85
    $region84: #{_fwd_full.1} parent=1 // pred_region
      _
    $region85: #{_fwd_full.1} parent=1 // pred_fallthru
      _
    %7133 = vsyncpa [#allocation3], 1
    %7134 = vsyncpa [#allocation5], 1
    %7135 = vsyncpa [#allocation8], 1
    %7136 = vsyncpa [#allocation11], 1

</llo_original>
